<compile_context>
chip_gen: v7x
topology: tpu7x:2x2x1
jax: 0.10.0
libtpu: 0.0.40
codegen_flags: <defaults>
</compile_context>

<pallas_src>
import functools

import jax
import jax.numpy as jnp
from jax.experimental import pallas as pl
from jax.experimental.pallas import tpu as pltpu

CFG = dict(
    enc_vocab=50, dec_vocab=60, hidden=32, heads=4,
    max_seq=16, enc_layers=2, dec_layers=2,
)
V_PAD = 128  # classifier output padded to a lane-dense 128-wide slab


# ----------------------------- in-kernel helpers -----------------------------

def _layernorm(h, g, b, eps=1e-5):
    """LayerNorm with biased variance (PyTorch nn.LayerNorm semantics)."""
    mu = jnp.mean(h, axis=-1, keepdims=True)
    var = jnp.mean((h - mu) ** 2, axis=-1, keepdims=True)
    return (h - mu) * jax.lax.rsqrt(var + eps) * g + b


def _mha_proj(q, k, v, mask, wo, heads):
    """Multi-head attention fused with the output projection (no lane concat).

    q:[Tq,E]  k,v:[Tk,E]  mask: additive [1,Tk] / [Tq,Tk] or None  wo:[E,E]
    returns   sum_h softmax(q_h @ k_h^T + mask) @ v_h @ wo[h*dh:(h+1)*dh, :]
    NOTE: no 1/sqrt(d) scaling, matching the reference qkv_attention_value.
    """
    E = q.shape[-1]
    dh = E // heads
    out = None
    for h in range(heads):                      # static unroll, lane slices
        sl = slice(h * dh, (h + 1) * dh)
        s = jax.lax.dot_general(q[:, sl], k[:, sl], (((1,), (1,)), ((), ())),
                                preferred_element_type=jnp.float32)
        if mask is not None:
            s = s + mask
        s = s - jnp.max(s, axis=-1, keepdims=True)
        p = jnp.exp(s)
        p = p * pl.reciprocal(jnp.sum(p, axis=-1, keepdims=True), approx=True)
        ctx = jnp.dot(p, v[:, sl], preferred_element_type=jnp.float32)
        zh = jnp.dot(ctx, wo[sl, :], preferred_element_type=jnp.float32)
        out = zh if out is None else out + zh
    return out


def _enc_layer(x, mask, wqkv, wo, w1, w2, vec, heads):
    """One encoder layer: ResidualsNorm(MHSA) + ResidualsNorm(FFN)."""
    E = x.shape[-1]
    bqkv = vec[0:1, :3 * E]
    bo = vec[1:2, :E]
    g1, b1 = vec[2:3, :E], vec[3:4, :E]
    bf1 = vec[4:5, :4 * E]
    bf2 = vec[5:6, :E]
    g2, b2 = vec[6:7, :E], vec[7:8, :E]

    qkv = jnp.dot(x, wqkv, preferred_element_type=jnp.float32) + bqkv
    z = _mha_proj(qkv[:, :E], qkv[:, E:2 * E], qkv[:, 2 * E:], mask, wo, heads)
    z = jnp.maximum(z + bo, 0.0)
    x = _layernorm(jnp.maximum(x + z, 0.0), g1, b1)

    h = jnp.maximum(jnp.dot(x, w1, preferred_element_type=jnp.float32) + bf1, 0.0)
    z = jnp.dot(h, w2, preferred_element_type=jnp.float32) + bf2
    x = _layernorm(jnp.maximum(x + z, 0.0), g2, b2)
    return x


def _dec_layer(x, mask, enc_k, enc_v, wqkv, wo1, wo2, wf1, wf2, vec, heads):
    """One decoder layer: masked MHSA + cross-attn (unprojected Q) + FFN."""
    E = x.shape[-1]
    bqkv = vec[0:1, :3 * E]
    bo1 = vec[1:2, :E]
    g1, b1 = vec[2:3, :E], vec[3:4, :E]
    bo2 = vec[4:5, :E]
    g2, b2 = vec[5:6, :E], vec[6:7, :E]
    bf1 = vec[7:8, :4 * E]
    bf2 = vec[8:9, :E]
    g3, b3 = vec[9:10, :E], vec[10:11, :E]

    qkv = jnp.dot(x, wqkv, preferred_element_type=jnp.float32) + bqkv
    z = _mha_proj(qkv[:, :E], qkv[:, E:2 * E], qkv[:, 2 * E:], mask, wo1, heads)
    z = jnp.maximum(z + bo1, 0.0)
    x = _layernorm(jnp.maximum(x + z, 0.0), g1, b1)

    z = _mha_proj(x, enc_k, enc_v, None, wo2, heads)   # un-projected Q, no mask
    z = jnp.maximum(z + bo2, 0.0)
    x = _layernorm(jnp.maximum(x + z, 0.0), g2, b2)

    h = jnp.maximum(jnp.dot(x, wf1, preferred_element_type=jnp.float32) + bf1, 0.0)
    z = jnp.dot(h, wf2, preferred_element_type=jnp.float32) + bf2
    x = _layernorm(jnp.maximum(x + z, 0.0), g3, b3)
    return x


# ------------------------------- fused kernel --------------------------------

def _transformer_kernel(enc_x_ref, enc_mask_ref, dec_x_ref, dec_mask_ref,
                        e_wqkv_ref, e_wo_ref, e_w1_ref, e_w2_ref, e_vec_ref,
                        d_wkv_ref, d_wqkv_ref, d_wo1_ref, d_wo2_ref,
                        d_wf1_ref, d_wf2_ref, d_vec_ref,
                        wp1_ref, wp2_ref, bp_ref,
                        o_ref, *, heads, enc_layers, dec_layers):
    E = enc_x_ref.shape[-1]
    T1 = enc_x_ref.shape[1]

    # ---------------- encoder stack (layers statically unrolled) ------------
    x = enc_x_ref[0]                            # [T1, E]
    enc_mask = enc_mask_ref[0]                  # [1, T1] additive
    for l in range(enc_layers):
        x = _enc_layer(x, enc_mask, e_wqkv_ref[l], e_wo_ref[l],
                       e_w1_ref[l], e_w2_ref[l], e_vec_ref[l], heads)

    # encoder output gate: zero rows at padded positions, x * (mask^T >= 0).
    # Lane->sublane move done as a tiny diag-matmul (MXU) instead of a transpose.
    eye = (jax.lax.broadcasted_iota(jnp.int32, (T1, T1), 0)
           == jax.lax.broadcasted_iota(jnp.int32, (T1, T1), 1)).astype(jnp.float32)
    diag_gate = eye * (enc_mask >= 0.0).astype(jnp.float32)
    enc_out = jnp.dot(diag_gate, x, preferred_element_type=jnp.float32)

    # shared, bias-free encoder K/V projections (computed once per batch)
    kv = jnp.dot(enc_out, d_wkv_ref[...], preferred_element_type=jnp.float32)
    enc_k, enc_v = kv[:, :E], kv[:, E:]

    # ---------------- decoder stack + fused classifier ----------------------
    y = dec_x_ref[0]                            # [T2, E]
    dec_mask = dec_mask_ref[0]                  # [T2, T2] additive causal
    for l in range(dec_layers):
        y = _dec_layer(y, dec_mask, enc_k, enc_v,
                       d_wqkv_ref[l], d_wo1_ref[l], d_wo2_ref[l],
                       d_wf1_ref[l], d_wf2_ref[l], d_vec_ref[l], heads)

    hp = jnp.maximum(jnp.dot(y, wp1_ref[...], preferred_element_type=jnp.float32)
                     + bp_ref[0:1, :], 0.0)
    o_ref[0] = (jnp.dot(hp, wp2_ref[...], preferred_element_type=jnp.float32)
                + bp_ref[1:2, :])


def fused_transformer_call(enc_x, enc_mask, dec_x, dec_mask, p, heads):
    N, T1, E = enc_x.shape
    T2 = dec_x.shape[1]
    Le = p["e_wqkv"].shape[0]
    Ld = p["d_wqkv"].shape[0]
    Vp = p["wp2"].shape[-1]

    batch = lambda s: pl.BlockSpec(s, lambda n: (n, 0, 0))
    whole = lambda s: pl.BlockSpec(s, lambda n: (0,) * len(s))

    return pl.pallas_call(
        functools.partial(_transformer_kernel, heads=heads,
                          enc_layers=Le, dec_layers=Ld),
        out_shape=jax.ShapeDtypeStruct((N, T2, Vp), jnp.float32),
        grid=(N,),
        in_specs=[batch((1, T1, E)), batch((1, 1, T1)),
                  batch((1, T2, E)), batch((1, T2, T2)),
                  whole(p["e_wqkv"].shape), whole(p["e_wo"].shape),
                  whole(p["e_w1"].shape), whole(p["e_w2"].shape),
                  whole(p["e_vec"].shape),
                  whole(p["d_wkv"].shape),
                  whole(p["d_wqkv"].shape), whole(p["d_wo1"].shape),
                  whole(p["d_wo2"].shape), whole(p["d_wf1"].shape),
                  whole(p["d_wf2"].shape), whole(p["d_vec"].shape),
                  whole(p["wp1"].shape), whole(p["wp2"].shape),
                  whole(p["bp"].shape)],
        out_specs=pl.BlockSpec((1, T2, Vp), lambda n: (n, 0, 0)),
        compiler_params=pltpu.CompilerParams(
            dimension_semantics=("parallel",)),
    )(enc_x, enc_mask, dec_x, dec_mask,
      p["e_wqkv"], p["e_wo"], p["e_w1"], p["e_w2"], p["e_vec"],
      p["d_wkv"], p["d_wqkv"], p["d_wo1"], p["d_wo2"],
      p["d_wf1"], p["d_wf2"], p["d_vec"],
      p["wp1"], p["wp2"], p["bp"])


# ------------------------------ model wrapper --------------------------------

def transformer_forward(params, enc_ids, enc_pos, enc_mask, dec_ids, dec_pos,
                        dec_mask):
    # embedding gathers + add are plain-JAX glue
    # TODO(synk): could fold the embedding gathers into the kernel with
    #             PrefetchScalarGridSpec (token ids in SMEM).
    x_enc = (jnp.take(params["enc_input_emb"], enc_ids, axis=0)
             + jnp.take(params["enc_position_emb"], enc_pos, axis=0))
    x_dec = (jnp.take(params["dec_input_emb"], dec_ids, axis=0)
             + jnp.take(params["dec_position_emb"], dec_pos, axis=0))
    scores_pad = fused_transformer_call(x_enc, enc_mask, x_dec, dec_mask,
                                        params, CFG["heads"])
    return scores_pad[:, :, :CFG["dec_vocab"]]


# --------------------------- pure-JAX reference -------------------------------

def _ref_layernorm(h, g, b, eps=1e-5):
    mu = h.mean(-1, keepdims=True)
    var = ((h - mu) ** 2).mean(-1, keepdims=True)
    return (h - mu) / jnp.sqrt(var + eps) * g + b


def _ref_mha(q, k, v, mask, heads):
    N, Tq, E = q.shape
    dh = E // heads
    split = lambda t: t.reshape(t.shape[0], t.shape[1], heads, dh).transpose(0, 2, 1, 3)
    qh, kh, vh = split(q), split(k), split(v)
    s = jnp.einsum('nhqd,nhkd->nhqk', qh, kh)
    if mask is not None:
        s = s + mask[:, None]
    p = jax.nn.softmax(s, axis=-1)
    o = jnp.einsum('nhqk,nhkd->nhqd', p, vh)
    return o.transpose(0, 2, 1, 3).reshape(N, Tq, E)


def reference_forward(p, enc_ids, enc_pos, enc_mask, dec_ids, dec_pos, dec_mask):
    E, H = CFG["hidden"], CFG["heads"]
    x = (jnp.take(p["enc_input_emb"], enc_ids, axis=0)
         + jnp.take(p["enc_position_emb"], enc_pos, axis=0))
    for l in range(CFG["enc_layers"]):
        vec = p["e_vec"][l]
        qkv = x @ p["e_wqkv"][l] + vec[0, :3 * E]
        att = _ref_mha(qkv[..., :E], qkv[..., E:2 * E], qkv[..., 2 * E:], enc_mask, H)
        z = jax.nn.relu(att @ p["e_wo"][l] + vec[1, :E])
        x = _ref_layernorm(jax.nn.relu(x + z), vec[2, :E], vec[3, :E])
        h = jax.nn.relu(x @ p["e_w1"][l] + vec[4, :4 * E])
        z = h @ p["e_w2"][l] + vec[5, :E]
        x = _ref_layernorm(jax.nn.relu(x + z), vec[6, :E], vec[7, :E])
    gate = (jnp.transpose(enc_mask, (0, 2, 1)) >= 0.0).astype(x.dtype)
    enc_out = x * gate

    kv = enc_out @ p["d_wkv"]
    enc_k, enc_v = kv[..., :E], kv[..., E:]

    y = (jnp.take(p["dec_input_emb"], dec_ids, axis=0)
         + jnp.take(p["dec_position_emb"], dec_pos, axis=0))
    for l in range(CFG["dec_layers"]):
        vec = p["d_vec"][l]
        qkv = y @ p["d_wqkv"][l] + vec[0, :3 * E]
        att = _ref_mha(qkv[..., :E], qkv[..., E:2 * E], qkv[..., 2 * E:], dec_mask, H)
        z = jax.nn.relu(att @ p["d_wo1"][l] + vec[1, :E])
        y = _ref_layernorm(jax.nn.relu(y + z), vec[2, :E], vec[3, :E])
        att = _ref_mha(y, enc_k, enc_v, None, H)
        z = jax.nn.relu(att @ p["d_wo2"][l] + vec[4, :E])
        y = _ref_layernorm(jax.nn.relu(y + z), vec[5, :E], vec[6, :E])
        h = jax.nn.relu(y @ p["d_wf1"][l] + vec[7, :4 * E])
        z = h @ p["d_wf2"][l] + vec[8, :E]
        y = _ref_layernorm(jax.nn.relu(y + z), vec[9, :E], vec[10, :E])
    hp = jax.nn.relu(y @ p["wp1"] + p["bp"][0])
    scores = hp @ p["wp2"] + p["bp"][1]
    return scores[:, :, :CFG["dec_vocab"]]


# ------------------------------ parameter init --------------------------------

def init_params(key):
    E = CFG["hidden"]
    H4 = 4 * E
    Le, Ld = CFG["enc_layers"], CFG["dec_layers"]
    V = CFG["dec_vocab"]
    keys = iter(jax.random.split(key, 64))

    def w(shape, scale=0.05):
        return jax.random.normal(next(keys), shape, jnp.float32) * scale

    def pack_rows(vecs, width=V_PAD):
        rows = []
        for v in vecs:
            row = jnp.zeros((1, width), jnp.float32)
            rows.append(row.at[:, :v.shape[-1]].set(v))
        return jnp.concatenate(rows, axis=0)

    ones = jnp.ones((1, E), jnp.float32)
    zeros = jnp.zeros((1, E), jnp.float32)

    # encoder: packed per-layer vectors [bqkv, bo, g1, b1, bf1, bf2, g2, b2]
    e_vec = jnp.stack([pack_rows([w((1, 3 * E)), w((1, E)), ones, zeros,
                                  w((1, H4)), w((1, E)), ones, zeros])
                       for _ in range(Le)])
    # decoder: [bqkv, bo1, g1, b1, bo2, g2, b2, bf1, bf2, g3, b3]
    d_vec = jnp.stack([pack_rows([w((1, 3 * E)), w((1, E)), ones, zeros,
                                  w((1, E)), ones, zeros,
                                  w((1, H4)), w((1, E)), ones, zeros])
                       for _ in range(Ld)])

    wp2 = jnp.zeros((H4, V_PAD), jnp.float32).at[:, :V].set(w((H4, V)))
    bp1 = w((1, H4))
    bp2 = jnp.zeros((1, V_PAD), jnp.float32).at[:, :V].set(w((1, V)))

    return dict(
        enc_input_emb=w((CFG["enc_vocab"], E)),
        enc_position_emb=w((CFG["max_seq"], E)),
        dec_input_emb=w((CFG["dec_vocab"], E)),
        dec_position_emb=w((CFG["max_seq"], E)),
        e_wqkv=w((Le, E, 3 * E)), e_wo=w((Le, E, E)),
        e_w1=w((Le, E, H4)), e_w2=w((Le, H4, E)), e_vec=e_vec,
        d_wkv=w((E, 2 * E)),                       # shared, bias-free wk|wv
        d_wqkv=w((Ld, E, 3 * E)), d_wo1=w((Ld, E, E)), d_wo2=w((Ld, E, E)),
        d_wf1=w((Ld, E, H4)), d_wf2=w((Ld, H4, E)), d_vec=d_vec,
        wp1=w((E, H4)), wp2=wp2,
        bp=jnp.concatenate([bp1, bp2], axis=0),    # [2, 128]
    )


# ---------------------------------- main ---------------------------------------

if __name__ == "__main__":
    key = jax.random.PRNGKey(0)
    kp, k1, k2 = jax.random.split(key, 3)
    params = init_params(kp)

    N, T1, T2 = 2, 8, 8
    enc_ids = jax.random.randint(k1, (N, T1), 0, CFG["enc_vocab"], dtype=jnp.int32)
    dec_ids = jax.random.randint(k2, (N, T2), 0, CFG["dec_vocab"], dtype=jnp.int32)
    enc_pos = jnp.broadcast_to(jnp.arange(T1, dtype=jnp.int32), (N, T1))
    dec_pos = jnp.broadcast_to(jnp.arange(T2, dtype=jnp.int32), (N, T2))

    # encoder mask [N,1,T1]: 0.0 for valid positions, -10000.0 for padding
    valid = jnp.array([T1, T1 - 2])
    enc_mask = jnp.where(jnp.arange(T1)[None, None, :] < valid[:, None, None],
                         0.0, -10000.0).astype(jnp.float32)
    # decoder mask [N,T2,T2]: additive causal mask
    causal = jnp.triu(jnp.ones((T2, T2), jnp.float32), k=1) * -10000.0
    dec_mask = jnp.broadcast_to(causal, (N, T2, T2))

    fwd = jax.jit(transformer_forward)
    scores = fwd(params, enc_ids, enc_pos, enc_mask, dec_ids, dec_pos, dec_mask)
    scores = jax.block_until_ready(scores)
    assert scores.shape == (N, T2, CFG["dec_vocab"]), scores.shape
    assert bool(jnp.all(jnp.isfinite(scores)))

    # pure-JAX reference check (loose tolerance: in-kernel softmax uses the
    # approximate EUP reciprocal)
    ref = reference_forward(params, enc_ids, enc_pos, enc_mask,
                            dec_ids, dec_pos, dec_mask)
    assert bool(jnp.allclose(scores, ref, atol=1e-2, rtol=1e-2)), (
        float(jnp.max(jnp.abs(scores - ref))))

    print("KERNEL_OK")
</pallas_src>

<mosaic_0001>
module attributes {stable_mosaic.version = 11 : i64} {
  func.func @_transformer_kernel(%arg0: i32, %arg1: memref<1x8x32xf32, #tpu.memory_space<vmem>>, %arg2: memref<1x1x8xf32, #tpu.memory_space<vmem>>, %arg3: memref<1x8x32xf32, #tpu.memory_space<vmem>>, %arg4: memref<1x8x8xf32, #tpu.memory_space<vmem>>, %arg5: memref<2x32x96xf32, #tpu.memory_space<vmem>>, %arg6: memref<2x32x32xf32, #tpu.memory_space<vmem>>, %arg7: memref<2x32x128xf32, #tpu.memory_space<vmem>>, %arg8: memref<2x128x32xf32, #tpu.memory_space<vmem>>, %arg9: memref<2x8x128xf32, #tpu.memory_space<vmem>>, %arg10: memref<32x64xf32, #tpu.memory_space<vmem>>, %arg11: memref<2x32x96xf32, #tpu.memory_space<vmem>>, %arg12: memref<2x32x32xf32, #tpu.memory_space<vmem>>, %arg13: memref<2x32x32xf32, #tpu.memory_space<vmem>>, %arg14: memref<2x32x128xf32, #tpu.memory_space<vmem>>, %arg15: memref<2x128x32xf32, #tpu.memory_space<vmem>>, %arg16: memref<2x11x128xf32, #tpu.memory_space<vmem>>, %arg17: memref<32x128xf32, #tpu.memory_space<vmem>>, %arg18: memref<128x128xf32, #tpu.memory_space<vmem>>, %arg19: memref<2x128xf32, #tpu.memory_space<vmem>>, %arg20: memref<1x8x128xf32, #tpu.memory_space<vmem>>) attributes {dimension_semantics = [#tpu.dimension_semantics<parallel>], iteration_bounds = array<i64: 2>, scalar_prefetch = 0 : i64, scratch_operands = 0 : i64, tpu.core_type = #tpu.core_type<tc>, window_params = [{transform_indices = @transform_0, window_bounds = array<i64: 1, 8, 32>}, {transform_indices = @transform_1, window_bounds = array<i64: 1, 1, 8>}, {transform_indices = @transform_2, window_bounds = array<i64: 1, 8, 32>}, {transform_indices = @transform_3, window_bounds = array<i64: 1, 8, 8>}, {pipeline_mode = #tpu.pipeline_mode<synchronous>, transform_indices = @transform_4, window_bounds = array<i64: 2, 32, 96>}, {pipeline_mode = #tpu.pipeline_mode<synchronous>, transform_indices = @transform_5, window_bounds = array<i64: 2, 32, 32>}, {pipeline_mode = #tpu.pipeline_mode<synchronous>, transform_indices = @transform_6, window_bounds = array<i64: 2, 32, 128>}, {pipeline_mode = #tpu.pipeline_mode<synchronous>, transform_indices = @transform_7, window_bounds = array<i64: 2, 128, 32>}, {pipeline_mode = #tpu.pipeline_mode<synchronous>, transform_indices = @transform_8, window_bounds = array<i64: 2, 8, 128>}, {pipeline_mode = #tpu.pipeline_mode<synchronous>, transform_indices = @transform_9, window_bounds = array<i64: 32, 64>}, {pipeline_mode = #tpu.pipeline_mode<synchronous>, transform_indices = @transform_10, window_bounds = array<i64: 2, 32, 96>}, {pipeline_mode = #tpu.pipeline_mode<synchronous>, transform_indices = @transform_11, window_bounds = array<i64: 2, 32, 32>}, {pipeline_mode = #tpu.pipeline_mode<synchronous>, transform_indices = @transform_12, window_bounds = array<i64: 2, 32, 32>}, {pipeline_mode = #tpu.pipeline_mode<synchronous>, transform_indices = @transform_13, window_bounds = array<i64: 2, 32, 128>}, {pipeline_mode = #tpu.pipeline_mode<synchronous>, transform_indices = @transform_14, window_bounds = array<i64: 2, 128, 32>}, {pipeline_mode = #tpu.pipeline_mode<synchronous>, transform_indices = @transform_15, window_bounds = array<i64: 2, 11, 128>}, {pipeline_mode = #tpu.pipeline_mode<synchronous>, transform_indices = @transform_16, window_bounds = array<i64: 32, 128>}, {pipeline_mode = #tpu.pipeline_mode<synchronous>, transform_indices = @transform_17, window_bounds = array<i64: 128, 128>}, {pipeline_mode = #tpu.pipeline_mode<synchronous>, transform_indices = @transform_18, window_bounds = array<i64: 2, 128>}, {transform_indices = @transform_19, window_bounds = array<i64: 1, 8, 128>}]} {
    %c0 = arith.constant 0 : index
    %c0_0 = arith.constant 0 : index
    %c0_1 = arith.constant 0 : index
    %0 = vector.load %arg1[%c0, %c0_0, %c0_1] : memref<1x8x32xf32, #tpu.memory_space<vmem>>, vector<1x8x32xf32>
    %1 = vector.shape_cast %0 : vector<1x8x32xf32> to vector<8x32xf32>
    %c0_2 = arith.constant 0 : index
    %c0_3 = arith.constant 0 : index
    %c0_4 = arith.constant 0 : index
    %2 = vector.load %arg2[%c0_2, %c0_3, %c0_4] : memref<1x1x8xf32, #tpu.memory_space<vmem>>, vector<1x1x8xf32>
    %3 = vector.shape_cast %2 : vector<1x1x8xf32> to vector<1x8xf32>
    %c0_5 = arith.constant 0 : index
    %c0_6 = arith.constant 0 : index
    %c0_7 = arith.constant 0 : index
    %4 = vector.load %arg5[%c0_5, %c0_6, %c0_7] : memref<2x32x96xf32, #tpu.memory_space<vmem>>, vector<1x32x96xf32>
    %5 = vector.shape_cast %4 : vector<1x32x96xf32> to vector<32x96xf32>
    %c0_8 = arith.constant 0 : index
    %c0_9 = arith.constant 0 : index
    %c0_10 = arith.constant 0 : index
    %6 = vector.load %arg6[%c0_8, %c0_9, %c0_10] : memref<2x32x32xf32, #tpu.memory_space<vmem>>, vector<1x32x32xf32>
    %7 = vector.shape_cast %6 : vector<1x32x32xf32> to vector<32x32xf32>
    %c0_11 = arith.constant 0 : index
    %c0_12 = arith.constant 0 : index
    %c0_13 = arith.constant 0 : index
    %8 = vector.load %arg7[%c0_11, %c0_12, %c0_13] : memref<2x32x128xf32, #tpu.memory_space<vmem>>, vector<1x32x128xf32>
    %9 = vector.shape_cast %8 : vector<1x32x128xf32> to vector<32x128xf32>
    %c0_14 = arith.constant 0 : index
    %c0_15 = arith.constant 0 : index
    %c0_16 = arith.constant 0 : index
    %10 = vector.load %arg8[%c0_14, %c0_15, %c0_16] : memref<2x128x32xf32, #tpu.memory_space<vmem>>, vector<1x128x32xf32>
    %11 = vector.shape_cast %10 : vector<1x128x32xf32> to vector<128x32xf32>
    %c0_17 = arith.constant 0 : index
    %c0_18 = arith.constant 0 : index
    %c0_19 = arith.constant 0 : index
    %12 = vector.load %arg9[%c0_17, %c0_18, %c0_19] : memref<2x8x128xf32, #tpu.memory_space<vmem>>, vector<1x8x128xf32>
    %13 = vector.shape_cast %12 : vector<1x8x128xf32> to vector<8x128xf32>
    %14 = vector.extract_strided_slice %13 {offsets = [0, 0], sizes = [1, 96], strides = [1, 1]} : vector<8x128xf32> to vector<1x96xf32>
    %15 = vector.extract_strided_slice %13 {offsets = [1, 0], sizes = [1, 32], strides = [1, 1]} : vector<8x128xf32> to vector<1x32xf32>
    %16 = vector.extract_strided_slice %13 {offsets = [2, 0], sizes = [1, 32], strides = [1, 1]} : vector<8x128xf32> to vector<1x32xf32>
    %17 = vector.extract_strided_slice %13 {offsets = [3, 0], sizes = [1, 32], strides = [1, 1]} : vector<8x128xf32> to vector<1x32xf32>
    %18 = vector.extract_strided_slice %13 {offsets = [4, 0], sizes = [1, 128], strides = [1, 1]} : vector<8x128xf32> to vector<1x128xf32>
    %19 = vector.extract_strided_slice %13 {offsets = [5, 0], sizes = [1, 32], strides = [1, 1]} : vector<8x128xf32> to vector<1x32xf32>
    %20 = vector.extract_strided_slice %13 {offsets = [6, 0], sizes = [1, 32], strides = [1, 1]} : vector<8x128xf32> to vector<1x32xf32>
    %21 = vector.extract_strided_slice %13 {offsets = [7, 0], sizes = [1, 32], strides = [1, 1]} : vector<8x128xf32> to vector<1x32xf32>
    %cst = arith.constant dense<0.000000e+00> : vector<8x96xf32>
    %22 = tpu.matmul %1, %5, %cst {dimension_numbers = #tpu.dot_dimension_numbers<[1], [0], [0], [1], [0, 0, 1, 1], [], []>} : vector<8x32xf32>, vector<32x96xf32>, vector<8x96xf32> -> vector<8x96xf32>
    %23 = vector.broadcast %14 : vector<1x96xf32> to vector<8x96xf32>
    %24 = arith.addf %22, %23 : vector<8x96xf32>
    %25 = vector.extract_strided_slice %24 {offsets = [0, 0], sizes = [8, 32], strides = [1, 1]} : vector<8x96xf32> to vector<8x32xf32>
    %26 = vector.extract_strided_slice %24 {offsets = [0, 32], sizes = [8, 32], strides = [1, 1]} : vector<8x96xf32> to vector<8x32xf32>
    %27 = vector.extract_strided_slice %24 {offsets = [0, 64], sizes = [8, 32], strides = [1, 1]} : vector<8x96xf32> to vector<8x32xf32>
    %28 = vector.extract_strided_slice %25 {offsets = [0, 0], sizes = [8, 8], strides = [1, 1]} : vector<8x32xf32> to vector<8x8xf32>
    %29 = vector.extract_strided_slice %26 {offsets = [0, 0], sizes = [8, 8], strides = [1, 1]} : vector<8x32xf32> to vector<8x8xf32>
    %cst_20 = arith.constant dense<0.000000e+00> : vector<8x8xf32>
    %30 = tpu.matmul %28, %29, %cst_20 {dimension_numbers = #tpu.dot_dimension_numbers<[1], [1], [0], [0], [0, 0, 1, 0], [], []>} : vector<8x8xf32>, vector<8x8xf32>, vector<8x8xf32> -> vector<8x8xf32>
    %31 = vector.broadcast %3 : vector<1x8xf32> to vector<8x8xf32>
    %32 = arith.addf %30, %31 : vector<8x8xf32>
    %cst_21 = arith.constant dense<0xFF800000> : vector<8xf32>
    %33 = vector.multi_reduction <maximumf>, %32, %cst_21 [1] : vector<8x8xf32> to vector<8xf32>
    %34 = vector.shape_cast %33 : vector<8xf32> to vector<8x1xf32>
    %35 = vector.broadcast %34 : vector<8x1xf32> to vector<8x8xf32>
    %36 = arith.subf %32, %35 : vector<8x8xf32>
    %37 = math.exp %36 : vector<8x8xf32>
    %cst_22 = arith.constant dense<0.000000e+00> : vector<8xf32>
    %38 = vector.multi_reduction <add>, %37, %cst_22 [1] : vector<8x8xf32> to vector<8xf32>
    %39 = vector.shape_cast %38 : vector<8xf32> to vector<8x1xf32>
    %40 = tpu.reciprocal %39 {approx = true} : vector<8x1xf32> -> vector<8x1xf32>
    %41 = vector.broadcast %40 : vector<8x1xf32> to vector<8x8xf32>
    %42 = arith.mulf %37, %41 : vector<8x8xf32>
    %43 = vector.extract_strided_slice %27 {offsets = [0, 0], sizes = [8, 8], strides = [1, 1]} : vector<8x32xf32> to vector<8x8xf32>
    %cst_23 = arith.constant dense<0.000000e+00> : vector<8x8xf32>
    %44 = tpu.matmul %42, %43, %cst_23 {dimension_numbers = #tpu.dot_dimension_numbers<[1], [0], [0], [1], [0, 0, 1, 1], [], []>} : vector<8x8xf32>, vector<8x8xf32>, vector<8x8xf32> -> vector<8x8xf32>
    %45 = vector.extract_strided_slice %7 {offsets = [0, 0], sizes = [8, 32], strides = [1, 1]} : vector<32x32xf32> to vector<8x32xf32>
    %cst_24 = arith.constant dense<0.000000e+00> : vector<8x32xf32>
    %46 = tpu.matmul %44, %45, %cst_24 {dimension_numbers = #tpu.dot_dimension_numbers<[1], [0], [0], [1], [0, 0, 1, 1], [], []>} : vector<8x8xf32>, vector<8x32xf32>, vector<8x32xf32> -> vector<8x32xf32>
    %47 = vector.extract_strided_slice %25 {offsets = [0, 8], sizes = [8, 8], strides = [1, 1]} : vector<8x32xf32> to vector<8x8xf32>
    %48 = vector.extract_strided_slice %26 {offsets = [0, 8], sizes = [8, 8], strides = [1, 1]} : vector<8x32xf32> to vector<8x8xf32>
    %cst_25 = arith.constant dense<0.000000e+00> : vector<8x8xf32>
    %49 = tpu.matmul %47, %48, %cst_25 {dimension_numbers = #tpu.dot_dimension_numbers<[1], [1], [0], [0], [0, 0, 1, 0], [], []>} : vector<8x8xf32>, vector<8x8xf32>, vector<8x8xf32> -> vector<8x8xf32>
    %50 = vector.broadcast %3 : vector<1x8xf32> to vector<8x8xf32>
    %51 = arith.addf %49, %50 : vector<8x8xf32>
    %cst_26 = arith.constant dense<0xFF800000> : vector<8xf32>
    %52 = vector.multi_reduction <maximumf>, %51, %cst_26 [1] : vector<8x8xf32> to vector<8xf32>
    %53 = vector.shape_cast %52 : vector<8xf32> to vector<8x1xf32>
    %54 = vector.broadcast %53 : vector<8x1xf32> to vector<8x8xf32>
    %55 = arith.subf %51, %54 : vector<8x8xf32>
    %56 = math.exp %55 : vector<8x8xf32>
    %cst_27 = arith.constant dense<0.000000e+00> : vector<8xf32>
    %57 = vector.multi_reduction <add>, %56, %cst_27 [1] : vector<8x8xf32> to vector<8xf32>
    %58 = vector.shape_cast %57 : vector<8xf32> to vector<8x1xf32>
    %59 = tpu.reciprocal %58 {approx = true} : vector<8x1xf32> -> vector<8x1xf32>
    %60 = vector.broadcast %59 : vector<8x1xf32> to vector<8x8xf32>
    %61 = arith.mulf %56, %60 : vector<8x8xf32>
    %62 = vector.extract_strided_slice %27 {offsets = [0, 8], sizes = [8, 8], strides = [1, 1]} : vector<8x32xf32> to vector<8x8xf32>
    %cst_28 = arith.constant dense<0.000000e+00> : vector<8x8xf32>
    %63 = tpu.matmul %61, %62, %cst_28 {dimension_numbers = #tpu.dot_dimension_numbers<[1], [0], [0], [1], [0, 0, 1, 1], [], []>} : vector<8x8xf32>, vector<8x8xf32>, vector<8x8xf32> -> vector<8x8xf32>
    %64 = vector.extract_strided_slice %7 {offsets = [8, 0], sizes = [8, 32], strides = [1, 1]} : vector<32x32xf32> to vector<8x32xf32>
    %cst_29 = arith.constant dense<0.000000e+00> : vector<8x32xf32>
    %65 = tpu.matmul %63, %64, %cst_29 {dimension_numbers = #tpu.dot_dimension_numbers<[1], [0], [0], [1], [0, 0, 1, 1], [], []>} : vector<8x8xf32>, vector<8x32xf32>, vector<8x32xf32> -> vector<8x32xf32>
    %66 = arith.addf %46, %65 : vector<8x32xf32>
    %67 = vector.extract_strided_slice %25 {offsets = [0, 16], sizes = [8, 8], strides = [1, 1]} : vector<8x32xf32> to vector<8x8xf32>
    %68 = vector.extract_strided_slice %26 {offsets = [0, 16], sizes = [8, 8], strides = [1, 1]} : vector<8x32xf32> to vector<8x8xf32>
    %cst_30 = arith.constant dense<0.000000e+00> : vector<8x8xf32>
    %69 = tpu.matmul %67, %68, %cst_30 {dimension_numbers = #tpu.dot_dimension_numbers<[1], [1], [0], [0], [0, 0, 1, 0], [], []>} : vector<8x8xf32>, vector<8x8xf32>, vector<8x8xf32> -> vector<8x8xf32>
    %70 = vector.broadcast %3 : vector<1x8xf32> to vector<8x8xf32>
    %71 = arith.addf %69, %70 : vector<8x8xf32>
    %cst_31 = arith.constant dense<0xFF800000> : vector<8xf32>
    %72 = vector.multi_reduction <maximumf>, %71, %cst_31 [1] : vector<8x8xf32> to vector<8xf32>
    %73 = vector.shape_cast %72 : vector<8xf32> to vector<8x1xf32>
    %74 = vector.broadcast %73 : vector<8x1xf32> to vector<8x8xf32>
    %75 = arith.subf %71, %74 : vector<8x8xf32>
    %76 = math.exp %75 : vector<8x8xf32>
    %cst_32 = arith.constant dense<0.000000e+00> : vector<8xf32>
    %77 = vector.multi_reduction <add>, %76, %cst_32 [1] : vector<8x8xf32> to vector<8xf32>
    %78 = vector.shape_cast %77 : vector<8xf32> to vector<8x1xf32>
    %79 = tpu.reciprocal %78 {approx = true} : vector<8x1xf32> -> vector<8x1xf32>
    %80 = vector.broadcast %79 : vector<8x1xf32> to vector<8x8xf32>
    %81 = arith.mulf %76, %80 : vector<8x8xf32>
    %82 = vector.extract_strided_slice %27 {offsets = [0, 16], sizes = [8, 8], strides = [1, 1]} : vector<8x32xf32> to vector<8x8xf32>
    %cst_33 = arith.constant dense<0.000000e+00> : vector<8x8xf32>
    %83 = tpu.matmul %81, %82, %cst_33 {dimension_numbers = #tpu.dot_dimension_numbers<[1], [0], [0], [1], [0, 0, 1, 1], [], []>} : vector<8x8xf32>, vector<8x8xf32>, vector<8x8xf32> -> vector<8x8xf32>
    %84 = vector.extract_strided_slice %7 {offsets = [16, 0], sizes = [8, 32], strides = [1, 1]} : vector<32x32xf32> to vector<8x32xf32>
    %cst_34 = arith.constant dense<0.000000e+00> : vector<8x32xf32>
    %85 = tpu.matmul %83, %84, %cst_34 {dimension_numbers = #tpu.dot_dimension_numbers<[1], [0], [0], [1], [0, 0, 1, 1], [], []>} : vector<8x8xf32>, vector<8x32xf32>, vector<8x32xf32> -> vector<8x32xf32>
    %86 = arith.addf %66, %85 : vector<8x32xf32>
    %87 = vector.extract_strided_slice %25 {offsets = [0, 24], sizes = [8, 8], strides = [1, 1]} : vector<8x32xf32> to vector<8x8xf32>
    %88 = vector.extract_strided_slice %26 {offsets = [0, 24], sizes = [8, 8], strides = [1, 1]} : vector<8x32xf32> to vector<8x8xf32>
    %cst_35 = arith.constant dense<0.000000e+00> : vector<8x8xf32>
    %89 = tpu.matmul %87, %88, %cst_35 {dimension_numbers = #tpu.dot_dimension_numbers<[1], [1], [0], [0], [0, 0, 1, 0], [], []>} : vector<8x8xf32>, vector<8x8xf32>, vector<8x8xf32> -> vector<8x8xf32>
    %90 = vector.broadcast %3 : vector<1x8xf32> to vector<8x8xf32>
    %91 = arith.addf %89, %90 : vector<8x8xf32>
    %cst_36 = arith.constant dense<0xFF800000> : vector<8xf32>
    %92 = vector.multi_reduction <maximumf>, %91, %cst_36 [1] : vector<8x8xf32> to vector<8xf32>
    %93 = vector.shape_cast %92 : vector<8xf32> to vector<8x1xf32>
    %94 = vector.broadcast %93 : vector<8x1xf32> to vector<8x8xf32>
    %95 = arith.subf %91, %94 : vector<8x8xf32>
    %96 = math.exp %95 : vector<8x8xf32>
    %cst_37 = arith.constant dense<0.000000e+00> : vector<8xf32>
    %97 = vector.multi_reduction <add>, %96, %cst_37 [1] : vector<8x8xf32> to vector<8xf32>
    %98 = vector.shape_cast %97 : vector<8xf32> to vector<8x1xf32>
    %99 = tpu.reciprocal %98 {approx = true} : vector<8x1xf32> -> vector<8x1xf32>
    %100 = vector.broadcast %99 : vector<8x1xf32> to vector<8x8xf32>
    %101 = arith.mulf %96, %100 : vector<8x8xf32>
    %102 = vector.extract_strided_slice %27 {offsets = [0, 24], sizes = [8, 8], strides = [1, 1]} : vector<8x32xf32> to vector<8x8xf32>
    %cst_38 = arith.constant dense<0.000000e+00> : vector<8x8xf32>
    %103 = tpu.matmul %101, %102, %cst_38 {dimension_numbers = #tpu.dot_dimension_numbers<[1], [0], [0], [1], [0, 0, 1, 1], [], []>} : vector<8x8xf32>, vector<8x8xf32>, vector<8x8xf32> -> vector<8x8xf32>
    %104 = vector.extract_strided_slice %7 {offsets = [24, 0], sizes = [8, 32], strides = [1, 1]} : vector<32x32xf32> to vector<8x32xf32>
    %cst_39 = arith.constant dense<0.000000e+00> : vector<8x32xf32>
    %105 = tpu.matmul %103, %104, %cst_39 {dimension_numbers = #tpu.dot_dimension_numbers<[1], [0], [0], [1], [0, 0, 1, 1], [], []>} : vector<8x8xf32>, vector<8x32xf32>, vector<8x32xf32> -> vector<8x32xf32>
    %106 = arith.addf %86, %105 : vector<8x32xf32>
    %107 = vector.broadcast %15 : vector<1x32xf32> to vector<8x32xf32>
    %108 = arith.addf %106, %107 : vector<8x32xf32>
    %cst_40 = arith.constant 0.000000e+00 : f32
    %109 = vector.broadcast %cst_40 : f32 to vector<8x32xf32>
    %110 = arith.maximumf %108, %109 : vector<8x32xf32>
    %111 = arith.addf %1, %110 : vector<8x32xf32>
    %cst_41 = arith.constant 0.000000e+00 : f32
    %112 = vector.broadcast %cst_41 : f32 to vector<8x32xf32>
    %113 = arith.maximumf %111, %112 : vector<8x32xf32>
    %cst_42 = arith.constant dense<0.000000e+00> : vector<8xf32>
    %114 = vector.multi_reduction <add>, %113, %cst_42 [1] : vector<8x32xf32> to vector<8xf32>
    %115 = vector.shape_cast %114 : vector<8xf32> to vector<8x1xf32>
    %cst_43 = arith.constant 3.200000e+01 : f32
    %116 = vector.broadcast %cst_43 : f32 to vector<8x1xf32>
    %117 = arith.divf %115, %116 : vector<8x1xf32>
    %118 = vector.broadcast %117 : vector<8x1xf32> to vector<8x32xf32>
    %119 = arith.subf %113, %118 : vector<8x32xf32>
    %120 = arith.mulf %119, %119 : vector<8x32xf32>
    %cst_44 = arith.constant dense<0.000000e+00> : vector<8xf32>
    %121 = vector.multi_reduction <add>, %120, %cst_44 [1] : vector<8x32xf32> to vector<8xf32>
    %122 = vector.shape_cast %121 : vector<8xf32> to vector<8x1xf32>
    %cst_45 = arith.constant 3.200000e+01 : f32
    %123 = vector.broadcast %cst_45 : f32 to vector<8x1xf32>
    %124 = arith.divf %122, %123 : vector<8x1xf32>
    %125 = vector.broadcast %117 : vector<8x1xf32> to vector<8x32xf32>
    %126 = arith.subf %113, %125 : vector<8x32xf32>
    %cst_46 = arith.constant 9.99999974E-6 : f32
    %127 = vector.broadcast %cst_46 : f32 to vector<8x1xf32>
    %128 = arith.addf %124, %127 : vector<8x1xf32>
    %129 = math.rsqrt %128 : vector<8x1xf32>
    %130 = vector.broadcast %129 : vector<8x1xf32> to vector<8x32xf32>
    %131 = arith.mulf %126, %130 : vector<8x32xf32>
    %132 = vector.broadcast %16 : vector<1x32xf32> to vector<8x32xf32>
    %133 = arith.mulf %131, %132 : vector<8x32xf32>
    %134 = vector.broadcast %17 : vector<1x32xf32> to vector<8x32xf32>
    %135 = arith.addf %133, %134 : vector<8x32xf32>
    %cst_47 = arith.constant dense<0.000000e+00> : vector<8x128xf32>
    %136 = tpu.matmul %135, %9, %cst_47 {dimension_numbers = #tpu.dot_dimension_numbers<[1], [0], [0], [1], [0, 0, 1, 1], [], []>} : vector<8x32xf32>, vector<32x128xf32>, vector<8x128xf32> -> vector<8x128xf32>
    %137 = vector.broadcast %18 : vector<1x128xf32> to vector<8x128xf32>
    %138 = arith.addf %136, %137 : vector<8x128xf32>
    %cst_48 = arith.constant 0.000000e+00 : f32
    %139 = vector.broadcast %cst_48 : f32 to vector<8x128xf32>
    %140 = arith.maximumf %138, %139 : vector<8x128xf32>
    %cst_49 = arith.constant dense<0.000000e+00> : vector<8x32xf32>
    %141 = tpu.matmul %140, %11, %cst_49 {dimension_numbers = #tpu.dot_dimension_numbers<[1], [0], [0], [1], [0, 0, 1, 1], [], []>} : vector<8x128xf32>, vector<128x32xf32>, vector<8x32xf32> -> vector<8x32xf32>
    %142 = vector.broadcast %19 : vector<1x32xf32> to vector<8x32xf32>
    %143 = arith.addf %141, %142 : vector<8x32xf32>
    %144 = arith.addf %135, %143 : vector<8x32xf32>
    %cst_50 = arith.constant 0.000000e+00 : f32
    %145 = vector.broadcast %cst_50 : f32 to vector<8x32xf32>
    %146 = arith.maximumf %144, %145 : vector<8x32xf32>
    %cst_51 = arith.constant dense<0.000000e+00> : vector<8xf32>
    %147 = vector.multi_reduction <add>, %146, %cst_51 [1] : vector<8x32xf32> to vector<8xf32>
    %148 = vector.shape_cast %147 : vector<8xf32> to vector<8x1xf32>
    %cst_52 = arith.constant 3.200000e+01 : f32
    %149 = vector.broadcast %cst_52 : f32 to vector<8x1xf32>
    %150 = arith.divf %148, %149 : vector<8x1xf32>
    %151 = vector.broadcast %150 : vector<8x1xf32> to vector<8x32xf32>
    %152 = arith.subf %146, %151 : vector<8x32xf32>
    %153 = arith.mulf %152, %152 : vector<8x32xf32>
    %cst_53 = arith.constant dense<0.000000e+00> : vector<8xf32>
    %154 = vector.multi_reduction <add>, %153, %cst_53 [1] : vector<8x32xf32> to vector<8xf32>
    %155 = vector.shape_cast %154 : vector<8xf32> to vector<8x1xf32>
    %cst_54 = arith.constant 3.200000e+01 : f32
    %156 = vector.broadcast %cst_54 : f32 to vector<8x1xf32>
    %157 = arith.divf %155, %156 : vector<8x1xf32>
    %158 = vector.broadcast %150 : vector<8x1xf32> to vector<8x32xf32>
    %159 = arith.subf %146, %158 : vector<8x32xf32>
    %cst_55 = arith.constant 9.99999974E-6 : f32
    %160 = vector.broadcast %cst_55 : f32 to vector<8x1xf32>
    %161 = arith.addf %157, %160 : vector<8x1xf32>
    %162 = math.rsqrt %161 : vector<8x1xf32>
    %163 = vector.broadcast %162 : vector<8x1xf32> to vector<8x32xf32>
    %164 = arith.mulf %159, %163 : vector<8x32xf32>
    %165 = vector.broadcast %20 : vector<1x32xf32> to vector<8x32xf32>
    %166 = arith.mulf %164, %165 : vector<8x32xf32>
    %167 = vector.broadcast %21 : vector<1x32xf32> to vector<8x32xf32>
    %168 = arith.addf %166, %167 : vector<8x32xf32>
    %c1 = arith.constant 1 : index
    %c0_56 = arith.constant 0 : index
    %c0_57 = arith.constant 0 : index
    %169 = vector.load %arg5[%c1, %c0_56, %c0_57] : memref<2x32x96xf32, #tpu.memory_space<vmem>>, vector<1x32x96xf32>
    %170 = vector.shape_cast %169 : vector<1x32x96xf32> to vector<32x96xf32>
    %c1_58 = arith.constant 1 : index
    %c0_59 = arith.constant 0 : index
    %c0_60 = arith.constant 0 : index
    %171 = vector.load %arg6[%c1_58, %c0_59, %c0_60] : memref<2x32x32xf32, #tpu.memory_space<vmem>>, vector<1x32x32xf32>
    %172 = vector.shape_cast %171 : vector<1x32x32xf32> to vector<32x32xf32>
    %c1_61 = arith.constant 1 : index
    %c0_62 = arith.constant 0 : index
    %c0_63 = arith.constant 0 : index
    %173 = vector.load %arg7[%c1_61, %c0_62, %c0_63] : memref<2x32x128xf32, #tpu.memory_space<vmem>>, vector<1x32x128xf32>
    %174 = vector.shape_cast %173 : vector<1x32x128xf32> to vector<32x128xf32>
    %c1_64 = arith.constant 1 : index
    %c0_65 = arith.constant 0 : index
    %c0_66 = arith.constant 0 : index
    %175 = vector.load %arg8[%c1_64, %c0_65, %c0_66] : memref<2x128x32xf32, #tpu.memory_space<vmem>>, vector<1x128x32xf32>
    %176 = vector.shape_cast %175 : vector<1x128x32xf32> to vector<128x32xf32>
    %c1_67 = arith.constant 1 : index
    %c0_68 = arith.constant 0 : index
    %c0_69 = arith.constant 0 : index
    %177 = vector.load %arg9[%c1_67, %c0_68, %c0_69] : memref<2x8x128xf32, #tpu.memory_space<vmem>>, vector<1x8x128xf32>
    %178 = vector.shape_cast %177 : vector<1x8x128xf32> to vector<8x128xf32>
    %179 = vector.extract_strided_slice %178 {offsets = [0, 0], sizes = [1, 96], strides = [1, 1]} : vector<8x128xf32> to vector<1x96xf32>
    %180 = vector.extract_strided_slice %178 {offsets = [1, 0], sizes = [1, 32], strides = [1, 1]} : vector<8x128xf32> to vector<1x32xf32>
    %181 = vector.extract_strided_slice %178 {offsets = [2, 0], sizes = [1, 32], strides = [1, 1]} : vector<8x128xf32> to vector<1x32xf32>
    %182 = vector.extract_strided_slice %178 {offsets = [3, 0], sizes = [1, 32], strides = [1, 1]} : vector<8x128xf32> to vector<1x32xf32>
    %183 = vector.extract_strided_slice %178 {offsets = [4, 0], sizes = [1, 128], strides = [1, 1]} : vector<8x128xf32> to vector<1x128xf32>
    %184 = vector.extract_strided_slice %178 {offsets = [5, 0], sizes = [1, 32], strides = [1, 1]} : vector<8x128xf32> to vector<1x32xf32>
    %185 = vector.extract_strided_slice %178 {offsets = [6, 0], sizes = [1, 32], strides = [1, 1]} : vector<8x128xf32> to vector<1x32xf32>
    %186 = vector.extract_strided_slice %178 {offsets = [7, 0], sizes = [1, 32], strides = [1, 1]} : vector<8x128xf32> to vector<1x32xf32>
    %cst_70 = arith.constant dense<0.000000e+00> : vector<8x96xf32>
    %187 = tpu.matmul %168, %170, %cst_70 {dimension_numbers = #tpu.dot_dimension_numbers<[1], [0], [0], [1], [0, 0, 1, 1], [], []>} : vector<8x32xf32>, vector<32x96xf32>, vector<8x96xf32> -> vector<8x96xf32>
    %188 = vector.broadcast %179 : vector<1x96xf32> to vector<8x96xf32>
    %189 = arith.addf %187, %188 : vector<8x96xf32>
    %190 = vector.extract_strided_slice %189 {offsets = [0, 0], sizes = [8, 32], strides = [1, 1]} : vector<8x96xf32> to vector<8x32xf32>
    %191 = vector.extract_strided_slice %189 {offsets = [0, 32], sizes = [8, 32], strides = [1, 1]} : vector<8x96xf32> to vector<8x32xf32>
    %192 = vector.extract_strided_slice %189 {offsets = [0, 64], sizes = [8, 32], strides = [1, 1]} : vector<8x96xf32> to vector<8x32xf32>
    %193 = vector.extract_strided_slice %190 {offsets = [0, 0], sizes = [8, 8], strides = [1, 1]} : vector<8x32xf32> to vector<8x8xf32>
    %194 = vector.extract_strided_slice %191 {offsets = [0, 0], sizes = [8, 8], strides = [1, 1]} : vector<8x32xf32> to vector<8x8xf32>
    %cst_71 = arith.constant dense<0.000000e+00> : vector<8x8xf32>
    %195 = tpu.matmul %193, %194, %cst_71 {dimension_numbers = #tpu.dot_dimension_numbers<[1], [1], [0], [0], [0, 0, 1, 0], [], []>} : vector<8x8xf32>, vector<8x8xf32>, vector<8x8xf32> -> vector<8x8xf32>
    %196 = vector.broadcast %3 : vector<1x8xf32> to vector<8x8xf32>
    %197 = arith.addf %195, %196 : vector<8x8xf32>
    %cst_72 = arith.constant dense<0xFF800000> : vector<8xf32>
    %198 = vector.multi_reduction <maximumf>, %197, %cst_72 [1] : vector<8x8xf32> to vector<8xf32>
    %199 = vector.shape_cast %198 : vector<8xf32> to vector<8x1xf32>
    %200 = vector.broadcast %199 : vector<8x1xf32> to vector<8x8xf32>
    %201 = arith.subf %197, %200 : vector<8x8xf32>
    %202 = math.exp %201 : vector<8x8xf32>
    %cst_73 = arith.constant dense<0.000000e+00> : vector<8xf32>
    %203 = vector.multi_reduction <add>, %202, %cst_73 [1] : vector<8x8xf32> to vector<8xf32>
    %204 = vector.shape_cast %203 : vector<8xf32> to vector<8x1xf32>
    %205 = tpu.reciprocal %204 {approx = true} : vector<8x1xf32> -> vector<8x1xf32>
    %206 = vector.broadcast %205 : vector<8x1xf32> to vector<8x8xf32>
    %207 = arith.mulf %202, %206 : vector<8x8xf32>
    %208 = vector.extract_strided_slice %192 {offsets = [0, 0], sizes = [8, 8], strides = [1, 1]} : vector<8x32xf32> to vector<8x8xf32>
    %cst_74 = arith.constant dense<0.000000e+00> : vector<8x8xf32>
    %209 = tpu.matmul %207, %208, %cst_74 {dimension_numbers = #tpu.dot_dimension_numbers<[1], [0], [0], [1], [0, 0, 1, 1], [], []>} : vector<8x8xf32>, vector<8x8xf32>, vector<8x8xf32> -> vector<8x8xf32>
    %210 = vector.extract_strided_slice %172 {offsets = [0, 0], sizes = [8, 32], strides = [1, 1]} : vector<32x32xf32> to vector<8x32xf32>
    %cst_75 = arith.constant dense<0.000000e+00> : vector<8x32xf32>
    %211 = tpu.matmul %209, %210, %cst_75 {dimension_numbers = #tpu.dot_dimension_numbers<[1], [0], [0], [1], [0, 0, 1, 1], [], []>} : vector<8x8xf32>, vector<8x32xf32>, vector<8x32xf32> -> vector<8x32xf32>
    %212 = vector.extract_strided_slice %190 {offsets = [0, 8], sizes = [8, 8], strides = [1, 1]} : vector<8x32xf32> to vector<8x8xf32>
    %213 = vector.extract_strided_slice %191 {offsets = [0, 8], sizes = [8, 8], strides = [1, 1]} : vector<8x32xf32> to vector<8x8xf32>
    %cst_76 = arith.constant dense<0.000000e+00> : vector<8x8xf32>
    %214 = tpu.matmul %212, %213, %cst_76 {dimension_numbers = #tpu.dot_dimension_numbers<[1], [1], [0], [0], [0, 0, 1, 0], [], []>} : vector<8x8xf32>, vector<8x8xf32>, vector<8x8xf32> -> vector<8x8xf32>
    %215 = vector.broadcast %3 : vector<1x8xf32> to vector<8x8xf32>
    %216 = arith.addf %214, %215 : vector<8x8xf32>
    %cst_77 = arith.constant dense<0xFF800000> : vector<8xf32>
    %217 = vector.multi_reduction <maximumf>, %216, %cst_77 [1] : vector<8x8xf32> to vector<8xf32>
    %218 = vector.shape_cast %217 : vector<8xf32> to vector<8x1xf32>
    %219 = vector.broadcast %218 : vector<8x1xf32> to vector<8x8xf32>
    %220 = arith.subf %216, %219 : vector<8x8xf32>
    %221 = math.exp %220 : vector<8x8xf32>
    %cst_78 = arith.constant dense<0.000000e+00> : vector<8xf32>
    %222 = vector.multi_reduction <add>, %221, %cst_78 [1] : vector<8x8xf32> to vector<8xf32>
    %223 = vector.shape_cast %222 : vector<8xf32> to vector<8x1xf32>
    %224 = tpu.reciprocal %223 {approx = true} : vector<8x1xf32> -> vector<8x1xf32>
    %225 = vector.broadcast %224 : vector<8x1xf32> to vector<8x8xf32>
    %226 = arith.mulf %221, %225 : vector<8x8xf32>
    %227 = vector.extract_strided_slice %192 {offsets = [0, 8], sizes = [8, 8], strides = [1, 1]} : vector<8x32xf32> to vector<8x8xf32>
    %cst_79 = arith.constant dense<0.000000e+00> : vector<8x8xf32>
    %228 = tpu.matmul %226, %227, %cst_79 {dimension_numbers = #tpu.dot_dimension_numbers<[1], [0], [0], [1], [0, 0, 1, 1], [], []>} : vector<8x8xf32>, vector<8x8xf32>, vector<8x8xf32> -> vector<8x8xf32>
    %229 = vector.extract_strided_slice %172 {offsets = [8, 0], sizes = [8, 32], strides = [1, 1]} : vector<32x32xf32> to vector<8x32xf32>
    %cst_80 = arith.constant dense<0.000000e+00> : vector<8x32xf32>
    %230 = tpu.matmul %228, %229, %cst_80 {dimension_numbers = #tpu.dot_dimension_numbers<[1], [0], [0], [1], [0, 0, 1, 1], [], []>} : vector<8x8xf32>, vector<8x32xf32>, vector<8x32xf32> -> vector<8x32xf32>
    %231 = arith.addf %211, %230 : vector<8x32xf32>
    %232 = vector.extract_strided_slice %190 {offsets = [0, 16], sizes = [8, 8], strides = [1, 1]} : vector<8x32xf32> to vector<8x8xf32>
    %233 = vector.extract_strided_slice %191 {offsets = [0, 16], sizes = [8, 8], strides = [1, 1]} : vector<8x32xf32> to vector<8x8xf32>
    %cst_81 = arith.constant dense<0.000000e+00> : vector<8x8xf32>
    %234 = tpu.matmul %232, %233, %cst_81 {dimension_numbers = #tpu.dot_dimension_numbers<[1], [1], [0], [0], [0, 0, 1, 0], [], []>} : vector<8x8xf32>, vector<8x8xf32>, vector<8x8xf32> -> vector<8x8xf32>
    %235 = vector.broadcast %3 : vector<1x8xf32> to vector<8x8xf32>
    %236 = arith.addf %234, %235 : vector<8x8xf32>
    %cst_82 = arith.constant dense<0xFF800000> : vector<8xf32>
    %237 = vector.multi_reduction <maximumf>, %236, %cst_82 [1] : vector<8x8xf32> to vector<8xf32>
    %238 = vector.shape_cast %237 : vector<8xf32> to vector<8x1xf32>
    %239 = vector.broadcast %238 : vector<8x1xf32> to vector<8x8xf32>
    %240 = arith.subf %236, %239 : vector<8x8xf32>
    %241 = math.exp %240 : vector<8x8xf32>
    %cst_83 = arith.constant dense<0.000000e+00> : vector<8xf32>
    %242 = vector.multi_reduction <add>, %241, %cst_83 [1] : vector<8x8xf32> to vector<8xf32>
    %243 = vector.shape_cast %242 : vector<8xf32> to vector<8x1xf32>
    %244 = tpu.reciprocal %243 {approx = true} : vector<8x1xf32> -> vector<8x1xf32>
    %245 = vector.broadcast %244 : vector<8x1xf32> to vector<8x8xf32>
    %246 = arith.mulf %241, %245 : vector<8x8xf32>
    %247 = vector.extract_strided_slice %192 {offsets = [0, 16], sizes = [8, 8], strides = [1, 1]} : vector<8x32xf32> to vector<8x8xf32>
    %cst_84 = arith.constant dense<0.000000e+00> : vector<8x8xf32>
    %248 = tpu.matmul %246, %247, %cst_84 {dimension_numbers = #tpu.dot_dimension_numbers<[1], [0], [0], [1], [0, 0, 1, 1], [], []>} : vector<8x8xf32>, vector<8x8xf32>, vector<8x8xf32> -> vector<8x8xf32>
    %249 = vector.extract_strided_slice %172 {offsets = [16, 0], sizes = [8, 32], strides = [1, 1]} : vector<32x32xf32> to vector<8x32xf32>
    %cst_85 = arith.constant dense<0.000000e+00> : vector<8x32xf32>
    %250 = tpu.matmul %248, %249, %cst_85 {dimension_numbers = #tpu.dot_dimension_numbers<[1], [0], [0], [1], [0, 0, 1, 1], [], []>} : vector<8x8xf32>, vector<8x32xf32>, vector<8x32xf32> -> vector<8x32xf32>
    %251 = arith.addf %231, %250 : vector<8x32xf32>
    %252 = vector.extract_strided_slice %190 {offsets = [0, 24], sizes = [8, 8], strides = [1, 1]} : vector<8x32xf32> to vector<8x8xf32>
    %253 = vector.extract_strided_slice %191 {offsets = [0, 24], sizes = [8, 8], strides = [1, 1]} : vector<8x32xf32> to vector<8x8xf32>
    %cst_86 = arith.constant dense<0.000000e+00> : vector<8x8xf32>
    %254 = tpu.matmul %252, %253, %cst_86 {dimension_numbers = #tpu.dot_dimension_numbers<[1], [1], [0], [0], [0, 0, 1, 0], [], []>} : vector<8x8xf32>, vector<8x8xf32>, vector<8x8xf32> -> vector<8x8xf32>
    %255 = vector.broadcast %3 : vector<1x8xf32> to vector<8x8xf32>
    %256 = arith.addf %254, %255 : vector<8x8xf32>
    %cst_87 = arith.constant dense<0xFF800000> : vector<8xf32>
    %257 = vector.multi_reduction <maximumf>, %256, %cst_87 [1] : vector<8x8xf32> to vector<8xf32>
    %258 = vector.shape_cast %257 : vector<8xf32> to vector<8x1xf32>
    %259 = vector.broadcast %258 : vector<8x1xf32> to vector<8x8xf32>
    %260 = arith.subf %256, %259 : vector<8x8xf32>
    %261 = math.exp %260 : vector<8x8xf32>
    %cst_88 = arith.constant dense<0.000000e+00> : vector<8xf32>
    %262 = vector.multi_reduction <add>, %261, %cst_88 [1] : vector<8x8xf32> to vector<8xf32>
    %263 = vector.shape_cast %262 : vector<8xf32> to vector<8x1xf32>
    %264 = tpu.reciprocal %263 {approx = true} : vector<8x1xf32> -> vector<8x1xf32>
    %265 = vector.broadcast %264 : vector<8x1xf32> to vector<8x8xf32>
    %266 = arith.mulf %261, %265 : vector<8x8xf32>
    %267 = vector.extract_strided_slice %192 {offsets = [0, 24], sizes = [8, 8], strides = [1, 1]} : vector<8x32xf32> to vector<8x8xf32>
    %cst_89 = arith.constant dense<0.000000e+00> : vector<8x8xf32>
    %268 = tpu.matmul %266, %267, %cst_89 {dimension_numbers = #tpu.dot_dimension_numbers<[1], [0], [0], [1], [0, 0, 1, 1], [], []>} : vector<8x8xf32>, vector<8x8xf32>, vector<8x8xf32> -> vector<8x8xf32>
    %269 = vector.extract_strided_slice %172 {offsets = [24, 0], sizes = [8, 32], strides = [1, 1]} : vector<32x32xf32> to vector<8x32xf32>
    %cst_90 = arith.constant dense<0.000000e+00> : vector<8x32xf32>
    %270 = tpu.matmul %268, %269, %cst_90 {dimension_numbers = #tpu.dot_dimension_numbers<[1], [0], [0], [1], [0, 0, 1, 1], [], []>} : vector<8x8xf32>, vector<8x32xf32>, vector<8x32xf32> -> vector<8x32xf32>
    %271 = arith.addf %251, %270 : vector<8x32xf32>
    %272 = vector.broadcast %180 : vector<1x32xf32> to vector<8x32xf32>
    %273 = arith.addf %271, %272 : vector<8x32xf32>
    %cst_91 = arith.constant 0.000000e+00 : f32
    %274 = vector.broadcast %cst_91 : f32 to vector<8x32xf32>
    %275 = arith.maximumf %273, %274 : vector<8x32xf32>
    %276 = arith.addf %168, %275 : vector<8x32xf32>
    %cst_92 = arith.constant 0.000000e+00 : f32
    %277 = vector.broadcast %cst_92 : f32 to vector<8x32xf32>
    %278 = arith.maximumf %276, %277 : vector<8x32xf32>
    %cst_93 = arith.constant dense<0.000000e+00> : vector<8xf32>
    %279 = vector.multi_reduction <add>, %278, %cst_93 [1] : vector<8x32xf32> to vector<8xf32>
    %280 = vector.shape_cast %279 : vector<8xf32> to vector<8x1xf32>
    %cst_94 = arith.constant 3.200000e+01 : f32
    %281 = vector.broadcast %cst_94 : f32 to vector<8x1xf32>
    %282 = arith.divf %280, %281 : vector<8x1xf32>
    %283 = vector.broadcast %282 : vector<8x1xf32> to vector<8x32xf32>
    %284 = arith.subf %278, %283 : vector<8x32xf32>
    %285 = arith.mulf %284, %284 : vector<8x32xf32>
    %cst_95 = arith.constant dense<0.000000e+00> : vector<8xf32>
    %286 = vector.multi_reduction <add>, %285, %cst_95 [1] : vector<8x32xf32> to vector<8xf32>
    %287 = vector.shape_cast %286 : vector<8xf32> to vector<8x1xf32>
    %cst_96 = arith.constant 3.200000e+01 : f32
    %288 = vector.broadcast %cst_96 : f32 to vector<8x1xf32>
    %289 = arith.divf %287, %288 : vector<8x1xf32>
    %290 = vector.broadcast %282 : vector<8x1xf32> to vector<8x32xf32>
    %291 = arith.subf %278, %290 : vector<8x32xf32>
    %cst_97 = arith.constant 9.99999974E-6 : f32
    %292 = vector.broadcast %cst_97 : f32 to vector<8x1xf32>
    %293 = arith.addf %289, %292 : vector<8x1xf32>
    %294 = math.rsqrt %293 : vector<8x1xf32>
    %295 = vector.broadcast %294 : vector<8x1xf32> to vector<8x32xf32>
    %296 = arith.mulf %291, %295 : vector<8x32xf32>
    %297 = vector.broadcast %181 : vector<1x32xf32> to vector<8x32xf32>
    %298 = arith.mulf %296, %297 : vector<8x32xf32>
    %299 = vector.broadcast %182 : vector<1x32xf32> to vector<8x32xf32>
    %300 = arith.addf %298, %299 : vector<8x32xf32>
    %cst_98 = arith.constant dense<0.000000e+00> : vector<8x128xf32>
    %301 = tpu.matmul %300, %174, %cst_98 {dimension_numbers = #tpu.dot_dimension_numbers<[1], [0], [0], [1], [0, 0, 1, 1], [], []>} : vector<8x32xf32>, vector<32x128xf32>, vector<8x128xf32> -> vector<8x128xf32>
    %302 = vector.broadcast %183 : vector<1x128xf32> to vector<8x128xf32>
    %303 = arith.addf %301, %302 : vector<8x128xf32>
    %cst_99 = arith.constant 0.000000e+00 : f32
    %304 = vector.broadcast %cst_99 : f32 to vector<8x128xf32>
    %305 = arith.maximumf %303, %304 : vector<8x128xf32>
    %cst_100 = arith.constant dense<0.000000e+00> : vector<8x32xf32>
    %306 = tpu.matmul %305, %176, %cst_100 {dimension_numbers = #tpu.dot_dimension_numbers<[1], [0], [0], [1], [0, 0, 1, 1], [], []>} : vector<8x128xf32>, vector<128x32xf32>, vector<8x32xf32> -> vector<8x32xf32>
    %307 = vector.broadcast %184 : vector<1x32xf32> to vector<8x32xf32>
    %308 = arith.addf %306, %307 : vector<8x32xf32>
    %309 = arith.addf %300, %308 : vector<8x32xf32>
    %cst_101 = arith.constant 0.000000e+00 : f32
    %310 = vector.broadcast %cst_101 : f32 to vector<8x32xf32>
    %311 = arith.maximumf %309, %310 : vector<8x32xf32>
    %cst_102 = arith.constant dense<0.000000e+00> : vector<8xf32>
    %312 = vector.multi_reduction <add>, %311, %cst_102 [1] : vector<8x32xf32> to vector<8xf32>
    %313 = vector.shape_cast %312 : vector<8xf32> to vector<8x1xf32>
    %cst_103 = arith.constant 3.200000e+01 : f32
    %314 = vector.broadcast %cst_103 : f32 to vector<8x1xf32>
    %315 = arith.divf %313, %314 : vector<8x1xf32>
    %316 = vector.broadcast %315 : vector<8x1xf32> to vector<8x32xf32>
    %317 = arith.subf %311, %316 : vector<8x32xf32>
    %318 = arith.mulf %317, %317 : vector<8x32xf32>
    %cst_104 = arith.constant dense<0.000000e+00> : vector<8xf32>
    %319 = vector.multi_reduction <add>, %318, %cst_104 [1] : vector<8x32xf32> to vector<8xf32>
    %320 = vector.shape_cast %319 : vector<8xf32> to vector<8x1xf32>
    %cst_105 = arith.constant 3.200000e+01 : f32
    %321 = vector.broadcast %cst_105 : f32 to vector<8x1xf32>
    %322 = arith.divf %320, %321 : vector<8x1xf32>
    %323 = vector.broadcast %315 : vector<8x1xf32> to vector<8x32xf32>
    %324 = arith.subf %311, %323 : vector<8x32xf32>
    %cst_106 = arith.constant 9.99999974E-6 : f32
    %325 = vector.broadcast %cst_106 : f32 to vector<8x1xf32>
    %326 = arith.addf %322, %325 : vector<8x1xf32>
    %327 = math.rsqrt %326 : vector<8x1xf32>
    %328 = vector.broadcast %327 : vector<8x1xf32> to vector<8x32xf32>
    %329 = arith.mulf %324, %328 : vector<8x32xf32>
    %330 = vector.broadcast %185 : vector<1x32xf32> to vector<8x32xf32>
    %331 = arith.mulf %329, %330 : vector<8x32xf32>
    %332 = vector.broadcast %186 : vector<1x32xf32> to vector<8x32xf32>
    %333 = arith.addf %331, %332 : vector<8x32xf32>
    %334 = tpu.iota {dimensions = array<i32: 0>} : vector<8x8xi32>
    %335 = tpu.iota {dimensions = array<i32: 1>} : vector<8x8xi32>
    %336 = arith.cmpi eq, %334, %335 : vector<8x8xi32>
    %337 = arith.extui %336 : vector<8x8xi1> to vector<8x8xi32>
    %338 = arith.sitofp %337 : vector<8x8xi32> to vector<8x8xf32>
    %cst_107 = arith.constant 0.000000e+00 : f32
    %339 = vector.broadcast %cst_107 : f32 to vector<1x8xf32>
    %340 = arith.cmpf oge, %3, %339 : vector<1x8xf32>
    %341 = arith.extui %340 : vector<1x8xi1> to vector<1x8xi32>
    %342 = arith.sitofp %341 : vector<1x8xi32> to vector<1x8xf32>
    %343 = vector.broadcast %342 : vector<1x8xf32> to vector<8x8xf32>
    %344 = arith.mulf %338, %343 : vector<8x8xf32>
    %cst_108 = arith.constant dense<0.000000e+00> : vector<8x32xf32>
    %345 = tpu.matmul %344, %333, %cst_108 {dimension_numbers = #tpu.dot_dimension_numbers<[1], [0], [0], [1], [0, 0, 1, 1], [], []>} : vector<8x8xf32>, vector<8x32xf32>, vector<8x32xf32> -> vector<8x32xf32>
    %c0_109 = arith.constant 0 : index
    %c0_110 = arith.constant 0 : index
    %346 = vector.load %arg10[%c0_109, %c0_110] : memref<32x64xf32, #tpu.memory_space<vmem>>, vector<32x64xf32>
    %cst_111 = arith.constant dense<0.000000e+00> : vector<8x64xf32>
    %347 = tpu.matmul %345, %346, %cst_111 {dimension_numbers = #tpu.dot_dimension_numbers<[1], [0], [0], [1], [0, 0, 1, 1], [], []>} : vector<8x32xf32>, vector<32x64xf32>, vector<8x64xf32> -> vector<8x64xf32>
    %348 = vector.extract_strided_slice %347 {offsets = [0, 0], sizes = [8, 32], strides = [1, 1]} : vector<8x64xf32> to vector<8x32xf32>
    %349 = vector.extract_strided_slice %347 {offsets = [0, 32], sizes = [8, 32], strides = [1, 1]} : vector<8x64xf32> to vector<8x32xf32>
    %c0_112 = arith.constant 0 : index
    %c0_113 = arith.constant 0 : index
    %c0_114 = arith.constant 0 : index
    %350 = vector.load %arg3[%c0_112, %c0_113, %c0_114] : memref<1x8x32xf32, #tpu.memory_space<vmem>>, vector<1x8x32xf32>
    %351 = vector.shape_cast %350 : vector<1x8x32xf32> to vector<8x32xf32>
    %c0_115 = arith.constant 0 : index
    %c0_116 = arith.constant 0 : index
    %c0_117 = arith.constant 0 : index
    %352 = vector.load %arg4[%c0_115, %c0_116, %c0_117] : memref<1x8x8xf32, #tpu.memory_space<vmem>>, vector<1x8x8xf32>
    %353 = vector.shape_cast %352 : vector<1x8x8xf32> to vector<8x8xf32>
    %c0_118 = arith.constant 0 : index
    %c0_119 = arith.constant 0 : index
    %c0_120 = arith.constant 0 : index
    %354 = vector.load %arg11[%c0_118, %c0_119, %c0_120] : memref<2x32x96xf32, #tpu.memory_space<vmem>>, vector<1x32x96xf32>
    %355 = vector.shape_cast %354 : vector<1x32x96xf32> to vector<32x96xf32>
    %c0_121 = arith.constant 0 : index
    %c0_122 = arith.constant 0 : index
    %c0_123 = arith.constant 0 : index
    %356 = vector.load %arg12[%c0_121, %c0_122, %c0_123] : memref<2x32x32xf32, #tpu.memory_space<vmem>>, vector<1x32x32xf32>
    %357 = vector.shape_cast %356 : vector<1x32x32xf32> to vector<32x32xf32>
    %c0_124 = arith.constant 0 : index
    %c0_125 = arith.constant 0 : index
    %c0_126 = arith.constant 0 : index
    %358 = vector.load %arg13[%c0_124, %c0_125, %c0_126] : memref<2x32x32xf32, #tpu.memory_space<vmem>>, vector<1x32x32xf32>
    %359 = vector.shape_cast %358 : vector<1x32x32xf32> to vector<32x32xf32>
    %c0_127 = arith.constant 0 : index
    %c0_128 = arith.constant 0 : index
    %c0_129 = arith.constant 0 : index
    %360 = vector.load %arg14[%c0_127, %c0_128, %c0_129] : memref<2x32x128xf32, #tpu.memory_space<vmem>>, vector<1x32x128xf32>
    %361 = vector.shape_cast %360 : vector<1x32x128xf32> to vector<32x128xf32>
    %c0_130 = arith.constant 0 : index
    %c0_131 = arith.constant 0 : index
    %c0_132 = arith.constant 0 : index
    %362 = vector.load %arg15[%c0_130, %c0_131, %c0_132] : memref<2x128x32xf32, #tpu.memory_space<vmem>>, vector<1x128x32xf32>
    %363 = vector.shape_cast %362 : vector<1x128x32xf32> to vector<128x32xf32>
    %c0_133 = arith.constant 0 : index
    %c0_134 = arith.constant 0 : index
    %c0_135 = arith.constant 0 : index
    %364 = vector.load %arg16[%c0_133, %c0_134, %c0_135] : memref<2x11x128xf32, #tpu.memory_space<vmem>>, vector<1x11x128xf32>
    %365 = vector.shape_cast %364 : vector<1x11x128xf32> to vector<11x128xf32>
    %366 = vector.extract_strided_slice %365 {offsets = [0, 0], sizes = [1, 96], strides = [1, 1]} : vector<11x128xf32> to vector<1x96xf32>
    %367 = vector.extract_strided_slice %365 {offsets = [1, 0], sizes = [1, 32], strides = [1, 1]} : vector<11x128xf32> to vector<1x32xf32>
    %368 = vector.extract_strided_slice %365 {offsets = [2, 0], sizes = [1, 32], strides = [1, 1]} : vector<11x128xf32> to vector<1x32xf32>
    %369 = vector.extract_strided_slice %365 {offsets = [3, 0], sizes = [1, 32], strides = [1, 1]} : vector<11x128xf32> to vector<1x32xf32>
    %370 = vector.extract_strided_slice %365 {offsets = [4, 0], sizes = [1, 32], strides = [1, 1]} : vector<11x128xf32> to vector<1x32xf32>
    %371 = vector.extract_strided_slice %365 {offsets = [5, 0], sizes = [1, 32], strides = [1, 1]} : vector<11x128xf32> to vector<1x32xf32>
    %372 = vector.extract_strided_slice %365 {offsets = [6, 0], sizes = [1, 32], strides = [1, 1]} : vector<11x128xf32> to vector<1x32xf32>
    %373 = vector.extract_strided_slice %365 {offsets = [7, 0], sizes = [1, 128], strides = [1, 1]} : vector<11x128xf32> to vector<1x128xf32>
    %374 = vector.extract_strided_slice %365 {offsets = [8, 0], sizes = [1, 32], strides = [1, 1]} : vector<11x128xf32> to vector<1x32xf32>
    %375 = vector.extract_strided_slice %365 {offsets = [9, 0], sizes = [1, 32], strides = [1, 1]} : vector<11x128xf32> to vector<1x32xf32>
    %376 = vector.extract_strided_slice %365 {offsets = [10, 0], sizes = [1, 32], strides = [1, 1]} : vector<11x128xf32> to vector<1x32xf32>
    %cst_136 = arith.constant dense<0.000000e+00> : vector<8x96xf32>
    %377 = tpu.matmul %351, %355, %cst_136 {dimension_numbers = #tpu.dot_dimension_numbers<[1], [0], [0], [1], [0, 0, 1, 1], [], []>} : vector<8x32xf32>, vector<32x96xf32>, vector<8x96xf32> -> vector<8x96xf32>
    %378 = vector.broadcast %366 : vector<1x96xf32> to vector<8x96xf32>
    %379 = arith.addf %377, %378 : vector<8x96xf32>
    %380 = vector.extract_strided_slice %379 {offsets = [0, 0], sizes = [8, 32], strides = [1, 1]} : vector<8x96xf32> to vector<8x32xf32>
    %381 = vector.extract_strided_slice %379 {offsets = [0, 32], sizes = [8, 32], strides = [1, 1]} : vector<8x96xf32> to vector<8x32xf32>
    %382 = vector.extract_strided_slice %379 {offsets = [0, 64], sizes = [8, 32], strides = [1, 1]} : vector<8x96xf32> to vector<8x32xf32>
    %383 = vector.extract_strided_slice %380 {offsets = [0, 0], sizes = [8, 8], strides = [1, 1]} : vector<8x32xf32> to vector<8x8xf32>
    %384 = vector.extract_strided_slice %381 {offsets = [0, 0], sizes = [8, 8], strides = [1, 1]} : vector<8x32xf32> to vector<8x8xf32>
    %cst_137 = arith.constant dense<0.000000e+00> : vector<8x8xf32>
    %385 = tpu.matmul %383, %384, %cst_137 {dimension_numbers = #tpu.dot_dimension_numbers<[1], [1], [0], [0], [0, 0, 1, 0], [], []>} : vector<8x8xf32>, vector<8x8xf32>, vector<8x8xf32> -> vector<8x8xf32>
    %386 = arith.addf %385, %353 : vector<8x8xf32>
    %cst_138 = arith.constant dense<0xFF800000> : vector<8xf32>
    %387 = vector.multi_reduction <maximumf>, %386, %cst_138 [1] : vector<8x8xf32> to vector<8xf32>
    %388 = vector.shape_cast %387 : vector<8xf32> to vector<8x1xf32>
    %389 = vector.broadcast %388 : vector<8x1xf32> to vector<8x8xf32>
    %390 = arith.subf %386, %389 : vector<8x8xf32>
    %391 = math.exp %390 : vector<8x8xf32>
    %cst_139 = arith.constant dense<0.000000e+00> : vector<8xf32>
    %392 = vector.multi_reduction <add>, %391, %cst_139 [1] : vector<8x8xf32> to vector<8xf32>
    %393 = vector.shape_cast %392 : vector<8xf32> to vector<8x1xf32>
    %394 = tpu.reciprocal %393 {approx = true} : vector<8x1xf32> -> vector<8x1xf32>
    %395 = vector.broadcast %394 : vector<8x1xf32> to vector<8x8xf32>
    %396 = arith.mulf %391, %395 : vector<8x8xf32>
    %397 = vector.extract_strided_slice %382 {offsets = [0, 0], sizes = [8, 8], strides = [1, 1]} : vector<8x32xf32> to vector<8x8xf32>
    %cst_140 = arith.constant dense<0.000000e+00> : vector<8x8xf32>
    %398 = tpu.matmul %396, %397, %cst_140 {dimension_numbers = #tpu.dot_dimension_numbers<[1], [0], [0], [1], [0, 0, 1, 1], [], []>} : vector<8x8xf32>, vector<8x8xf32>, vector<8x8xf32> -> vector<8x8xf32>
    %399 = vector.extract_strided_slice %357 {offsets = [0, 0], sizes = [8, 32], strides = [1, 1]} : vector<32x32xf32> to vector<8x32xf32>
    %cst_141 = arith.constant dense<0.000000e+00> : vector<8x32xf32>
    %400 = tpu.matmul %398, %399, %cst_141 {dimension_numbers = #tpu.dot_dimension_numbers<[1], [0], [0], [1], [0, 0, 1, 1], [], []>} : vector<8x8xf32>, vector<8x32xf32>, vector<8x32xf32> -> vector<8x32xf32>
    %401 = vector.extract_strided_slice %380 {offsets = [0, 8], sizes = [8, 8], strides = [1, 1]} : vector<8x32xf32> to vector<8x8xf32>
    %402 = vector.extract_strided_slice %381 {offsets = [0, 8], sizes = [8, 8], strides = [1, 1]} : vector<8x32xf32> to vector<8x8xf32>
    %cst_142 = arith.constant dense<0.000000e+00> : vector<8x8xf32>
    %403 = tpu.matmul %401, %402, %cst_142 {dimension_numbers = #tpu.dot_dimension_numbers<[1], [1], [0], [0], [0, 0, 1, 0], [], []>} : vector<8x8xf32>, vector<8x8xf32>, vector<8x8xf32> -> vector<8x8xf32>
    %404 = arith.addf %403, %353 : vector<8x8xf32>
    %cst_143 = arith.constant dense<0xFF800000> : vector<8xf32>
    %405 = vector.multi_reduction <maximumf>, %404, %cst_143 [1] : vector<8x8xf32> to vector<8xf32>
    %406 = vector.shape_cast %405 : vector<8xf32> to vector<8x1xf32>
    %407 = vector.broadcast %406 : vector<8x1xf32> to vector<8x8xf32>
    %408 = arith.subf %404, %407 : vector<8x8xf32>
    %409 = math.exp %408 : vector<8x8xf32>
    %cst_144 = arith.constant dense<0.000000e+00> : vector<8xf32>
    %410 = vector.multi_reduction <add>, %409, %cst_144 [1] : vector<8x8xf32> to vector<8xf32>
    %411 = vector.shape_cast %410 : vector<8xf32> to vector<8x1xf32>
    %412 = tpu.reciprocal %411 {approx = true} : vector<8x1xf32> -> vector<8x1xf32>
    %413 = vector.broadcast %412 : vector<8x1xf32> to vector<8x8xf32>
    %414 = arith.mulf %409, %413 : vector<8x8xf32>
    %415 = vector.extract_strided_slice %382 {offsets = [0, 8], sizes = [8, 8], strides = [1, 1]} : vector<8x32xf32> to vector<8x8xf32>
    %cst_145 = arith.constant dense<0.000000e+00> : vector<8x8xf32>
    %416 = tpu.matmul %414, %415, %cst_145 {dimension_numbers = #tpu.dot_dimension_numbers<[1], [0], [0], [1], [0, 0, 1, 1], [], []>} : vector<8x8xf32>, vector<8x8xf32>, vector<8x8xf32> -> vector<8x8xf32>
    %417 = vector.extract_strided_slice %357 {offsets = [8, 0], sizes = [8, 32], strides = [1, 1]} : vector<32x32xf32> to vector<8x32xf32>
    %cst_146 = arith.constant dense<0.000000e+00> : vector<8x32xf32>
    %418 = tpu.matmul %416, %417, %cst_146 {dimension_numbers = #tpu.dot_dimension_numbers<[1], [0], [0], [1], [0, 0, 1, 1], [], []>} : vector<8x8xf32>, vector<8x32xf32>, vector<8x32xf32> -> vector<8x32xf32>
    %419 = arith.addf %400, %418 : vector<8x32xf32>
    %420 = vector.extract_strided_slice %380 {offsets = [0, 16], sizes = [8, 8], strides = [1, 1]} : vector<8x32xf32> to vector<8x8xf32>
    %421 = vector.extract_strided_slice %381 {offsets = [0, 16], sizes = [8, 8], strides = [1, 1]} : vector<8x32xf32> to vector<8x8xf32>
    %cst_147 = arith.constant dense<0.000000e+00> : vector<8x8xf32>
    %422 = tpu.matmul %420, %421, %cst_147 {dimension_numbers = #tpu.dot_dimension_numbers<[1], [1], [0], [0], [0, 0, 1, 0], [], []>} : vector<8x8xf32>, vector<8x8xf32>, vector<8x8xf32> -> vector<8x8xf32>
    %423 = arith.addf %422, %353 : vector<8x8xf32>
    %cst_148 = arith.constant dense<0xFF800000> : vector<8xf32>
    %424 = vector.multi_reduction <maximumf>, %423, %cst_148 [1] : vector<8x8xf32> to vector<8xf32>
    %425 = vector.shape_cast %424 : vector<8xf32> to vector<8x1xf32>
    %426 = vector.broadcast %425 : vector<8x1xf32> to vector<8x8xf32>
    %427 = arith.subf %423, %426 : vector<8x8xf32>
    %428 = math.exp %427 : vector<8x8xf32>
    %cst_149 = arith.constant dense<0.000000e+00> : vector<8xf32>
    %429 = vector.multi_reduction <add>, %428, %cst_149 [1] : vector<8x8xf32> to vector<8xf32>
    %430 = vector.shape_cast %429 : vector<8xf32> to vector<8x1xf32>
    %431 = tpu.reciprocal %430 {approx = true} : vector<8x1xf32> -> vector<8x1xf32>
    %432 = vector.broadcast %431 : vector<8x1xf32> to vector<8x8xf32>
    %433 = arith.mulf %428, %432 : vector<8x8xf32>
    %434 = vector.extract_strided_slice %382 {offsets = [0, 16], sizes = [8, 8], strides = [1, 1]} : vector<8x32xf32> to vector<8x8xf32>
    %cst_150 = arith.constant dense<0.000000e+00> : vector<8x8xf32>
    %435 = tpu.matmul %433, %434, %cst_150 {dimension_numbers = #tpu.dot_dimension_numbers<[1], [0], [0], [1], [0, 0, 1, 1], [], []>} : vector<8x8xf32>, vector<8x8xf32>, vector<8x8xf32> -> vector<8x8xf32>
    %436 = vector.extract_strided_slice %357 {offsets = [16, 0], sizes = [8, 32], strides = [1, 1]} : vector<32x32xf32> to vector<8x32xf32>
    %cst_151 = arith.constant dense<0.000000e+00> : vector<8x32xf32>
    %437 = tpu.matmul %435, %436, %cst_151 {dimension_numbers = #tpu.dot_dimension_numbers<[1], [0], [0], [1], [0, 0, 1, 1], [], []>} : vector<8x8xf32>, vector<8x32xf32>, vector<8x32xf32> -> vector<8x32xf32>
    %438 = arith.addf %419, %437 : vector<8x32xf32>
    %439 = vector.extract_strided_slice %380 {offsets = [0, 24], sizes = [8, 8], strides = [1, 1]} : vector<8x32xf32> to vector<8x8xf32>
    %440 = vector.extract_strided_slice %381 {offsets = [0, 24], sizes = [8, 8], strides = [1, 1]} : vector<8x32xf32> to vector<8x8xf32>
    %cst_152 = arith.constant dense<0.000000e+00> : vector<8x8xf32>
    %441 = tpu.matmul %439, %440, %cst_152 {dimension_numbers = #tpu.dot_dimension_numbers<[1], [1], [0], [0], [0, 0, 1, 0], [], []>} : vector<8x8xf32>, vector<8x8xf32>, vector<8x8xf32> -> vector<8x8xf32>
    %442 = arith.addf %441, %353 : vector<8x8xf32>
    %cst_153 = arith.constant dense<0xFF800000> : vector<8xf32>
    %443 = vector.multi_reduction <maximumf>, %442, %cst_153 [1] : vector<8x8xf32> to vector<8xf32>
    %444 = vector.shape_cast %443 : vector<8xf32> to vector<8x1xf32>
    %445 = vector.broadcast %444 : vector<8x1xf32> to vector<8x8xf32>
    %446 = arith.subf %442, %445 : vector<8x8xf32>
    %447 = math.exp %446 : vector<8x8xf32>
    %cst_154 = arith.constant dense<0.000000e+00> : vector<8xf32>
    %448 = vector.multi_reduction <add>, %447, %cst_154 [1] : vector<8x8xf32> to vector<8xf32>
    %449 = vector.shape_cast %448 : vector<8xf32> to vector<8x1xf32>
    %450 = tpu.reciprocal %449 {approx = true} : vector<8x1xf32> -> vector<8x1xf32>
    %451 = vector.broadcast %450 : vector<8x1xf32> to vector<8x8xf32>
    %452 = arith.mulf %447, %451 : vector<8x8xf32>
    %453 = vector.extract_strided_slice %382 {offsets = [0, 24], sizes = [8, 8], strides = [1, 1]} : vector<8x32xf32> to vector<8x8xf32>
    %cst_155 = arith.constant dense<0.000000e+00> : vector<8x8xf32>
    %454 = tpu.matmul %452, %453, %cst_155 {dimension_numbers = #tpu.dot_dimension_numbers<[1], [0], [0], [1], [0, 0, 1, 1], [], []>} : vector<8x8xf32>, vector<8x8xf32>, vector<8x8xf32> -> vector<8x8xf32>
    %455 = vector.extract_strided_slice %357 {offsets = [24, 0], sizes = [8, 32], strides = [1, 1]} : vector<32x32xf32> to vector<8x32xf32>
    %cst_156 = arith.constant dense<0.000000e+00> : vector<8x32xf32>
    %456 = tpu.matmul %454, %455, %cst_156 {dimension_numbers = #tpu.dot_dimension_numbers<[1], [0], [0], [1], [0, 0, 1, 1], [], []>} : vector<8x8xf32>, vector<8x32xf32>, vector<8x32xf32> -> vector<8x32xf32>
    %457 = arith.addf %438, %456 : vector<8x32xf32>
    %458 = vector.broadcast %367 : vector<1x32xf32> to vector<8x32xf32>
    %459 = arith.addf %457, %458 : vector<8x32xf32>
    %cst_157 = arith.constant 0.000000e+00 : f32
    %460 = vector.broadcast %cst_157 : f32 to vector<8x32xf32>
    %461 = arith.maximumf %459, %460 : vector<8x32xf32>
    %462 = arith.addf %351, %461 : vector<8x32xf32>
    %cst_158 = arith.constant 0.000000e+00 : f32
    %463 = vector.broadcast %cst_158 : f32 to vector<8x32xf32>
    %464 = arith.maximumf %462, %463 : vector<8x32xf32>
    %cst_159 = arith.constant dense<0.000000e+00> : vector<8xf32>
    %465 = vector.multi_reduction <add>, %464, %cst_159 [1] : vector<8x32xf32> to vector<8xf32>
    %466 = vector.shape_cast %465 : vector<8xf32> to vector<8x1xf32>
    %cst_160 = arith.constant 3.200000e+01 : f32
    %467 = vector.broadcast %cst_160 : f32 to vector<8x1xf32>
    %468 = arith.divf %466, %467 : vector<8x1xf32>
    %469 = vector.broadcast %468 : vector<8x1xf32> to vector<8x32xf32>
    %470 = arith.subf %464, %469 : vector<8x32xf32>
    %471 = arith.mulf %470, %470 : vector<8x32xf32>
    %cst_161 = arith.constant dense<0.000000e+00> : vector<8xf32>
    %472 = vector.multi_reduction <add>, %471, %cst_161 [1] : vector<8x32xf32> to vector<8xf32>
    %473 = vector.shape_cast %472 : vector<8xf32> to vector<8x1xf32>
    %cst_162 = arith.constant 3.200000e+01 : f32
    %474 = vector.broadcast %cst_162 : f32 to vector<8x1xf32>
    %475 = arith.divf %473, %474 : vector<8x1xf32>
    %476 = vector.broadcast %468 : vector<8x1xf32> to vector<8x32xf32>
    %477 = arith.subf %464, %476 : vector<8x32xf32>
    %cst_163 = arith.constant 9.99999974E-6 : f32
    %478 = vector.broadcast %cst_163 : f32 to vector<8x1xf32>
    %479 = arith.addf %475, %478 : vector<8x1xf32>
    %480 = math.rsqrt %479 : vector<8x1xf32>
    %481 = vector.broadcast %480 : vector<8x1xf32> to vector<8x32xf32>
    %482 = arith.mulf %477, %481 : vector<8x32xf32>
    %483 = vector.broadcast %368 : vector<1x32xf32> to vector<8x32xf32>
    %484 = arith.mulf %482, %483 : vector<8x32xf32>
    %485 = vector.broadcast %369 : vector<1x32xf32> to vector<8x32xf32>
    %486 = arith.addf %484, %485 : vector<8x32xf32>
    %487 = vector.extract_strided_slice %486 {offsets = [0, 0], sizes = [8, 8], strides = [1, 1]} : vector<8x32xf32> to vector<8x8xf32>
    %488 = vector.extract_strided_slice %348 {offsets = [0, 0], sizes = [8, 8], strides = [1, 1]} : vector<8x32xf32> to vector<8x8xf32>
    %cst_164 = arith.constant dense<0.000000e+00> : vector<8x8xf32>
    %489 = tpu.matmul %487, %488, %cst_164 {dimension_numbers = #tpu.dot_dimension_numbers<[1], [1], [0], [0], [0, 0, 1, 0], [], []>} : vector<8x8xf32>, vector<8x8xf32>, vector<8x8xf32> -> vector<8x8xf32>
    %cst_165 = arith.constant dense<0xFF800000> : vector<8xf32>
    %490 = vector.multi_reduction <maximumf>, %489, %cst_165 [1] : vector<8x8xf32> to vector<8xf32>
    %491 = vector.shape_cast %490 : vector<8xf32> to vector<8x1xf32>
    %492 = vector.broadcast %491 : vector<8x1xf32> to vector<8x8xf32>
    %493 = arith.subf %489, %492 : vector<8x8xf32>
    %494 = math.exp %493 : vector<8x8xf32>
    %cst_166 = arith.constant dense<0.000000e+00> : vector<8xf32>
    %495 = vector.multi_reduction <add>, %494, %cst_166 [1] : vector<8x8xf32> to vector<8xf32>
    %496 = vector.shape_cast %495 : vector<8xf32> to vector<8x1xf32>
    %497 = tpu.reciprocal %496 {approx = true} : vector<8x1xf32> -> vector<8x1xf32>
    %498 = vector.broadcast %497 : vector<8x1xf32> to vector<8x8xf32>
    %499 = arith.mulf %494, %498 : vector<8x8xf32>
    %500 = vector.extract_strided_slice %349 {offsets = [0, 0], sizes = [8, 8], strides = [1, 1]} : vector<8x32xf32> to vector<8x8xf32>
    %cst_167 = arith.constant dense<0.000000e+00> : vector<8x8xf32>
    %501 = tpu.matmul %499, %500, %cst_167 {dimension_numbers = #tpu.dot_dimension_numbers<[1], [0], [0], [1], [0, 0, 1, 1], [], []>} : vector<8x8xf32>, vector<8x8xf32>, vector<8x8xf32> -> vector<8x8xf32>
    %502 = vector.extract_strided_slice %359 {offsets = [0, 0], sizes = [8, 32], strides = [1, 1]} : vector<32x32xf32> to vector<8x32xf32>
    %cst_168 = arith.constant dense<0.000000e+00> : vector<8x32xf32>
    %503 = tpu.matmul %501, %502, %cst_168 {dimension_numbers = #tpu.dot_dimension_numbers<[1], [0], [0], [1], [0, 0, 1, 1], [], []>} : vector<8x8xf32>, vector<8x32xf32>, vector<8x32xf32> -> vector<8x32xf32>
    %504 = vector.extract_strided_slice %486 {offsets = [0, 8], sizes = [8, 8], strides = [1, 1]} : vector<8x32xf32> to vector<8x8xf32>
    %505 = vector.extract_strided_slice %348 {offsets = [0, 8], sizes = [8, 8], strides = [1, 1]} : vector<8x32xf32> to vector<8x8xf32>
    %cst_169 = arith.constant dense<0.000000e+00> : vector<8x8xf32>
    %506 = tpu.matmul %504, %505, %cst_169 {dimension_numbers = #tpu.dot_dimension_numbers<[1], [1], [0], [0], [0, 0, 1, 0], [], []>} : vector<8x8xf32>, vector<8x8xf32>, vector<8x8xf32> -> vector<8x8xf32>
    %cst_170 = arith.constant dense<0xFF800000> : vector<8xf32>
    %507 = vector.multi_reduction <maximumf>, %506, %cst_170 [1] : vector<8x8xf32> to vector<8xf32>
    %508 = vector.shape_cast %507 : vector<8xf32> to vector<8x1xf32>
    %509 = vector.broadcast %508 : vector<8x1xf32> to vector<8x8xf32>
    %510 = arith.subf %506, %509 : vector<8x8xf32>
    %511 = math.exp %510 : vector<8x8xf32>
    %cst_171 = arith.constant dense<0.000000e+00> : vector<8xf32>
    %512 = vector.multi_reduction <add>, %511, %cst_171 [1] : vector<8x8xf32> to vector<8xf32>
    %513 = vector.shape_cast %512 : vector<8xf32> to vector<8x1xf32>
    %514 = tpu.reciprocal %513 {approx = true} : vector<8x1xf32> -> vector<8x1xf32>
    %515 = vector.broadcast %514 : vector<8x1xf32> to vector<8x8xf32>
    %516 = arith.mulf %511, %515 : vector<8x8xf32>
    %517 = vector.extract_strided_slice %349 {offsets = [0, 8], sizes = [8, 8], strides = [1, 1]} : vector<8x32xf32> to vector<8x8xf32>
    %cst_172 = arith.constant dense<0.000000e+00> : vector<8x8xf32>
    %518 = tpu.matmul %516, %517, %cst_172 {dimension_numbers = #tpu.dot_dimension_numbers<[1], [0], [0], [1], [0, 0, 1, 1], [], []>} : vector<8x8xf32>, vector<8x8xf32>, vector<8x8xf32> -> vector<8x8xf32>
    %519 = vector.extract_strided_slice %359 {offsets = [8, 0], sizes = [8, 32], strides = [1, 1]} : vector<32x32xf32> to vector<8x32xf32>
    %cst_173 = arith.constant dense<0.000000e+00> : vector<8x32xf32>
    %520 = tpu.matmul %518, %519, %cst_173 {dimension_numbers = #tpu.dot_dimension_numbers<[1], [0], [0], [1], [0, 0, 1, 1], [], []>} : vector<8x8xf32>, vector<8x32xf32>, vector<8x32xf32> -> vector<8x32xf32>
    %521 = arith.addf %503, %520 : vector<8x32xf32>
    %522 = vector.extract_strided_slice %486 {offsets = [0, 16], sizes = [8, 8], strides = [1, 1]} : vector<8x32xf32> to vector<8x8xf32>
    %523 = vector.extract_strided_slice %348 {offsets = [0, 16], sizes = [8, 8], strides = [1, 1]} : vector<8x32xf32> to vector<8x8xf32>
    %cst_174 = arith.constant dense<0.000000e+00> : vector<8x8xf32>
    %524 = tpu.matmul %522, %523, %cst_174 {dimension_numbers = #tpu.dot_dimension_numbers<[1], [1], [0], [0], [0, 0, 1, 0], [], []>} : vector<8x8xf32>, vector<8x8xf32>, vector<8x8xf32> -> vector<8x8xf32>
    %cst_175 = arith.constant dense<0xFF800000> : vector<8xf32>
    %525 = vector.multi_reduction <maximumf>, %524, %cst_175 [1] : vector<8x8xf32> to vector<8xf32>
    %526 = vector.shape_cast %525 : vector<8xf32> to vector<8x1xf32>
    %527 = vector.broadcast %526 : vector<8x1xf32> to vector<8x8xf32>
    %528 = arith.subf %524, %527 : vector<8x8xf32>
    %529 = math.exp %528 : vector<8x8xf32>
    %cst_176 = arith.constant dense<0.000000e+00> : vector<8xf32>
    %530 = vector.multi_reduction <add>, %529, %cst_176 [1] : vector<8x8xf32> to vector<8xf32>
    %531 = vector.shape_cast %530 : vector<8xf32> to vector<8x1xf32>
    %532 = tpu.reciprocal %531 {approx = true} : vector<8x1xf32> -> vector<8x1xf32>
    %533 = vector.broadcast %532 : vector<8x1xf32> to vector<8x8xf32>
    %534 = arith.mulf %529, %533 : vector<8x8xf32>
    %535 = vector.extract_strided_slice %349 {offsets = [0, 16], sizes = [8, 8], strides = [1, 1]} : vector<8x32xf32> to vector<8x8xf32>
    %cst_177 = arith.constant dense<0.000000e+00> : vector<8x8xf32>
    %536 = tpu.matmul %534, %535, %cst_177 {dimension_numbers = #tpu.dot_dimension_numbers<[1], [0], [0], [1], [0, 0, 1, 1], [], []>} : vector<8x8xf32>, vector<8x8xf32>, vector<8x8xf32> -> vector<8x8xf32>
    %537 = vector.extract_strided_slice %359 {offsets = [16, 0], sizes = [8, 32], strides = [1, 1]} : vector<32x32xf32> to vector<8x32xf32>
    %cst_178 = arith.constant dense<0.000000e+00> : vector<8x32xf32>
    %538 = tpu.matmul %536, %537, %cst_178 {dimension_numbers = #tpu.dot_dimension_numbers<[1], [0], [0], [1], [0, 0, 1, 1], [], []>} : vector<8x8xf32>, vector<8x32xf32>, vector<8x32xf32> -> vector<8x32xf32>
    %539 = arith.addf %521, %538 : vector<8x32xf32>
    %540 = vector.extract_strided_slice %486 {offsets = [0, 24], sizes = [8, 8], strides = [1, 1]} : vector<8x32xf32> to vector<8x8xf32>
    %541 = vector.extract_strided_slice %348 {offsets = [0, 24], sizes = [8, 8], strides = [1, 1]} : vector<8x32xf32> to vector<8x8xf32>
    %cst_179 = arith.constant dense<0.000000e+00> : vector<8x8xf32>
    %542 = tpu.matmul %540, %541, %cst_179 {dimension_numbers = #tpu.dot_dimension_numbers<[1], [1], [0], [0], [0, 0, 1, 0], [], []>} : vector<8x8xf32>, vector<8x8xf32>, vector<8x8xf32> -> vector<8x8xf32>
    %cst_180 = arith.constant dense<0xFF800000> : vector<8xf32>
    %543 = vector.multi_reduction <maximumf>, %542, %cst_180 [1] : vector<8x8xf32> to vector<8xf32>
    %544 = vector.shape_cast %543 : vector<8xf32> to vector<8x1xf32>
    %545 = vector.broadcast %544 : vector<8x1xf32> to vector<8x8xf32>
    %546 = arith.subf %542, %545 : vector<8x8xf32>
    %547 = math.exp %546 : vector<8x8xf32>
    %cst_181 = arith.constant dense<0.000000e+00> : vector<8xf32>
    %548 = vector.multi_reduction <add>, %547, %cst_181 [1] : vector<8x8xf32> to vector<8xf32>
    %549 = vector.shape_cast %548 : vector<8xf32> to vector<8x1xf32>
    %550 = tpu.reciprocal %549 {approx = true} : vector<8x1xf32> -> vector<8x1xf32>
    %551 = vector.broadcast %550 : vector<8x1xf32> to vector<8x8xf32>
    %552 = arith.mulf %547, %551 : vector<8x8xf32>
    %553 = vector.extract_strided_slice %349 {offsets = [0, 24], sizes = [8, 8], strides = [1, 1]} : vector<8x32xf32> to vector<8x8xf32>
    %cst_182 = arith.constant dense<0.000000e+00> : vector<8x8xf32>
    %554 = tpu.matmul %552, %553, %cst_182 {dimension_numbers = #tpu.dot_dimension_numbers<[1], [0], [0], [1], [0, 0, 1, 1], [], []>} : vector<8x8xf32>, vector<8x8xf32>, vector<8x8xf32> -> vector<8x8xf32>
    %555 = vector.extract_strided_slice %359 {offsets = [24, 0], sizes = [8, 32], strides = [1, 1]} : vector<32x32xf32> to vector<8x32xf32>
    %cst_183 = arith.constant dense<0.000000e+00> : vector<8x32xf32>
    %556 = tpu.matmul %554, %555, %cst_183 {dimension_numbers = #tpu.dot_dimension_numbers<[1], [0], [0], [1], [0, 0, 1, 1], [], []>} : vector<8x8xf32>, vector<8x32xf32>, vector<8x32xf32> -> vector<8x32xf32>
    %557 = arith.addf %539, %556 : vector<8x32xf32>
    %558 = vector.broadcast %370 : vector<1x32xf32> to vector<8x32xf32>
    %559 = arith.addf %557, %558 : vector<8x32xf32>
    %cst_184 = arith.constant 0.000000e+00 : f32
    %560 = vector.broadcast %cst_184 : f32 to vector<8x32xf32>
    %561 = arith.maximumf %559, %560 : vector<8x32xf32>
    %562 = arith.addf %486, %561 : vector<8x32xf32>
    %cst_185 = arith.constant 0.000000e+00 : f32
    %563 = vector.broadcast %cst_185 : f32 to vector<8x32xf32>
    %564 = arith.maximumf %562, %563 : vector<8x32xf32>
    %cst_186 = arith.constant dense<0.000000e+00> : vector<8xf32>
    %565 = vector.multi_reduction <add>, %564, %cst_186 [1] : vector<8x32xf32> to vector<8xf32>
    %566 = vector.shape_cast %565 : vector<8xf32> to vector<8x1xf32>
    %cst_187 = arith.constant 3.200000e+01 : f32
    %567 = vector.broadcast %cst_187 : f32 to vector<8x1xf32>
    %568 = arith.divf %566, %567 : vector<8x1xf32>
    %569 = vector.broadcast %568 : vector<8x1xf32> to vector<8x32xf32>
    %570 = arith.subf %564, %569 : vector<8x32xf32>
    %571 = arith.mulf %570, %570 : vector<8x32xf32>
    %cst_188 = arith.constant dense<0.000000e+00> : vector<8xf32>
    %572 = vector.multi_reduction <add>, %571, %cst_188 [1] : vector<8x32xf32> to vector<8xf32>
    %573 = vector.shape_cast %572 : vector<8xf32> to vector<8x1xf32>
    %cst_189 = arith.constant 3.200000e+01 : f32
    %574 = vector.broadcast %cst_189 : f32 to vector<8x1xf32>
    %575 = arith.divf %573, %574 : vector<8x1xf32>
    %576 = vector.broadcast %568 : vector<8x1xf32> to vector<8x32xf32>
    %577 = arith.subf %564, %576 : vector<8x32xf32>
    %cst_190 = arith.constant 9.99999974E-6 : f32
    %578 = vector.broadcast %cst_190 : f32 to vector<8x1xf32>
    %579 = arith.addf %575, %578 : vector<8x1xf32>
    %580 = math.rsqrt %579 : vector<8x1xf32>
    %581 = vector.broadcast %580 : vector<8x1xf32> to vector<8x32xf32>
    %582 = arith.mulf %577, %581 : vector<8x32xf32>
    %583 = vector.broadcast %371 : vector<1x32xf32> to vector<8x32xf32>
    %584 = arith.mulf %582, %583 : vector<8x32xf32>
    %585 = vector.broadcast %372 : vector<1x32xf32> to vector<8x32xf32>
    %586 = arith.addf %584, %585 : vector<8x32xf32>
    %cst_191 = arith.constant dense<0.000000e+00> : vector<8x128xf32>
    %587 = tpu.matmul %586, %361, %cst_191 {dimension_numbers = #tpu.dot_dimension_numbers<[1], [0], [0], [1], [0, 0, 1, 1], [], []>} : vector<8x32xf32>, vector<32x128xf32>, vector<8x128xf32> -> vector<8x128xf32>
    %588 = vector.broadcast %373 : vector<1x128xf32> to vector<8x128xf32>
    %589 = arith.addf %587, %588 : vector<8x128xf32>
    %cst_192 = arith.constant 0.000000e+00 : f32
    %590 = vector.broadcast %cst_192 : f32 to vector<8x128xf32>
    %591 = arith.maximumf %589, %590 : vector<8x128xf32>
    %cst_193 = arith.constant dense<0.000000e+00> : vector<8x32xf32>
    %592 = tpu.matmul %591, %363, %cst_193 {dimension_numbers = #tpu.dot_dimension_numbers<[1], [0], [0], [1], [0, 0, 1, 1], [], []>} : vector<8x128xf32>, vector<128x32xf32>, vector<8x32xf32> -> vector<8x32xf32>
    %593 = vector.broadcast %374 : vector<1x32xf32> to vector<8x32xf32>
    %594 = arith.addf %592, %593 : vector<8x32xf32>
    %595 = arith.addf %586, %594 : vector<8x32xf32>
    %cst_194 = arith.constant 0.000000e+00 : f32
    %596 = vector.broadcast %cst_194 : f32 to vector<8x32xf32>
    %597 = arith.maximumf %595, %596 : vector<8x32xf32>
    %cst_195 = arith.constant dense<0.000000e+00> : vector<8xf32>
    %598 = vector.multi_reduction <add>, %597, %cst_195 [1] : vector<8x32xf32> to vector<8xf32>
    %599 = vector.shape_cast %598 : vector<8xf32> to vector<8x1xf32>
    %cst_196 = arith.constant 3.200000e+01 : f32
    %600 = vector.broadcast %cst_196 : f32 to vector<8x1xf32>
    %601 = arith.divf %599, %600 : vector<8x1xf32>
    %602 = vector.broadcast %601 : vector<8x1xf32> to vector<8x32xf32>
    %603 = arith.subf %597, %602 : vector<8x32xf32>
    %604 = arith.mulf %603, %603 : vector<8x32xf32>
    %cst_197 = arith.constant dense<0.000000e+00> : vector<8xf32>
    %605 = vector.multi_reduction <add>, %604, %cst_197 [1] : vector<8x32xf32> to vector<8xf32>
    %606 = vector.shape_cast %605 : vector<8xf32> to vector<8x1xf32>
    %cst_198 = arith.constant 3.200000e+01 : f32
    %607 = vector.broadcast %cst_198 : f32 to vector<8x1xf32>
    %608 = arith.divf %606, %607 : vector<8x1xf32>
    %609 = vector.broadcast %601 : vector<8x1xf32> to vector<8x32xf32>
    %610 = arith.subf %597, %609 : vector<8x32xf32>
    %cst_199 = arith.constant 9.99999974E-6 : f32
    %611 = vector.broadcast %cst_199 : f32 to vector<8x1xf32>
    %612 = arith.addf %608, %611 : vector<8x1xf32>
    %613 = math.rsqrt %612 : vector<8x1xf32>
    %614 = vector.broadcast %613 : vector<8x1xf32> to vector<8x32xf32>
    %615 = arith.mulf %610, %614 : vector<8x32xf32>
    %616 = vector.broadcast %375 : vector<1x32xf32> to vector<8x32xf32>
    %617 = arith.mulf %615, %616 : vector<8x32xf32>
    %618 = vector.broadcast %376 : vector<1x32xf32> to vector<8x32xf32>
    %619 = arith.addf %617, %618 : vector<8x32xf32>
    %c1_200 = arith.constant 1 : index
    %c0_201 = arith.constant 0 : index
    %c0_202 = arith.constant 0 : index
    %620 = vector.load %arg11[%c1_200, %c0_201, %c0_202] : memref<2x32x96xf32, #tpu.memory_space<vmem>>, vector<1x32x96xf32>
    %621 = vector.shape_cast %620 : vector<1x32x96xf32> to vector<32x96xf32>
    %c1_203 = arith.constant 1 : index
    %c0_204 = arith.constant 0 : index
    %c0_205 = arith.constant 0 : index
    %622 = vector.load %arg12[%c1_203, %c0_204, %c0_205] : memref<2x32x32xf32, #tpu.memory_space<vmem>>, vector<1x32x32xf32>
    %623 = vector.shape_cast %622 : vector<1x32x32xf32> to vector<32x32xf32>
    %c1_206 = arith.constant 1 : index
    %c0_207 = arith.constant 0 : index
    %c0_208 = arith.constant 0 : index
    %624 = vector.load %arg13[%c1_206, %c0_207, %c0_208] : memref<2x32x32xf32, #tpu.memory_space<vmem>>, vector<1x32x32xf32>
    %625 = vector.shape_cast %624 : vector<1x32x32xf32> to vector<32x32xf32>
    %c1_209 = arith.constant 1 : index
    %c0_210 = arith.constant 0 : index
    %c0_211 = arith.constant 0 : index
    %626 = vector.load %arg14[%c1_209, %c0_210, %c0_211] : memref<2x32x128xf32, #tpu.memory_space<vmem>>, vector<1x32x128xf32>
    %627 = vector.shape_cast %626 : vector<1x32x128xf32> to vector<32x128xf32>
    %c1_212 = arith.constant 1 : index
    %c0_213 = arith.constant 0 : index
    %c0_214 = arith.constant 0 : index
    %628 = vector.load %arg15[%c1_212, %c0_213, %c0_214] : memref<2x128x32xf32, #tpu.memory_space<vmem>>, vector<1x128x32xf32>
    %629 = vector.shape_cast %628 : vector<1x128x32xf32> to vector<128x32xf32>
    %c1_215 = arith.constant 1 : index
    %c0_216 = arith.constant 0 : index
    %c0_217 = arith.constant 0 : index
    %630 = vector.load %arg16[%c1_215, %c0_216, %c0_217] : memref<2x11x128xf32, #tpu.memory_space<vmem>>, vector<1x11x128xf32>
    %631 = vector.shape_cast %630 : vector<1x11x128xf32> to vector<11x128xf32>
    %632 = vector.extract_strided_slice %631 {offsets = [0, 0], sizes = [1, 96], strides = [1, 1]} : vector<11x128xf32> to vector<1x96xf32>
    %633 = vector.extract_strided_slice %631 {offsets = [1, 0], sizes = [1, 32], strides = [1, 1]} : vector<11x128xf32> to vector<1x32xf32>
    %634 = vector.extract_strided_slice %631 {offsets = [2, 0], sizes = [1, 32], strides = [1, 1]} : vector<11x128xf32> to vector<1x32xf32>
    %635 = vector.extract_strided_slice %631 {offsets = [3, 0], sizes = [1, 32], strides = [1, 1]} : vector<11x128xf32> to vector<1x32xf32>
    %636 = vector.extract_strided_slice %631 {offsets = [4, 0], sizes = [1, 32], strides = [1, 1]} : vector<11x128xf32> to vector<1x32xf32>
    %637 = vector.extract_strided_slice %631 {offsets = [5, 0], sizes = [1, 32], strides = [1, 1]} : vector<11x128xf32> to vector<1x32xf32>
    %638 = vector.extract_strided_slice %631 {offsets = [6, 0], sizes = [1, 32], strides = [1, 1]} : vector<11x128xf32> to vector<1x32xf32>
    %639 = vector.extract_strided_slice %631 {offsets = [7, 0], sizes = [1, 128], strides = [1, 1]} : vector<11x128xf32> to vector<1x128xf32>
    %640 = vector.extract_strided_slice %631 {offsets = [8, 0], sizes = [1, 32], strides = [1, 1]} : vector<11x128xf32> to vector<1x32xf32>
    %641 = vector.extract_strided_slice %631 {offsets = [9, 0], sizes = [1, 32], strides = [1, 1]} : vector<11x128xf32> to vector<1x32xf32>
    %642 = vector.extract_strided_slice %631 {offsets = [10, 0], sizes = [1, 32], strides = [1, 1]} : vector<11x128xf32> to vector<1x32xf32>
    %cst_218 = arith.constant dense<0.000000e+00> : vector<8x96xf32>
    %643 = tpu.matmul %619, %621, %cst_218 {dimension_numbers = #tpu.dot_dimension_numbers<[1], [0], [0], [1], [0, 0, 1, 1], [], []>} : vector<8x32xf32>, vector<32x96xf32>, vector<8x96xf32> -> vector<8x96xf32>
    %644 = vector.broadcast %632 : vector<1x96xf32> to vector<8x96xf32>
    %645 = arith.addf %643, %644 : vector<8x96xf32>
    %646 = vector.extract_strided_slice %645 {offsets = [0, 0], sizes = [8, 32], strides = [1, 1]} : vector<8x96xf32> to vector<8x32xf32>
    %647 = vector.extract_strided_slice %645 {offsets = [0, 32], sizes = [8, 32], strides = [1, 1]} : vector<8x96xf32> to vector<8x32xf32>
    %648 = vector.extract_strided_slice %645 {offsets = [0, 64], sizes = [8, 32], strides = [1, 1]} : vector<8x96xf32> to vector<8x32xf32>
    %649 = vector.extract_strided_slice %646 {offsets = [0, 0], sizes = [8, 8], strides = [1, 1]} : vector<8x32xf32> to vector<8x8xf32>
    %650 = vector.extract_strided_slice %647 {offsets = [0, 0], sizes = [8, 8], strides = [1, 1]} : vector<8x32xf32> to vector<8x8xf32>
    %cst_219 = arith.constant dense<0.000000e+00> : vector<8x8xf32>
    %651 = tpu.matmul %649, %650, %cst_219 {dimension_numbers = #tpu.dot_dimension_numbers<[1], [1], [0], [0], [0, 0, 1, 0], [], []>} : vector<8x8xf32>, vector<8x8xf32>, vector<8x8xf32> -> vector<8x8xf32>
    %652 = arith.addf %651, %353 : vector<8x8xf32>
    %cst_220 = arith.constant dense<0xFF800000> : vector<8xf32>
    %653 = vector.multi_reduction <maximumf>, %652, %cst_220 [1] : vector<8x8xf32> to vector<8xf32>
    %654 = vector.shape_cast %653 : vector<8xf32> to vector<8x1xf32>
    %655 = vector.broadcast %654 : vector<8x1xf32> to vector<8x8xf32>
    %656 = arith.subf %652, %655 : vector<8x8xf32>
    %657 = math.exp %656 : vector<8x8xf32>
    %cst_221 = arith.constant dense<0.000000e+00> : vector<8xf32>
    %658 = vector.multi_reduction <add>, %657, %cst_221 [1] : vector<8x8xf32> to vector<8xf32>
    %659 = vector.shape_cast %658 : vector<8xf32> to vector<8x1xf32>
    %660 = tpu.reciprocal %659 {approx = true} : vector<8x1xf32> -> vector<8x1xf32>
    %661 = vector.broadcast %660 : vector<8x1xf32> to vector<8x8xf32>
    %662 = arith.mulf %657, %661 : vector<8x8xf32>
    %663 = vector.extract_strided_slice %648 {offsets = [0, 0], sizes = [8, 8], strides = [1, 1]} : vector<8x32xf32> to vector<8x8xf32>
    %cst_222 = arith.constant dense<0.000000e+00> : vector<8x8xf32>
    %664 = tpu.matmul %662, %663, %cst_222 {dimension_numbers = #tpu.dot_dimension_numbers<[1], [0], [0], [1], [0, 0, 1, 1], [], []>} : vector<8x8xf32>, vector<8x8xf32>, vector<8x8xf32> -> vector<8x8xf32>
    %665 = vector.extract_strided_slice %623 {offsets = [0, 0], sizes = [8, 32], strides = [1, 1]} : vector<32x32xf32> to vector<8x32xf32>
    %cst_223 = arith.constant dense<0.000000e+00> : vector<8x32xf32>
    %666 = tpu.matmul %664, %665, %cst_223 {dimension_numbers = #tpu.dot_dimension_numbers<[1], [0], [0], [1], [0, 0, 1, 1], [], []>} : vector<8x8xf32>, vector<8x32xf32>, vector<8x32xf32> -> vector<8x32xf32>
    %667 = vector.extract_strided_slice %646 {offsets = [0, 8], sizes = [8, 8], strides = [1, 1]} : vector<8x32xf32> to vector<8x8xf32>
    %668 = vector.extract_strided_slice %647 {offsets = [0, 8], sizes = [8, 8], strides = [1, 1]} : vector<8x32xf32> to vector<8x8xf32>
    %cst_224 = arith.constant dense<0.000000e+00> : vector<8x8xf32>
    %669 = tpu.matmul %667, %668, %cst_224 {dimension_numbers = #tpu.dot_dimension_numbers<[1], [1], [0], [0], [0, 0, 1, 0], [], []>} : vector<8x8xf32>, vector<8x8xf32>, vector<8x8xf32> -> vector<8x8xf32>
    %670 = arith.addf %669, %353 : vector<8x8xf32>
    %cst_225 = arith.constant dense<0xFF800000> : vector<8xf32>
    %671 = vector.multi_reduction <maximumf>, %670, %cst_225 [1] : vector<8x8xf32> to vector<8xf32>
    %672 = vector.shape_cast %671 : vector<8xf32> to vector<8x1xf32>
    %673 = vector.broadcast %672 : vector<8x1xf32> to vector<8x8xf32>
    %674 = arith.subf %670, %673 : vector<8x8xf32>
    %675 = math.exp %674 : vector<8x8xf32>
    %cst_226 = arith.constant dense<0.000000e+00> : vector<8xf32>
    %676 = vector.multi_reduction <add>, %675, %cst_226 [1] : vector<8x8xf32> to vector<8xf32>
    %677 = vector.shape_cast %676 : vector<8xf32> to vector<8x1xf32>
    %678 = tpu.reciprocal %677 {approx = true} : vector<8x1xf32> -> vector<8x1xf32>
    %679 = vector.broadcast %678 : vector<8x1xf32> to vector<8x8xf32>
    %680 = arith.mulf %675, %679 : vector<8x8xf32>
    %681 = vector.extract_strided_slice %648 {offsets = [0, 8], sizes = [8, 8], strides = [1, 1]} : vector<8x32xf32> to vector<8x8xf32>
    %cst_227 = arith.constant dense<0.000000e+00> : vector<8x8xf32>
    %682 = tpu.matmul %680, %681, %cst_227 {dimension_numbers = #tpu.dot_dimension_numbers<[1], [0], [0], [1], [0, 0, 1, 1], [], []>} : vector<8x8xf32>, vector<8x8xf32>, vector<8x8xf32> -> vector<8x8xf32>
    %683 = vector.extract_strided_slice %623 {offsets = [8, 0], sizes = [8, 32], strides = [1, 1]} : vector<32x32xf32> to vector<8x32xf32>
    %cst_228 = arith.constant dense<0.000000e+00> : vector<8x32xf32>
    %684 = tpu.matmul %682, %683, %cst_228 {dimension_numbers = #tpu.dot_dimension_numbers<[1], [0], [0], [1], [0, 0, 1, 1], [], []>} : vector<8x8xf32>, vector<8x32xf32>, vector<8x32xf32> -> vector<8x32xf32>
    %685 = arith.addf %666, %684 : vector<8x32xf32>
    %686 = vector.extract_strided_slice %646 {offsets = [0, 16], sizes = [8, 8], strides = [1, 1]} : vector<8x32xf32> to vector<8x8xf32>
    %687 = vector.extract_strided_slice %647 {offsets = [0, 16], sizes = [8, 8], strides = [1, 1]} : vector<8x32xf32> to vector<8x8xf32>
    %cst_229 = arith.constant dense<0.000000e+00> : vector<8x8xf32>
    %688 = tpu.matmul %686, %687, %cst_229 {dimension_numbers = #tpu.dot_dimension_numbers<[1], [1], [0], [0], [0, 0, 1, 0], [], []>} : vector<8x8xf32>, vector<8x8xf32>, vector<8x8xf32> -> vector<8x8xf32>
    %689 = arith.addf %688, %353 : vector<8x8xf32>
    %cst_230 = arith.constant dense<0xFF800000> : vector<8xf32>
    %690 = vector.multi_reduction <maximumf>, %689, %cst_230 [1] : vector<8x8xf32> to vector<8xf32>
    %691 = vector.shape_cast %690 : vector<8xf32> to vector<8x1xf32>
    %692 = vector.broadcast %691 : vector<8x1xf32> to vector<8x8xf32>
    %693 = arith.subf %689, %692 : vector<8x8xf32>
    %694 = math.exp %693 : vector<8x8xf32>
    %cst_231 = arith.constant dense<0.000000e+00> : vector<8xf32>
    %695 = vector.multi_reduction <add>, %694, %cst_231 [1] : vector<8x8xf32> to vector<8xf32>
    %696 = vector.shape_cast %695 : vector<8xf32> to vector<8x1xf32>
    %697 = tpu.reciprocal %696 {approx = true} : vector<8x1xf32> -> vector<8x1xf32>
    %698 = vector.broadcast %697 : vector<8x1xf32> to vector<8x8xf32>
    %699 = arith.mulf %694, %698 : vector<8x8xf32>
    %700 = vector.extract_strided_slice %648 {offsets = [0, 16], sizes = [8, 8], strides = [1, 1]} : vector<8x32xf32> to vector<8x8xf32>
    %cst_232 = arith.constant dense<0.000000e+00> : vector<8x8xf32>
    %701 = tpu.matmul %699, %700, %cst_232 {dimension_numbers = #tpu.dot_dimension_numbers<[1], [0], [0], [1], [0, 0, 1, 1], [], []>} : vector<8x8xf32>, vector<8x8xf32>, vector<8x8xf32> -> vector<8x8xf32>
    %702 = vector.extract_strided_slice %623 {offsets = [16, 0], sizes = [8, 32], strides = [1, 1]} : vector<32x32xf32> to vector<8x32xf32>
    %cst_233 = arith.constant dense<0.000000e+00> : vector<8x32xf32>
    %703 = tpu.matmul %701, %702, %cst_233 {dimension_numbers = #tpu.dot_dimension_numbers<[1], [0], [0], [1], [0, 0, 1, 1], [], []>} : vector<8x8xf32>, vector<8x32xf32>, vector<8x32xf32> -> vector<8x32xf32>
    %704 = arith.addf %685, %703 : vector<8x32xf32>
    %705 = vector.extract_strided_slice %646 {offsets = [0, 24], sizes = [8, 8], strides = [1, 1]} : vector<8x32xf32> to vector<8x8xf32>
    %706 = vector.extract_strided_slice %647 {offsets = [0, 24], sizes = [8, 8], strides = [1, 1]} : vector<8x32xf32> to vector<8x8xf32>
    %cst_234 = arith.constant dense<0.000000e+00> : vector<8x8xf32>
    %707 = tpu.matmul %705, %706, %cst_234 {dimension_numbers = #tpu.dot_dimension_numbers<[1], [1], [0], [0], [0, 0, 1, 0], [], []>} : vector<8x8xf32>, vector<8x8xf32>, vector<8x8xf32> -> vector<8x8xf32>
    %708 = arith.addf %707, %353 : vector<8x8xf32>
    %cst_235 = arith.constant dense<0xFF800000> : vector<8xf32>
    %709 = vector.multi_reduction <maximumf>, %708, %cst_235 [1] : vector<8x8xf32> to vector<8xf32>
    %710 = vector.shape_cast %709 : vector<8xf32> to vector<8x1xf32>
    %711 = vector.broadcast %710 : vector<8x1xf32> to vector<8x8xf32>
    %712 = arith.subf %708, %711 : vector<8x8xf32>
    %713 = math.exp %712 : vector<8x8xf32>
    %cst_236 = arith.constant dense<0.000000e+00> : vector<8xf32>
    %714 = vector.multi_reduction <add>, %713, %cst_236 [1] : vector<8x8xf32> to vector<8xf32>
    %715 = vector.shape_cast %714 : vector<8xf32> to vector<8x1xf32>
    %716 = tpu.reciprocal %715 {approx = true} : vector<8x1xf32> -> vector<8x1xf32>
    %717 = vector.broadcast %716 : vector<8x1xf32> to vector<8x8xf32>
    %718 = arith.mulf %713, %717 : vector<8x8xf32>
    %719 = vector.extract_strided_slice %648 {offsets = [0, 24], sizes = [8, 8], strides = [1, 1]} : vector<8x32xf32> to vector<8x8xf32>
    %cst_237 = arith.constant dense<0.000000e+00> : vector<8x8xf32>
    %720 = tpu.matmul %718, %719, %cst_237 {dimension_numbers = #tpu.dot_dimension_numbers<[1], [0], [0], [1], [0, 0, 1, 1], [], []>} : vector<8x8xf32>, vector<8x8xf32>, vector<8x8xf32> -> vector<8x8xf32>
    %721 = vector.extract_strided_slice %623 {offsets = [24, 0], sizes = [8, 32], strides = [1, 1]} : vector<32x32xf32> to vector<8x32xf32>
    %cst_238 = arith.constant dense<0.000000e+00> : vector<8x32xf32>
    %722 = tpu.matmul %720, %721, %cst_238 {dimension_numbers = #tpu.dot_dimension_numbers<[1], [0], [0], [1], [0, 0, 1, 1], [], []>} : vector<8x8xf32>, vector<8x32xf32>, vector<8x32xf32> -> vector<8x32xf32>
    %723 = arith.addf %704, %722 : vector<8x32xf32>
    %724 = vector.broadcast %633 : vector<1x32xf32> to vector<8x32xf32>
    %725 = arith.addf %723, %724 : vector<8x32xf32>
    %cst_239 = arith.constant 0.000000e+00 : f32
    %726 = vector.broadcast %cst_239 : f32 to vector<8x32xf32>
    %727 = arith.maximumf %725, %726 : vector<8x32xf32>
    %728 = arith.addf %619, %727 : vector<8x32xf32>
    %cst_240 = arith.constant 0.000000e+00 : f32
    %729 = vector.broadcast %cst_240 : f32 to vector<8x32xf32>
    %730 = arith.maximumf %728, %729 : vector<8x32xf32>
    %cst_241 = arith.constant dense<0.000000e+00> : vector<8xf32>
    %731 = vector.multi_reduction <add>, %730, %cst_241 [1] : vector<8x32xf32> to vector<8xf32>
    %732 = vector.shape_cast %731 : vector<8xf32> to vector<8x1xf32>
    %cst_242 = arith.constant 3.200000e+01 : f32
    %733 = vector.broadcast %cst_242 : f32 to vector<8x1xf32>
    %734 = arith.divf %732, %733 : vector<8x1xf32>
    %735 = vector.broadcast %734 : vector<8x1xf32> to vector<8x32xf32>
    %736 = arith.subf %730, %735 : vector<8x32xf32>
    %737 = arith.mulf %736, %736 : vector<8x32xf32>
    %cst_243 = arith.constant dense<0.000000e+00> : vector<8xf32>
    %738 = vector.multi_reduction <add>, %737, %cst_243 [1] : vector<8x32xf32> to vector<8xf32>
    %739 = vector.shape_cast %738 : vector<8xf32> to vector<8x1xf32>
    %cst_244 = arith.constant 3.200000e+01 : f32
    %740 = vector.broadcast %cst_244 : f32 to vector<8x1xf32>
    %741 = arith.divf %739, %740 : vector<8x1xf32>
    %742 = vector.broadcast %734 : vector<8x1xf32> to vector<8x32xf32>
    %743 = arith.subf %730, %742 : vector<8x32xf32>
    %cst_245 = arith.constant 9.99999974E-6 : f32
    %744 = vector.broadcast %cst_245 : f32 to vector<8x1xf32>
    %745 = arith.addf %741, %744 : vector<8x1xf32>
    %746 = math.rsqrt %745 : vector<8x1xf32>
    %747 = vector.broadcast %746 : vector<8x1xf32> to vector<8x32xf32>
    %748 = arith.mulf %743, %747 : vector<8x32xf32>
    %749 = vector.broadcast %634 : vector<1x32xf32> to vector<8x32xf32>
    %750 = arith.mulf %748, %749 : vector<8x32xf32>
    %751 = vector.broadcast %635 : vector<1x32xf32> to vector<8x32xf32>
    %752 = arith.addf %750, %751 : vector<8x32xf32>
    %753 = vector.extract_strided_slice %752 {offsets = [0, 0], sizes = [8, 8], strides = [1, 1]} : vector<8x32xf32> to vector<8x8xf32>
    %754 = vector.extract_strided_slice %348 {offsets = [0, 0], sizes = [8, 8], strides = [1, 1]} : vector<8x32xf32> to vector<8x8xf32>
    %cst_246 = arith.constant dense<0.000000e+00> : vector<8x8xf32>
    %755 = tpu.matmul %753, %754, %cst_246 {dimension_numbers = #tpu.dot_dimension_numbers<[1], [1], [0], [0], [0, 0, 1, 0], [], []>} : vector<8x8xf32>, vector<8x8xf32>, vector<8x8xf32> -> vector<8x8xf32>
    %cst_247 = arith.constant dense<0xFF800000> : vector<8xf32>
    %756 = vector.multi_reduction <maximumf>, %755, %cst_247 [1] : vector<8x8xf32> to vector<8xf32>
    %757 = vector.shape_cast %756 : vector<8xf32> to vector<8x1xf32>
    %758 = vector.broadcast %757 : vector<8x1xf32> to vector<8x8xf32>
    %759 = arith.subf %755, %758 : vector<8x8xf32>
    %760 = math.exp %759 : vector<8x8xf32>
    %cst_248 = arith.constant dense<0.000000e+00> : vector<8xf32>
    %761 = vector.multi_reduction <add>, %760, %cst_248 [1] : vector<8x8xf32> to vector<8xf32>
    %762 = vector.shape_cast %761 : vector<8xf32> to vector<8x1xf32>
    %763 = tpu.reciprocal %762 {approx = true} : vector<8x1xf32> -> vector<8x1xf32>
    %764 = vector.broadcast %763 : vector<8x1xf32> to vector<8x8xf32>
    %765 = arith.mulf %760, %764 : vector<8x8xf32>
    %766 = vector.extract_strided_slice %349 {offsets = [0, 0], sizes = [8, 8], strides = [1, 1]} : vector<8x32xf32> to vector<8x8xf32>
    %cst_249 = arith.constant dense<0.000000e+00> : vector<8x8xf32>
    %767 = tpu.matmul %765, %766, %cst_249 {dimension_numbers = #tpu.dot_dimension_numbers<[1], [0], [0], [1], [0, 0, 1, 1], [], []>} : vector<8x8xf32>, vector<8x8xf32>, vector<8x8xf32> -> vector<8x8xf32>
    %768 = vector.extract_strided_slice %625 {offsets = [0, 0], sizes = [8, 32], strides = [1, 1]} : vector<32x32xf32> to vector<8x32xf32>
    %cst_250 = arith.constant dense<0.000000e+00> : vector<8x32xf32>
    %769 = tpu.matmul %767, %768, %cst_250 {dimension_numbers = #tpu.dot_dimension_numbers<[1], [0], [0], [1], [0, 0, 1, 1], [], []>} : vector<8x8xf32>, vector<8x32xf32>, vector<8x32xf32> -> vector<8x32xf32>
    %770 = vector.extract_strided_slice %752 {offsets = [0, 8], sizes = [8, 8], strides = [1, 1]} : vector<8x32xf32> to vector<8x8xf32>
    %771 = vector.extract_strided_slice %348 {offsets = [0, 8], sizes = [8, 8], strides = [1, 1]} : vector<8x32xf32> to vector<8x8xf32>
    %cst_251 = arith.constant dense<0.000000e+00> : vector<8x8xf32>
    %772 = tpu.matmul %770, %771, %cst_251 {dimension_numbers = #tpu.dot_dimension_numbers<[1], [1], [0], [0], [0, 0, 1, 0], [], []>} : vector<8x8xf32>, vector<8x8xf32>, vector<8x8xf32> -> vector<8x8xf32>
    %cst_252 = arith.constant dense<0xFF800000> : vector<8xf32>
    %773 = vector.multi_reduction <maximumf>, %772, %cst_252 [1] : vector<8x8xf32> to vector<8xf32>
    %774 = vector.shape_cast %773 : vector<8xf32> to vector<8x1xf32>
    %775 = vector.broadcast %774 : vector<8x1xf32> to vector<8x8xf32>
    %776 = arith.subf %772, %775 : vector<8x8xf32>
    %777 = math.exp %776 : vector<8x8xf32>
    %cst_253 = arith.constant dense<0.000000e+00> : vector<8xf32>
    %778 = vector.multi_reduction <add>, %777, %cst_253 [1] : vector<8x8xf32> to vector<8xf32>
    %779 = vector.shape_cast %778 : vector<8xf32> to vector<8x1xf32>
    %780 = tpu.reciprocal %779 {approx = true} : vector<8x1xf32> -> vector<8x1xf32>
    %781 = vector.broadcast %780 : vector<8x1xf32> to vector<8x8xf32>
    %782 = arith.mulf %777, %781 : vector<8x8xf32>
    %783 = vector.extract_strided_slice %349 {offsets = [0, 8], sizes = [8, 8], strides = [1, 1]} : vector<8x32xf32> to vector<8x8xf32>
    %cst_254 = arith.constant dense<0.000000e+00> : vector<8x8xf32>
    %784 = tpu.matmul %782, %783, %cst_254 {dimension_numbers = #tpu.dot_dimension_numbers<[1], [0], [0], [1], [0, 0, 1, 1], [], []>} : vector<8x8xf32>, vector<8x8xf32>, vector<8x8xf32> -> vector<8x8xf32>
    %785 = vector.extract_strided_slice %625 {offsets = [8, 0], sizes = [8, 32], strides = [1, 1]} : vector<32x32xf32> to vector<8x32xf32>
    %cst_255 = arith.constant dense<0.000000e+00> : vector<8x32xf32>
    %786 = tpu.matmul %784, %785, %cst_255 {dimension_numbers = #tpu.dot_dimension_numbers<[1], [0], [0], [1], [0, 0, 1, 1], [], []>} : vector<8x8xf32>, vector<8x32xf32>, vector<8x32xf32> -> vector<8x32xf32>
    %787 = arith.addf %769, %786 : vector<8x32xf32>
    %788 = vector.extract_strided_slice %752 {offsets = [0, 16], sizes = [8, 8], strides = [1, 1]} : vector<8x32xf32> to vector<8x8xf32>
    %789 = vector.extract_strided_slice %348 {offsets = [0, 16], sizes = [8, 8], strides = [1, 1]} : vector<8x32xf32> to vector<8x8xf32>
    %cst_256 = arith.constant dense<0.000000e+00> : vector<8x8xf32>
    %790 = tpu.matmul %788, %789, %cst_256 {dimension_numbers = #tpu.dot_dimension_numbers<[1], [1], [0], [0], [0, 0, 1, 0], [], []>} : vector<8x8xf32>, vector<8x8xf32>, vector<8x8xf32> -> vector<8x8xf32>
    %cst_257 = arith.constant dense<0xFF800000> : vector<8xf32>
    %791 = vector.multi_reduction <maximumf>, %790, %cst_257 [1] : vector<8x8xf32> to vector<8xf32>
    %792 = vector.shape_cast %791 : vector<8xf32> to vector<8x1xf32>
    %793 = vector.broadcast %792 : vector<8x1xf32> to vector<8x8xf32>
    %794 = arith.subf %790, %793 : vector<8x8xf32>
    %795 = math.exp %794 : vector<8x8xf32>
    %cst_258 = arith.constant dense<0.000000e+00> : vector<8xf32>
    %796 = vector.multi_reduction <add>, %795, %cst_258 [1] : vector<8x8xf32> to vector<8xf32>
    %797 = vector.shape_cast %796 : vector<8xf32> to vector<8x1xf32>
    %798 = tpu.reciprocal %797 {approx = true} : vector<8x1xf32> -> vector<8x1xf32>
    %799 = vector.broadcast %798 : vector<8x1xf32> to vector<8x8xf32>
    %800 = arith.mulf %795, %799 : vector<8x8xf32>
    %801 = vector.extract_strided_slice %349 {offsets = [0, 16], sizes = [8, 8], strides = [1, 1]} : vector<8x32xf32> to vector<8x8xf32>
    %cst_259 = arith.constant dense<0.000000e+00> : vector<8x8xf32>
    %802 = tpu.matmul %800, %801, %cst_259 {dimension_numbers = #tpu.dot_dimension_numbers<[1], [0], [0], [1], [0, 0, 1, 1], [], []>} : vector<8x8xf32>, vector<8x8xf32>, vector<8x8xf32> -> vector<8x8xf32>
    %803 = vector.extract_strided_slice %625 {offsets = [16, 0], sizes = [8, 32], strides = [1, 1]} : vector<32x32xf32> to vector<8x32xf32>
    %cst_260 = arith.constant dense<0.000000e+00> : vector<8x32xf32>
    %804 = tpu.matmul %802, %803, %cst_260 {dimension_numbers = #tpu.dot_dimension_numbers<[1], [0], [0], [1], [0, 0, 1, 1], [], []>} : vector<8x8xf32>, vector<8x32xf32>, vector<8x32xf32> -> vector<8x32xf32>
    %805 = arith.addf %787, %804 : vector<8x32xf32>
    %806 = vector.extract_strided_slice %752 {offsets = [0, 24], sizes = [8, 8], strides = [1, 1]} : vector<8x32xf32> to vector<8x8xf32>
    %807 = vector.extract_strided_slice %348 {offsets = [0, 24], sizes = [8, 8], strides = [1, 1]} : vector<8x32xf32> to vector<8x8xf32>
    %cst_261 = arith.constant dense<0.000000e+00> : vector<8x8xf32>
    %808 = tpu.matmul %806, %807, %cst_261 {dimension_numbers = #tpu.dot_dimension_numbers<[1], [1], [0], [0], [0, 0, 1, 0], [], []>} : vector<8x8xf32>, vector<8x8xf32>, vector<8x8xf32> -> vector<8x8xf32>
    %cst_262 = arith.constant dense<0xFF800000> : vector<8xf32>
    %809 = vector.multi_reduction <maximumf>, %808, %cst_262 [1] : vector<8x8xf32> to vector<8xf32>
    %810 = vector.shape_cast %809 : vector<8xf32> to vector<8x1xf32>
    %811 = vector.broadcast %810 : vector<8x1xf32> to vector<8x8xf32>
    %812 = arith.subf %808, %811 : vector<8x8xf32>
    %813 = math.exp %812 : vector<8x8xf32>
    %cst_263 = arith.constant dense<0.000000e+00> : vector<8xf32>
    %814 = vector.multi_reduction <add>, %813, %cst_263 [1] : vector<8x8xf32> to vector<8xf32>
    %815 = vector.shape_cast %814 : vector<8xf32> to vector<8x1xf32>
    %816 = tpu.reciprocal %815 {approx = true} : vector<8x1xf32> -> vector<8x1xf32>
    %817 = vector.broadcast %816 : vector<8x1xf32> to vector<8x8xf32>
    %818 = arith.mulf %813, %817 : vector<8x8xf32>
    %819 = vector.extract_strided_slice %349 {offsets = [0, 24], sizes = [8, 8], strides = [1, 1]} : vector<8x32xf32> to vector<8x8xf32>
    %cst_264 = arith.constant dense<0.000000e+00> : vector<8x8xf32>
    %820 = tpu.matmul %818, %819, %cst_264 {dimension_numbers = #tpu.dot_dimension_numbers<[1], [0], [0], [1], [0, 0, 1, 1], [], []>} : vector<8x8xf32>, vector<8x8xf32>, vector<8x8xf32> -> vector<8x8xf32>
    %821 = vector.extract_strided_slice %625 {offsets = [24, 0], sizes = [8, 32], strides = [1, 1]} : vector<32x32xf32> to vector<8x32xf32>
    %cst_265 = arith.constant dense<0.000000e+00> : vector<8x32xf32>
    %822 = tpu.matmul %820, %821, %cst_265 {dimension_numbers = #tpu.dot_dimension_numbers<[1], [0], [0], [1], [0, 0, 1, 1], [], []>} : vector<8x8xf32>, vector<8x32xf32>, vector<8x32xf32> -> vector<8x32xf32>
    %823 = arith.addf %805, %822 : vector<8x32xf32>
    %824 = vector.broadcast %636 : vector<1x32xf32> to vector<8x32xf32>
    %825 = arith.addf %823, %824 : vector<8x32xf32>
    %cst_266 = arith.constant 0.000000e+00 : f32
    %826 = vector.broadcast %cst_266 : f32 to vector<8x32xf32>
    %827 = arith.maximumf %825, %826 : vector<8x32xf32>
    %828 = arith.addf %752, %827 : vector<8x32xf32>
    %cst_267 = arith.constant 0.000000e+00 : f32
    %829 = vector.broadcast %cst_267 : f32 to vector<8x32xf32>
    %830 = arith.maximumf %828, %829 : vector<8x32xf32>
    %cst_268 = arith.constant dense<0.000000e+00> : vector<8xf32>
    %831 = vector.multi_reduction <add>, %830, %cst_268 [1] : vector<8x32xf32> to vector<8xf32>
    %832 = vector.shape_cast %831 : vector<8xf32> to vector<8x1xf32>
    %cst_269 = arith.constant 3.200000e+01 : f32
    %833 = vector.broadcast %cst_269 : f32 to vector<8x1xf32>
    %834 = arith.divf %832, %833 : vector<8x1xf32>
    %835 = vector.broadcast %834 : vector<8x1xf32> to vector<8x32xf32>
    %836 = arith.subf %830, %835 : vector<8x32xf32>
    %837 = arith.mulf %836, %836 : vector<8x32xf32>
    %cst_270 = arith.constant dense<0.000000e+00> : vector<8xf32>
    %838 = vector.multi_reduction <add>, %837, %cst_270 [1] : vector<8x32xf32> to vector<8xf32>
    %839 = vector.shape_cast %838 : vector<8xf32> to vector<8x1xf32>
    %cst_271 = arith.constant 3.200000e+01 : f32
    %840 = vector.broadcast %cst_271 : f32 to vector<8x1xf32>
    %841 = arith.divf %839, %840 : vector<8x1xf32>
    %842 = vector.broadcast %834 : vector<8x1xf32> to vector<8x32xf32>
    %843 = arith.subf %830, %842 : vector<8x32xf32>
    %cst_272 = arith.constant 9.99999974E-6 : f32
    %844 = vector.broadcast %cst_272 : f32 to vector<8x1xf32>
    %845 = arith.addf %841, %844 : vector<8x1xf32>
    %846 = math.rsqrt %845 : vector<8x1xf32>
    %847 = vector.broadcast %846 : vector<8x1xf32> to vector<8x32xf32>
    %848 = arith.mulf %843, %847 : vector<8x32xf32>
    %849 = vector.broadcast %637 : vector<1x32xf32> to vector<8x32xf32>
    %850 = arith.mulf %848, %849 : vector<8x32xf32>
    %851 = vector.broadcast %638 : vector<1x32xf32> to vector<8x32xf32>
    %852 = arith.addf %850, %851 : vector<8x32xf32>
    %cst_273 = arith.constant dense<0.000000e+00> : vector<8x128xf32>
    %853 = tpu.matmul %852, %627, %cst_273 {dimension_numbers = #tpu.dot_dimension_numbers<[1], [0], [0], [1], [0, 0, 1, 1], [], []>} : vector<8x32xf32>, vector<32x128xf32>, vector<8x128xf32> -> vector<8x128xf32>
    %854 = vector.broadcast %639 : vector<1x128xf32> to vector<8x128xf32>
    %855 = arith.addf %853, %854 : vector<8x128xf32>
    %cst_274 = arith.constant 0.000000e+00 : f32
    %856 = vector.broadcast %cst_274 : f32 to vector<8x128xf32>
    %857 = arith.maximumf %855, %856 : vector<8x128xf32>
    %cst_275 = arith.constant dense<0.000000e+00> : vector<8x32xf32>
    %858 = tpu.matmul %857, %629, %cst_275 {dimension_numbers = #tpu.dot_dimension_numbers<[1], [0], [0], [1], [0, 0, 1, 1], [], []>} : vector<8x128xf32>, vector<128x32xf32>, vector<8x32xf32> -> vector<8x32xf32>
    %859 = vector.broadcast %640 : vector<1x32xf32> to vector<8x32xf32>
    %860 = arith.addf %858, %859 : vector<8x32xf32>
    %861 = arith.addf %852, %860 : vector<8x32xf32>
    %cst_276 = arith.constant 0.000000e+00 : f32
    %862 = vector.broadcast %cst_276 : f32 to vector<8x32xf32>
    %863 = arith.maximumf %861, %862 : vector<8x32xf32>
    %cst_277 = arith.constant dense<0.000000e+00> : vector<8xf32>
    %864 = vector.multi_reduction <add>, %863, %cst_277 [1] : vector<8x32xf32> to vector<8xf32>
    %865 = vector.shape_cast %864 : vector<8xf32> to vector<8x1xf32>
    %cst_278 = arith.constant 3.200000e+01 : f32
    %866 = vector.broadcast %cst_278 : f32 to vector<8x1xf32>
    %867 = arith.divf %865, %866 : vector<8x1xf32>
    %868 = vector.broadcast %867 : vector<8x1xf32> to vector<8x32xf32>
    %869 = arith.subf %863, %868 : vector<8x32xf32>
    %870 = arith.mulf %869, %869 : vector<8x32xf32>
    %cst_279 = arith.constant dense<0.000000e+00> : vector<8xf32>
    %871 = vector.multi_reduction <add>, %870, %cst_279 [1] : vector<8x32xf32> to vector<8xf32>
    %872 = vector.shape_cast %871 : vector<8xf32> to vector<8x1xf32>
    %cst_280 = arith.constant 3.200000e+01 : f32
    %873 = vector.broadcast %cst_280 : f32 to vector<8x1xf32>
    %874 = arith.divf %872, %873 : vector<8x1xf32>
    %875 = vector.broadcast %867 : vector<8x1xf32> to vector<8x32xf32>
    %876 = arith.subf %863, %875 : vector<8x32xf32>
    %cst_281 = arith.constant 9.99999974E-6 : f32
    %877 = vector.broadcast %cst_281 : f32 to vector<8x1xf32>
    %878 = arith.addf %874, %877 : vector<8x1xf32>
    %879 = math.rsqrt %878 : vector<8x1xf32>
    %880 = vector.broadcast %879 : vector<8x1xf32> to vector<8x32xf32>
    %881 = arith.mulf %876, %880 : vector<8x32xf32>
    %882 = vector.broadcast %641 : vector<1x32xf32> to vector<8x32xf32>
    %883 = arith.mulf %881, %882 : vector<8x32xf32>
    %884 = vector.broadcast %642 : vector<1x32xf32> to vector<8x32xf32>
    %885 = arith.addf %883, %884 : vector<8x32xf32>
    %c0_282 = arith.constant 0 : index
    %c0_283 = arith.constant 0 : index
    %886 = vector.load %arg17[%c0_282, %c0_283] : memref<32x128xf32, #tpu.memory_space<vmem>>, vector<32x128xf32>
    %cst_284 = arith.constant dense<0.000000e+00> : vector<8x128xf32>
    %887 = tpu.matmul %885, %886, %cst_284 {dimension_numbers = #tpu.dot_dimension_numbers<[1], [0], [0], [1], [0, 0, 1, 1], [], []>} : vector<8x32xf32>, vector<32x128xf32>, vector<8x128xf32> -> vector<8x128xf32>
    %c0_285 = arith.constant 0 : index
    %c0_286 = arith.constant 0 : index
    %888 = vector.load %arg19[%c0_285, %c0_286] : memref<2x128xf32, #tpu.memory_space<vmem>>, vector<1x128xf32>
    %889 = vector.broadcast %888 : vector<1x128xf32> to vector<8x128xf32>
    %890 = arith.addf %887, %889 : vector<8x128xf32>
    %cst_287 = arith.constant 0.000000e+00 : f32
    %891 = vector.broadcast %cst_287 : f32 to vector<8x128xf32>
    %892 = arith.maximumf %890, %891 : vector<8x128xf32>
    %c0_288 = arith.constant 0 : index
    %c0_289 = arith.constant 0 : index
    %893 = vector.load %arg18[%c0_288, %c0_289] : memref<128x128xf32, #tpu.memory_space<vmem>>, vector<128x128xf32>
    %cst_290 = arith.constant dense<0.000000e+00> : vector<8x128xf32>
    %894 = tpu.matmul %892, %893, %cst_290 {dimension_numbers = #tpu.dot_dimension_numbers<[1], [0], [0], [1], [0, 0, 1, 1], [], []>} : vector<8x128xf32>, vector<128x128xf32>, vector<8x128xf32> -> vector<8x128xf32>
    %c1_291 = arith.constant 1 : index
    %c0_292 = arith.constant 0 : index
    %895 = vector.load %arg19[%c1_291, %c0_292] : memref<2x128xf32, #tpu.memory_space<vmem>>, vector<1x128xf32>
    %896 = vector.broadcast %895 : vector<1x128xf32> to vector<8x128xf32>
    %897 = arith.addf %894, %896 : vector<8x128xf32>
    %c0_293 = arith.constant 0 : index
    %c0_294 = arith.constant 0 : index
    %c0_295 = arith.constant 0 : index
    %898 = vector.load %arg20[%c0_293, %c0_294, %c0_295] : memref<1x8x128xf32, #tpu.memory_space<vmem>>, vector<1x8x128xf32>
    %899 = vector.shape_cast %898 : vector<1x8x128xf32> to vector<8x128xf32>
    %900 = vector.shape_cast %897 : vector<8x128xf32> to vector<1x8x128xf32>
    tpu.vector_store %arg20[%c0_293, %c0_294, %c0_295], %900 {strides = array<i32>} : memref<1x8x128xf32, #tpu.memory_space<vmem>>, vector<1x8x128xf32>,
    return
  }
  func.func @transform_0(%arg0: i32) -> (i32, i32, i32) {
    %c0_i32 = arith.constant 0 : i32
    %c0_i32_0 = arith.constant 0 : i32
    %c0_i32_1 = arith.constant 0 : i32
    return %arg0, %c0_i32, %c0_i32_0 : i32, i32, i32
  }
  func.func @transform_1(%arg0: i32) -> (i32, i32, i32) {
    %c0_i32 = arith.constant 0 : i32
    %c0_i32_0 = arith.constant 0 : i32
    %c0_i32_1 = arith.constant 0 : i32
    return %arg0, %c0_i32, %c0_i32_0 : i32, i32, i32
  }
  func.func @transform_2(%arg0: i32) -> (i32, i32, i32) {
    %c0_i32 = arith.constant 0 : i32
    %c0_i32_0 = arith.constant 0 : i32
    %c0_i32_1 = arith.constant 0 : i32
    return %arg0, %c0_i32, %c0_i32_0 : i32, i32, i32
  }
  func.func @transform_3(%arg0: i32) -> (i32, i32, i32) {
    %c0_i32 = arith.constant 0 : i32
    %c0_i32_0 = arith.constant 0 : i32
    %c0_i32_1 = arith.constant 0 : i32
    return %arg0, %c0_i32, %c0_i32_0 : i32, i32, i32
  }
  func.func @transform_4(%arg0: i32) -> (i32, i32, i32) {
    %c0_i32 = arith.constant 0 : i32
    %c0_i32_0 = arith.constant 0 : i32
    %c0_i32_1 = arith.constant 0 : i32
    %c0_i32_2 = arith.constant 0 : i32
    return %c0_i32, %c0_i32_0, %c0_i32_1 : i32, i32, i32
  }
  func.func @transform_5(%arg0: i32) -> (i32, i32, i32) {
    %c0_i32 = arith.constant 0 : i32
    %c0_i32_0 = arith.constant 0 : i32
    %c0_i32_1 = arith.constant 0 : i32
    %c0_i32_2 = arith.constant 0 : i32
    return %c0_i32, %c0_i32_0, %c0_i32_1 : i32, i32, i32
  }
  func.func @transform_6(%arg0: i32) -> (i32, i32, i32) {
    %c0_i32 = arith.constant 0 : i32
    %c0_i32_0 = arith.constant 0 : i32
    %c0_i32_1 = arith.constant 0 : i32
    %c0_i32_2 = arith.constant 0 : i32
    return %c0_i32, %c0_i32_0, %c0_i32_1 : i32, i32, i32
  }
  func.func @transform_7(%arg0: i32) -> (i32, i32, i32) {
    %c0_i32 = arith.constant 0 : i32
    %c0_i32_0 = arith.constant 0 : i32
    %c0_i32_1 = arith.constant 0 : i32
    %c0_i32_2 = arith.constant 0 : i32
    return %c0_i32, %c0_i32_0, %c0_i32_1 : i32, i32, i32
  }
  func.func @transform_8(%arg0: i32) -> (i32, i32, i32) {
    %c0_i32 = arith.constant 0 : i32
    %c0_i32_0 = arith.constant 0 : i32
    %c0_i32_1 = arith.constant 0 : i32
    %c0_i32_2 = arith.constant 0 : i32
    return %c0_i32, %c0_i32_0, %c0_i32_1 : i32, i32, i32
  }
  func.func @transform_9(%arg0: i32) -> (i32, i32) {
    %c0_i32 = arith.constant 0 : i32
    %c0_i32_0 = arith.constant 0 : i32
    %c0_i32_1 = arith.constant 0 : i32
    return %c0_i32, %c0_i32_0 : i32, i32
  }
  func.func @transform_10(%arg0: i32) -> (i32, i32, i32) {
    %c0_i32 = arith.constant 0 : i32
    %c0_i32_0 = arith.constant 0 : i32
    %c0_i32_1 = arith.constant 0 : i32
    %c0_i32_2 = arith.constant 0 : i32
    return %c0_i32, %c0_i32_0, %c0_i32_1 : i32, i32, i32
  }
  func.func @transform_11(%arg0: i32) -> (i32, i32, i32) {
    %c0_i32 = arith.constant 0 : i32
    %c0_i32_0 = arith.constant 0 : i32
    %c0_i32_1 = arith.constant 0 : i32
    %c0_i32_2 = arith.constant 0 : i32
    return %c0_i32, %c0_i32_0, %c0_i32_1 : i32, i32, i32
  }
  func.func @transform_12(%arg0: i32) -> (i32, i32, i32) {
    %c0_i32 = arith.constant 0 : i32
    %c0_i32_0 = arith.constant 0 : i32
    %c0_i32_1 = arith.constant 0 : i32
    %c0_i32_2 = arith.constant 0 : i32
    return %c0_i32, %c0_i32_0, %c0_i32_1 : i32, i32, i32
  }
  func.func @transform_13(%arg0: i32) -> (i32, i32, i32) {
    %c0_i32 = arith.constant 0 : i32
    %c0_i32_0 = arith.constant 0 : i32
    %c0_i32_1 = arith.constant 0 : i32
    %c0_i32_2 = arith.constant 0 : i32
    return %c0_i32, %c0_i32_0, %c0_i32_1 : i32, i32, i32
  }
  func.func @transform_14(%arg0: i32) -> (i32, i32, i32) {
    %c0_i32 = arith.constant 0 : i32
    %c0_i32_0 = arith.constant 0 : i32
    %c0_i32_1 = arith.constant 0 : i32
    %c0_i32_2 = arith.constant 0 : i32
    return %c0_i32, %c0_i32_0, %c0_i32_1 : i32, i32, i32
  }
  func.func @transform_15(%arg0: i32) -> (i32, i32, i32) {
    %c0_i32 = arith.constant 0 : i32
    %c0_i32_0 = arith.constant 0 : i32
    %c0_i32_1 = arith.constant 0 : i32
    %c0_i32_2 = arith.constant 0 : i32
    return %c0_i32, %c0_i32_0, %c0_i32_1 : i32, i32, i32
  }
  func.func @transform_16(%arg0: i32) -> (i32, i32) {
    %c0_i32 = arith.constant 0 : i32
    %c0_i32_0 = arith.constant 0 : i32
    %c0_i32_1 = arith.constant 0 : i32
    return %c0_i32, %c0_i32_0 : i32, i32
  }
  func.func @transform_17(%arg0: i32) -> (i32, i32) {
    %c0_i32 = arith.constant 0 : i32
    %c0_i32_0 = arith.constant 0 : i32
    %c0_i32_1 = arith.constant 0 : i32
    return %c0_i32, %c0_i32_0 : i32, i32
  }
  func.func @transform_18(%arg0: i32) -> (i32, i32) {
    %c0_i32 = arith.constant 0 : i32
    %c0_i32_0 = arith.constant 0 : i32
    %c0_i32_1 = arith.constant 0 : i32
    return %c0_i32, %c0_i32_0 : i32, i32
  }
  func.func @transform_19(%arg0: i32) -> (i32, i32, i32) {
    %c0_i32 = arith.constant 0 : i32
    %c0_i32_0 = arith.constant 0 : i32
    %c0_i32_1 = arith.constant 0 : i32
    return %arg0, %c0_i32, %c0_i32_0 : i32, i32, i32
  }
}

</mosaic_0001>

<llo_original>
// kernel: transformer_forward.1
$region0: #{transformer_forward.1}
  #allocation0 [shape = 'u32[]', space=smem, size = 0x4, offset = 0x4, fixed_abs, tag = 'smem constant byte address 0x4 - core index']
  #allocation1 [shape = 'u32[144,128]{1,0:T(1,128)}', space=vmem, size = 0x12000, scoped, tag = 'internal scratch']
  %s0 = inlined_call_operand.vmem [shape: f32[2,8,32], index: 0, kind: input, shape index: {}]
  %s1 = inlined_call_operand.vmem [shape: f32[2,1,8], index: 1, kind: input, shape index: {}]
  %s2 = inlined_call_operand.vmem [shape: f32[2,8,32], index: 2, kind: input, shape index: {}]
  %s3 = inlined_call_operand.vmem [shape: f32[2,8,8], index: 3, kind: input, shape index: {}]
  %s4 = inlined_call_operand.vmem [shape: f32[2,32,96], index: 4, kind: input, shape index: {}]
  %s5 = inlined_call_operand.vmem [shape: f32[2,32,32], index: 5, kind: input, shape index: {}]
  %s6 = inlined_call_operand.vmem [shape: f32[2,32,128], index: 6, kind: input, shape index: {}]
  %s7 = inlined_call_operand.vmem [shape: f32[2,128,32], index: 7, kind: input, shape index: {}]
  %s8 = inlined_call_operand.vmem [shape: f32[2,8,128], index: 8, kind: input, shape index: {}]
  %s9 = inlined_call_operand.vmem [shape: f32[32,64], index: 9, kind: input, shape index: {}]
  %s10 = inlined_call_operand.vmem [shape: f32[2,32,96], index: 10, kind: input, shape index: {}]
  %s11 = inlined_call_operand.vmem [shape: f32[2,32,32], index: 11, kind: input, shape index: {}]
  %s12 = inlined_call_operand.vmem [shape: f32[2,32,32], index: 12, kind: input, shape index: {}]
  %s13 = inlined_call_operand.vmem [shape: f32[2,32,128], index: 13, kind: input, shape index: {}]
  %s14 = inlined_call_operand.vmem [shape: f32[2,128,32], index: 14, kind: input, shape index: {}]
  %s15 = inlined_call_operand.vmem [shape: f32[2,11,128], index: 15, kind: input, shape index: {}]
  %s16 = inlined_call_operand.vmem [shape: f32[32,128], index: 16, kind: input, shape index: {}]
  %s17 = inlined_call_operand.vmem [shape: f32[128,128], index: 17, kind: input, shape index: {}]
  %s18 = inlined_call_operand.vmem [shape: f32[2,128], index: 18, kind: input, shape index: {}]
  %s19 = inlined_call_operand.hbm [shape: f32[2,8,128], index: 19, kind: output, shape index: {}]
  %s20 = sld [smem:[#allocation0]]
  $region109: #{transformer_forward.1} parent=0
    _
  %s22 = ssub.s32 1, %s20
  %s23 = scalar_select 0, %s22, %s20
  $region1: #{transformer_forward.1} parent=0
    #allocation2 [shape = 'u8[8192]{0}', space=vmem, size = 0x2000, scoped, tag = 'output window, operand 0']
    #allocation3 [shape = 's32[2]{0}', space=sflag, size = 0x8, scoped, tag = 'scoped memory for transformer_forward.1']
    %24 = vsyncpa [#allocation3], 0
    %s25 = scalar_lea.sflag [#allocation3], 1
    %26 = vsyncpa %s25, 0
    loop: start=0, step=1, limit=4
    $region2: #{transformer_forward.1} parent=1 // loop_pre_header
      _
    $region3: #{transformer_forward.1} parent=1 // loop_header
      %s28 = sphi 0, %s32
      %p29 = scmp.ge.s32.totalorder %s28, 4
      %s38 = sphi 0, %s40
      %s41 = sphi 0, %s38
      %s42 = sphi 0, %s41
      %s58 = sphi 0, %s42
      %s64 = sphi 0, %s66
      %s67 = sphi 0, %s64
      %s68 = sphi 0, %s67
      %s84 = sphi 0, %s68
      %s90 = sphi 0, %s92
      %s93 = sphi 0, %s90
      %s94 = sphi 0, %s93
      %s110 = sphi 0, %s94
      %s116 = sphi 0, %s118
      %s119 = sphi 0, %s116
      %s120 = sphi 0, %s119
      %s136 = sphi 0, %s120
      %s140 = sphi 0, %s140
      %s142 = sphi 0, %s140
      %s143 = sphi 0, %s142
      %s157 = sphi 0, %s143
      %s161 = sphi 0, %s161
      %s163 = sphi 0, %s161
      %s164 = sphi 0, %s163
      %s178 = sphi 0, %s164
      %s182 = sphi 0, %s182
      %s184 = sphi 0, %s182
      %s185 = sphi 0, %s184
      %s199 = sphi 0, %s185
      %s203 = sphi 0, %s203
      %s205 = sphi 0, %s203
      %s206 = sphi 0, %s205
      %s220 = sphi 0, %s206
      %s224 = sphi 0, %s224
      %s226 = sphi 0, %s224
      %s227 = sphi 0, %s226
      %s241 = sphi 0, %s227
      %s245 = sphi 0, %s245
      %s247 = sphi 0, %s245
      %s248 = sphi 0, %s247
      %s262 = sphi 0, %s248
      %s266 = sphi 0, %s266
      %s268 = sphi 0, %s266
      %s269 = sphi 0, %s268
      %s283 = sphi 0, %s269
      %s287 = sphi 0, %s287
      %s289 = sphi 0, %s287
      %s290 = sphi 0, %s289
      %s304 = sphi 0, %s290
      %s308 = sphi 0, %s308
      %s310 = sphi 0, %s308
      %s311 = sphi 0, %s310
      %s325 = sphi 0, %s311
      %s329 = sphi 0, %s329
      %s331 = sphi 0, %s329
      %s332 = sphi 0, %s331
      %s346 = sphi 0, %s332
      %s350 = sphi 0, %s350
      %s352 = sphi 0, %s350
      %s353 = sphi 0, %s352
      %s367 = sphi 0, %s353
      %s371 = sphi 0, %s371
      %s373 = sphi 0, %s371
      %s374 = sphi 0, %s373
      %s388 = sphi 0, %s374
      %s392 = sphi 0, %s392
      %s394 = sphi 0, %s392
      %s395 = sphi 0, %s394
      %s409 = sphi 0, %s395
      %s413 = sphi 0, %s413
      %s415 = sphi 0, %s413
      %s416 = sphi 0, %s415
      %s430 = sphi 0, %s416
      %s434 = sphi 0, %s434
      %s436 = sphi 0, %s434
      %s437 = sphi 0, %s436
      %s451 = sphi 0, %s437
      %s457 = sphi 0, %s459
      %s460 = sphi 0, %s457
      %s461 = sphi 0, %s460
      %s477 = sphi 0, %s461
    $region4: #{transformer_forward.1} parent=1 // loop_header_branch
      %31 = sbr.rel (%p29) target = $region8
    $region5: #{transformer_forward.1} parent=1 // loop_body
      %s33 = ssub.s32 %s28, 1
      %s34 = ssub.s32 %s28, 2
      %s35 = sadd.s32 %s28, 1
      %s36 = ssub.s32 %s28, %s35
      %p37 = scmp.eq.s32.totalorder %s36, 0
      %s39 = sadd.s32 %s38, 1
      %s40 = scalar_select %p37, %s38, %s39
      %p43 = pneg %p37
      %p44 = scmp.eq.s32.totalorder %s28, 1
      %p45 = por %p43, %p44
      %p46 = scmp.ne.s32.totalorder %s38, %s41
      %p47 = scmp.eq.s32.totalorder %s28, 0
      %p48 = por %p46, %p47
      %p49 = scmp.ne.s32.totalorder %s38, %s41
      %p50 = scmp.eq.s32.totalorder %s33, 1
      %p51 = por %p49, %p50
      %p52 = scmp.ne.s32.totalorder %s41, %s42
      %p53 = scmp.eq.s32.totalorder %s33, 0
      %p54 = por %p52, %p53
      %p55 = scmp.ne.s32.totalorder %s41, %s42
      %p56 = scmp.eq.s32.totalorder %s34, 1
      %p57 = por %p55, %p56
      %p59 = scmp.ne.s32.totalorder %s42, %s58
      %p60 = scmp.eq.s32.totalorder %s34, 0
      %p61 = por %p59, %p60
      %s62 = ssub.s32 %s28, %s35
      %p63 = scmp.eq.s32.totalorder %s62, 0
      %s65 = sadd.s32 %s64, 1
      %s66 = scalar_select %p63, %s64, %s65
      %p69 = pneg %p63
      %p70 = scmp.eq.s32.totalorder %s28, 1
      %p71 = por %p69, %p70
      %p72 = scmp.ne.s32.totalorder %s64, %s67
      %p73 = scmp.eq.s32.totalorder %s28, 0
      %p74 = por %p72, %p73
      %p75 = scmp.ne.s32.totalorder %s64, %s67
      %p76 = scmp.eq.s32.totalorder %s33, 1
      %p77 = por %p75, %p76
      %p78 = scmp.ne.s32.totalorder %s67, %s68
      %p79 = scmp.eq.s32.totalorder %s33, 0
      %p80 = por %p78, %p79
      %p81 = scmp.ne.s32.totalorder %s67, %s68
      %p82 = scmp.eq.s32.totalorder %s34, 1
      %p83 = por %p81, %p82
      %p85 = scmp.ne.s32.totalorder %s68, %s84
      %p86 = scmp.eq.s32.totalorder %s34, 0
      %p87 = por %p85, %p86
      %s88 = ssub.s32 %s28, %s35
      %p89 = scmp.eq.s32.totalorder %s88, 0
      %s91 = sadd.s32 %s90, 1
      %s92 = scalar_select %p89, %s90, %s91
      %p95 = pneg %p89
      %p96 = scmp.eq.s32.totalorder %s28, 1
      %p97 = por %p95, %p96
      %p98 = scmp.ne.s32.totalorder %s90, %s93
      %p99 = scmp.eq.s32.totalorder %s28, 0
      %p100 = por %p98, %p99
      %p101 = scmp.ne.s32.totalorder %s90, %s93
      %p102 = scmp.eq.s32.totalorder %s33, 1
      %p103 = por %p101, %p102
      %p104 = scmp.ne.s32.totalorder %s93, %s94
      %p105 = scmp.eq.s32.totalorder %s33, 0
      %p106 = por %p104, %p105
      %p107 = scmp.ne.s32.totalorder %s93, %s94
      %p108 = scmp.eq.s32.totalorder %s34, 1
      %p109 = por %p107, %p108
      %p111 = scmp.ne.s32.totalorder %s94, %s110
      %p112 = scmp.eq.s32.totalorder %s34, 0
      %p113 = por %p111, %p112
      %s114 = ssub.s32 %s28, %s35
      %p115 = scmp.eq.s32.totalorder %s114, 0
      %s117 = sadd.s32 %s116, 1
      %s118 = scalar_select %p115, %s116, %s117
      %p121 = pneg %p115
      %p122 = scmp.eq.s32.totalorder %s28, 1
      %p123 = por %p121, %p122
      %p124 = scmp.ne.s32.totalorder %s116, %s119
      %p125 = scmp.eq.s32.totalorder %s28, 0
      %p126 = por %p124, %p125
      %p127 = scmp.ne.s32.totalorder %s116, %s119
      %p128 = scmp.eq.s32.totalorder %s33, 1
      %p129 = por %p127, %p128
      %p130 = scmp.ne.s32.totalorder %s119, %s120
      %p131 = scmp.eq.s32.totalorder %s33, 0
      %p132 = por %p130, %p131
      %p133 = scmp.ne.s32.totalorder %s119, %s120
      %p134 = scmp.eq.s32.totalorder %s34, 1
      %p135 = por %p133, %p134
      %p137 = scmp.ne.s32.totalorder %s120, %s136
      %p138 = scmp.eq.s32.totalorder %s34, 0
      %p139 = por %p137, %p138
      %s141 = sadd.s32 %s140, 1
      %p144 = scmp.eq.s32.totalorder %s28, 1
      %p145 = scmp.ne.s32.totalorder %s140, %s142
      %p146 = scmp.eq.s32.totalorder %s28, 0
      %p147 = por %p145, %p146
      %p148 = scmp.ne.s32.totalorder %s140, %s142
      %p149 = scmp.eq.s32.totalorder %s33, 1
      %p150 = por %p148, %p149
      %p151 = scmp.ne.s32.totalorder %s142, %s143
      %p152 = scmp.eq.s32.totalorder %s33, 0
      %p153 = por %p151, %p152
      %p154 = scmp.ne.s32.totalorder %s142, %s143
      %p155 = scmp.eq.s32.totalorder %s34, 1
      %p156 = por %p154, %p155
      %p158 = scmp.ne.s32.totalorder %s143, %s157
      %p159 = scmp.eq.s32.totalorder %s34, 0
      %p160 = por %p158, %p159
      %s162 = sadd.s32 %s161, 1
      %p165 = scmp.eq.s32.totalorder %s28, 1
      %p166 = scmp.ne.s32.totalorder %s161, %s163
      %p167 = scmp.eq.s32.totalorder %s28, 0
      %p168 = por %p166, %p167
      %p169 = scmp.ne.s32.totalorder %s161, %s163
      %p170 = scmp.eq.s32.totalorder %s33, 1
      %p171 = por %p169, %p170
      %p172 = scmp.ne.s32.totalorder %s163, %s164
      %p173 = scmp.eq.s32.totalorder %s33, 0
      %p174 = por %p172, %p173
      %p175 = scmp.ne.s32.totalorder %s163, %s164
      %p176 = scmp.eq.s32.totalorder %s34, 1
      %p177 = por %p175, %p176
      %p179 = scmp.ne.s32.totalorder %s164, %s178
      %p180 = scmp.eq.s32.totalorder %s34, 0
      %p181 = por %p179, %p180
      %s183 = sadd.s32 %s182, 1
      %p186 = scmp.eq.s32.totalorder %s28, 1
      %p187 = scmp.ne.s32.totalorder %s182, %s184
      %p188 = scmp.eq.s32.totalorder %s28, 0
      %p189 = por %p187, %p188
      %p190 = scmp.ne.s32.totalorder %s182, %s184
      %p191 = scmp.eq.s32.totalorder %s33, 1
      %p192 = por %p190, %p191
      %p193 = scmp.ne.s32.totalorder %s184, %s185
      %p194 = scmp.eq.s32.totalorder %s33, 0
      %p195 = por %p193, %p194
      %p196 = scmp.ne.s32.totalorder %s184, %s185
      %p197 = scmp.eq.s32.totalorder %s34, 1
      %p198 = por %p196, %p197
      %p200 = scmp.ne.s32.totalorder %s185, %s199
      %p201 = scmp.eq.s32.totalorder %s34, 0
      %p202 = por %p200, %p201
      %s204 = sadd.s32 %s203, 1
      %p207 = scmp.eq.s32.totalorder %s28, 1
      %p208 = scmp.ne.s32.totalorder %s203, %s205
      %p209 = scmp.eq.s32.totalorder %s28, 0
      %p210 = por %p208, %p209
      %p211 = scmp.ne.s32.totalorder %s203, %s205
      %p212 = scmp.eq.s32.totalorder %s33, 1
      %p213 = por %p211, %p212
      %p214 = scmp.ne.s32.totalorder %s205, %s206
      %p215 = scmp.eq.s32.totalorder %s33, 0
      %p216 = por %p214, %p215
      %p217 = scmp.ne.s32.totalorder %s205, %s206
      %p218 = scmp.eq.s32.totalorder %s34, 1
      %p219 = por %p217, %p218
      %p221 = scmp.ne.s32.totalorder %s206, %s220
      %p222 = scmp.eq.s32.totalorder %s34, 0
      %p223 = por %p221, %p222
      %s225 = sadd.s32 %s224, 1
      %p228 = scmp.eq.s32.totalorder %s28, 1
      %p229 = scmp.ne.s32.totalorder %s224, %s226
      %p230 = scmp.eq.s32.totalorder %s28, 0
      %p231 = por %p229, %p230
      %p232 = scmp.ne.s32.totalorder %s224, %s226
      %p233 = scmp.eq.s32.totalorder %s33, 1
      %p234 = por %p232, %p233
      %p235 = scmp.ne.s32.totalorder %s226, %s227
      %p236 = scmp.eq.s32.totalorder %s33, 0
      %p237 = por %p235, %p236
      %p238 = scmp.ne.s32.totalorder %s226, %s227
      %p239 = scmp.eq.s32.totalorder %s34, 1
      %p240 = por %p238, %p239
      %p242 = scmp.ne.s32.totalorder %s227, %s241
      %p243 = scmp.eq.s32.totalorder %s34, 0
      %p244 = por %p242, %p243
      %s246 = sadd.s32 %s245, 1
      %p249 = scmp.eq.s32.totalorder %s28, 1
      %p250 = scmp.ne.s32.totalorder %s245, %s247
      %p251 = scmp.eq.s32.totalorder %s28, 0
      %p252 = por %p250, %p251
      %p253 = scmp.ne.s32.totalorder %s245, %s247
      %p254 = scmp.eq.s32.totalorder %s33, 1
      %p255 = por %p253, %p254
      %p256 = scmp.ne.s32.totalorder %s247, %s248
      %p257 = scmp.eq.s32.totalorder %s33, 0
      %p258 = por %p256, %p257
      %p259 = scmp.ne.s32.totalorder %s247, %s248
      %p260 = scmp.eq.s32.totalorder %s34, 1
      %p261 = por %p259, %p260
      %p263 = scmp.ne.s32.totalorder %s248, %s262
      %p264 = scmp.eq.s32.totalorder %s34, 0
      %p265 = por %p263, %p264
      %s267 = sadd.s32 %s266, 1
      %p270 = scmp.eq.s32.totalorder %s28, 1
      %p271 = scmp.ne.s32.totalorder %s266, %s268
      %p272 = scmp.eq.s32.totalorder %s28, 0
      %p273 = por %p271, %p272
      %p274 = scmp.ne.s32.totalorder %s266, %s268
      %p275 = scmp.eq.s32.totalorder %s33, 1
      %p276 = por %p274, %p275
      %p277 = scmp.ne.s32.totalorder %s268, %s269
      %p278 = scmp.eq.s32.totalorder %s33, 0
      %p279 = por %p277, %p278
      %p280 = scmp.ne.s32.totalorder %s268, %s269
      %p281 = scmp.eq.s32.totalorder %s34, 1
      %p282 = por %p280, %p281
      %p284 = scmp.ne.s32.totalorder %s269, %s283
      %p285 = scmp.eq.s32.totalorder %s34, 0
      %p286 = por %p284, %p285
      %s288 = sadd.s32 %s287, 1
      %p291 = scmp.eq.s32.totalorder %s28, 1
      %p292 = scmp.ne.s32.totalorder %s287, %s289
      %p293 = scmp.eq.s32.totalorder %s28, 0
      %p294 = por %p292, %p293
      %p295 = scmp.ne.s32.totalorder %s287, %s289
      %p296 = scmp.eq.s32.totalorder %s33, 1
      %p297 = por %p295, %p296
      %p298 = scmp.ne.s32.totalorder %s289, %s290
      %p299 = scmp.eq.s32.totalorder %s33, 0
      %p300 = por %p298, %p299
      %p301 = scmp.ne.s32.totalorder %s289, %s290
      %p302 = scmp.eq.s32.totalorder %s34, 1
      %p303 = por %p301, %p302
      %p305 = scmp.ne.s32.totalorder %s290, %s304
      %p306 = scmp.eq.s32.totalorder %s34, 0
      %p307 = por %p305, %p306
      %s309 = sadd.s32 %s308, 1
      %p312 = scmp.eq.s32.totalorder %s28, 1
      %p313 = scmp.ne.s32.totalorder %s308, %s310
      %p314 = scmp.eq.s32.totalorder %s28, 0
      %p315 = por %p313, %p314
      %p316 = scmp.ne.s32.totalorder %s308, %s310
      %p317 = scmp.eq.s32.totalorder %s33, 1
      %p318 = por %p316, %p317
      %p319 = scmp.ne.s32.totalorder %s310, %s311
      %p320 = scmp.eq.s32.totalorder %s33, 0
      %p321 = por %p319, %p320
      %p322 = scmp.ne.s32.totalorder %s310, %s311
      %p323 = scmp.eq.s32.totalorder %s34, 1
      %p324 = por %p322, %p323
      %p326 = scmp.ne.s32.totalorder %s311, %s325
      %p327 = scmp.eq.s32.totalorder %s34, 0
      %p328 = por %p326, %p327
      %s330 = sadd.s32 %s329, 1
      %p333 = scmp.eq.s32.totalorder %s28, 1
      %p334 = scmp.ne.s32.totalorder %s329, %s331
      %p335 = scmp.eq.s32.totalorder %s28, 0
      %p336 = por %p334, %p335
      %p337 = scmp.ne.s32.totalorder %s329, %s331
      %p338 = scmp.eq.s32.totalorder %s33, 1
      %p339 = por %p337, %p338
      %p340 = scmp.ne.s32.totalorder %s331, %s332
      %p341 = scmp.eq.s32.totalorder %s33, 0
      %p342 = por %p340, %p341
      %p343 = scmp.ne.s32.totalorder %s331, %s332
      %p344 = scmp.eq.s32.totalorder %s34, 1
      %p345 = por %p343, %p344
      %p347 = scmp.ne.s32.totalorder %s332, %s346
      %p348 = scmp.eq.s32.totalorder %s34, 0
      %p349 = por %p347, %p348
      %s351 = sadd.s32 %s350, 1
      %p354 = scmp.eq.s32.totalorder %s28, 1
      %p355 = scmp.ne.s32.totalorder %s350, %s352
      %p356 = scmp.eq.s32.totalorder %s28, 0
      %p357 = por %p355, %p356
      %p358 = scmp.ne.s32.totalorder %s350, %s352
      %p359 = scmp.eq.s32.totalorder %s33, 1
      %p360 = por %p358, %p359
      %p361 = scmp.ne.s32.totalorder %s352, %s353
      %p362 = scmp.eq.s32.totalorder %s33, 0
      %p363 = por %p361, %p362
      %p364 = scmp.ne.s32.totalorder %s352, %s353
      %p365 = scmp.eq.s32.totalorder %s34, 1
      %p366 = por %p364, %p365
      %p368 = scmp.ne.s32.totalorder %s353, %s367
      %p369 = scmp.eq.s32.totalorder %s34, 0
      %p370 = por %p368, %p369
      %s372 = sadd.s32 %s371, 1
      %p375 = scmp.eq.s32.totalorder %s28, 1
      %p376 = scmp.ne.s32.totalorder %s371, %s373
      %p377 = scmp.eq.s32.totalorder %s28, 0
      %p378 = por %p376, %p377
      %p379 = scmp.ne.s32.totalorder %s371, %s373
      %p380 = scmp.eq.s32.totalorder %s33, 1
      %p381 = por %p379, %p380
      %p382 = scmp.ne.s32.totalorder %s373, %s374
      %p383 = scmp.eq.s32.totalorder %s33, 0
      %p384 = por %p382, %p383
      %p385 = scmp.ne.s32.totalorder %s373, %s374
      %p386 = scmp.eq.s32.totalorder %s34, 1
      %p387 = por %p385, %p386
      %p389 = scmp.ne.s32.totalorder %s374, %s388
      %p390 = scmp.eq.s32.totalorder %s34, 0
      %p391 = por %p389, %p390
      %s393 = sadd.s32 %s392, 1
      %p396 = scmp.eq.s32.totalorder %s28, 1
      %p397 = scmp.ne.s32.totalorder %s392, %s394
      %p398 = scmp.eq.s32.totalorder %s28, 0
      %p399 = por %p397, %p398
      %p400 = scmp.ne.s32.totalorder %s392, %s394
      %p401 = scmp.eq.s32.totalorder %s33, 1
      %p402 = por %p400, %p401
      %p403 = scmp.ne.s32.totalorder %s394, %s395
      %p404 = scmp.eq.s32.totalorder %s33, 0
      %p405 = por %p403, %p404
      %p406 = scmp.ne.s32.totalorder %s394, %s395
      %p407 = scmp.eq.s32.totalorder %s34, 1
      %p408 = por %p406, %p407
      %p410 = scmp.ne.s32.totalorder %s395, %s409
      %p411 = scmp.eq.s32.totalorder %s34, 0
      %p412 = por %p410, %p411
      %s414 = sadd.s32 %s413, 1
      %p417 = scmp.eq.s32.totalorder %s28, 1
      %p418 = scmp.ne.s32.totalorder %s413, %s415
      %p419 = scmp.eq.s32.totalorder %s28, 0
      %p420 = por %p418, %p419
      %p421 = scmp.ne.s32.totalorder %s413, %s415
      %p422 = scmp.eq.s32.totalorder %s33, 1
      %p423 = por %p421, %p422
      %p424 = scmp.ne.s32.totalorder %s415, %s416
      %p425 = scmp.eq.s32.totalorder %s33, 0
      %p426 = por %p424, %p425
      %p427 = scmp.ne.s32.totalorder %s415, %s416
      %p428 = scmp.eq.s32.totalorder %s34, 1
      %p429 = por %p427, %p428
      %p431 = scmp.ne.s32.totalorder %s416, %s430
      %p432 = scmp.eq.s32.totalorder %s34, 0
      %p433 = por %p431, %p432
      %s435 = sadd.s32 %s434, 1
      %p438 = scmp.eq.s32.totalorder %s28, 1
      %p439 = scmp.ne.s32.totalorder %s434, %s436
      %p440 = scmp.eq.s32.totalorder %s28, 0
      %p441 = por %p439, %p440
      %p442 = scmp.ne.s32.totalorder %s434, %s436
      %p443 = scmp.eq.s32.totalorder %s33, 1
      %p444 = por %p442, %p443
      %p445 = scmp.ne.s32.totalorder %s436, %s437
      %p446 = scmp.eq.s32.totalorder %s33, 0
      %p447 = por %p445, %p446
      %p448 = scmp.ne.s32.totalorder %s436, %s437
      %p449 = scmp.eq.s32.totalorder %s34, 1
      %p450 = por %p448, %p449
      %p452 = scmp.ne.s32.totalorder %s437, %s451
      %p453 = scmp.eq.s32.totalorder %s34, 0
      %p454 = por %p452, %p453
      %s455 = ssub.s32 %s28, %s35
      %p456 = scmp.eq.s32.totalorder %s455, 0
      %s458 = sadd.s32 %s457, 1
      %s459 = scalar_select %p456, %s457, %s458
      %p462 = pneg %p456
      %p463 = scmp.eq.s32.totalorder %s28, 1
      %p464 = por %p462, %p463
      %p465 = scmp.ne.s32.totalorder %s457, %s460
      %p466 = scmp.eq.s32.totalorder %s28, 0
      %p467 = por %p465, %p466
      %p468 = scmp.ne.s32.totalorder %s457, %s460
      %p469 = scmp.eq.s32.totalorder %s33, 1
      %p470 = por %p468, %p469
      %p471 = scmp.ne.s32.totalorder %s460, %s461
      %p472 = scmp.eq.s32.totalorder %s33, 0
      %p473 = por %p471, %p472
      %p474 = scmp.ne.s32.totalorder %s460, %s461
      %p475 = scmp.eq.s32.totalorder %s34, 1
      %p476 = por %p474, %p475
      %p478 = scmp.ne.s32.totalorder %s461, %s477
      %p479 = scmp.eq.s32.totalorder %s34, 0
      %p480 = por %p478, %p479
      %p481 = scmp.le.s32.totalorder 1, %s28
      %p482 = scmp.lt.s32.totalorder %s28, 3
      %p483 = pnand %p481, %p482
      %p484 = pneg %p483
      // Predicated region
      $region9: #{transformer_forward.1} parent=5 // pred_check
        _
      $region10: #{transformer_forward.1} parent=5 // pred_check_branch
        %486 = sbr.rel (%p483) target = $region12
      $region11: #{transformer_forward.1} parent=5 // pred_region
        %s487 = ssub.s32 %s28, 1
        // Predicated region
        $region13: #{transformer_forward.1} parent=11 // pred_check
          %p488 = pneg %p153
        $region14: #{transformer_forward.1} parent=11 // pred_check_branch
          %490 = sbr.rel (%p488) target = $region16
        $region15: #{transformer_forward.1} parent=11 // pred_region
          _
        $region16: #{transformer_forward.1} parent=11 // pred_fallthru
          _
        // Predicated region
        $region17: #{transformer_forward.1} parent=11 // pred_check
          %p491 = pneg %p174
        $region18: #{transformer_forward.1} parent=11 // pred_check_branch
          %493 = sbr.rel (%p491) target = $region20
        $region19: #{transformer_forward.1} parent=11 // pred_region
          _
        $region20: #{transformer_forward.1} parent=11 // pred_fallthru
          _
        // Predicated region
        $region21: #{transformer_forward.1} parent=11 // pred_check
          %p494 = pneg %p195
        $region22: #{transformer_forward.1} parent=11 // pred_check_branch
          %496 = sbr.rel (%p494) target = $region24
        $region23: #{transformer_forward.1} parent=11 // pred_region
          _
        $region24: #{transformer_forward.1} parent=11 // pred_fallthru
          _
        // Predicated region
        $region25: #{transformer_forward.1} parent=11 // pred_check
          %p497 = pneg %p216
        $region26: #{transformer_forward.1} parent=11 // pred_check_branch
          %499 = sbr.rel (%p497) target = $region28
        $region27: #{transformer_forward.1} parent=11 // pred_region
          _
        $region28: #{transformer_forward.1} parent=11 // pred_fallthru
          _
        // Predicated region
        $region29: #{transformer_forward.1} parent=11 // pred_check
          %p500 = pneg %p237
        $region30: #{transformer_forward.1} parent=11 // pred_check_branch
          %502 = sbr.rel (%p500) target = $region32
        $region31: #{transformer_forward.1} parent=11 // pred_region
          _
        $region32: #{transformer_forward.1} parent=11 // pred_fallthru
          _
        // Predicated region
        $region33: #{transformer_forward.1} parent=11 // pred_check
          %p503 = pneg %p258
        $region34: #{transformer_forward.1} parent=11 // pred_check_branch
          %505 = sbr.rel (%p503) target = $region36
        $region35: #{transformer_forward.1} parent=11 // pred_region
          _
        $region36: #{transformer_forward.1} parent=11 // pred_fallthru
          _
        // Predicated region
        $region37: #{transformer_forward.1} parent=11 // pred_check
          %p506 = pneg %p279
        $region38: #{transformer_forward.1} parent=11 // pred_check_branch
          %508 = sbr.rel (%p506) target = $region40
        $region39: #{transformer_forward.1} parent=11 // pred_region
          _
        $region40: #{transformer_forward.1} parent=11 // pred_fallthru
          _
        // Predicated region
        $region41: #{transformer_forward.1} parent=11 // pred_check
          %p509 = pneg %p300
        $region42: #{transformer_forward.1} parent=11 // pred_check_branch
          %511 = sbr.rel (%p509) target = $region44
        $region43: #{transformer_forward.1} parent=11 // pred_region
          _
        $region44: #{transformer_forward.1} parent=11 // pred_fallthru
          _
        // Predicated region
        $region45: #{transformer_forward.1} parent=11 // pred_check
          %p512 = pneg %p321
        $region46: #{transformer_forward.1} parent=11 // pred_check_branch
          %514 = sbr.rel (%p512) target = $region48
        $region47: #{transformer_forward.1} parent=11 // pred_region
          _
        $region48: #{transformer_forward.1} parent=11 // pred_fallthru
          _
        // Predicated region
        $region49: #{transformer_forward.1} parent=11 // pred_check
          %p515 = pneg %p342
        $region50: #{transformer_forward.1} parent=11 // pred_check_branch
          %517 = sbr.rel (%p515) target = $region52
        $region51: #{transformer_forward.1} parent=11 // pred_region
          _
        $region52: #{transformer_forward.1} parent=11 // pred_fallthru
          _
        // Predicated region
        $region53: #{transformer_forward.1} parent=11 // pred_check
          %p518 = pneg %p363
        $region54: #{transformer_forward.1} parent=11 // pred_check_branch
          %520 = sbr.rel (%p518) target = $region56
        $region55: #{transformer_forward.1} parent=11 // pred_region
          _
        $region56: #{transformer_forward.1} parent=11 // pred_fallthru
          _
        // Predicated region
        $region57: #{transformer_forward.1} parent=11 // pred_check
          %p521 = pneg %p384
        $region58: #{transformer_forward.1} parent=11 // pred_check_branch
          %523 = sbr.rel (%p521) target = $region60
        $region59: #{transformer_forward.1} parent=11 // pred_region
          _
        $region60: #{transformer_forward.1} parent=11 // pred_fallthru
          _
        // Predicated region
        $region61: #{transformer_forward.1} parent=11 // pred_check
          %p524 = pneg %p405
        $region62: #{transformer_forward.1} parent=11 // pred_check_branch
          %526 = sbr.rel (%p524) target = $region64
        $region63: #{transformer_forward.1} parent=11 // pred_region
          _
        $region64: #{transformer_forward.1} parent=11 // pred_fallthru
          _
        // Predicated region
        $region65: #{transformer_forward.1} parent=11 // pred_check
          %p527 = pneg %p426
        $region66: #{transformer_forward.1} parent=11 // pred_check_branch
          %529 = sbr.rel (%p527) target = $region68
        $region67: #{transformer_forward.1} parent=11 // pred_region
          _
        $region68: #{transformer_forward.1} parent=11 // pred_fallthru
          _
        // Predicated region
        $region69: #{transformer_forward.1} parent=11 // pred_check
          %p530 = pneg %p447
        $region70: #{transformer_forward.1} parent=11 // pred_check_branch
          %532 = sbr.rel (%p530) target = $region72
        $region71: #{transformer_forward.1} parent=11 // pred_region
          _
        $region72: #{transformer_forward.1} parent=11 // pred_fallthru
          _
      $region12: #{transformer_forward.1} parent=5 // pred_fallthru
        _
      %p533 = scmp.lt.s32.totalorder %s28, 2
      // Predicated region
      $region73: #{transformer_forward.1} parent=5 // pred_check
        %p534 = pneg %p533
      $region74: #{transformer_forward.1} parent=5 // pred_check_branch
        %536 = sbr.rel (%p534) target = $region76
      $region75: #{transformer_forward.1} parent=5 // pred_region
        // Predicated region
        $region77: #{transformer_forward.1} parent=75 // pred_check
          %p537 = pneg %p48
        $region78: #{transformer_forward.1} parent=75 // pred_check_branch
          %539 = sbr.rel (%p537) target = $region80
        $region79: #{transformer_forward.1} parent=75 // pred_region
          %p540 = scmp.lt.s32.totalorder %s28, 1
          %s541 = scalar_select %p540, %s28, 1
          %s542 = smul.addr %s541, 8
          %s543 = scalar_lea.vmem %s0, %s542
        $region80: #{transformer_forward.1} parent=75 // pred_fallthru
          _
        // Predicated region
        $region81: #{transformer_forward.1} parent=75 // pred_check
          %p544 = pneg %p74
        $region82: #{transformer_forward.1} parent=75 // pred_check_branch
          %546 = sbr.rel (%p544) target = $region84
        $region83: #{transformer_forward.1} parent=75 // pred_region
          %p547 = scmp.lt.s32.totalorder %s28, 1
          %s548 = scalar_select %p547, %s28, 1
          %s549 = scalar_lea.vmem %s1, %s548
        $region84: #{transformer_forward.1} parent=75 // pred_fallthru
          _
        // Predicated region
        $region85: #{transformer_forward.1} parent=75 // pred_check
          %p550 = pneg %p100
        $region86: #{transformer_forward.1} parent=75 // pred_check_branch
          %552 = sbr.rel (%p550) target = $region88
        $region87: #{transformer_forward.1} parent=75 // pred_region
          %p553 = scmp.lt.s32.totalorder %s28, 1
          %s554 = scalar_select %p553, %s28, 1
          %s555 = smul.addr %s554, 8
          %s556 = scalar_lea.vmem %s2, %s555
        $region88: #{transformer_forward.1} parent=75 // pred_fallthru
          _
        // Predicated region
        $region89: #{transformer_forward.1} parent=75 // pred_check
          %p557 = pneg %p126
        $region90: #{transformer_forward.1} parent=75 // pred_check_branch
          %559 = sbr.rel (%p557) target = $region92
        $region91: #{transformer_forward.1} parent=75 // pred_region
          %p560 = scmp.lt.s32.totalorder %s28, 1
          %s561 = scalar_select %p560, %s28, 1
          %s562 = smul.addr %s561, 8
          %s563 = scalar_lea.vmem %s3, %s562
        $region92: #{transformer_forward.1} parent=75 // pred_fallthru
          _
      $region76: #{transformer_forward.1} parent=5 // pred_fallthru
        _
      %p564 = scmp.le.s32.totalorder 1, %s28
      %p565 = scmp.lt.s32.totalorder %s28, 3
      %p566 = pnand %p564, %p565
      %p567 = pneg %p566
      // Predicated region
      $region93: #{transformer_forward.1} parent=5 // pred_check
        _
      $region94: #{transformer_forward.1} parent=5 // pred_check_branch
        %569 = sbr.rel (%p566) target = $region96
      $region95: #{transformer_forward.1} parent=5 // pred_region
        %s570 = ssub.s32 %s28, 1
        %p571 = scmp.lt.s32.totalorder %s33, 1
        %s572 = scalar_select %p571, %s33, 1
        %s573 = smul.addr %s572, 8
        %s574 = scalar_lea.vmem %s0, %s573
        %p575 = pneg %p54
        %p576 = pneg %p51
        %p577 = scmp.lt.s32.totalorder %s33, 1
        %s578 = scalar_select %p577, %s33, 1
        %s579 = scalar_lea.vmem %s1, %s578
        %p580 = pneg %p80
        %p581 = pneg %p77
        %p582 = scmp.lt.s32.totalorder %s33, 1
        %s583 = scalar_select %p582, %s33, 1
        %s584 = smul.addr %s583, 8
        %s585 = scalar_lea.vmem %s2, %s584
        %p586 = pneg %p106
        %p587 = pneg %p103
        %p588 = scmp.lt.s32.totalorder %s33, 1
        %s589 = scalar_select %p588, %s33, 1
        %s590 = smul.addr %s589, 8
        %s591 = scalar_lea.vmem %s3, %s590
        %p592 = pneg %p132
        %p593 = pneg %p129
        %p594 = pneg %p153
        %p595 = pneg %p150
        %p596 = pneg %p174
        %p597 = pneg %p171
        %p598 = pneg %p195
        %p599 = pneg %p192
        %p600 = pneg %p216
        %p601 = pneg %p213
        %p602 = pneg %p237
        %p603 = pneg %p234
        %p604 = pneg %p258
        %p605 = pneg %p255
        %p606 = pneg %p279
        %p607 = pneg %p276
        %p608 = pneg %p300
        %p609 = pneg %p297
        %p610 = pneg %p321
        %p611 = pneg %p318
        %p612 = pneg %p342
        %p613 = pneg %p339
        %p614 = pneg %p363
        %p615 = pneg %p360
        %p616 = pneg %p384
        %p617 = pneg %p381
        %p618 = pneg %p405
        %p619 = pneg %p402
        %p620 = pneg %p426
        %p621 = pneg %p423
        %p622 = pneg %p447
        %p623 = pneg %p444
        %p624 = pneg %p473
        %p625 = pneg %p470
        %s626 = sand.u32 %s460, 1
        %s627 = scalar_lea.sflag [#allocation3], %s626
        %s628 = sand.u32 %s460, 1
        %s629 = smul.addr %s628, 8
        %s630 = scalar_lea.vmem [#allocation2], %s629
        %p631 = scmp.lt.s32.totalorder %s33, 1
        %s632 = scalar_select %p631, %s33, 1
        %s633 = smul.addr %s632, 8
        %s634 = scalar_lea.vmem %s0, %s633
        %p635 = scmp.lt.s32.totalorder %s33, 1
        %s636 = scalar_select %p635, %s33, 1
        %s637 = scalar_lea.vmem %s1, %s636
        %p638 = scmp.lt.s32.totalorder %s33, 1
        %s639 = scalar_select %p638, %s33, 1
        %s640 = smul.addr %s639, 8
        %s641 = scalar_lea.vmem %s2, %s640
        %p642 = scmp.lt.s32.totalorder %s33, 1
        %s643 = scalar_select %p642, %s33, 1
        %s644 = smul.addr %s643, 8
        %s645 = scalar_lea.vmem %s3, %s644
        %v646 = vld [vmem:[%s634] sm:$0xff]
        %v647 = vld [vmem:[%s637] sm:$0x1]
        %v648 = vld [vmem:[%s4] sm:$0xff]
        %v649 = vld [vmem:[%s4 + $0x8] sm:$0xff]
        %v650 = vld [vmem:[%s4 + $0x10] sm:$0xff]
        %v651 = vld [vmem:[%s4 + $0x18] sm:$0xff]
        %v652 = vld [vmem:[%s5] sm:$0xff]
        %v653 = vld [vmem:[%s5 + $0x8] sm:$0xff]
        %v654 = vld [vmem:[%s5 + $0x10] sm:$0xff]
        %v655 = vld [vmem:[%s5 + $0x18] sm:$0xff]
        %v656 = vld [vmem:[%s6] sm:$0xff]
        %v657 = vld [vmem:[%s6 + $0x8] sm:$0xff]
        %v658 = vld [vmem:[%s6 + $0x10] sm:$0xff]
        %v659 = vld [vmem:[%s6 + $0x18] sm:$0xff]
        %v660 = vld [vmem:[%s7] sm:$0xff]
        %v661 = vld [vmem:[%s7 + $0x8] sm:$0xff]
        %v662 = vld [vmem:[%s7 + $0x10] sm:$0xff]
        %v663 = vld [vmem:[%s7 + $0x18] sm:$0xff]
        %v664 = vld [vmem:[%s7 + $0x20] sm:$0xff]
        %v665 = vld [vmem:[%s7 + $0x28] sm:$0xff]
        %v666 = vld [vmem:[%s7 + $0x30] sm:$0xff]
        %v667 = vld [vmem:[%s7 + $0x38] sm:$0xff]
        %v668 = vld [vmem:[%s7 + $0x40] sm:$0xff]
        %v669 = vld [vmem:[%s7 + $0x48] sm:$0xff]
        %v670 = vld [vmem:[%s7 + $0x50] sm:$0xff]
        %v671 = vld [vmem:[%s7 + $0x58] sm:$0xff]
        %v672 = vld [vmem:[%s7 + $0x60] sm:$0xff]
        %v673 = vld [vmem:[%s7 + $0x68] sm:$0xff]
        %v674 = vld [vmem:[%s7 + $0x70] sm:$0xff]
        %v675 = vld [vmem:[%s7 + $0x78] sm:$0xff]
        %v676 = vld [vmem:[%s8] sm:$0xff]
        %v677 = vlaneseq
        %v678 = vshrl.u32 %v677, 7
        %v679 = vsub.s32 0, %v678
        %v680 = vrot.slane %v676, %v679
        %vm681 = vcmask 261120
        %v683 = vsel %vm681, %v646, 0
        %685 = vmatprep.subr.mxu0 0.0
        %686 = vmatpush1.msra.mxu0 %v648
        %687 = vmatprep.subr.mxu0 0.0
        %688 = vmatpush1.msra.mxu0 %v649
        %689 = vmatprep.subr.mxu0 0.0
        %690 = vmatpush1.msra.mxu0 %v650
        %691 = vmatprep.subr.mxu0 0.0
        %692 = vmatpush1.msra.mxu0 %v651
        %693 = vmatprep.subr.mxu0 0.0
        %694 = vmatpush1.msra.mxu0 0.0
        %695 = vmatprep.subr.mxu0 0.0
        %696 = vmatpush1.msra.mxu0 0.0
        %697 = vmatprep.subr.mxu0 0.0
        %698 = vmatpush1.msra.mxu0 0.0
        %699 = vmatprep.subr.mxu0 0.0
        %700 = vmatpush1.msra.mxu0 0.0
        %701 = vmatprep.subr.mxu0 0.0
        %702 = vmatpush1.msra.mxu0 0.0
        %703 = vmatprep.subr.mxu0 0.0
        %704 = vmatpush1.msra.mxu0 0.0
        %705 = vmatprep.subr.mxu0 0.0
        %706 = vmatpush1.msra.mxu0 0.0
        %707 = vmatprep.subr.mxu0 0.0
        %708 = vmatpush1.msra.mxu0 0.0
        %709 = vmatprep.subr.mxu0 0.0
        %710 = vmatpush1.msra.mxu0 0.0
        %711 = vmatprep.subr.mxu0 0.0
        %712 = vmatpush1.msra.mxu0 0.0
        %713 = vmatprep.subr.mxu0 0.0
        %714 = vmatpush1.msra.mxu0 0.0
        %715 = vmatprep.subr.mxu0 0.0
        %716 = vmatpush1.msra.mxu0 0.0
        %717 = vmatprep.subr.mxu0 0.0
        %718 = vmatpush1.msra.mxu0 0.0
        %719 = vmatprep.subr.mxu0 0.0
        %720 = vmatpush1.msra.mxu0 0.0
        %721 = vmatprep.subr.mxu0 0.0
        %722 = vmatpush1.msra.mxu0 0.0
        %723 = vmatprep.subr.mxu0 0.0
        %724 = vmatpush1.msra.mxu0 0.0
        %725 = vmatprep.subr.mxu0 0.0
        %726 = vmatpush1.msra.mxu0 0.0
        %727 = vmatprep.subr.mxu0 0.0
        %728 = vmatpush1.msra.mxu0 0.0
        %729 = vmatprep.subr.mxu0 0.0
        %730 = vmatpush1.msra.mxu0 0.0
        %731 = vmatprep.subr.mxu0 0.0
        %732 = vmatpush1.msra.mxu0 0.0
        %733 = vmatprep.subr.mxu0 0.0
        %734 = vmatpush1.msra.mxu0 0.0
        %735 = vmatprep.subr.mxu0 0.0
        %736 = vmatpush1.msra.mxu0 0.0
        %737 = vmatprep.subr.mxu0 0.0
        %738 = vmatpush1.msra.mxu0 0.0
        %739 = vmatprep.subr.mxu0 0.0
        %740 = vmatpush1.msra.mxu0 0.0
        %741 = vmatprep.subr.mxu0 0.0
        %742 = vmatpush1.msra.mxu0 0.0
        %743 = vmatprep.subr.mxu0 0.0
        %744 = vmatpush1.msra.mxu0 0.0
        %745 = vmatprep.subr.mxu0 0.0
        %746 = vmatpush1.msra.mxu0 0.0
        %747 = vmatprep.subr.mxu0 0.0
        %748 = vmatpush1.msra.mxu0 0.0
        %749 = vmatprep.mubr.f32.mxu0 0.0
        %750 = vmatmul.mubr.f32.gmra.mrb[0].mxu0 %v683
        %v751 = vpop.f32.mrb[0].mxu0
        %v752 = vadd.f32 %v680, %v751
        %v753 = vpop.f32.mrb[0].mxu0
        %754 = vdwg.mxu0
        %v756 = vlaneseq
        %v757 = vshrl.u32 %v756, 7
        %v758 = vsub.s32 0, %v757
        %v759 = vrot.slane %v647, %v758
        %762 = vrot.lane.b32.xlu0 %v752, 96
        %v763 = vpop.permute.xlu0 %762
        %vm764 = vcmask 64512
        %v765 = vsel %vm764, %v752, 0
        %v767 = vsel %vm764, %v763, 0
        %769 = vmatprep.subr.mxu0 0.0
        %770 = vmatpush1.xpose.msra.mxu0 %v767
        %771 = vmatprep.subr.mxu0 0.0
        %772 = vmatpush1.xpose.msra.mxu0 0.0
        %773 = vmatprep.subr.mxu0 0.0
        %774 = vmatpush1.xpose.msra.mxu0 0.0
        %775 = vmatprep.subr.mxu0 0.0
        %776 = vmatpush1.xpose.msra.mxu0 0.0
        %777 = vmatprep.subr.mxu0 0.0
        %778 = vmatpush1.xpose.msra.mxu0 0.0
        %779 = vmatprep.subr.mxu0 0.0
        %780 = vmatpush1.xpose.msra.mxu0 0.0
        %781 = vmatprep.subr.mxu0 0.0
        %782 = vmatpush1.xpose.msra.mxu0 0.0
        %783 = vmatprep.subr.mxu0 0.0
        %784 = vmatpush1.xpose.msra.mxu0 0.0
        %785 = vmatprep.subr.mxu0 0.0
        %786 = vmatpush1.xpose.msra.mxu0 0.0
        %787 = vmatprep.subr.mxu0 0.0
        %788 = vmatpush1.xpose.msra.mxu0 0.0
        %789 = vmatprep.subr.mxu0 0.0
        %790 = vmatpush1.xpose.msra.mxu0 0.0
        %791 = vmatprep.subr.mxu0 0.0
        %792 = vmatpush1.xpose.msra.mxu0 0.0
        %793 = vmatprep.subr.mxu0 0.0
        %794 = vmatpush1.xpose.msra.mxu0 0.0
        %795 = vmatprep.subr.mxu0 0.0
        %796 = vmatpush1.xpose.msra.mxu0 0.0
        %797 = vmatprep.subr.mxu0 0.0
        %798 = vmatpush1.xpose.msra.mxu0 0.0
        %799 = vmatprep.subr.mxu0 0.0
        %800 = vmatpush1.xpose.msra.mxu0 0.0
        %801 = vmatprep.subr.mxu0 0.0
        %802 = vmatpush1.xpose.msra.mxu0 0.0
        %803 = vmatprep.subr.mxu0 0.0
        %804 = vmatpush1.xpose.msra.mxu0 0.0
        %805 = vmatprep.subr.mxu0 0.0
        %806 = vmatpush1.xpose.msra.mxu0 0.0
        %807 = vmatprep.subr.mxu0 0.0
        %808 = vmatpush1.xpose.msra.mxu0 0.0
        %809 = vmatprep.subr.mxu0 0.0
        %810 = vmatpush1.xpose.msra.mxu0 0.0
        %811 = vmatprep.subr.mxu0 0.0
        %812 = vmatpush1.xpose.msra.mxu0 0.0
        %813 = vmatprep.subr.mxu0 0.0
        %814 = vmatpush1.xpose.msra.mxu0 0.0
        %815 = vmatprep.subr.mxu0 0.0
        %816 = vmatpush1.xpose.msra.mxu0 0.0
        %817 = vmatprep.subr.mxu0 0.0
        %818 = vmatpush1.xpose.msra.mxu0 0.0
        %819 = vmatprep.subr.mxu0 0.0
        %820 = vmatpush1.xpose.msra.mxu0 0.0
        %821 = vmatprep.subr.mxu0 0.0
        %822 = vmatpush1.xpose.msra.mxu0 0.0
        %823 = vmatprep.subr.mxu0 0.0
        %824 = vmatpush1.xpose.msra.mxu0 0.0
        %825 = vmatprep.subr.mxu0 0.0
        %826 = vmatpush1.xpose.msra.mxu0 0.0
        %827 = vmatprep.subr.mxu0 0.0
        %828 = vmatpush1.xpose.msra.mxu0 0.0
        %829 = vmatprep.subr.mxu0 0.0
        %830 = vmatpush1.xpose.msra.mxu0 0.0
        %831 = vmatprep.subr.mxu0 0.0
        %832 = vmatpush1.xpose.msra.mxu0 0.0
        %833 = vmatprep.mubr.f32.mxu0 0.0
        %834 = vmatmul.mubr.f32.gmra.mrb[0].mxu0 %v765
        %v835 = vpop.f32.mrb[0].mxu0
        %v836 = vadd.f32 %v759, %v835
        %v837 = vpop.f32.mrb[0].mxu0
        %838 = vdwg.mxu0
        %v839 = vsel %vm764, %v836, -inf
        %840 = vmax.xlane.f32.xlu0 %v839
        %v841 = vpop.xlane.xlu0 %840
        %v842 = vsub.f32 %v836, %v841
        %v843 = vmul.f32 %v842, 1.442695
        %v844 = vpow.pop %v843
        %v845 = vsel %vm764, %v844, 0.0
        %846 = vadd.xlane.f32.xlu0 %v845
        %v847 = vpop.xlane.xlu0 %846
        %v848 = vrcp.pop %v847
        %v849 = vmul.f32 %v844, %v848
        %850 = vrot.lane.b32.xlu0 %v752, 64
        %v851 = vpop.permute.xlu0 %850
        %v854 = vsel %vm764, %v849, 0
        %856 = vmatprep.subr.mxu0 0.0
        %857 = vmatpush1.msra.mxu0 %v851
        %858 = vmatprep.subr.mxu0 0.0
        %859 = vmatpush1.msra.mxu0 0.0
        %860 = vmatprep.subr.mxu0 0.0
        %861 = vmatpush1.msra.mxu0 0.0
        %862 = vmatprep.subr.mxu0 0.0
        %863 = vmatpush1.msra.mxu0 0.0
        %864 = vmatprep.subr.mxu0 0.0
        %865 = vmatpush1.msra.mxu0 0.0
        %866 = vmatprep.subr.mxu0 0.0
        %867 = vmatpush1.msra.mxu0 0.0
        %868 = vmatprep.subr.mxu0 0.0
        %869 = vmatpush1.msra.mxu0 0.0
        %870 = vmatprep.subr.mxu0 0.0
        %871 = vmatpush1.msra.mxu0 0.0
        %872 = vmatprep.subr.mxu0 0.0
        %873 = vmatpush1.msra.mxu0 0.0
        %874 = vmatprep.subr.mxu0 0.0
        %875 = vmatpush1.msra.mxu0 0.0
        %876 = vmatprep.subr.mxu0 0.0
        %877 = vmatpush1.msra.mxu0 0.0
        %878 = vmatprep.subr.mxu0 0.0
        %879 = vmatpush1.msra.mxu0 0.0
        %880 = vmatprep.subr.mxu0 0.0
        %881 = vmatpush1.msra.mxu0 0.0
        %882 = vmatprep.subr.mxu0 0.0
        %883 = vmatpush1.msra.mxu0 0.0
        %884 = vmatprep.subr.mxu0 0.0
        %885 = vmatpush1.msra.mxu0 0.0
        %886 = vmatprep.subr.mxu0 0.0
        %887 = vmatpush1.msra.mxu0 0.0
        %888 = vmatprep.subr.mxu0 0.0
        %889 = vmatpush1.msra.mxu0 0.0
        %890 = vmatprep.subr.mxu0 0.0
        %891 = vmatpush1.msra.mxu0 0.0
        %892 = vmatprep.subr.mxu0 0.0
        %893 = vmatpush1.msra.mxu0 0.0
        %894 = vmatprep.subr.mxu0 0.0
        %895 = vmatpush1.msra.mxu0 0.0
        %896 = vmatprep.subr.mxu0 0.0
        %897 = vmatpush1.msra.mxu0 0.0
        %898 = vmatprep.subr.mxu0 0.0
        %899 = vmatpush1.msra.mxu0 0.0
        %900 = vmatprep.subr.mxu0 0.0
        %901 = vmatpush1.msra.mxu0 0.0
        %902 = vmatprep.subr.mxu0 0.0
        %903 = vmatpush1.msra.mxu0 0.0
        %904 = vmatprep.subr.mxu0 0.0
        %905 = vmatpush1.msra.mxu0 0.0
        %906 = vmatprep.subr.mxu0 0.0
        %907 = vmatpush1.msra.mxu0 0.0
        %908 = vmatprep.subr.mxu0 0.0
        %909 = vmatpush1.msra.mxu0 0.0
        %910 = vmatprep.subr.mxu0 0.0
        %911 = vmatpush1.msra.mxu0 0.0
        %912 = vmatprep.subr.mxu0 0.0
        %913 = vmatpush1.msra.mxu0 0.0
        %914 = vmatprep.subr.mxu0 0.0
        %915 = vmatpush1.msra.mxu0 0.0
        %916 = vmatprep.subr.mxu0 0.0
        %917 = vmatpush1.msra.mxu0 0.0
        %918 = vmatprep.subr.mxu0 0.0
        %919 = vmatpush1.msra.mxu0 0.0
        %920 = vmatprep.mubr.f32.mxu0 0.0
        %921 = vmatmul.mubr.f32.gmra.mrb[0].mxu0 %v854
        %v922 = vpop.f32.mrb[0].mxu0
        %v923 = vadd.f32 0.0, %v922
        %v924 = vpop.f32.mrb[0].mxu0
        %925 = vdwg.mxu0
        %926 = vrot.lane.b32.xlu0 %v752, 120
        %v927 = vpop.permute.xlu0 %926
        %928 = vrot.lane.b32.xlu0 %v752, 88
        %v929 = vpop.permute.xlu0 %928
        %v930 = vsel %vm764, %v927, 0
        %v932 = vsel %vm764, %v929, 0
        %934 = vmatprep.subr.mxu0 0.0
        %935 = vmatpush1.xpose.msra.mxu0 %v932
        %936 = vmatprep.subr.mxu0 0.0
        %937 = vmatpush1.xpose.msra.mxu0 0.0
        %938 = vmatprep.subr.mxu0 0.0
        %939 = vmatpush1.xpose.msra.mxu0 0.0
        %940 = vmatprep.subr.mxu0 0.0
        %941 = vmatpush1.xpose.msra.mxu0 0.0
        %942 = vmatprep.subr.mxu0 0.0
        %943 = vmatpush1.xpose.msra.mxu0 0.0
        %944 = vmatprep.subr.mxu0 0.0
        %945 = vmatpush1.xpose.msra.mxu0 0.0
        %946 = vmatprep.subr.mxu0 0.0
        %947 = vmatpush1.xpose.msra.mxu0 0.0
        %948 = vmatprep.subr.mxu0 0.0
        %949 = vmatpush1.xpose.msra.mxu0 0.0
        %950 = vmatprep.subr.mxu0 0.0
        %951 = vmatpush1.xpose.msra.mxu0 0.0
        %952 = vmatprep.subr.mxu0 0.0
        %953 = vmatpush1.xpose.msra.mxu0 0.0
        %954 = vmatprep.subr.mxu0 0.0
        %955 = vmatpush1.xpose.msra.mxu0 0.0
        %956 = vmatprep.subr.mxu0 0.0
        %957 = vmatpush1.xpose.msra.mxu0 0.0
        %958 = vmatprep.subr.mxu0 0.0
        %959 = vmatpush1.xpose.msra.mxu0 0.0
        %960 = vmatprep.subr.mxu0 0.0
        %961 = vmatpush1.xpose.msra.mxu0 0.0
        %962 = vmatprep.subr.mxu0 0.0
        %963 = vmatpush1.xpose.msra.mxu0 0.0
        %964 = vmatprep.subr.mxu0 0.0
        %965 = vmatpush1.xpose.msra.mxu0 0.0
        %966 = vmatprep.subr.mxu0 0.0
        %967 = vmatpush1.xpose.msra.mxu0 0.0
        %968 = vmatprep.subr.mxu0 0.0
        %969 = vmatpush1.xpose.msra.mxu0 0.0
        %970 = vmatprep.subr.mxu0 0.0
        %971 = vmatpush1.xpose.msra.mxu0 0.0
        %972 = vmatprep.subr.mxu0 0.0
        %973 = vmatpush1.xpose.msra.mxu0 0.0
        %974 = vmatprep.subr.mxu0 0.0
        %975 = vmatpush1.xpose.msra.mxu0 0.0
        %976 = vmatprep.subr.mxu0 0.0
        %977 = vmatpush1.xpose.msra.mxu0 0.0
        %978 = vmatprep.subr.mxu0 0.0
        %979 = vmatpush1.xpose.msra.mxu0 0.0
        %980 = vmatprep.subr.mxu0 0.0
        %981 = vmatpush1.xpose.msra.mxu0 0.0
        %982 = vmatprep.subr.mxu0 0.0
        %983 = vmatpush1.xpose.msra.mxu0 0.0
        %984 = vmatprep.subr.mxu0 0.0
        %985 = vmatpush1.xpose.msra.mxu0 0.0
        %986 = vmatprep.subr.mxu0 0.0
        %987 = vmatpush1.xpose.msra.mxu0 0.0
        %988 = vmatprep.subr.mxu0 0.0
        %989 = vmatpush1.xpose.msra.mxu0 0.0
        %990 = vmatprep.subr.mxu0 0.0
        %991 = vmatpush1.xpose.msra.mxu0 0.0
        %992 = vmatprep.subr.mxu0 0.0
        %993 = vmatpush1.xpose.msra.mxu0 0.0
        %994 = vmatprep.subr.mxu0 0.0
        %995 = vmatpush1.xpose.msra.mxu0 0.0
        %996 = vmatprep.subr.mxu0 0.0
        %997 = vmatpush1.xpose.msra.mxu0 0.0
        %998 = vmatprep.mubr.f32.mxu0 0.0
        %999 = vmatmul.mubr.f32.gmra.mrb[0].mxu0 %v930
        %v1000 = vpop.f32.mrb[0].mxu0
        %v1001 = vadd.f32 %v759, %v1000
        %v1002 = vpop.f32.mrb[0].mxu0
        %1003 = vdwg.mxu0
        %v1004 = vsel %vm764, %v1001, -inf
        %1005 = vmax.xlane.f32.xlu0 %v1004
        %v1006 = vpop.xlane.xlu0 %1005
        %v1007 = vsub.f32 %v1001, %v1006
        %v1008 = vmul.f32 %v1007, 1.442695
        %v1009 = vpow.pop %v1008
        %v1010 = vsel %vm764, %v1009, 0.0
        %1011 = vadd.xlane.f32.xlu0 %v1010
        %v1012 = vpop.xlane.xlu0 %1011
        %v1013 = vrcp.pop %v1012
        %v1014 = vmul.f32 %v1009, %v1013
        %1015 = vrot.lane.b32.xlu0 %v752, 56
        %v1016 = vpop.permute.xlu0 %1015
        %v1019 = vsel %vm764, %v1014, 0
        %1021 = vmatprep.subr.mxu0 0.0
        %1022 = vmatpush1.msra.mxu0 %v1016
        %1023 = vmatprep.subr.mxu0 0.0
        %1024 = vmatpush1.msra.mxu0 0.0
        %1025 = vmatprep.subr.mxu0 0.0
        %1026 = vmatpush1.msra.mxu0 0.0
        %1027 = vmatprep.subr.mxu0 0.0
        %1028 = vmatpush1.msra.mxu0 0.0
        %1029 = vmatprep.subr.mxu0 0.0
        %1030 = vmatpush1.msra.mxu0 0.0
        %1031 = vmatprep.subr.mxu0 0.0
        %1032 = vmatpush1.msra.mxu0 0.0
        %1033 = vmatprep.subr.mxu0 0.0
        %1034 = vmatpush1.msra.mxu0 0.0
        %1035 = vmatprep.subr.mxu0 0.0
        %1036 = vmatpush1.msra.mxu0 0.0
        %1037 = vmatprep.subr.mxu0 0.0
        %1038 = vmatpush1.msra.mxu0 0.0
        %1039 = vmatprep.subr.mxu0 0.0
        %1040 = vmatpush1.msra.mxu0 0.0
        %1041 = vmatprep.subr.mxu0 0.0
        %1042 = vmatpush1.msra.mxu0 0.0
        %1043 = vmatprep.subr.mxu0 0.0
        %1044 = vmatpush1.msra.mxu0 0.0
        %1045 = vmatprep.subr.mxu0 0.0
        %1046 = vmatpush1.msra.mxu0 0.0
        %1047 = vmatprep.subr.mxu0 0.0
        %1048 = vmatpush1.msra.mxu0 0.0
        %1049 = vmatprep.subr.mxu0 0.0
        %1050 = vmatpush1.msra.mxu0 0.0
        %1051 = vmatprep.subr.mxu0 0.0
        %1052 = vmatpush1.msra.mxu0 0.0
        %1053 = vmatprep.subr.mxu0 0.0
        %1054 = vmatpush1.msra.mxu0 0.0
        %1055 = vmatprep.subr.mxu0 0.0
        %1056 = vmatpush1.msra.mxu0 0.0
        %1057 = vmatprep.subr.mxu0 0.0
        %1058 = vmatpush1.msra.mxu0 0.0
        %1059 = vmatprep.subr.mxu0 0.0
        %1060 = vmatpush1.msra.mxu0 0.0
        %1061 = vmatprep.subr.mxu0 0.0
        %1062 = vmatpush1.msra.mxu0 0.0
        %1063 = vmatprep.subr.mxu0 0.0
        %1064 = vmatpush1.msra.mxu0 0.0
        %1065 = vmatprep.subr.mxu0 0.0
        %1066 = vmatpush1.msra.mxu0 0.0
        %1067 = vmatprep.subr.mxu0 0.0
        %1068 = vmatpush1.msra.mxu0 0.0
        %1069 = vmatprep.subr.mxu0 0.0
        %1070 = vmatpush1.msra.mxu0 0.0
        %1071 = vmatprep.subr.mxu0 0.0
        %1072 = vmatpush1.msra.mxu0 0.0
        %1073 = vmatprep.subr.mxu0 0.0
        %1074 = vmatpush1.msra.mxu0 0.0
        %1075 = vmatprep.subr.mxu0 0.0
        %1076 = vmatpush1.msra.mxu0 0.0
        %1077 = vmatprep.subr.mxu0 0.0
        %1078 = vmatpush1.msra.mxu0 0.0
        %1079 = vmatprep.subr.mxu0 0.0
        %1080 = vmatpush1.msra.mxu0 0.0
        %1081 = vmatprep.subr.mxu0 0.0
        %1082 = vmatpush1.msra.mxu0 0.0
        %1083 = vmatprep.subr.mxu0 0.0
        %1084 = vmatpush1.msra.mxu0 0.0
        %1085 = vmatprep.mubr.f32.mxu0 0.0
        %1086 = vmatmul.mubr.f32.gmra.mrb[0].mxu0 %v1019
        %v1087 = vpop.f32.mrb[0].mxu0
        %v1088 = vadd.f32 0.0, %v1087
        %v1089 = vpop.f32.mrb[0].mxu0
        %1090 = vdwg.mxu0
        %v1092 = vsel %vm764, %v1088, 0
        %1094 = vmatprep.subr.mxu0 0.0
        %1095 = vmatpush1.msra.mxu0 %v653
        %1096 = vmatprep.subr.mxu0 0.0
        %1097 = vmatpush1.msra.mxu0 0.0
        %1098 = vmatprep.subr.mxu0 0.0
        %1099 = vmatpush1.msra.mxu0 0.0
        %1100 = vmatprep.subr.mxu0 0.0
        %1101 = vmatpush1.msra.mxu0 0.0
        %1102 = vmatprep.subr.mxu0 0.0
        %1103 = vmatpush1.msra.mxu0 0.0
        %1104 = vmatprep.subr.mxu0 0.0
        %1105 = vmatpush1.msra.mxu0 0.0
        %1106 = vmatprep.subr.mxu0 0.0
        %1107 = vmatpush1.msra.mxu0 0.0
        %1108 = vmatprep.subr.mxu0 0.0
        %1109 = vmatpush1.msra.mxu0 0.0
        %1110 = vmatprep.subr.mxu0 0.0
        %1111 = vmatpush1.msra.mxu0 0.0
        %1112 = vmatprep.subr.mxu0 0.0
        %1113 = vmatpush1.msra.mxu0 0.0
        %1114 = vmatprep.subr.mxu0 0.0
        %1115 = vmatpush1.msra.mxu0 0.0
        %1116 = vmatprep.subr.mxu0 0.0
        %1117 = vmatpush1.msra.mxu0 0.0
        %1118 = vmatprep.subr.mxu0 0.0
        %1119 = vmatpush1.msra.mxu0 0.0
        %1120 = vmatprep.subr.mxu0 0.0
        %1121 = vmatpush1.msra.mxu0 0.0
        %1122 = vmatprep.subr.mxu0 0.0
        %1123 = vmatpush1.msra.mxu0 0.0
        %1124 = vmatprep.subr.mxu0 0.0
        %1125 = vmatpush1.msra.mxu0 0.0
        %1126 = vmatprep.subr.mxu0 0.0
        %1127 = vmatpush1.msra.mxu0 0.0
        %1128 = vmatprep.subr.mxu0 0.0
        %1129 = vmatpush1.msra.mxu0 0.0
        %1130 = vmatprep.subr.mxu0 0.0
        %1131 = vmatpush1.msra.mxu0 0.0
        %1132 = vmatprep.subr.mxu0 0.0
        %1133 = vmatpush1.msra.mxu0 0.0
        %1134 = vmatprep.subr.mxu0 0.0
        %1135 = vmatpush1.msra.mxu0 0.0
        %1136 = vmatprep.subr.mxu0 0.0
        %1137 = vmatpush1.msra.mxu0 0.0
        %1138 = vmatprep.subr.mxu0 0.0
        %1139 = vmatpush1.msra.mxu0 0.0
        %1140 = vmatprep.subr.mxu0 0.0
        %1141 = vmatpush1.msra.mxu0 0.0
        %1142 = vmatprep.subr.mxu0 0.0
        %1143 = vmatpush1.msra.mxu0 0.0
        %1144 = vmatprep.subr.mxu0 0.0
        %1145 = vmatpush1.msra.mxu0 0.0
        %1146 = vmatprep.subr.mxu0 0.0
        %1147 = vmatpush1.msra.mxu0 0.0
        %1148 = vmatprep.subr.mxu0 0.0
        %1149 = vmatpush1.msra.mxu0 0.0
        %1150 = vmatprep.subr.mxu0 0.0
        %1151 = vmatpush1.msra.mxu0 0.0
        %1152 = vmatprep.subr.mxu0 0.0
        %1153 = vmatpush1.msra.mxu0 0.0
        %1154 = vmatprep.subr.mxu0 0.0
        %1155 = vmatpush1.msra.mxu0 0.0
        %1156 = vmatprep.subr.mxu0 0.0
        %1157 = vmatpush1.msra.mxu0 0.0
        %1158 = vmatprep.mubr.f32.mxu0 0.0
        %1159 = vmatmul.mubr.f32.gmra.mrb[0].mxu0 %v1092
        %v1160 = vpop.f32.mrb[0].mxu0
        %v1161 = vadd.f32 0.0, %v1160
        %v1162 = vpop.f32.mrb[0].mxu0
        %1163 = vdwg.mxu0
        %v1165 = vsel %vm764, %v923, 0
        %1167 = vmatprep.subr.mxu0 0.0
        %1168 = vmatpush1.msra.mxu0 %v652
        %1169 = vmatprep.subr.mxu0 0.0
        %1170 = vmatpush1.msra.mxu0 0.0
        %1171 = vmatprep.subr.mxu0 0.0
        %1172 = vmatpush1.msra.mxu0 0.0
        %1173 = vmatprep.subr.mxu0 0.0
        %1174 = vmatpush1.msra.mxu0 0.0
        %1175 = vmatprep.subr.mxu0 0.0
        %1176 = vmatpush1.msra.mxu0 0.0
        %1177 = vmatprep.subr.mxu0 0.0
        %1178 = vmatpush1.msra.mxu0 0.0
        %1179 = vmatprep.subr.mxu0 0.0
        %1180 = vmatpush1.msra.mxu0 0.0
        %1181 = vmatprep.subr.mxu0 0.0
        %1182 = vmatpush1.msra.mxu0 0.0
        %1183 = vmatprep.subr.mxu0 0.0
        %1184 = vmatpush1.msra.mxu0 0.0
        %1185 = vmatprep.subr.mxu0 0.0
        %1186 = vmatpush1.msra.mxu0 0.0
        %1187 = vmatprep.subr.mxu0 0.0
        %1188 = vmatpush1.msra.mxu0 0.0
        %1189 = vmatprep.subr.mxu0 0.0
        %1190 = vmatpush1.msra.mxu0 0.0
        %1191 = vmatprep.subr.mxu0 0.0
        %1192 = vmatpush1.msra.mxu0 0.0
        %1193 = vmatprep.subr.mxu0 0.0
        %1194 = vmatpush1.msra.mxu0 0.0
        %1195 = vmatprep.subr.mxu0 0.0
        %1196 = vmatpush1.msra.mxu0 0.0
        %1197 = vmatprep.subr.mxu0 0.0
        %1198 = vmatpush1.msra.mxu0 0.0
        %1199 = vmatprep.subr.mxu0 0.0
        %1200 = vmatpush1.msra.mxu0 0.0
        %1201 = vmatprep.subr.mxu0 0.0
        %1202 = vmatpush1.msra.mxu0 0.0
        %1203 = vmatprep.subr.mxu0 0.0
        %1204 = vmatpush1.msra.mxu0 0.0
        %1205 = vmatprep.subr.mxu0 0.0
        %1206 = vmatpush1.msra.mxu0 0.0
        %1207 = vmatprep.subr.mxu0 0.0
        %1208 = vmatpush1.msra.mxu0 0.0
        %1209 = vmatprep.subr.mxu0 0.0
        %1210 = vmatpush1.msra.mxu0 0.0
        %1211 = vmatprep.subr.mxu0 0.0
        %1212 = vmatpush1.msra.mxu0 0.0
        %1213 = vmatprep.subr.mxu0 0.0
        %1214 = vmatpush1.msra.mxu0 0.0
        %1215 = vmatprep.subr.mxu0 0.0
        %1216 = vmatpush1.msra.mxu0 0.0
        %1217 = vmatprep.subr.mxu0 0.0
        %1218 = vmatpush1.msra.mxu0 0.0
        %1219 = vmatprep.subr.mxu0 0.0
        %1220 = vmatpush1.msra.mxu0 0.0
        %1221 = vmatprep.subr.mxu0 0.0
        %1222 = vmatpush1.msra.mxu0 0.0
        %1223 = vmatprep.subr.mxu0 0.0
        %1224 = vmatpush1.msra.mxu0 0.0
        %1225 = vmatprep.subr.mxu0 0.0
        %1226 = vmatpush1.msra.mxu0 0.0
        %1227 = vmatprep.subr.mxu0 0.0
        %1228 = vmatpush1.msra.mxu0 0.0
        %1229 = vmatprep.subr.mxu0 0.0
        %1230 = vmatpush1.msra.mxu0 0.0
        %1231 = vmatprep.mubr.f32.mxu0 0.0
        %1232 = vmatmul.mubr.f32.gmra.mrb[0].mxu0 %v1165
        %v1233 = vpop.f32.mrb[0].mxu0
        %v1234 = vadd.f32 %v1161, %v1233
        %v1235 = vpop.f32.mrb[0].mxu0
        %1236 = vdwg.mxu0
        %1237 = vrot.lane.b32.xlu0 %v752, 112
        %v1238 = vpop.permute.xlu0 %1237
        %1239 = vrot.lane.b32.xlu0 %v752, 80
        %v1240 = vpop.permute.xlu0 %1239
        %v1241 = vsel %vm764, %v1238, 0
        %v1243 = vsel %vm764, %v1240, 0
        %1245 = vmatprep.subr.mxu0 0.0
        %1246 = vmatpush1.xpose.msra.mxu0 %v1243
        %1247 = vmatprep.subr.mxu0 0.0
        %1248 = vmatpush1.xpose.msra.mxu0 0.0
        %1249 = vmatprep.subr.mxu0 0.0
        %1250 = vmatpush1.xpose.msra.mxu0 0.0
        %1251 = vmatprep.subr.mxu0 0.0
        %1252 = vmatpush1.xpose.msra.mxu0 0.0
        %1253 = vmatprep.subr.mxu0 0.0
        %1254 = vmatpush1.xpose.msra.mxu0 0.0
        %1255 = vmatprep.subr.mxu0 0.0
        %1256 = vmatpush1.xpose.msra.mxu0 0.0
        %1257 = vmatprep.subr.mxu0 0.0
        %1258 = vmatpush1.xpose.msra.mxu0 0.0
        %1259 = vmatprep.subr.mxu0 0.0
        %1260 = vmatpush1.xpose.msra.mxu0 0.0
        %1261 = vmatprep.subr.mxu0 0.0
        %1262 = vmatpush1.xpose.msra.mxu0 0.0
        %1263 = vmatprep.subr.mxu0 0.0
        %1264 = vmatpush1.xpose.msra.mxu0 0.0
        %1265 = vmatprep.subr.mxu0 0.0
        %1266 = vmatpush1.xpose.msra.mxu0 0.0
        %1267 = vmatprep.subr.mxu0 0.0
        %1268 = vmatpush1.xpose.msra.mxu0 0.0
        %1269 = vmatprep.subr.mxu0 0.0
        %1270 = vmatpush1.xpose.msra.mxu0 0.0
        %1271 = vmatprep.subr.mxu0 0.0
        %1272 = vmatpush1.xpose.msra.mxu0 0.0
        %1273 = vmatprep.subr.mxu0 0.0
        %1274 = vmatpush1.xpose.msra.mxu0 0.0
        %1275 = vmatprep.subr.mxu0 0.0
        %1276 = vmatpush1.xpose.msra.mxu0 0.0
        %1277 = vmatprep.subr.mxu0 0.0
        %1278 = vmatpush1.xpose.msra.mxu0 0.0
        %1279 = vmatprep.subr.mxu0 0.0
        %1280 = vmatpush1.xpose.msra.mxu0 0.0
        %1281 = vmatprep.subr.mxu0 0.0
        %1282 = vmatpush1.xpose.msra.mxu0 0.0
        %1283 = vmatprep.subr.mxu0 0.0
        %1284 = vmatpush1.xpose.msra.mxu0 0.0
        %1285 = vmatprep.subr.mxu0 0.0
        %1286 = vmatpush1.xpose.msra.mxu0 0.0
        %1287 = vmatprep.subr.mxu0 0.0
        %1288 = vmatpush1.xpose.msra.mxu0 0.0
        %1289 = vmatprep.subr.mxu0 0.0
        %1290 = vmatpush1.xpose.msra.mxu0 0.0
        %1291 = vmatprep.subr.mxu0 0.0
        %1292 = vmatpush1.xpose.msra.mxu0 0.0
        %1293 = vmatprep.subr.mxu0 0.0
        %1294 = vmatpush1.xpose.msra.mxu0 0.0
        %1295 = vmatprep.subr.mxu0 0.0
        %1296 = vmatpush1.xpose.msra.mxu0 0.0
        %1297 = vmatprep.subr.mxu0 0.0
        %1298 = vmatpush1.xpose.msra.mxu0 0.0
        %1299 = vmatprep.subr.mxu0 0.0
        %1300 = vmatpush1.xpose.msra.mxu0 0.0
        %1301 = vmatprep.subr.mxu0 0.0
        %1302 = vmatpush1.xpose.msra.mxu0 0.0
        %1303 = vmatprep.subr.mxu0 0.0
        %1304 = vmatpush1.xpose.msra.mxu0 0.0
        %1305 = vmatprep.subr.mxu0 0.0
        %1306 = vmatpush1.xpose.msra.mxu0 0.0
        %1307 = vmatprep.subr.mxu0 0.0
        %1308 = vmatpush1.xpose.msra.mxu0 0.0
        %1309 = vmatprep.mubr.f32.mxu0 0.0
        %1310 = vmatmul.mubr.f32.gmra.mrb[0].mxu0 %v1241
        %v1311 = vpop.f32.mrb[0].mxu0
        %v1312 = vadd.f32 %v759, %v1311
        %v1313 = vpop.f32.mrb[0].mxu0
        %1314 = vdwg.mxu0
        %v1315 = vsel %vm764, %v1312, -inf
        %1316 = vmax.xlane.f32.xlu0 %v1315
        %v1317 = vpop.xlane.xlu0 %1316
        %v1318 = vsub.f32 %v1312, %v1317
        %v1319 = vmul.f32 %v1318, 1.442695
        %v1320 = vpow.pop %v1319
        %v1321 = vsel %vm764, %v1320, 0.0
        %1322 = vadd.xlane.f32.xlu0 %v1321
        %v1323 = vpop.xlane.xlu0 %1322
        %v1324 = vrcp.pop %v1323
        %v1325 = vmul.f32 %v1320, %v1324
        %1326 = vrot.lane.b32.xlu0 %v752, 48
        %v1327 = vpop.permute.xlu0 %1326
        %v1330 = vsel %vm764, %v1325, 0
        %1332 = vmatprep.subr.mxu0 0.0
        %1333 = vmatpush1.msra.mxu0 %v1327
        %1334 = vmatprep.subr.mxu0 0.0
        %1335 = vmatpush1.msra.mxu0 0.0
        %1336 = vmatprep.subr.mxu0 0.0
        %1337 = vmatpush1.msra.mxu0 0.0
        %1338 = vmatprep.subr.mxu0 0.0
        %1339 = vmatpush1.msra.mxu0 0.0
        %1340 = vmatprep.subr.mxu0 0.0
        %1341 = vmatpush1.msra.mxu0 0.0
        %1342 = vmatprep.subr.mxu0 0.0
        %1343 = vmatpush1.msra.mxu0 0.0
        %1344 = vmatprep.subr.mxu0 0.0
        %1345 = vmatpush1.msra.mxu0 0.0
        %1346 = vmatprep.subr.mxu0 0.0
        %1347 = vmatpush1.msra.mxu0 0.0
        %1348 = vmatprep.subr.mxu0 0.0
        %1349 = vmatpush1.msra.mxu0 0.0
        %1350 = vmatprep.subr.mxu0 0.0
        %1351 = vmatpush1.msra.mxu0 0.0
        %1352 = vmatprep.subr.mxu0 0.0
        %1353 = vmatpush1.msra.mxu0 0.0
        %1354 = vmatprep.subr.mxu0 0.0
        %1355 = vmatpush1.msra.mxu0 0.0
        %1356 = vmatprep.subr.mxu0 0.0
        %1357 = vmatpush1.msra.mxu0 0.0
        %1358 = vmatprep.subr.mxu0 0.0
        %1359 = vmatpush1.msra.mxu0 0.0
        %1360 = vmatprep.subr.mxu0 0.0
        %1361 = vmatpush1.msra.mxu0 0.0
        %1362 = vmatprep.subr.mxu0 0.0
        %1363 = vmatpush1.msra.mxu0 0.0
        %1364 = vmatprep.subr.mxu0 0.0
        %1365 = vmatpush1.msra.mxu0 0.0
        %1366 = vmatprep.subr.mxu0 0.0
        %1367 = vmatpush1.msra.mxu0 0.0
        %1368 = vmatprep.subr.mxu0 0.0
        %1369 = vmatpush1.msra.mxu0 0.0
        %1370 = vmatprep.subr.mxu0 0.0
        %1371 = vmatpush1.msra.mxu0 0.0
        %1372 = vmatprep.subr.mxu0 0.0
        %1373 = vmatpush1.msra.mxu0 0.0
        %1374 = vmatprep.subr.mxu0 0.0
        %1375 = vmatpush1.msra.mxu0 0.0
        %1376 = vmatprep.subr.mxu0 0.0
        %1377 = vmatpush1.msra.mxu0 0.0
        %1378 = vmatprep.subr.mxu0 0.0
        %1379 = vmatpush1.msra.mxu0 0.0
        %1380 = vmatprep.subr.mxu0 0.0
        %1381 = vmatpush1.msra.mxu0 0.0
        %1382 = vmatprep.subr.mxu0 0.0
        %1383 = vmatpush1.msra.mxu0 0.0
        %1384 = vmatprep.subr.mxu0 0.0
        %1385 = vmatpush1.msra.mxu0 0.0
        %1386 = vmatprep.subr.mxu0 0.0
        %1387 = vmatpush1.msra.mxu0 0.0
        %1388 = vmatprep.subr.mxu0 0.0
        %1389 = vmatpush1.msra.mxu0 0.0
        %1390 = vmatprep.subr.mxu0 0.0
        %1391 = vmatpush1.msra.mxu0 0.0
        %1392 = vmatprep.subr.mxu0 0.0
        %1393 = vmatpush1.msra.mxu0 0.0
        %1394 = vmatprep.subr.mxu0 0.0
        %1395 = vmatpush1.msra.mxu0 0.0
        %1396 = vmatprep.mubr.f32.mxu0 0.0
        %1397 = vmatmul.mubr.f32.gmra.mrb[0].mxu0 %v1330
        %v1398 = vpop.f32.mrb[0].mxu0
        %v1399 = vadd.f32 0.0, %v1398
        %v1400 = vpop.f32.mrb[0].mxu0
        %1401 = vdwg.mxu0
        %v1403 = vsel %vm764, %v1399, 0
        %1405 = vmatprep.subr.mxu0 0.0
        %1406 = vmatpush1.msra.mxu0 %v654
        %1407 = vmatprep.subr.mxu0 0.0
        %1408 = vmatpush1.msra.mxu0 0.0
        %1409 = vmatprep.subr.mxu0 0.0
        %1410 = vmatpush1.msra.mxu0 0.0
        %1411 = vmatprep.subr.mxu0 0.0
        %1412 = vmatpush1.msra.mxu0 0.0
        %1413 = vmatprep.subr.mxu0 0.0
        %1414 = vmatpush1.msra.mxu0 0.0
        %1415 = vmatprep.subr.mxu0 0.0
        %1416 = vmatpush1.msra.mxu0 0.0
        %1417 = vmatprep.subr.mxu0 0.0
        %1418 = vmatpush1.msra.mxu0 0.0
        %1419 = vmatprep.subr.mxu0 0.0
        %1420 = vmatpush1.msra.mxu0 0.0
        %1421 = vmatprep.subr.mxu0 0.0
        %1422 = vmatpush1.msra.mxu0 0.0
        %1423 = vmatprep.subr.mxu0 0.0
        %1424 = vmatpush1.msra.mxu0 0.0
        %1425 = vmatprep.subr.mxu0 0.0
        %1426 = vmatpush1.msra.mxu0 0.0
        %1427 = vmatprep.subr.mxu0 0.0
        %1428 = vmatpush1.msra.mxu0 0.0
        %1429 = vmatprep.subr.mxu0 0.0
        %1430 = vmatpush1.msra.mxu0 0.0
        %1431 = vmatprep.subr.mxu0 0.0
        %1432 = vmatpush1.msra.mxu0 0.0
        %1433 = vmatprep.subr.mxu0 0.0
        %1434 = vmatpush1.msra.mxu0 0.0
        %1435 = vmatprep.subr.mxu0 0.0
        %1436 = vmatpush1.msra.mxu0 0.0
        %1437 = vmatprep.subr.mxu0 0.0
        %1438 = vmatpush1.msra.mxu0 0.0
        %1439 = vmatprep.subr.mxu0 0.0
        %1440 = vmatpush1.msra.mxu0 0.0
        %1441 = vmatprep.subr.mxu0 0.0
        %1442 = vmatpush1.msra.mxu0 0.0
        %1443 = vmatprep.subr.mxu0 0.0
        %1444 = vmatpush1.msra.mxu0 0.0
        %1445 = vmatprep.subr.mxu0 0.0
        %1446 = vmatpush1.msra.mxu0 0.0
        %1447 = vmatprep.subr.mxu0 0.0
        %1448 = vmatpush1.msra.mxu0 0.0
        %1449 = vmatprep.subr.mxu0 0.0
        %1450 = vmatpush1.msra.mxu0 0.0
        %1451 = vmatprep.subr.mxu0 0.0
        %1452 = vmatpush1.msra.mxu0 0.0
        %1453 = vmatprep.subr.mxu0 0.0
        %1454 = vmatpush1.msra.mxu0 0.0
        %1455 = vmatprep.subr.mxu0 0.0
        %1456 = vmatpush1.msra.mxu0 0.0
        %1457 = vmatprep.subr.mxu0 0.0
        %1458 = vmatpush1.msra.mxu0 0.0
        %1459 = vmatprep.subr.mxu0 0.0
        %1460 = vmatpush1.msra.mxu0 0.0
        %1461 = vmatprep.subr.mxu0 0.0
        %1462 = vmatpush1.msra.mxu0 0.0
        %1463 = vmatprep.subr.mxu0 0.0
        %1464 = vmatpush1.msra.mxu0 0.0
        %1465 = vmatprep.subr.mxu0 0.0
        %1466 = vmatpush1.msra.mxu0 0.0
        %1467 = vmatprep.subr.mxu0 0.0
        %1468 = vmatpush1.msra.mxu0 0.0
        %1469 = vmatprep.mubr.f32.mxu0 0.0
        %1470 = vmatmul.mubr.f32.gmra.mrb[0].mxu0 %v1403
        %v1471 = vpop.f32.mrb[0].mxu0
        %v1472 = vadd.f32 0.0, %v1471
        %v1473 = vpop.f32.mrb[0].mxu0
        %1474 = vdwg.mxu0
        %v1475 = vadd.f32 %v1234, %v1472
        %1476 = vrot.lane.b32.xlu0 %v752, 104
        %v1477 = vpop.permute.xlu0 %1476
        %1478 = vrot.lane.b32.xlu0 %v752, 72
        %v1479 = vpop.permute.xlu0 %1478
        %v1480 = vsel %vm764, %v1477, 0
        %v1482 = vsel %vm764, %v1479, 0
        %1484 = vmatprep.subr.mxu0 0.0
        %1485 = vmatpush1.xpose.msra.mxu0 %v1482
        %1486 = vmatprep.subr.mxu0 0.0
        %1487 = vmatpush1.xpose.msra.mxu0 0.0
        %1488 = vmatprep.subr.mxu0 0.0
        %1489 = vmatpush1.xpose.msra.mxu0 0.0
        %1490 = vmatprep.subr.mxu0 0.0
        %1491 = vmatpush1.xpose.msra.mxu0 0.0
        %1492 = vmatprep.subr.mxu0 0.0
        %1493 = vmatpush1.xpose.msra.mxu0 0.0
        %1494 = vmatprep.subr.mxu0 0.0
        %1495 = vmatpush1.xpose.msra.mxu0 0.0
        %1496 = vmatprep.subr.mxu0 0.0
        %1497 = vmatpush1.xpose.msra.mxu0 0.0
        %1498 = vmatprep.subr.mxu0 0.0
        %1499 = vmatpush1.xpose.msra.mxu0 0.0
        %1500 = vmatprep.subr.mxu0 0.0
        %1501 = vmatpush1.xpose.msra.mxu0 0.0
        %1502 = vmatprep.subr.mxu0 0.0
        %1503 = vmatpush1.xpose.msra.mxu0 0.0
        %1504 = vmatprep.subr.mxu0 0.0
        %1505 = vmatpush1.xpose.msra.mxu0 0.0
        %1506 = vmatprep.subr.mxu0 0.0
        %1507 = vmatpush1.xpose.msra.mxu0 0.0
        %1508 = vmatprep.subr.mxu0 0.0
        %1509 = vmatpush1.xpose.msra.mxu0 0.0
        %1510 = vmatprep.subr.mxu0 0.0
        %1511 = vmatpush1.xpose.msra.mxu0 0.0
        %1512 = vmatprep.subr.mxu0 0.0
        %1513 = vmatpush1.xpose.msra.mxu0 0.0
        %1514 = vmatprep.subr.mxu0 0.0
        %1515 = vmatpush1.xpose.msra.mxu0 0.0
        %1516 = vmatprep.subr.mxu0 0.0
        %1517 = vmatpush1.xpose.msra.mxu0 0.0
        %1518 = vmatprep.subr.mxu0 0.0
        %1519 = vmatpush1.xpose.msra.mxu0 0.0
        %1520 = vmatprep.subr.mxu0 0.0
        %1521 = vmatpush1.xpose.msra.mxu0 0.0
        %1522 = vmatprep.subr.mxu0 0.0
        %1523 = vmatpush1.xpose.msra.mxu0 0.0
        %1524 = vmatprep.subr.mxu0 0.0
        %1525 = vmatpush1.xpose.msra.mxu0 0.0
        %1526 = vmatprep.subr.mxu0 0.0
        %1527 = vmatpush1.xpose.msra.mxu0 0.0
        %1528 = vmatprep.subr.mxu0 0.0
        %1529 = vmatpush1.xpose.msra.mxu0 0.0
        %1530 = vmatprep.subr.mxu0 0.0
        %1531 = vmatpush1.xpose.msra.mxu0 0.0
        %1532 = vmatprep.subr.mxu0 0.0
        %1533 = vmatpush1.xpose.msra.mxu0 0.0
        %1534 = vmatprep.subr.mxu0 0.0
        %1535 = vmatpush1.xpose.msra.mxu0 0.0
        %1536 = vmatprep.subr.mxu0 0.0
        %1537 = vmatpush1.xpose.msra.mxu0 0.0
        %1538 = vmatprep.subr.mxu0 0.0
        %1539 = vmatpush1.xpose.msra.mxu0 0.0
        %1540 = vmatprep.subr.mxu0 0.0
        %1541 = vmatpush1.xpose.msra.mxu0 0.0
        %1542 = vmatprep.subr.mxu0 0.0
        %1543 = vmatpush1.xpose.msra.mxu0 0.0
        %1544 = vmatprep.subr.mxu0 0.0
        %1545 = vmatpush1.xpose.msra.mxu0 0.0
        %1546 = vmatprep.subr.mxu0 0.0
        %1547 = vmatpush1.xpose.msra.mxu0 0.0
        %1548 = vmatprep.mubr.f32.mxu0 0.0
        %1549 = vmatmul.mubr.f32.gmra.mrb[0].mxu0 %v1480
        %v1550 = vpop.f32.mrb[0].mxu0
        %v1551 = vadd.f32 %v759, %v1550
        %v1552 = vpop.f32.mrb[0].mxu0
        %1553 = vdwg.mxu0
        %v1554 = vsel %vm764, %v1551, -inf
        %1555 = vmax.xlane.f32.xlu0 %v1554
        %v1556 = vpop.xlane.xlu0 %1555
        %v1557 = vsub.f32 %v1551, %v1556
        %v1558 = vmul.f32 %v1557, 1.442695
        %v1559 = vpow.pop %v1558
        %v1560 = vsel %vm764, %v1559, 0.0
        %1561 = vadd.xlane.f32.xlu0 %v1560
        %v1562 = vpop.xlane.xlu0 %1561
        %v1563 = vrcp.pop %v1562
        %v1564 = vmul.f32 %v1559, %v1563
        %1565 = vrot.lane.b32.xlu0 %v752, 40
        %v1566 = vpop.permute.xlu0 %1565
        %v1569 = vsel %vm764, %v1564, 0
        %1571 = vmatprep.subr.mxu0 0.0
        %1572 = vmatpush1.msra.mxu0 %v1566
        %1573 = vmatprep.subr.mxu0 0.0
        %1574 = vmatpush1.msra.mxu0 0.0
        %1575 = vmatprep.subr.mxu0 0.0
        %1576 = vmatpush1.msra.mxu0 0.0
        %1577 = vmatprep.subr.mxu0 0.0
        %1578 = vmatpush1.msra.mxu0 0.0
        %1579 = vmatprep.subr.mxu0 0.0
        %1580 = vmatpush1.msra.mxu0 0.0
        %1581 = vmatprep.subr.mxu0 0.0
        %1582 = vmatpush1.msra.mxu0 0.0
        %1583 = vmatprep.subr.mxu0 0.0
        %1584 = vmatpush1.msra.mxu0 0.0
        %1585 = vmatprep.subr.mxu0 0.0
        %1586 = vmatpush1.msra.mxu0 0.0
        %1587 = vmatprep.subr.mxu0 0.0
        %1588 = vmatpush1.msra.mxu0 0.0
        %1589 = vmatprep.subr.mxu0 0.0
        %1590 = vmatpush1.msra.mxu0 0.0
        %1591 = vmatprep.subr.mxu0 0.0
        %1592 = vmatpush1.msra.mxu0 0.0
        %1593 = vmatprep.subr.mxu0 0.0
        %1594 = vmatpush1.msra.mxu0 0.0
        %1595 = vmatprep.subr.mxu0 0.0
        %1596 = vmatpush1.msra.mxu0 0.0
        %1597 = vmatprep.subr.mxu0 0.0
        %1598 = vmatpush1.msra.mxu0 0.0
        %1599 = vmatprep.subr.mxu0 0.0
        %1600 = vmatpush1.msra.mxu0 0.0
        %1601 = vmatprep.subr.mxu0 0.0
        %1602 = vmatpush1.msra.mxu0 0.0
        %1603 = vmatprep.subr.mxu0 0.0
        %1604 = vmatpush1.msra.mxu0 0.0
        %1605 = vmatprep.subr.mxu0 0.0
        %1606 = vmatpush1.msra.mxu0 0.0
        %1607 = vmatprep.subr.mxu0 0.0
        %1608 = vmatpush1.msra.mxu0 0.0
        %1609 = vmatprep.subr.mxu0 0.0
        %1610 = vmatpush1.msra.mxu0 0.0
        %1611 = vmatprep.subr.mxu0 0.0
        %1612 = vmatpush1.msra.mxu0 0.0
        %1613 = vmatprep.subr.mxu0 0.0
        %1614 = vmatpush1.msra.mxu0 0.0
        %1615 = vmatprep.subr.mxu0 0.0
        %1616 = vmatpush1.msra.mxu0 0.0
        %1617 = vmatprep.subr.mxu0 0.0
        %1618 = vmatpush1.msra.mxu0 0.0
        %1619 = vmatprep.subr.mxu0 0.0
        %1620 = vmatpush1.msra.mxu0 0.0
        %1621 = vmatprep.subr.mxu0 0.0
        %1622 = vmatpush1.msra.mxu0 0.0
        %1623 = vmatprep.subr.mxu0 0.0
        %1624 = vmatpush1.msra.mxu0 0.0
        %1625 = vmatprep.subr.mxu0 0.0
        %1626 = vmatpush1.msra.mxu0 0.0
        %1627 = vmatprep.subr.mxu0 0.0
        %1628 = vmatpush1.msra.mxu0 0.0
        %1629 = vmatprep.subr.mxu0 0.0
        %1630 = vmatpush1.msra.mxu0 0.0
        %1631 = vmatprep.subr.mxu0 0.0
        %1632 = vmatpush1.msra.mxu0 0.0
        %1633 = vmatprep.subr.mxu0 0.0
        %1634 = vmatpush1.msra.mxu0 0.0
        %1635 = vmatprep.mubr.f32.mxu0 0.0
        %1636 = vmatmul.mubr.f32.gmra.mrb[0].mxu0 %v1569
        %v1637 = vpop.f32.mrb[0].mxu0
        %v1638 = vadd.f32 0.0, %v1637
        %v1639 = vpop.f32.mrb[0].mxu0
        %1640 = vdwg.mxu0
        %v1642 = vsel %vm764, %v1638, 0
        %1644 = vmatprep.subr.mxu0 0.0
        %1645 = vmatpush1.msra.mxu0 %v655
        %1646 = vmatprep.subr.mxu0 0.0
        %1647 = vmatpush1.msra.mxu0 0.0
        %1648 = vmatprep.subr.mxu0 0.0
        %1649 = vmatpush1.msra.mxu0 0.0
        %1650 = vmatprep.subr.mxu0 0.0
        %1651 = vmatpush1.msra.mxu0 0.0
        %1652 = vmatprep.subr.mxu0 0.0
        %1653 = vmatpush1.msra.mxu0 0.0
        %1654 = vmatprep.subr.mxu0 0.0
        %1655 = vmatpush1.msra.mxu0 0.0
        %1656 = vmatprep.subr.mxu0 0.0
        %1657 = vmatpush1.msra.mxu0 0.0
        %1658 = vmatprep.subr.mxu0 0.0
        %1659 = vmatpush1.msra.mxu0 0.0
        %1660 = vmatprep.subr.mxu0 0.0
        %1661 = vmatpush1.msra.mxu0 0.0
        %1662 = vmatprep.subr.mxu0 0.0
        %1663 = vmatpush1.msra.mxu0 0.0
        %1664 = vmatprep.subr.mxu0 0.0
        %1665 = vmatpush1.msra.mxu0 0.0
        %1666 = vmatprep.subr.mxu0 0.0
        %1667 = vmatpush1.msra.mxu0 0.0
        %1668 = vmatprep.subr.mxu0 0.0
        %1669 = vmatpush1.msra.mxu0 0.0
        %1670 = vmatprep.subr.mxu0 0.0
        %1671 = vmatpush1.msra.mxu0 0.0
        %1672 = vmatprep.subr.mxu0 0.0
        %1673 = vmatpush1.msra.mxu0 0.0
        %1674 = vmatprep.subr.mxu0 0.0
        %1675 = vmatpush1.msra.mxu0 0.0
        %1676 = vmatprep.subr.mxu0 0.0
        %1677 = vmatpush1.msra.mxu0 0.0
        %1678 = vmatprep.subr.mxu0 0.0
        %1679 = vmatpush1.msra.mxu0 0.0
        %1680 = vmatprep.subr.mxu0 0.0
        %1681 = vmatpush1.msra.mxu0 0.0
        %1682 = vmatprep.subr.mxu0 0.0
        %1683 = vmatpush1.msra.mxu0 0.0
        %1684 = vmatprep.subr.mxu0 0.0
        %1685 = vmatpush1.msra.mxu0 0.0
        %1686 = vmatprep.subr.mxu0 0.0
        %1687 = vmatpush1.msra.mxu0 0.0
        %1688 = vmatprep.subr.mxu0 0.0
        %1689 = vmatpush1.msra.mxu0 0.0
        %1690 = vmatprep.subr.mxu0 0.0
        %1691 = vmatpush1.msra.mxu0 0.0
        %1692 = vmatprep.subr.mxu0 0.0
        %1693 = vmatpush1.msra.mxu0 0.0
        %1694 = vmatprep.subr.mxu0 0.0
        %1695 = vmatpush1.msra.mxu0 0.0
        %1696 = vmatprep.subr.mxu0 0.0
        %1697 = vmatpush1.msra.mxu0 0.0
        %1698 = vmatprep.subr.mxu0 0.0
        %1699 = vmatpush1.msra.mxu0 0.0
        %1700 = vmatprep.subr.mxu0 0.0
        %1701 = vmatpush1.msra.mxu0 0.0
        %1702 = vmatprep.subr.mxu0 0.0
        %1703 = vmatpush1.msra.mxu0 0.0
        %1704 = vmatprep.subr.mxu0 0.0
        %1705 = vmatpush1.msra.mxu0 0.0
        %1706 = vmatprep.subr.mxu0 0.0
        %1707 = vmatpush1.msra.mxu0 0.0
        %1708 = vmatprep.mubr.f32.mxu0 0.0
        %1709 = vmatmul.mubr.f32.gmra.mrb[0].mxu0 %v1642
        %v1710 = vpop.f32.mrb[0].mxu0
        %v1711 = vadd.f32 0.0, %v1710
        %v1712 = vpop.f32.mrb[0].mxu0
        %1713 = vdwg.mxu0
        %v1714 = vadd.f32 %v1475, %v1711
        %v1715 = vlaneseq
        %v1716 = vshrl.u32 %v1715, 7
        %v1717 = vsub.s32 1, %v1716
        %v1718 = vrot.slane %v676, %v1717
        %v1719 = vadd.f32 %v1714, %v1718
        %v1720 = vmax.f32 %v1719, 0.0
        %v1721 = vadd.f32 %v646, %v1720
        %v1722 = vmax.f32 %v1721, 0.0
        %v1723 = vsel %vm681, %v1722, 0.0
        %1724 = vadd.xlane.f32.xlu0 %v1723
        %v1725 = vpop.xlane.xlu0 %1724
        %v1726 = vrcp.pop 32.0
        %v1727 = vmul.f32 %v1725, %v1726
        %v1728 = vsub.f32 %v1722, %v1727
        %v1729 = vmul.f32 %v1728, %v1728
        %v1730 = vsel %vm681, %v1729, 0.0
        %1731 = vadd.xlane.f32.xlu0 %v1730
        %v1732 = vpop.xlane.xlu0 %1731
        %v1733 = vmul.f32 %v1732, %v1726
        %v1734 = vadd.f32 %v1733, 1e-05
        %v1735 = vrsqrt.pop %v1734
        %v1736 = vmul.f32 %v1728, %v1735
        %v1737 = vlaneseq
        %v1738 = vshrl.u32 %v1737, 7
        %v1739 = vsub.s32 2, %v1738
        %v1740 = vrot.slane %v676, %v1739
        %v1741 = vmul.f32 %v1736, %v1740
        %v1742 = vlaneseq
        %v1743 = vshrl.u32 %v1742, 7
        %v1744 = vsub.s32 3, %v1743
        %v1745 = vrot.slane %v676, %v1744
        %v1746 = vadd.f32 %v1741, %v1745
        %v1747 = vlaneseq
        %v1748 = vshrl.u32 %v1747, 7
        %v1749 = vsub.s32 4, %v1748
        %v1750 = vrot.slane %v676, %v1749
        %v1752 = vsel %vm681, %v1746, 0
        %1754 = vmatprep.subr.mxu0 0.0
        %1755 = vmatpush1.msra.mxu0 %v656
        %1756 = vmatprep.subr.mxu0 0.0
        %1757 = vmatpush1.msra.mxu0 %v657
        %1758 = vmatprep.subr.mxu0 0.0
        %1759 = vmatpush1.msra.mxu0 %v658
        %1760 = vmatprep.subr.mxu0 0.0
        %1761 = vmatpush1.msra.mxu0 %v659
        %1762 = vmatprep.subr.mxu0 0.0
        %1763 = vmatpush1.msra.mxu0 0.0
        %1764 = vmatprep.subr.mxu0 0.0
        %1765 = vmatpush1.msra.mxu0 0.0
        %1766 = vmatprep.subr.mxu0 0.0
        %1767 = vmatpush1.msra.mxu0 0.0
        %1768 = vmatprep.subr.mxu0 0.0
        %1769 = vmatpush1.msra.mxu0 0.0
        %1770 = vmatprep.subr.mxu0 0.0
        %1771 = vmatpush1.msra.mxu0 0.0
        %1772 = vmatprep.subr.mxu0 0.0
        %1773 = vmatpush1.msra.mxu0 0.0
        %1774 = vmatprep.subr.mxu0 0.0
        %1775 = vmatpush1.msra.mxu0 0.0
        %1776 = vmatprep.subr.mxu0 0.0
        %1777 = vmatpush1.msra.mxu0 0.0
        %1778 = vmatprep.subr.mxu0 0.0
        %1779 = vmatpush1.msra.mxu0 0.0
        %1780 = vmatprep.subr.mxu0 0.0
        %1781 = vmatpush1.msra.mxu0 0.0
        %1782 = vmatprep.subr.mxu0 0.0
        %1783 = vmatpush1.msra.mxu0 0.0
        %1784 = vmatprep.subr.mxu0 0.0
        %1785 = vmatpush1.msra.mxu0 0.0
        %1786 = vmatprep.subr.mxu0 0.0
        %1787 = vmatpush1.msra.mxu0 0.0
        %1788 = vmatprep.subr.mxu0 0.0
        %1789 = vmatpush1.msra.mxu0 0.0
        %1790 = vmatprep.subr.mxu0 0.0
        %1791 = vmatpush1.msra.mxu0 0.0
        %1792 = vmatprep.subr.mxu0 0.0
        %1793 = vmatpush1.msra.mxu0 0.0
        %1794 = vmatprep.subr.mxu0 0.0
        %1795 = vmatpush1.msra.mxu0 0.0
        %1796 = vmatprep.subr.mxu0 0.0
        %1797 = vmatpush1.msra.mxu0 0.0
        %1798 = vmatprep.subr.mxu0 0.0
        %1799 = vmatpush1.msra.mxu0 0.0
        %1800 = vmatprep.subr.mxu0 0.0
        %1801 = vmatpush1.msra.mxu0 0.0
        %1802 = vmatprep.subr.mxu0 0.0
        %1803 = vmatpush1.msra.mxu0 0.0
        %1804 = vmatprep.subr.mxu0 0.0
        %1805 = vmatpush1.msra.mxu0 0.0
        %1806 = vmatprep.subr.mxu0 0.0
        %1807 = vmatpush1.msra.mxu0 0.0
        %1808 = vmatprep.subr.mxu0 0.0
        %1809 = vmatpush1.msra.mxu0 0.0
        %1810 = vmatprep.subr.mxu0 0.0
        %1811 = vmatpush1.msra.mxu0 0.0
        %1812 = vmatprep.subr.mxu0 0.0
        %1813 = vmatpush1.msra.mxu0 0.0
        %1814 = vmatprep.subr.mxu0 0.0
        %1815 = vmatpush1.msra.mxu0 0.0
        %1816 = vmatprep.subr.mxu0 0.0
        %1817 = vmatpush1.msra.mxu0 0.0
        %1818 = vmatprep.mubr.f32.mxu0 0.0
        %1819 = vmatmul.mubr.f32.gmra.mrb[0].mxu0 %v1752
        %v1820 = vpop.f32.mrb[0].mxu0
        %v1821 = vadd.f32 %v1750, %v1820
        %v1822 = vpop.f32.mrb[0].mxu0
        %1823 = vdwg.mxu0
        %v1824 = vmax.f32 %v1821, 0.0
        %v1825 = vlaneseq
        %v1826 = vshrl.u32 %v1825, 7
        %v1827 = vsub.s32 5, %v1826
        %v1828 = vrot.slane %v676, %v1827
        %1829 = vmatprep.subr.mxu0 0.0
        %1830 = vmatpush1.msra.mxu0 %v660
        %1831 = vmatprep.subr.mxu0 0.0
        %1832 = vmatpush1.msra.mxu0 %v661
        %1833 = vmatprep.subr.mxu0 0.0
        %1834 = vmatpush1.msra.mxu0 %v662
        %1835 = vmatprep.subr.mxu0 0.0
        %1836 = vmatpush1.msra.mxu0 %v663
        %1837 = vmatprep.subr.mxu0 0.0
        %1838 = vmatpush1.msra.mxu0 %v664
        %1839 = vmatprep.subr.mxu0 0.0
        %1840 = vmatpush1.msra.mxu0 %v665
        %1841 = vmatprep.subr.mxu0 0.0
        %1842 = vmatpush1.msra.mxu0 %v666
        %1843 = vmatprep.subr.mxu0 0.0
        %1844 = vmatpush1.msra.mxu0 %v667
        %1845 = vmatprep.subr.mxu0 0.0
        %1846 = vmatpush1.msra.mxu0 %v668
        %1847 = vmatprep.subr.mxu0 0.0
        %1848 = vmatpush1.msra.mxu0 %v669
        %1849 = vmatprep.subr.mxu0 0.0
        %1850 = vmatpush1.msra.mxu0 %v670
        %1851 = vmatprep.subr.mxu0 0.0
        %1852 = vmatpush1.msra.mxu0 %v671
        %1853 = vmatprep.subr.mxu0 0.0
        %1854 = vmatpush1.msra.mxu0 %v672
        %1855 = vmatprep.subr.mxu0 0.0
        %1856 = vmatpush1.msra.mxu0 %v673
        %1857 = vmatprep.subr.mxu0 0.0
        %1858 = vmatpush1.msra.mxu0 %v674
        %1859 = vmatprep.subr.mxu0 0.0
        %1860 = vmatpush1.msra.mxu0 %v675
        %1861 = vmatprep.subr.mxu0 0.0
        %1862 = vmatpush1.msra.mxu0 0.0
        %1863 = vmatprep.subr.mxu0 0.0
        %1864 = vmatpush1.msra.mxu0 0.0
        %1865 = vmatprep.subr.mxu0 0.0
        %1866 = vmatpush1.msra.mxu0 0.0
        %1867 = vmatprep.subr.mxu0 0.0
        %1868 = vmatpush1.msra.mxu0 0.0
        %1869 = vmatprep.subr.mxu0 0.0
        %1870 = vmatpush1.msra.mxu0 0.0
        %1871 = vmatprep.subr.mxu0 0.0
        %1872 = vmatpush1.msra.mxu0 0.0
        %1873 = vmatprep.subr.mxu0 0.0
        %1874 = vmatpush1.msra.mxu0 0.0
        %1875 = vmatprep.subr.mxu0 0.0
        %1876 = vmatpush1.msra.mxu0 0.0
        %1877 = vmatprep.subr.mxu0 0.0
        %1878 = vmatpush1.msra.mxu0 0.0
        %1879 = vmatprep.subr.mxu0 0.0
        %1880 = vmatpush1.msra.mxu0 0.0
        %1881 = vmatprep.subr.mxu0 0.0
        %1882 = vmatpush1.msra.mxu0 0.0
        %1883 = vmatprep.subr.mxu0 0.0
        %1884 = vmatpush1.msra.mxu0 0.0
        %1885 = vmatprep.subr.mxu0 0.0
        %1886 = vmatpush1.msra.mxu0 0.0
        %1887 = vmatprep.subr.mxu0 0.0
        %1888 = vmatpush1.msra.mxu0 0.0
        %1889 = vmatprep.subr.mxu0 0.0
        %1890 = vmatpush1.msra.mxu0 0.0
        %1891 = vmatprep.subr.mxu0 0.0
        %1892 = vmatpush1.msra.mxu0 0.0
        %1893 = vmatprep.mubr.f32.mxu0 0.0
        %1894 = vmatmul.mubr.f32.gmra.mrb[0].mxu0 %v1824
        %v1895 = vpop.f32.mrb[0].mxu0
        %v1896 = vadd.f32 %v1828, %v1895
        %v1897 = vpop.f32.mrb[0].mxu0
        %1898 = vdwg.mxu0
        %v1899 = vadd.f32 %v1746, %v1896
        %v1900 = vmax.f32 %v1899, 0.0
        %v1901 = vsel %vm681, %v1900, 0.0
        %1902 = vadd.xlane.f32.xlu0 %v1901
        %v1903 = vpop.xlane.xlu0 %1902
        %v1904 = vmul.f32 %v1903, %v1726
        %v1905 = vsub.f32 %v1900, %v1904
        %v1906 = vmul.f32 %v1905, %v1905
        %v1907 = vsel %vm681, %v1906, 0.0
        %1908 = vadd.xlane.f32.xlu0 %v1907
        %v1909 = vpop.xlane.xlu0 %1908
        %v1910 = vmul.f32 %v1909, %v1726
        %v1911 = vadd.f32 %v1910, 1e-05
        %v1912 = vrsqrt.pop %v1911
        %v1913 = vmul.f32 %v1905, %v1912
        %v1914 = vlaneseq
        %v1915 = vshrl.u32 %v1914, 7
        %v1916 = vsub.s32 6, %v1915
        %v1917 = vrot.slane %v676, %v1916
        %v1918 = vmul.f32 %v1913, %v1917
        %v1919 = vlaneseq
        %v1920 = vshrl.u32 %v1919, 7
        %v1921 = vsub.s32 7, %v1920
        %v1922 = vrot.slane %v676, %v1921
        %v1923 = vadd.f32 %v1918, %v1922
        %s1924 = scalar_lea.vmem %s4, 32
        %v1925 = vld [vmem:[%s1924] sm:$0xff]
        %v1926 = vld [vmem:[%s1924 + $0x8] sm:$0xff]
        %v1927 = vld [vmem:[%s1924 + $0x10] sm:$0xff]
        %v1928 = vld [vmem:[%s1924 + $0x18] sm:$0xff]
        %s1929 = scalar_lea.vmem %s5, 32
        %v1930 = vld [vmem:[%s1929] sm:$0xff]
        %v1931 = vld [vmem:[%s1929 + $0x8] sm:$0xff]
        %v1932 = vld [vmem:[%s1929 + $0x10] sm:$0xff]
        %v1933 = vld [vmem:[%s1929 + $0x18] sm:$0xff]
        %s1934 = scalar_lea.vmem %s6, 32
        %v1935 = vld [vmem:[%s1934] sm:$0xff]
        %v1936 = vld [vmem:[%s1934 + $0x8] sm:$0xff]
        %v1937 = vld [vmem:[%s1934 + $0x10] sm:$0xff]
        %v1938 = vld [vmem:[%s1934 + $0x18] sm:$0xff]
        %s1939 = scalar_lea.vmem %s7, 128
        %v1940 = vld [vmem:[%s1939] sm:$0xff]
        %v1941 = vld [vmem:[%s1939 + $0x8] sm:$0xff]
        %v1942 = vld [vmem:[%s1939 + $0x10] sm:$0xff]
        %v1943 = vld [vmem:[%s1939 + $0x18] sm:$0xff]
        %v1944 = vld [vmem:[%s1939 + $0x20] sm:$0xff]
        %v1945 = vld [vmem:[%s1939 + $0x28] sm:$0xff]
        %v1946 = vld [vmem:[%s1939 + $0x30] sm:$0xff]
        %v1947 = vld [vmem:[%s1939 + $0x38] sm:$0xff]
        %v1948 = vld [vmem:[%s1939 + $0x40] sm:$0xff]
        %v1949 = vld [vmem:[%s1939 + $0x48] sm:$0xff]
        %v1950 = vld [vmem:[%s1939 + $0x50] sm:$0xff]
        %v1951 = vld [vmem:[%s1939 + $0x58] sm:$0xff]
        %v1952 = vld [vmem:[%s1939 + $0x60] sm:$0xff]
        %v1953 = vld [vmem:[%s1939 + $0x68] sm:$0xff]
        %v1954 = vld [vmem:[%s1939 + $0x70] sm:$0xff]
        %v1955 = vld [vmem:[%s1939 + $0x78] sm:$0xff]
        %s1956 = scalar_lea.vmem %s8, 8
        %v1957 = vld [vmem:[%s1956] sm:$0xff]
        %v1958 = vlaneseq
        %v1959 = vshrl.u32 %v1958, 7
        %v1960 = vsub.s32 0, %v1959
        %v1961 = vrot.slane %v1957, %v1960
        %v1963 = vsel %vm681, %v1923, 0
        %1965 = vmatprep.subr.mxu0 0.0
        %1966 = vmatpush1.msra.mxu0 %v1925
        %1967 = vmatprep.subr.mxu0 0.0
        %1968 = vmatpush1.msra.mxu0 %v1926
        %1969 = vmatprep.subr.mxu0 0.0
        %1970 = vmatpush1.msra.mxu0 %v1927
        %1971 = vmatprep.subr.mxu0 0.0
        %1972 = vmatpush1.msra.mxu0 %v1928
        %1973 = vmatprep.subr.mxu0 0.0
        %1974 = vmatpush1.msra.mxu0 0.0
        %1975 = vmatprep.subr.mxu0 0.0
        %1976 = vmatpush1.msra.mxu0 0.0
        %1977 = vmatprep.subr.mxu0 0.0
        %1978 = vmatpush1.msra.mxu0 0.0
        %1979 = vmatprep.subr.mxu0 0.0
        %1980 = vmatpush1.msra.mxu0 0.0
        %1981 = vmatprep.subr.mxu0 0.0
        %1982 = vmatpush1.msra.mxu0 0.0
        %1983 = vmatprep.subr.mxu0 0.0
        %1984 = vmatpush1.msra.mxu0 0.0
        %1985 = vmatprep.subr.mxu0 0.0
        %1986 = vmatpush1.msra.mxu0 0.0
        %1987 = vmatprep.subr.mxu0 0.0
        %1988 = vmatpush1.msra.mxu0 0.0
        %1989 = vmatprep.subr.mxu0 0.0
        %1990 = vmatpush1.msra.mxu0 0.0
        %1991 = vmatprep.subr.mxu0 0.0
        %1992 = vmatpush1.msra.mxu0 0.0
        %1993 = vmatprep.subr.mxu0 0.0
        %1994 = vmatpush1.msra.mxu0 0.0
        %1995 = vmatprep.subr.mxu0 0.0
        %1996 = vmatpush1.msra.mxu0 0.0
        %1997 = vmatprep.subr.mxu0 0.0
        %1998 = vmatpush1.msra.mxu0 0.0
        %1999 = vmatprep.subr.mxu0 0.0
        %2000 = vmatpush1.msra.mxu0 0.0
        %2001 = vmatprep.subr.mxu0 0.0
        %2002 = vmatpush1.msra.mxu0 0.0
        %2003 = vmatprep.subr.mxu0 0.0
        %2004 = vmatpush1.msra.mxu0 0.0
        %2005 = vmatprep.subr.mxu0 0.0
        %2006 = vmatpush1.msra.mxu0 0.0
        %2007 = vmatprep.subr.mxu0 0.0
        %2008 = vmatpush1.msra.mxu0 0.0
        %2009 = vmatprep.subr.mxu0 0.0
        %2010 = vmatpush1.msra.mxu0 0.0
        %2011 = vmatprep.subr.mxu0 0.0
        %2012 = vmatpush1.msra.mxu0 0.0
        %2013 = vmatprep.subr.mxu0 0.0
        %2014 = vmatpush1.msra.mxu0 0.0
        %2015 = vmatprep.subr.mxu0 0.0
        %2016 = vmatpush1.msra.mxu0 0.0
        %2017 = vmatprep.subr.mxu0 0.0
        %2018 = vmatpush1.msra.mxu0 0.0
        %2019 = vmatprep.subr.mxu0 0.0
        %2020 = vmatpush1.msra.mxu0 0.0
        %2021 = vmatprep.subr.mxu0 0.0
        %2022 = vmatpush1.msra.mxu0 0.0
        %2023 = vmatprep.subr.mxu0 0.0
        %2024 = vmatpush1.msra.mxu0 0.0
        %2025 = vmatprep.subr.mxu0 0.0
        %2026 = vmatpush1.msra.mxu0 0.0
        %2027 = vmatprep.subr.mxu0 0.0
        %2028 = vmatpush1.msra.mxu0 0.0
        %2029 = vmatprep.mubr.f32.mxu0 0.0
        %2030 = vmatmul.mubr.f32.gmra.mrb[0].mxu0 %v1963
        %v2031 = vpop.f32.mrb[0].mxu0
        %v2032 = vadd.f32 %v1961, %v2031
        %v2033 = vpop.f32.mrb[0].mxu0
        %2034 = vdwg.mxu0
        %2036 = vrot.lane.b32.xlu0 %v2032, 96
        %v2037 = vpop.permute.xlu0 %2036
        %v2038 = vsel %vm764, %v2032, 0
        %v2040 = vsel %vm764, %v2037, 0
        %2042 = vmatprep.subr.mxu0 0.0
        %2043 = vmatpush1.xpose.msra.mxu0 %v2040
        %2044 = vmatprep.subr.mxu0 0.0
        %2045 = vmatpush1.xpose.msra.mxu0 0.0
        %2046 = vmatprep.subr.mxu0 0.0
        %2047 = vmatpush1.xpose.msra.mxu0 0.0
        %2048 = vmatprep.subr.mxu0 0.0
        %2049 = vmatpush1.xpose.msra.mxu0 0.0
        %2050 = vmatprep.subr.mxu0 0.0
        %2051 = vmatpush1.xpose.msra.mxu0 0.0
        %2052 = vmatprep.subr.mxu0 0.0
        %2053 = vmatpush1.xpose.msra.mxu0 0.0
        %2054 = vmatprep.subr.mxu0 0.0
        %2055 = vmatpush1.xpose.msra.mxu0 0.0
        %2056 = vmatprep.subr.mxu0 0.0
        %2057 = vmatpush1.xpose.msra.mxu0 0.0
        %2058 = vmatprep.subr.mxu0 0.0
        %2059 = vmatpush1.xpose.msra.mxu0 0.0
        %2060 = vmatprep.subr.mxu0 0.0
        %2061 = vmatpush1.xpose.msra.mxu0 0.0
        %2062 = vmatprep.subr.mxu0 0.0
        %2063 = vmatpush1.xpose.msra.mxu0 0.0
        %2064 = vmatprep.subr.mxu0 0.0
        %2065 = vmatpush1.xpose.msra.mxu0 0.0
        %2066 = vmatprep.subr.mxu0 0.0
        %2067 = vmatpush1.xpose.msra.mxu0 0.0
        %2068 = vmatprep.subr.mxu0 0.0
        %2069 = vmatpush1.xpose.msra.mxu0 0.0
        %2070 = vmatprep.subr.mxu0 0.0
        %2071 = vmatpush1.xpose.msra.mxu0 0.0
        %2072 = vmatprep.subr.mxu0 0.0
        %2073 = vmatpush1.xpose.msra.mxu0 0.0
        %2074 = vmatprep.subr.mxu0 0.0
        %2075 = vmatpush1.xpose.msra.mxu0 0.0
        %2076 = vmatprep.subr.mxu0 0.0
        %2077 = vmatpush1.xpose.msra.mxu0 0.0
        %2078 = vmatprep.subr.mxu0 0.0
        %2079 = vmatpush1.xpose.msra.mxu0 0.0
        %2080 = vmatprep.subr.mxu0 0.0
        %2081 = vmatpush1.xpose.msra.mxu0 0.0
        %2082 = vmatprep.subr.mxu0 0.0
        %2083 = vmatpush1.xpose.msra.mxu0 0.0
        %2084 = vmatprep.subr.mxu0 0.0
        %2085 = vmatpush1.xpose.msra.mxu0 0.0
        %2086 = vmatprep.subr.mxu0 0.0
        %2087 = vmatpush1.xpose.msra.mxu0 0.0
        %2088 = vmatprep.subr.mxu0 0.0
        %2089 = vmatpush1.xpose.msra.mxu0 0.0
        %2090 = vmatprep.subr.mxu0 0.0
        %2091 = vmatpush1.xpose.msra.mxu0 0.0
        %2092 = vmatprep.subr.mxu0 0.0
        %2093 = vmatpush1.xpose.msra.mxu0 0.0
        %2094 = vmatprep.subr.mxu0 0.0
        %2095 = vmatpush1.xpose.msra.mxu0 0.0
        %2096 = vmatprep.subr.mxu0 0.0
        %2097 = vmatpush1.xpose.msra.mxu0 0.0
        %2098 = vmatprep.subr.mxu0 0.0
        %2099 = vmatpush1.xpose.msra.mxu0 0.0
        %2100 = vmatprep.subr.mxu0 0.0
        %2101 = vmatpush1.xpose.msra.mxu0 0.0
        %2102 = vmatprep.subr.mxu0 0.0
        %2103 = vmatpush1.xpose.msra.mxu0 0.0
        %2104 = vmatprep.subr.mxu0 0.0
        %2105 = vmatpush1.xpose.msra.mxu0 0.0
        %2106 = vmatprep.mubr.f32.mxu0 0.0
        %2107 = vmatmul.mubr.f32.gmra.mrb[0].mxu0 %v2038
        %v2108 = vpop.f32.mrb[0].mxu0
        %v2109 = vadd.f32 %v759, %v2108
        %v2110 = vpop.f32.mrb[0].mxu0
        %2111 = vdwg.mxu0
        %v2112 = vsel %vm764, %v2109, -inf
        %2113 = vmax.xlane.f32.xlu0 %v2112
        %v2114 = vpop.xlane.xlu0 %2113
        %v2115 = vsub.f32 %v2109, %v2114
        %v2116 = vmul.f32 %v2115, 1.442695
        %v2117 = vpow.pop %v2116
        %v2118 = vsel %vm764, %v2117, 0.0
        %2119 = vadd.xlane.f32.xlu0 %v2118
        %v2120 = vpop.xlane.xlu0 %2119
        %v2121 = vrcp.pop %v2120
        %v2122 = vmul.f32 %v2117, %v2121
        %2123 = vrot.lane.b32.xlu0 %v2032, 64
        %v2124 = vpop.permute.xlu0 %2123
        %v2127 = vsel %vm764, %v2122, 0
        %2129 = vmatprep.subr.mxu0 0.0
        %2130 = vmatpush1.msra.mxu0 %v2124
        %2131 = vmatprep.subr.mxu0 0.0
        %2132 = vmatpush1.msra.mxu0 0.0
        %2133 = vmatprep.subr.mxu0 0.0
        %2134 = vmatpush1.msra.mxu0 0.0
        %2135 = vmatprep.subr.mxu0 0.0
        %2136 = vmatpush1.msra.mxu0 0.0
        %2137 = vmatprep.subr.mxu0 0.0
        %2138 = vmatpush1.msra.mxu0 0.0
        %2139 = vmatprep.subr.mxu0 0.0
        %2140 = vmatpush1.msra.mxu0 0.0
        %2141 = vmatprep.subr.mxu0 0.0
        %2142 = vmatpush1.msra.mxu0 0.0
        %2143 = vmatprep.subr.mxu0 0.0
        %2144 = vmatpush1.msra.mxu0 0.0
        %2145 = vmatprep.subr.mxu0 0.0
        %2146 = vmatpush1.msra.mxu0 0.0
        %2147 = vmatprep.subr.mxu0 0.0
        %2148 = vmatpush1.msra.mxu0 0.0
        %2149 = vmatprep.subr.mxu0 0.0
        %2150 = vmatpush1.msra.mxu0 0.0
        %2151 = vmatprep.subr.mxu0 0.0
        %2152 = vmatpush1.msra.mxu0 0.0
        %2153 = vmatprep.subr.mxu0 0.0
        %2154 = vmatpush1.msra.mxu0 0.0
        %2155 = vmatprep.subr.mxu0 0.0
        %2156 = vmatpush1.msra.mxu0 0.0
        %2157 = vmatprep.subr.mxu0 0.0
        %2158 = vmatpush1.msra.mxu0 0.0
        %2159 = vmatprep.subr.mxu0 0.0
        %2160 = vmatpush1.msra.mxu0 0.0
        %2161 = vmatprep.subr.mxu0 0.0
        %2162 = vmatpush1.msra.mxu0 0.0
        %2163 = vmatprep.subr.mxu0 0.0
        %2164 = vmatpush1.msra.mxu0 0.0
        %2165 = vmatprep.subr.mxu0 0.0
        %2166 = vmatpush1.msra.mxu0 0.0
        %2167 = vmatprep.subr.mxu0 0.0
        %2168 = vmatpush1.msra.mxu0 0.0
        %2169 = vmatprep.subr.mxu0 0.0
        %2170 = vmatpush1.msra.mxu0 0.0
        %2171 = vmatprep.subr.mxu0 0.0
        %2172 = vmatpush1.msra.mxu0 0.0
        %2173 = vmatprep.subr.mxu0 0.0
        %2174 = vmatpush1.msra.mxu0 0.0
        %2175 = vmatprep.subr.mxu0 0.0
        %2176 = vmatpush1.msra.mxu0 0.0
        %2177 = vmatprep.subr.mxu0 0.0
        %2178 = vmatpush1.msra.mxu0 0.0
        %2179 = vmatprep.subr.mxu0 0.0
        %2180 = vmatpush1.msra.mxu0 0.0
        %2181 = vmatprep.subr.mxu0 0.0
        %2182 = vmatpush1.msra.mxu0 0.0
        %2183 = vmatprep.subr.mxu0 0.0
        %2184 = vmatpush1.msra.mxu0 0.0
        %2185 = vmatprep.subr.mxu0 0.0
        %2186 = vmatpush1.msra.mxu0 0.0
        %2187 = vmatprep.subr.mxu0 0.0
        %2188 = vmatpush1.msra.mxu0 0.0
        %2189 = vmatprep.subr.mxu0 0.0
        %2190 = vmatpush1.msra.mxu0 0.0
        %2191 = vmatprep.subr.mxu0 0.0
        %2192 = vmatpush1.msra.mxu0 0.0
        %2193 = vmatprep.mubr.f32.mxu0 0.0
        %2194 = vmatmul.mubr.f32.gmra.mrb[0].mxu0 %v2127
        %v2195 = vpop.f32.mrb[0].mxu0
        %v2196 = vadd.f32 0.0, %v2195
        %v2197 = vpop.f32.mrb[0].mxu0
        %2198 = vdwg.mxu0
        %2199 = vrot.lane.b32.xlu0 %v2032, 120
        %v2200 = vpop.permute.xlu0 %2199
        %2201 = vrot.lane.b32.xlu0 %v2032, 88
        %v2202 = vpop.permute.xlu0 %2201
        %v2203 = vsel %vm764, %v2200, 0
        %v2205 = vsel %vm764, %v2202, 0
        %2207 = vmatprep.subr.mxu0 0.0
        %2208 = vmatpush1.xpose.msra.mxu0 %v2205
        %2209 = vmatprep.subr.mxu0 0.0
        %2210 = vmatpush1.xpose.msra.mxu0 0.0
        %2211 = vmatprep.subr.mxu0 0.0
        %2212 = vmatpush1.xpose.msra.mxu0 0.0
        %2213 = vmatprep.subr.mxu0 0.0
        %2214 = vmatpush1.xpose.msra.mxu0 0.0
        %2215 = vmatprep.subr.mxu0 0.0
        %2216 = vmatpush1.xpose.msra.mxu0 0.0
        %2217 = vmatprep.subr.mxu0 0.0
        %2218 = vmatpush1.xpose.msra.mxu0 0.0
        %2219 = vmatprep.subr.mxu0 0.0
        %2220 = vmatpush1.xpose.msra.mxu0 0.0
        %2221 = vmatprep.subr.mxu0 0.0
        %2222 = vmatpush1.xpose.msra.mxu0 0.0
        %2223 = vmatprep.subr.mxu0 0.0
        %2224 = vmatpush1.xpose.msra.mxu0 0.0
        %2225 = vmatprep.subr.mxu0 0.0
        %2226 = vmatpush1.xpose.msra.mxu0 0.0
        %2227 = vmatprep.subr.mxu0 0.0
        %2228 = vmatpush1.xpose.msra.mxu0 0.0
        %2229 = vmatprep.subr.mxu0 0.0
        %2230 = vmatpush1.xpose.msra.mxu0 0.0
        %2231 = vmatprep.subr.mxu0 0.0
        %2232 = vmatpush1.xpose.msra.mxu0 0.0
        %2233 = vmatprep.subr.mxu0 0.0
        %2234 = vmatpush1.xpose.msra.mxu0 0.0
        %2235 = vmatprep.subr.mxu0 0.0
        %2236 = vmatpush1.xpose.msra.mxu0 0.0
        %2237 = vmatprep.subr.mxu0 0.0
        %2238 = vmatpush1.xpose.msra.mxu0 0.0
        %2239 = vmatprep.subr.mxu0 0.0
        %2240 = vmatpush1.xpose.msra.mxu0 0.0
        %2241 = vmatprep.subr.mxu0 0.0
        %2242 = vmatpush1.xpose.msra.mxu0 0.0
        %2243 = vmatprep.subr.mxu0 0.0
        %2244 = vmatpush1.xpose.msra.mxu0 0.0
        %2245 = vmatprep.subr.mxu0 0.0
        %2246 = vmatpush1.xpose.msra.mxu0 0.0
        %2247 = vmatprep.subr.mxu0 0.0
        %2248 = vmatpush1.xpose.msra.mxu0 0.0
        %2249 = vmatprep.subr.mxu0 0.0
        %2250 = vmatpush1.xpose.msra.mxu0 0.0
        %2251 = vmatprep.subr.mxu0 0.0
        %2252 = vmatpush1.xpose.msra.mxu0 0.0
        %2253 = vmatprep.subr.mxu0 0.0
        %2254 = vmatpush1.xpose.msra.mxu0 0.0
        %2255 = vmatprep.subr.mxu0 0.0
        %2256 = vmatpush1.xpose.msra.mxu0 0.0
        %2257 = vmatprep.subr.mxu0 0.0
        %2258 = vmatpush1.xpose.msra.mxu0 0.0
        %2259 = vmatprep.subr.mxu0 0.0
        %2260 = vmatpush1.xpose.msra.mxu0 0.0
        %2261 = vmatprep.subr.mxu0 0.0
        %2262 = vmatpush1.xpose.msra.mxu0 0.0
        %2263 = vmatprep.subr.mxu0 0.0
        %2264 = vmatpush1.xpose.msra.mxu0 0.0
        %2265 = vmatprep.subr.mxu0 0.0
        %2266 = vmatpush1.xpose.msra.mxu0 0.0
        %2267 = vmatprep.subr.mxu0 0.0
        %2268 = vmatpush1.xpose.msra.mxu0 0.0
        %2269 = vmatprep.subr.mxu0 0.0
        %2270 = vmatpush1.xpose.msra.mxu0 0.0
        %2271 = vmatprep.mubr.f32.mxu0 0.0
        %2272 = vmatmul.mubr.f32.gmra.mrb[0].mxu0 %v2203
        %v2273 = vpop.f32.mrb[0].mxu0
        %v2274 = vadd.f32 %v759, %v2273
        %v2275 = vpop.f32.mrb[0].mxu0
        %2276 = vdwg.mxu0
        %v2277 = vsel %vm764, %v2274, -inf
        %2278 = vmax.xlane.f32.xlu0 %v2277
        %v2279 = vpop.xlane.xlu0 %2278
        %v2280 = vsub.f32 %v2274, %v2279
        %v2281 = vmul.f32 %v2280, 1.442695
        %v2282 = vpow.pop %v2281
        %v2283 = vsel %vm764, %v2282, 0.0
        %2284 = vadd.xlane.f32.xlu0 %v2283
        %v2285 = vpop.xlane.xlu0 %2284
        %v2286 = vrcp.pop %v2285
        %v2287 = vmul.f32 %v2282, %v2286
        %2288 = vrot.lane.b32.xlu0 %v2032, 56
        %v2289 = vpop.permute.xlu0 %2288
        %v2292 = vsel %vm764, %v2287, 0
        %2294 = vmatprep.subr.mxu0 0.0
        %2295 = vmatpush1.msra.mxu0 %v2289
        %2296 = vmatprep.subr.mxu0 0.0
        %2297 = vmatpush1.msra.mxu0 0.0
        %2298 = vmatprep.subr.mxu0 0.0
        %2299 = vmatpush1.msra.mxu0 0.0
        %2300 = vmatprep.subr.mxu0 0.0
        %2301 = vmatpush1.msra.mxu0 0.0
        %2302 = vmatprep.subr.mxu0 0.0
        %2303 = vmatpush1.msra.mxu0 0.0
        %2304 = vmatprep.subr.mxu0 0.0
        %2305 = vmatpush1.msra.mxu0 0.0
        %2306 = vmatprep.subr.mxu0 0.0
        %2307 = vmatpush1.msra.mxu0 0.0
        %2308 = vmatprep.subr.mxu0 0.0
        %2309 = vmatpush1.msra.mxu0 0.0
        %2310 = vmatprep.subr.mxu0 0.0
        %2311 = vmatpush1.msra.mxu0 0.0
        %2312 = vmatprep.subr.mxu0 0.0
        %2313 = vmatpush1.msra.mxu0 0.0
        %2314 = vmatprep.subr.mxu0 0.0
        %2315 = vmatpush1.msra.mxu0 0.0
        %2316 = vmatprep.subr.mxu0 0.0
        %2317 = vmatpush1.msra.mxu0 0.0
        %2318 = vmatprep.subr.mxu0 0.0
        %2319 = vmatpush1.msra.mxu0 0.0
        %2320 = vmatprep.subr.mxu0 0.0
        %2321 = vmatpush1.msra.mxu0 0.0
        %2322 = vmatprep.subr.mxu0 0.0
        %2323 = vmatpush1.msra.mxu0 0.0
        %2324 = vmatprep.subr.mxu0 0.0
        %2325 = vmatpush1.msra.mxu0 0.0
        %2326 = vmatprep.subr.mxu0 0.0
        %2327 = vmatpush1.msra.mxu0 0.0
        %2328 = vmatprep.subr.mxu0 0.0
        %2329 = vmatpush1.msra.mxu0 0.0
        %2330 = vmatprep.subr.mxu0 0.0
        %2331 = vmatpush1.msra.mxu0 0.0
        %2332 = vmatprep.subr.mxu0 0.0
        %2333 = vmatpush1.msra.mxu0 0.0
        %2334 = vmatprep.subr.mxu0 0.0
        %2335 = vmatpush1.msra.mxu0 0.0
        %2336 = vmatprep.subr.mxu0 0.0
        %2337 = vmatpush1.msra.mxu0 0.0
        %2338 = vmatprep.subr.mxu0 0.0
        %2339 = vmatpush1.msra.mxu0 0.0
        %2340 = vmatprep.subr.mxu0 0.0
        %2341 = vmatpush1.msra.mxu0 0.0
        %2342 = vmatprep.subr.mxu0 0.0
        %2343 = vmatpush1.msra.mxu0 0.0
        %2344 = vmatprep.subr.mxu0 0.0
        %2345 = vmatpush1.msra.mxu0 0.0
        %2346 = vmatprep.subr.mxu0 0.0
        %2347 = vmatpush1.msra.mxu0 0.0
        %2348 = vmatprep.subr.mxu0 0.0
        %2349 = vmatpush1.msra.mxu0 0.0
        %2350 = vmatprep.subr.mxu0 0.0
        %2351 = vmatpush1.msra.mxu0 0.0
        %2352 = vmatprep.subr.mxu0 0.0
        %2353 = vmatpush1.msra.mxu0 0.0
        %2354 = vmatprep.subr.mxu0 0.0
        %2355 = vmatpush1.msra.mxu0 0.0
        %2356 = vmatprep.subr.mxu0 0.0
        %2357 = vmatpush1.msra.mxu0 0.0
        %2358 = vmatprep.mubr.f32.mxu0 0.0
        %2359 = vmatmul.mubr.f32.gmra.mrb[0].mxu0 %v2292
        %v2360 = vpop.f32.mrb[0].mxu0
        %v2361 = vadd.f32 0.0, %v2360
        %v2362 = vpop.f32.mrb[0].mxu0
        %2363 = vdwg.mxu0
        %v2365 = vsel %vm764, %v2361, 0
        %2367 = vmatprep.subr.mxu0 0.0
        %2368 = vmatpush1.msra.mxu0 %v1931
        %2369 = vmatprep.subr.mxu0 0.0
        %2370 = vmatpush1.msra.mxu0 0.0
        %2371 = vmatprep.subr.mxu0 0.0
        %2372 = vmatpush1.msra.mxu0 0.0
        %2373 = vmatprep.subr.mxu0 0.0
        %2374 = vmatpush1.msra.mxu0 0.0
        %2375 = vmatprep.subr.mxu0 0.0
        %2376 = vmatpush1.msra.mxu0 0.0
        %2377 = vmatprep.subr.mxu0 0.0
        %2378 = vmatpush1.msra.mxu0 0.0
        %2379 = vmatprep.subr.mxu0 0.0
        %2380 = vmatpush1.msra.mxu0 0.0
        %2381 = vmatprep.subr.mxu0 0.0
        %2382 = vmatpush1.msra.mxu0 0.0
        %2383 = vmatprep.subr.mxu0 0.0
        %2384 = vmatpush1.msra.mxu0 0.0
        %2385 = vmatprep.subr.mxu0 0.0
        %2386 = vmatpush1.msra.mxu0 0.0
        %2387 = vmatprep.subr.mxu0 0.0
        %2388 = vmatpush1.msra.mxu0 0.0
        %2389 = vmatprep.subr.mxu0 0.0
        %2390 = vmatpush1.msra.mxu0 0.0
        %2391 = vmatprep.subr.mxu0 0.0
        %2392 = vmatpush1.msra.mxu0 0.0
        %2393 = vmatprep.subr.mxu0 0.0
        %2394 = vmatpush1.msra.mxu0 0.0
        %2395 = vmatprep.subr.mxu0 0.0
        %2396 = vmatpush1.msra.mxu0 0.0
        %2397 = vmatprep.subr.mxu0 0.0
        %2398 = vmatpush1.msra.mxu0 0.0
        %2399 = vmatprep.subr.mxu0 0.0
        %2400 = vmatpush1.msra.mxu0 0.0
        %2401 = vmatprep.subr.mxu0 0.0
        %2402 = vmatpush1.msra.mxu0 0.0
        %2403 = vmatprep.subr.mxu0 0.0
        %2404 = vmatpush1.msra.mxu0 0.0
        %2405 = vmatprep.subr.mxu0 0.0
        %2406 = vmatpush1.msra.mxu0 0.0
        %2407 = vmatprep.subr.mxu0 0.0
        %2408 = vmatpush1.msra.mxu0 0.0
        %2409 = vmatprep.subr.mxu0 0.0
        %2410 = vmatpush1.msra.mxu0 0.0
        %2411 = vmatprep.subr.mxu0 0.0
        %2412 = vmatpush1.msra.mxu0 0.0
        %2413 = vmatprep.subr.mxu0 0.0
        %2414 = vmatpush1.msra.mxu0 0.0
        %2415 = vmatprep.subr.mxu0 0.0
        %2416 = vmatpush1.msra.mxu0 0.0
        %2417 = vmatprep.subr.mxu0 0.0
        %2418 = vmatpush1.msra.mxu0 0.0
        %2419 = vmatprep.subr.mxu0 0.0
        %2420 = vmatpush1.msra.mxu0 0.0
        %2421 = vmatprep.subr.mxu0 0.0
        %2422 = vmatpush1.msra.mxu0 0.0
        %2423 = vmatprep.subr.mxu0 0.0
        %2424 = vmatpush1.msra.mxu0 0.0
        %2425 = vmatprep.subr.mxu0 0.0
        %2426 = vmatpush1.msra.mxu0 0.0
        %2427 = vmatprep.subr.mxu0 0.0
        %2428 = vmatpush1.msra.mxu0 0.0
        %2429 = vmatprep.subr.mxu0 0.0
        %2430 = vmatpush1.msra.mxu0 0.0
        %2431 = vmatprep.mubr.f32.mxu0 0.0
        %2432 = vmatmul.mubr.f32.gmra.mrb[0].mxu0 %v2365
        %v2433 = vpop.f32.mrb[0].mxu0
        %v2434 = vadd.f32 0.0, %v2433
        %v2435 = vpop.f32.mrb[0].mxu0
        %2436 = vdwg.mxu0
        %v2438 = vsel %vm764, %v2196, 0
        %2440 = vmatprep.subr.mxu0 0.0
        %2441 = vmatpush1.msra.mxu0 %v1930
        %2442 = vmatprep.subr.mxu0 0.0
        %2443 = vmatpush1.msra.mxu0 0.0
        %2444 = vmatprep.subr.mxu0 0.0
        %2445 = vmatpush1.msra.mxu0 0.0
        %2446 = vmatprep.subr.mxu0 0.0
        %2447 = vmatpush1.msra.mxu0 0.0
        %2448 = vmatprep.subr.mxu0 0.0
        %2449 = vmatpush1.msra.mxu0 0.0
        %2450 = vmatprep.subr.mxu0 0.0
        %2451 = vmatpush1.msra.mxu0 0.0
        %2452 = vmatprep.subr.mxu0 0.0
        %2453 = vmatpush1.msra.mxu0 0.0
        %2454 = vmatprep.subr.mxu0 0.0
        %2455 = vmatpush1.msra.mxu0 0.0
        %2456 = vmatprep.subr.mxu0 0.0
        %2457 = vmatpush1.msra.mxu0 0.0
        %2458 = vmatprep.subr.mxu0 0.0
        %2459 = vmatpush1.msra.mxu0 0.0
        %2460 = vmatprep.subr.mxu0 0.0
        %2461 = vmatpush1.msra.mxu0 0.0
        %2462 = vmatprep.subr.mxu0 0.0
        %2463 = vmatpush1.msra.mxu0 0.0
        %2464 = vmatprep.subr.mxu0 0.0
        %2465 = vmatpush1.msra.mxu0 0.0
        %2466 = vmatprep.subr.mxu0 0.0
        %2467 = vmatpush1.msra.mxu0 0.0
        %2468 = vmatprep.subr.mxu0 0.0
        %2469 = vmatpush1.msra.mxu0 0.0
        %2470 = vmatprep.subr.mxu0 0.0
        %2471 = vmatpush1.msra.mxu0 0.0
        %2472 = vmatprep.subr.mxu0 0.0
        %2473 = vmatpush1.msra.mxu0 0.0
        %2474 = vmatprep.subr.mxu0 0.0
        %2475 = vmatpush1.msra.mxu0 0.0
        %2476 = vmatprep.subr.mxu0 0.0
        %2477 = vmatpush1.msra.mxu0 0.0
        %2478 = vmatprep.subr.mxu0 0.0
        %2479 = vmatpush1.msra.mxu0 0.0
        %2480 = vmatprep.subr.mxu0 0.0
        %2481 = vmatpush1.msra.mxu0 0.0
        %2482 = vmatprep.subr.mxu0 0.0
        %2483 = vmatpush1.msra.mxu0 0.0
        %2484 = vmatprep.subr.mxu0 0.0
        %2485 = vmatpush1.msra.mxu0 0.0
        %2486 = vmatprep.subr.mxu0 0.0
        %2487 = vmatpush1.msra.mxu0 0.0
        %2488 = vmatprep.subr.mxu0 0.0
        %2489 = vmatpush1.msra.mxu0 0.0
        %2490 = vmatprep.subr.mxu0 0.0
        %2491 = vmatpush1.msra.mxu0 0.0
        %2492 = vmatprep.subr.mxu0 0.0
        %2493 = vmatpush1.msra.mxu0 0.0
        %2494 = vmatprep.subr.mxu0 0.0
        %2495 = vmatpush1.msra.mxu0 0.0
        %2496 = vmatprep.subr.mxu0 0.0
        %2497 = vmatpush1.msra.mxu0 0.0
        %2498 = vmatprep.subr.mxu0 0.0
        %2499 = vmatpush1.msra.mxu0 0.0
        %2500 = vmatprep.subr.mxu0 0.0
        %2501 = vmatpush1.msra.mxu0 0.0
        %2502 = vmatprep.subr.mxu0 0.0
        %2503 = vmatpush1.msra.mxu0 0.0
        %2504 = vmatprep.mubr.f32.mxu0 0.0
        %2505 = vmatmul.mubr.f32.gmra.mrb[0].mxu0 %v2438
        %v2506 = vpop.f32.mrb[0].mxu0
        %v2507 = vadd.f32 %v2434, %v2506
        %v2508 = vpop.f32.mrb[0].mxu0
        %2509 = vdwg.mxu0
        %2510 = vrot.lane.b32.xlu0 %v2032, 112
        %v2511 = vpop.permute.xlu0 %2510
        %2512 = vrot.lane.b32.xlu0 %v2032, 80
        %v2513 = vpop.permute.xlu0 %2512
        %v2514 = vsel %vm764, %v2511, 0
        %v2516 = vsel %vm764, %v2513, 0
        %2518 = vmatprep.subr.mxu0 0.0
        %2519 = vmatpush1.xpose.msra.mxu0 %v2516
        %2520 = vmatprep.subr.mxu0 0.0
        %2521 = vmatpush1.xpose.msra.mxu0 0.0
        %2522 = vmatprep.subr.mxu0 0.0
        %2523 = vmatpush1.xpose.msra.mxu0 0.0
        %2524 = vmatprep.subr.mxu0 0.0
        %2525 = vmatpush1.xpose.msra.mxu0 0.0
        %2526 = vmatprep.subr.mxu0 0.0
        %2527 = vmatpush1.xpose.msra.mxu0 0.0
        %2528 = vmatprep.subr.mxu0 0.0
        %2529 = vmatpush1.xpose.msra.mxu0 0.0
        %2530 = vmatprep.subr.mxu0 0.0
        %2531 = vmatpush1.xpose.msra.mxu0 0.0
        %2532 = vmatprep.subr.mxu0 0.0
        %2533 = vmatpush1.xpose.msra.mxu0 0.0
        %2534 = vmatprep.subr.mxu0 0.0
        %2535 = vmatpush1.xpose.msra.mxu0 0.0
        %2536 = vmatprep.subr.mxu0 0.0
        %2537 = vmatpush1.xpose.msra.mxu0 0.0
        %2538 = vmatprep.subr.mxu0 0.0
        %2539 = vmatpush1.xpose.msra.mxu0 0.0
        %2540 = vmatprep.subr.mxu0 0.0
        %2541 = vmatpush1.xpose.msra.mxu0 0.0
        %2542 = vmatprep.subr.mxu0 0.0
        %2543 = vmatpush1.xpose.msra.mxu0 0.0
        %2544 = vmatprep.subr.mxu0 0.0
        %2545 = vmatpush1.xpose.msra.mxu0 0.0
        %2546 = vmatprep.subr.mxu0 0.0
        %2547 = vmatpush1.xpose.msra.mxu0 0.0
        %2548 = vmatprep.subr.mxu0 0.0
        %2549 = vmatpush1.xpose.msra.mxu0 0.0
        %2550 = vmatprep.subr.mxu0 0.0
        %2551 = vmatpush1.xpose.msra.mxu0 0.0
        %2552 = vmatprep.subr.mxu0 0.0
        %2553 = vmatpush1.xpose.msra.mxu0 0.0
        %2554 = vmatprep.subr.mxu0 0.0
        %2555 = vmatpush1.xpose.msra.mxu0 0.0
        %2556 = vmatprep.subr.mxu0 0.0
        %2557 = vmatpush1.xpose.msra.mxu0 0.0
        %2558 = vmatprep.subr.mxu0 0.0
        %2559 = vmatpush1.xpose.msra.mxu0 0.0
        %2560 = vmatprep.subr.mxu0 0.0
        %2561 = vmatpush1.xpose.msra.mxu0 0.0
        %2562 = vmatprep.subr.mxu0 0.0
        %2563 = vmatpush1.xpose.msra.mxu0 0.0
        %2564 = vmatprep.subr.mxu0 0.0
        %2565 = vmatpush1.xpose.msra.mxu0 0.0
        %2566 = vmatprep.subr.mxu0 0.0
        %2567 = vmatpush1.xpose.msra.mxu0 0.0
        %2568 = vmatprep.subr.mxu0 0.0
        %2569 = vmatpush1.xpose.msra.mxu0 0.0
        %2570 = vmatprep.subr.mxu0 0.0
        %2571 = vmatpush1.xpose.msra.mxu0 0.0
        %2572 = vmatprep.subr.mxu0 0.0
        %2573 = vmatpush1.xpose.msra.mxu0 0.0
        %2574 = vmatprep.subr.mxu0 0.0
        %2575 = vmatpush1.xpose.msra.mxu0 0.0
        %2576 = vmatprep.subr.mxu0 0.0
        %2577 = vmatpush1.xpose.msra.mxu0 0.0
        %2578 = vmatprep.subr.mxu0 0.0
        %2579 = vmatpush1.xpose.msra.mxu0 0.0
        %2580 = vmatprep.subr.mxu0 0.0
        %2581 = vmatpush1.xpose.msra.mxu0 0.0
        %2582 = vmatprep.mubr.f32.mxu0 0.0
        %2583 = vmatmul.mubr.f32.gmra.mrb[0].mxu0 %v2514
        %v2584 = vpop.f32.mrb[0].mxu0
        %v2585 = vadd.f32 %v759, %v2584
        %v2586 = vpop.f32.mrb[0].mxu0
        %2587 = vdwg.mxu0
        %v2588 = vsel %vm764, %v2585, -inf
        %2589 = vmax.xlane.f32.xlu0 %v2588
        %v2590 = vpop.xlane.xlu0 %2589
        %v2591 = vsub.f32 %v2585, %v2590
        %v2592 = vmul.f32 %v2591, 1.442695
        %v2593 = vpow.pop %v2592
        %v2594 = vsel %vm764, %v2593, 0.0
        %2595 = vadd.xlane.f32.xlu0 %v2594
        %v2596 = vpop.xlane.xlu0 %2595
        %v2597 = vrcp.pop %v2596
        %v2598 = vmul.f32 %v2593, %v2597
        %2599 = vrot.lane.b32.xlu0 %v2032, 48
        %v2600 = vpop.permute.xlu0 %2599
        %v2603 = vsel %vm764, %v2598, 0
        %2605 = vmatprep.subr.mxu0 0.0
        %2606 = vmatpush1.msra.mxu0 %v2600
        %2607 = vmatprep.subr.mxu0 0.0
        %2608 = vmatpush1.msra.mxu0 0.0
        %2609 = vmatprep.subr.mxu0 0.0
        %2610 = vmatpush1.msra.mxu0 0.0
        %2611 = vmatprep.subr.mxu0 0.0
        %2612 = vmatpush1.msra.mxu0 0.0
        %2613 = vmatprep.subr.mxu0 0.0
        %2614 = vmatpush1.msra.mxu0 0.0
        %2615 = vmatprep.subr.mxu0 0.0
        %2616 = vmatpush1.msra.mxu0 0.0
        %2617 = vmatprep.subr.mxu0 0.0
        %2618 = vmatpush1.msra.mxu0 0.0
        %2619 = vmatprep.subr.mxu0 0.0
        %2620 = vmatpush1.msra.mxu0 0.0
        %2621 = vmatprep.subr.mxu0 0.0
        %2622 = vmatpush1.msra.mxu0 0.0
        %2623 = vmatprep.subr.mxu0 0.0
        %2624 = vmatpush1.msra.mxu0 0.0
        %2625 = vmatprep.subr.mxu0 0.0
        %2626 = vmatpush1.msra.mxu0 0.0
        %2627 = vmatprep.subr.mxu0 0.0
        %2628 = vmatpush1.msra.mxu0 0.0
        %2629 = vmatprep.subr.mxu0 0.0
        %2630 = vmatpush1.msra.mxu0 0.0
        %2631 = vmatprep.subr.mxu0 0.0
        %2632 = vmatpush1.msra.mxu0 0.0
        %2633 = vmatprep.subr.mxu0 0.0
        %2634 = vmatpush1.msra.mxu0 0.0
        %2635 = vmatprep.subr.mxu0 0.0
        %2636 = vmatpush1.msra.mxu0 0.0
        %2637 = vmatprep.subr.mxu0 0.0
        %2638 = vmatpush1.msra.mxu0 0.0
        %2639 = vmatprep.subr.mxu0 0.0
        %2640 = vmatpush1.msra.mxu0 0.0
        %2641 = vmatprep.subr.mxu0 0.0
        %2642 = vmatpush1.msra.mxu0 0.0
        %2643 = vmatprep.subr.mxu0 0.0
        %2644 = vmatpush1.msra.mxu0 0.0
        %2645 = vmatprep.subr.mxu0 0.0
        %2646 = vmatpush1.msra.mxu0 0.0
        %2647 = vmatprep.subr.mxu0 0.0
        %2648 = vmatpush1.msra.mxu0 0.0
        %2649 = vmatprep.subr.mxu0 0.0
        %2650 = vmatpush1.msra.mxu0 0.0
        %2651 = vmatprep.subr.mxu0 0.0
        %2652 = vmatpush1.msra.mxu0 0.0
        %2653 = vmatprep.subr.mxu0 0.0
        %2654 = vmatpush1.msra.mxu0 0.0
        %2655 = vmatprep.subr.mxu0 0.0
        %2656 = vmatpush1.msra.mxu0 0.0
        %2657 = vmatprep.subr.mxu0 0.0
        %2658 = vmatpush1.msra.mxu0 0.0
        %2659 = vmatprep.subr.mxu0 0.0
        %2660 = vmatpush1.msra.mxu0 0.0
        %2661 = vmatprep.subr.mxu0 0.0
        %2662 = vmatpush1.msra.mxu0 0.0
        %2663 = vmatprep.subr.mxu0 0.0
        %2664 = vmatpush1.msra.mxu0 0.0
        %2665 = vmatprep.subr.mxu0 0.0
        %2666 = vmatpush1.msra.mxu0 0.0
        %2667 = vmatprep.subr.mxu0 0.0
        %2668 = vmatpush1.msra.mxu0 0.0
        %2669 = vmatprep.mubr.f32.mxu0 0.0
        %2670 = vmatmul.mubr.f32.gmra.mrb[0].mxu0 %v2603
        %v2671 = vpop.f32.mrb[0].mxu0
        %v2672 = vadd.f32 0.0, %v2671
        %v2673 = vpop.f32.mrb[0].mxu0
        %2674 = vdwg.mxu0
        %v2676 = vsel %vm764, %v2672, 0
        %2678 = vmatprep.subr.mxu0 0.0
        %2679 = vmatpush1.msra.mxu0 %v1932
        %2680 = vmatprep.subr.mxu0 0.0
        %2681 = vmatpush1.msra.mxu0 0.0
        %2682 = vmatprep.subr.mxu0 0.0
        %2683 = vmatpush1.msra.mxu0 0.0
        %2684 = vmatprep.subr.mxu0 0.0
        %2685 = vmatpush1.msra.mxu0 0.0
        %2686 = vmatprep.subr.mxu0 0.0
        %2687 = vmatpush1.msra.mxu0 0.0
        %2688 = vmatprep.subr.mxu0 0.0
        %2689 = vmatpush1.msra.mxu0 0.0
        %2690 = vmatprep.subr.mxu0 0.0
        %2691 = vmatpush1.msra.mxu0 0.0
        %2692 = vmatprep.subr.mxu0 0.0
        %2693 = vmatpush1.msra.mxu0 0.0
        %2694 = vmatprep.subr.mxu0 0.0
        %2695 = vmatpush1.msra.mxu0 0.0
        %2696 = vmatprep.subr.mxu0 0.0
        %2697 = vmatpush1.msra.mxu0 0.0
        %2698 = vmatprep.subr.mxu0 0.0
        %2699 = vmatpush1.msra.mxu0 0.0
        %2700 = vmatprep.subr.mxu0 0.0
        %2701 = vmatpush1.msra.mxu0 0.0
        %2702 = vmatprep.subr.mxu0 0.0
        %2703 = vmatpush1.msra.mxu0 0.0
        %2704 = vmatprep.subr.mxu0 0.0
        %2705 = vmatpush1.msra.mxu0 0.0
        %2706 = vmatprep.subr.mxu0 0.0
        %2707 = vmatpush1.msra.mxu0 0.0
        %2708 = vmatprep.subr.mxu0 0.0
        %2709 = vmatpush1.msra.mxu0 0.0
        %2710 = vmatprep.subr.mxu0 0.0
        %2711 = vmatpush1.msra.mxu0 0.0
        %2712 = vmatprep.subr.mxu0 0.0
        %2713 = vmatpush1.msra.mxu0 0.0
        %2714 = vmatprep.subr.mxu0 0.0
        %2715 = vmatpush1.msra.mxu0 0.0
        %2716 = vmatprep.subr.mxu0 0.0
        %2717 = vmatpush1.msra.mxu0 0.0
        %2718 = vmatprep.subr.mxu0 0.0
        %2719 = vmatpush1.msra.mxu0 0.0
        %2720 = vmatprep.subr.mxu0 0.0
        %2721 = vmatpush1.msra.mxu0 0.0
        %2722 = vmatprep.subr.mxu0 0.0
        %2723 = vmatpush1.msra.mxu0 0.0
        %2724 = vmatprep.subr.mxu0 0.0
        %2725 = vmatpush1.msra.mxu0 0.0
        %2726 = vmatprep.subr.mxu0 0.0
        %2727 = vmatpush1.msra.mxu0 0.0
        %2728 = vmatprep.subr.mxu0 0.0
        %2729 = vmatpush1.msra.mxu0 0.0
        %2730 = vmatprep.subr.mxu0 0.0
        %2731 = vmatpush1.msra.mxu0 0.0
        %2732 = vmatprep.subr.mxu0 0.0
        %2733 = vmatpush1.msra.mxu0 0.0
        %2734 = vmatprep.subr.mxu0 0.0
        %2735 = vmatpush1.msra.mxu0 0.0
        %2736 = vmatprep.subr.mxu0 0.0
        %2737 = vmatpush1.msra.mxu0 0.0
        %2738 = vmatprep.subr.mxu0 0.0
        %2739 = vmatpush1.msra.mxu0 0.0
        %2740 = vmatprep.subr.mxu0 0.0
        %2741 = vmatpush1.msra.mxu0 0.0
        %2742 = vmatprep.mubr.f32.mxu0 0.0
        %2743 = vmatmul.mubr.f32.gmra.mrb[0].mxu0 %v2676
        %v2744 = vpop.f32.mrb[0].mxu0
        %v2745 = vadd.f32 0.0, %v2744
        %v2746 = vpop.f32.mrb[0].mxu0
        %2747 = vdwg.mxu0
        %v2748 = vadd.f32 %v2507, %v2745
        %2749 = vrot.lane.b32.xlu0 %v2032, 104
        %v2750 = vpop.permute.xlu0 %2749
        %2751 = vrot.lane.b32.xlu0 %v2032, 72
        %v2752 = vpop.permute.xlu0 %2751
        %v2753 = vsel %vm764, %v2750, 0
        %v2755 = vsel %vm764, %v2752, 0
        %2757 = vmatprep.subr.mxu0 0.0
        %2758 = vmatpush1.xpose.msra.mxu0 %v2755
        %2759 = vmatprep.subr.mxu0 0.0
        %2760 = vmatpush1.xpose.msra.mxu0 0.0
        %2761 = vmatprep.subr.mxu0 0.0
        %2762 = vmatpush1.xpose.msra.mxu0 0.0
        %2763 = vmatprep.subr.mxu0 0.0
        %2764 = vmatpush1.xpose.msra.mxu0 0.0
        %2765 = vmatprep.subr.mxu0 0.0
        %2766 = vmatpush1.xpose.msra.mxu0 0.0
        %2767 = vmatprep.subr.mxu0 0.0
        %2768 = vmatpush1.xpose.msra.mxu0 0.0
        %2769 = vmatprep.subr.mxu0 0.0
        %2770 = vmatpush1.xpose.msra.mxu0 0.0
        %2771 = vmatprep.subr.mxu0 0.0
        %2772 = vmatpush1.xpose.msra.mxu0 0.0
        %2773 = vmatprep.subr.mxu0 0.0
        %2774 = vmatpush1.xpose.msra.mxu0 0.0
        %2775 = vmatprep.subr.mxu0 0.0
        %2776 = vmatpush1.xpose.msra.mxu0 0.0
        %2777 = vmatprep.subr.mxu0 0.0
        %2778 = vmatpush1.xpose.msra.mxu0 0.0
        %2779 = vmatprep.subr.mxu0 0.0
        %2780 = vmatpush1.xpose.msra.mxu0 0.0
        %2781 = vmatprep.subr.mxu0 0.0
        %2782 = vmatpush1.xpose.msra.mxu0 0.0
        %2783 = vmatprep.subr.mxu0 0.0
        %2784 = vmatpush1.xpose.msra.mxu0 0.0
        %2785 = vmatprep.subr.mxu0 0.0
        %2786 = vmatpush1.xpose.msra.mxu0 0.0
        %2787 = vmatprep.subr.mxu0 0.0
        %2788 = vmatpush1.xpose.msra.mxu0 0.0
        %2789 = vmatprep.subr.mxu0 0.0
        %2790 = vmatpush1.xpose.msra.mxu0 0.0
        %2791 = vmatprep.subr.mxu0 0.0
        %2792 = vmatpush1.xpose.msra.mxu0 0.0
        %2793 = vmatprep.subr.mxu0 0.0
        %2794 = vmatpush1.xpose.msra.mxu0 0.0
        %2795 = vmatprep.subr.mxu0 0.0
        %2796 = vmatpush1.xpose.msra.mxu0 0.0
        %2797 = vmatprep.subr.mxu0 0.0
        %2798 = vmatpush1.xpose.msra.mxu0 0.0
        %2799 = vmatprep.subr.mxu0 0.0
        %2800 = vmatpush1.xpose.msra.mxu0 0.0
        %2801 = vmatprep.subr.mxu0 0.0
        %2802 = vmatpush1.xpose.msra.mxu0 0.0
        %2803 = vmatprep.subr.mxu0 0.0
        %2804 = vmatpush1.xpose.msra.mxu0 0.0
        %2805 = vmatprep.subr.mxu0 0.0
        %2806 = vmatpush1.xpose.msra.mxu0 0.0
        %2807 = vmatprep.subr.mxu0 0.0
        %2808 = vmatpush1.xpose.msra.mxu0 0.0
        %2809 = vmatprep.subr.mxu0 0.0
        %2810 = vmatpush1.xpose.msra.mxu0 0.0
        %2811 = vmatprep.subr.mxu0 0.0
        %2812 = vmatpush1.xpose.msra.mxu0 0.0
        %2813 = vmatprep.subr.mxu0 0.0
        %2814 = vmatpush1.xpose.msra.mxu0 0.0
        %2815 = vmatprep.subr.mxu0 0.0
        %2816 = vmatpush1.xpose.msra.mxu0 0.0
        %2817 = vmatprep.subr.mxu0 0.0
        %2818 = vmatpush1.xpose.msra.mxu0 0.0
        %2819 = vmatprep.subr.mxu0 0.0
        %2820 = vmatpush1.xpose.msra.mxu0 0.0
        %2821 = vmatprep.mubr.f32.mxu0 0.0
        %2822 = vmatmul.mubr.f32.gmra.mrb[0].mxu0 %v2753
        %v2823 = vpop.f32.mrb[0].mxu0
        %v2824 = vadd.f32 %v759, %v2823
        %v2825 = vpop.f32.mrb[0].mxu0
        %2826 = vdwg.mxu0
        %v2827 = vsel %vm764, %v2824, -inf
        %2828 = vmax.xlane.f32.xlu0 %v2827
        %v2829 = vpop.xlane.xlu0 %2828
        %v2830 = vsub.f32 %v2824, %v2829
        %v2831 = vmul.f32 %v2830, 1.442695
        %v2832 = vpow.pop %v2831
        %v2833 = vsel %vm764, %v2832, 0.0
        %2834 = vadd.xlane.f32.xlu0 %v2833
        %v2835 = vpop.xlane.xlu0 %2834
        %v2836 = vrcp.pop %v2835
        %v2837 = vmul.f32 %v2832, %v2836
        %2838 = vrot.lane.b32.xlu0 %v2032, 40
        %v2839 = vpop.permute.xlu0 %2838
        %v2842 = vsel %vm764, %v2837, 0
        %2844 = vmatprep.subr.mxu0 0.0
        %2845 = vmatpush1.msra.mxu0 %v2839
        %2846 = vmatprep.subr.mxu0 0.0
        %2847 = vmatpush1.msra.mxu0 0.0
        %2848 = vmatprep.subr.mxu0 0.0
        %2849 = vmatpush1.msra.mxu0 0.0
        %2850 = vmatprep.subr.mxu0 0.0
        %2851 = vmatpush1.msra.mxu0 0.0
        %2852 = vmatprep.subr.mxu0 0.0
        %2853 = vmatpush1.msra.mxu0 0.0
        %2854 = vmatprep.subr.mxu0 0.0
        %2855 = vmatpush1.msra.mxu0 0.0
        %2856 = vmatprep.subr.mxu0 0.0
        %2857 = vmatpush1.msra.mxu0 0.0
        %2858 = vmatprep.subr.mxu0 0.0
        %2859 = vmatpush1.msra.mxu0 0.0
        %2860 = vmatprep.subr.mxu0 0.0
        %2861 = vmatpush1.msra.mxu0 0.0
        %2862 = vmatprep.subr.mxu0 0.0
        %2863 = vmatpush1.msra.mxu0 0.0
        %2864 = vmatprep.subr.mxu0 0.0
        %2865 = vmatpush1.msra.mxu0 0.0
        %2866 = vmatprep.subr.mxu0 0.0
        %2867 = vmatpush1.msra.mxu0 0.0
        %2868 = vmatprep.subr.mxu0 0.0
        %2869 = vmatpush1.msra.mxu0 0.0
        %2870 = vmatprep.subr.mxu0 0.0
        %2871 = vmatpush1.msra.mxu0 0.0
        %2872 = vmatprep.subr.mxu0 0.0
        %2873 = vmatpush1.msra.mxu0 0.0
        %2874 = vmatprep.subr.mxu0 0.0
        %2875 = vmatpush1.msra.mxu0 0.0
        %2876 = vmatprep.subr.mxu0 0.0
        %2877 = vmatpush1.msra.mxu0 0.0
        %2878 = vmatprep.subr.mxu0 0.0
        %2879 = vmatpush1.msra.mxu0 0.0
        %2880 = vmatprep.subr.mxu0 0.0
        %2881 = vmatpush1.msra.mxu0 0.0
        %2882 = vmatprep.subr.mxu0 0.0
        %2883 = vmatpush1.msra.mxu0 0.0
        %2884 = vmatprep.subr.mxu0 0.0
        %2885 = vmatpush1.msra.mxu0 0.0
        %2886 = vmatprep.subr.mxu0 0.0
        %2887 = vmatpush1.msra.mxu0 0.0
        %2888 = vmatprep.subr.mxu0 0.0
        %2889 = vmatpush1.msra.mxu0 0.0
        %2890 = vmatprep.subr.mxu0 0.0
        %2891 = vmatpush1.msra.mxu0 0.0
        %2892 = vmatprep.subr.mxu0 0.0
        %2893 = vmatpush1.msra.mxu0 0.0
        %2894 = vmatprep.subr.mxu0 0.0
        %2895 = vmatpush1.msra.mxu0 0.0
        %2896 = vmatprep.subr.mxu0 0.0
        %2897 = vmatpush1.msra.mxu0 0.0
        %2898 = vmatprep.subr.mxu0 0.0
        %2899 = vmatpush1.msra.mxu0 0.0
        %2900 = vmatprep.subr.mxu0 0.0
        %2901 = vmatpush1.msra.mxu0 0.0
        %2902 = vmatprep.subr.mxu0 0.0
        %2903 = vmatpush1.msra.mxu0 0.0
        %2904 = vmatprep.subr.mxu0 0.0
        %2905 = vmatpush1.msra.mxu0 0.0
        %2906 = vmatprep.subr.mxu0 0.0
        %2907 = vmatpush1.msra.mxu0 0.0
        %2908 = vmatprep.mubr.f32.mxu0 0.0
        %2909 = vmatmul.mubr.f32.gmra.mrb[0].mxu0 %v2842
        %v2910 = vpop.f32.mrb[0].mxu0
        %v2911 = vadd.f32 0.0, %v2910
        %v2912 = vpop.f32.mrb[0].mxu0
        %2913 = vdwg.mxu0
        %v2915 = vsel %vm764, %v2911, 0
        %2917 = vmatprep.subr.mxu0 0.0
        %2918 = vmatpush1.msra.mxu0 %v1933
        %2919 = vmatprep.subr.mxu0 0.0
        %2920 = vmatpush1.msra.mxu0 0.0
        %2921 = vmatprep.subr.mxu0 0.0
        %2922 = vmatpush1.msra.mxu0 0.0
        %2923 = vmatprep.subr.mxu0 0.0
        %2924 = vmatpush1.msra.mxu0 0.0
        %2925 = vmatprep.subr.mxu0 0.0
        %2926 = vmatpush1.msra.mxu0 0.0
        %2927 = vmatprep.subr.mxu0 0.0
        %2928 = vmatpush1.msra.mxu0 0.0
        %2929 = vmatprep.subr.mxu0 0.0
        %2930 = vmatpush1.msra.mxu0 0.0
        %2931 = vmatprep.subr.mxu0 0.0
        %2932 = vmatpush1.msra.mxu0 0.0
        %2933 = vmatprep.subr.mxu0 0.0
        %2934 = vmatpush1.msra.mxu0 0.0
        %2935 = vmatprep.subr.mxu0 0.0
        %2936 = vmatpush1.msra.mxu0 0.0
        %2937 = vmatprep.subr.mxu0 0.0
        %2938 = vmatpush1.msra.mxu0 0.0
        %2939 = vmatprep.subr.mxu0 0.0
        %2940 = vmatpush1.msra.mxu0 0.0
        %2941 = vmatprep.subr.mxu0 0.0
        %2942 = vmatpush1.msra.mxu0 0.0
        %2943 = vmatprep.subr.mxu0 0.0
        %2944 = vmatpush1.msra.mxu0 0.0
        %2945 = vmatprep.subr.mxu0 0.0
        %2946 = vmatpush1.msra.mxu0 0.0
        %2947 = vmatprep.subr.mxu0 0.0
        %2948 = vmatpush1.msra.mxu0 0.0
        %2949 = vmatprep.subr.mxu0 0.0
        %2950 = vmatpush1.msra.mxu0 0.0
        %2951 = vmatprep.subr.mxu0 0.0
        %2952 = vmatpush1.msra.mxu0 0.0
        %2953 = vmatprep.subr.mxu0 0.0
        %2954 = vmatpush1.msra.mxu0 0.0
        %2955 = vmatprep.subr.mxu0 0.0
        %2956 = vmatpush1.msra.mxu0 0.0
        %2957 = vmatprep.subr.mxu0 0.0
        %2958 = vmatpush1.msra.mxu0 0.0
        %2959 = vmatprep.subr.mxu0 0.0
        %2960 = vmatpush1.msra.mxu0 0.0
        %2961 = vmatprep.subr.mxu0 0.0
        %2962 = vmatpush1.msra.mxu0 0.0
        %2963 = vmatprep.subr.mxu0 0.0
        %2964 = vmatpush1.msra.mxu0 0.0
        %2965 = vmatprep.subr.mxu0 0.0
        %2966 = vmatpush1.msra.mxu0 0.0
        %2967 = vmatprep.subr.mxu0 0.0
        %2968 = vmatpush1.msra.mxu0 0.0
        %2969 = vmatprep.subr.mxu0 0.0
        %2970 = vmatpush1.msra.mxu0 0.0
        %2971 = vmatprep.subr.mxu0 0.0
        %2972 = vmatpush1.msra.mxu0 0.0
        %2973 = vmatprep.subr.mxu0 0.0
        %2974 = vmatpush1.msra.mxu0 0.0
        %2975 = vmatprep.subr.mxu0 0.0
        %2976 = vmatpush1.msra.mxu0 0.0
        %2977 = vmatprep.subr.mxu0 0.0
        %2978 = vmatpush1.msra.mxu0 0.0
        %2979 = vmatprep.subr.mxu0 0.0
        %2980 = vmatpush1.msra.mxu0 0.0
        %2981 = vmatprep.mubr.f32.mxu0 0.0
        %2982 = vmatmul.mubr.f32.gmra.mrb[0].mxu0 %v2915
        %v2983 = vpop.f32.mrb[0].mxu0
        %v2984 = vadd.f32 0.0, %v2983
        %v2985 = vpop.f32.mrb[0].mxu0
        %2986 = vdwg.mxu0
        %v2987 = vadd.f32 %v2748, %v2984
        %v2988 = vlaneseq
        %v2989 = vshrl.u32 %v2988, 7
        %v2990 = vsub.s32 1, %v2989
        %v2991 = vrot.slane %v1957, %v2990
        %v2992 = vadd.f32 %v2987, %v2991
        %v2993 = vmax.f32 %v2992, 0.0
        %v2994 = vadd.f32 %v1923, %v2993
        %v2995 = vmax.f32 %v2994, 0.0
        %v2996 = vsel %vm681, %v2995, 0.0
        %2997 = vadd.xlane.f32.xlu0 %v2996
        %v2998 = vpop.xlane.xlu0 %2997
        %v2999 = vmul.f32 %v2998, %v1726
        %v3000 = vsub.f32 %v2995, %v2999
        %v3001 = vmul.f32 %v3000, %v3000
        %v3002 = vsel %vm681, %v3001, 0.0
        %3003 = vadd.xlane.f32.xlu0 %v3002
        %v3004 = vpop.xlane.xlu0 %3003
        %v3005 = vmul.f32 %v3004, %v1726
        %v3006 = vadd.f32 %v3005, 1e-05
        %v3007 = vrsqrt.pop %v3006
        %v3008 = vmul.f32 %v3000, %v3007
        %v3009 = vlaneseq
        %v3010 = vshrl.u32 %v3009, 7
        %v3011 = vsub.s32 2, %v3010
        %v3012 = vrot.slane %v1957, %v3011
        %v3013 = vmul.f32 %v3008, %v3012
        %v3014 = vlaneseq
        %v3015 = vshrl.u32 %v3014, 7
        %v3016 = vsub.s32 3, %v3015
        %v3017 = vrot.slane %v1957, %v3016
        %v3018 = vadd.f32 %v3013, %v3017
        %v3019 = vlaneseq
        %v3020 = vshrl.u32 %v3019, 7
        %v3021 = vsub.s32 4, %v3020
        %v3022 = vrot.slane %v1957, %v3021
        %v3024 = vsel %vm681, %v3018, 0
        %3026 = vmatprep.subr.mxu0 0.0
        %3027 = vmatpush1.msra.mxu0 %v1935
        %3028 = vmatprep.subr.mxu0 0.0
        %3029 = vmatpush1.msra.mxu0 %v1936
        %3030 = vmatprep.subr.mxu0 0.0
        %3031 = vmatpush1.msra.mxu0 %v1937
        %3032 = vmatprep.subr.mxu0 0.0
        %3033 = vmatpush1.msra.mxu0 %v1938
        %3034 = vmatprep.subr.mxu0 0.0
        %3035 = vmatpush1.msra.mxu0 0.0
        %3036 = vmatprep.subr.mxu0 0.0
        %3037 = vmatpush1.msra.mxu0 0.0
        %3038 = vmatprep.subr.mxu0 0.0
        %3039 = vmatpush1.msra.mxu0 0.0
        %3040 = vmatprep.subr.mxu0 0.0
        %3041 = vmatpush1.msra.mxu0 0.0
        %3042 = vmatprep.subr.mxu0 0.0
        %3043 = vmatpush1.msra.mxu0 0.0
        %3044 = vmatprep.subr.mxu0 0.0
        %3045 = vmatpush1.msra.mxu0 0.0
        %3046 = vmatprep.subr.mxu0 0.0
        %3047 = vmatpush1.msra.mxu0 0.0
        %3048 = vmatprep.subr.mxu0 0.0
        %3049 = vmatpush1.msra.mxu0 0.0
        %3050 = vmatprep.subr.mxu0 0.0
        %3051 = vmatpush1.msra.mxu0 0.0
        %3052 = vmatprep.subr.mxu0 0.0
        %3053 = vmatpush1.msra.mxu0 0.0
        %3054 = vmatprep.subr.mxu0 0.0
        %3055 = vmatpush1.msra.mxu0 0.0
        %3056 = vmatprep.subr.mxu0 0.0
        %3057 = vmatpush1.msra.mxu0 0.0
        %3058 = vmatprep.subr.mxu0 0.0
        %3059 = vmatpush1.msra.mxu0 0.0
        %3060 = vmatprep.subr.mxu0 0.0
        %3061 = vmatpush1.msra.mxu0 0.0
        %3062 = vmatprep.subr.mxu0 0.0
        %3063 = vmatpush1.msra.mxu0 0.0
        %3064 = vmatprep.subr.mxu0 0.0
        %3065 = vmatpush1.msra.mxu0 0.0
        %3066 = vmatprep.subr.mxu0 0.0
        %3067 = vmatpush1.msra.mxu0 0.0
        %3068 = vmatprep.subr.mxu0 0.0
        %3069 = vmatpush1.msra.mxu0 0.0
        %3070 = vmatprep.subr.mxu0 0.0
        %3071 = vmatpush1.msra.mxu0 0.0
        %3072 = vmatprep.subr.mxu0 0.0
        %3073 = vmatpush1.msra.mxu0 0.0
        %3074 = vmatprep.subr.mxu0 0.0
        %3075 = vmatpush1.msra.mxu0 0.0
        %3076 = vmatprep.subr.mxu0 0.0
        %3077 = vmatpush1.msra.mxu0 0.0
        %3078 = vmatprep.subr.mxu0 0.0
        %3079 = vmatpush1.msra.mxu0 0.0
        %3080 = vmatprep.subr.mxu0 0.0
        %3081 = vmatpush1.msra.mxu0 0.0
        %3082 = vmatprep.subr.mxu0 0.0
        %3083 = vmatpush1.msra.mxu0 0.0
        %3084 = vmatprep.subr.mxu0 0.0
        %3085 = vmatpush1.msra.mxu0 0.0
        %3086 = vmatprep.subr.mxu0 0.0
        %3087 = vmatpush1.msra.mxu0 0.0
        %3088 = vmatprep.subr.mxu0 0.0
        %3089 = vmatpush1.msra.mxu0 0.0
        %3090 = vmatprep.mubr.f32.mxu0 0.0
        %3091 = vmatmul.mubr.f32.gmra.mrb[0].mxu0 %v3024
        %v3092 = vpop.f32.mrb[0].mxu0
        %v3093 = vadd.f32 %v3022, %v3092
        %v3094 = vpop.f32.mrb[0].mxu0
        %3095 = vdwg.mxu0
        %v3096 = vmax.f32 %v3093, 0.0
        %v3097 = vlaneseq
        %v3098 = vshrl.u32 %v3097, 7
        %v3099 = vsub.s32 5, %v3098
        %v3100 = vrot.slane %v1957, %v3099
        %3101 = vmatprep.subr.mxu0 0.0
        %3102 = vmatpush1.msra.mxu0 %v1940
        %3103 = vmatprep.subr.mxu0 0.0
        %3104 = vmatpush1.msra.mxu0 %v1941
        %3105 = vmatprep.subr.mxu0 0.0
        %3106 = vmatpush1.msra.mxu0 %v1942
        %3107 = vmatprep.subr.mxu0 0.0
        %3108 = vmatpush1.msra.mxu0 %v1943
        %3109 = vmatprep.subr.mxu0 0.0
        %3110 = vmatpush1.msra.mxu0 %v1944
        %3111 = vmatprep.subr.mxu0 0.0
        %3112 = vmatpush1.msra.mxu0 %v1945
        %3113 = vmatprep.subr.mxu0 0.0
        %3114 = vmatpush1.msra.mxu0 %v1946
        %3115 = vmatprep.subr.mxu0 0.0
        %3116 = vmatpush1.msra.mxu0 %v1947
        %3117 = vmatprep.subr.mxu0 0.0
        %3118 = vmatpush1.msra.mxu0 %v1948
        %3119 = vmatprep.subr.mxu0 0.0
        %3120 = vmatpush1.msra.mxu0 %v1949
        %3121 = vmatprep.subr.mxu0 0.0
        %3122 = vmatpush1.msra.mxu0 %v1950
        %3123 = vmatprep.subr.mxu0 0.0
        %3124 = vmatpush1.msra.mxu0 %v1951
        %3125 = vmatprep.subr.mxu0 0.0
        %3126 = vmatpush1.msra.mxu0 %v1952
        %3127 = vmatprep.subr.mxu0 0.0
        %3128 = vmatpush1.msra.mxu0 %v1953
        %3129 = vmatprep.subr.mxu0 0.0
        %3130 = vmatpush1.msra.mxu0 %v1954
        %3131 = vmatprep.subr.mxu0 0.0
        %3132 = vmatpush1.msra.mxu0 %v1955
        %3133 = vmatprep.subr.mxu0 0.0
        %3134 = vmatpush1.msra.mxu0 0.0
        %3135 = vmatprep.subr.mxu0 0.0
        %3136 = vmatpush1.msra.mxu0 0.0
        %3137 = vmatprep.subr.mxu0 0.0
        %3138 = vmatpush1.msra.mxu0 0.0
        %3139 = vmatprep.subr.mxu0 0.0
        %3140 = vmatpush1.msra.mxu0 0.0
        %3141 = vmatprep.subr.mxu0 0.0
        %3142 = vmatpush1.msra.mxu0 0.0
        %3143 = vmatprep.subr.mxu0 0.0
        %3144 = vmatpush1.msra.mxu0 0.0
        %3145 = vmatprep.subr.mxu0 0.0
        %3146 = vmatpush1.msra.mxu0 0.0
        %3147 = vmatprep.subr.mxu0 0.0
        %3148 = vmatpush1.msra.mxu0 0.0
        %3149 = vmatprep.subr.mxu0 0.0
        %3150 = vmatpush1.msra.mxu0 0.0
        %3151 = vmatprep.subr.mxu0 0.0
        %3152 = vmatpush1.msra.mxu0 0.0
        %3153 = vmatprep.subr.mxu0 0.0
        %3154 = vmatpush1.msra.mxu0 0.0
        %3155 = vmatprep.subr.mxu0 0.0
        %3156 = vmatpush1.msra.mxu0 0.0
        %3157 = vmatprep.subr.mxu0 0.0
        %3158 = vmatpush1.msra.mxu0 0.0
        %3159 = vmatprep.subr.mxu0 0.0
        %3160 = vmatpush1.msra.mxu0 0.0
        %3161 = vmatprep.subr.mxu0 0.0
        %3162 = vmatpush1.msra.mxu0 0.0
        %3163 = vmatprep.subr.mxu0 0.0
        %3164 = vmatpush1.msra.mxu0 0.0
        %3165 = vmatprep.mubr.f32.mxu0 0.0
        %3166 = vmatmul.mubr.f32.gmra.mrb[0].mxu0 %v3096
        %v3167 = vpop.f32.mrb[0].mxu0
        %v3168 = vadd.f32 %v3100, %v3167
        %v3169 = vpop.f32.mrb[0].mxu0
        %3170 = vdwg.mxu0
        %v3171 = vadd.f32 %v3018, %v3168
        %v3172 = vmax.f32 %v3171, 0.0
        %v3173 = vsel %vm681, %v3172, 0.0
        %3174 = vadd.xlane.f32.xlu0 %v3173
        %v3175 = vpop.xlane.xlu0 %3174
        %v3176 = vmul.f32 %v3175, %v1726
        %v3177 = vsub.f32 %v3172, %v3176
        %v3178 = vmul.f32 %v3177, %v3177
        %v3179 = vsel %vm681, %v3178, 0.0
        %3180 = vadd.xlane.f32.xlu0 %v3179
        %v3181 = vpop.xlane.xlu0 %3180
        %v3182 = vmul.f32 %v3181, %v1726
        %v3183 = vadd.f32 %v3182, 1e-05
        %v3184 = vrsqrt.pop %v3183
        %v3185 = vmul.f32 %v3177, %v3184
        %v3186 = vlaneseq
        %v3187 = vshrl.u32 %v3186, 7
        %v3188 = vsub.s32 6, %v3187
        %v3189 = vrot.slane %v1957, %v3188
        %v3190 = vmul.f32 %v3185, %v3189
        %v3191 = vlaneseq
        %v3192 = vshrl.u32 %v3191, 7
        %v3193 = vsub.s32 7, %v3192
        %v3194 = vrot.slane %v1957, %v3193
        %v3195 = vadd.f32 %v3190, %v3194
        %v3196 = vlaneseq
        %v3197 = vshrl.u32 %v3196, 7
        %v3198 = vlaneseq
        %v3199 = vand.u32 %v3198, 127
        %vm3200 = vcmp.eq.s32.totalorder %v3197, %v3199
        %v3201 = vsel %vm3200, 1, 0
        %v3202 = vcvt.s32.f32 %v3201
        %vm3203 = vcmp.ge.f32.partialorder %v647, 0.0
        %v3204 = vsel %vm3203, 1, 0
        %v3205 = vcvt.s32.f32 %v3204
        %v3207 = vlaneseq
        %v3208 = vshrl.u32 %v3207, 7
        %v3209 = vsub.s32 0, %v3208
        %v3210 = vrot.slane %v3205, %v3209
        %v3212 = vmul.f32 %v3202, %v3210
        %v3214 = vsel %vm764, %v3212, 0
        %3216 = vmatprep.subr.mxu0 0.0
        %3217 = vmatpush1.msra.mxu0 %v3195
        %3218 = vmatprep.subr.mxu0 0.0
        %3219 = vmatpush1.msra.mxu0 0.0
        %3220 = vmatprep.subr.mxu0 0.0
        %3221 = vmatpush1.msra.mxu0 0.0
        %3222 = vmatprep.subr.mxu0 0.0
        %3223 = vmatpush1.msra.mxu0 0.0
        %3224 = vmatprep.subr.mxu0 0.0
        %3225 = vmatpush1.msra.mxu0 0.0
        %3226 = vmatprep.subr.mxu0 0.0
        %3227 = vmatpush1.msra.mxu0 0.0
        %3228 = vmatprep.subr.mxu0 0.0
        %3229 = vmatpush1.msra.mxu0 0.0
        %3230 = vmatprep.subr.mxu0 0.0
        %3231 = vmatpush1.msra.mxu0 0.0
        %3232 = vmatprep.subr.mxu0 0.0
        %3233 = vmatpush1.msra.mxu0 0.0
        %3234 = vmatprep.subr.mxu0 0.0
        %3235 = vmatpush1.msra.mxu0 0.0
        %3236 = vmatprep.subr.mxu0 0.0
        %3237 = vmatpush1.msra.mxu0 0.0
        %3238 = vmatprep.subr.mxu0 0.0
        %3239 = vmatpush1.msra.mxu0 0.0
        %3240 = vmatprep.subr.mxu0 0.0
        %3241 = vmatpush1.msra.mxu0 0.0
        %3242 = vmatprep.subr.mxu0 0.0
        %3243 = vmatpush1.msra.mxu0 0.0
        %3244 = vmatprep.subr.mxu0 0.0
        %3245 = vmatpush1.msra.mxu0 0.0
        %3246 = vmatprep.subr.mxu0 0.0
        %3247 = vmatpush1.msra.mxu0 0.0
        %3248 = vmatprep.subr.mxu0 0.0
        %3249 = vmatpush1.msra.mxu0 0.0
        %3250 = vmatprep.subr.mxu0 0.0
        %3251 = vmatpush1.msra.mxu0 0.0
        %3252 = vmatprep.subr.mxu0 0.0
        %3253 = vmatpush1.msra.mxu0 0.0
        %3254 = vmatprep.subr.mxu0 0.0
        %3255 = vmatpush1.msra.mxu0 0.0
        %3256 = vmatprep.subr.mxu0 0.0
        %3257 = vmatpush1.msra.mxu0 0.0
        %3258 = vmatprep.subr.mxu0 0.0
        %3259 = vmatpush1.msra.mxu0 0.0
        %3260 = vmatprep.subr.mxu0 0.0
        %3261 = vmatpush1.msra.mxu0 0.0
        %3262 = vmatprep.subr.mxu0 0.0
        %3263 = vmatpush1.msra.mxu0 0.0
        %3264 = vmatprep.subr.mxu0 0.0
        %3265 = vmatpush1.msra.mxu0 0.0
        %3266 = vmatprep.subr.mxu0 0.0
        %3267 = vmatpush1.msra.mxu0 0.0
        %3268 = vmatprep.subr.mxu0 0.0
        %3269 = vmatpush1.msra.mxu0 0.0
        %3270 = vmatprep.subr.mxu0 0.0
        %3271 = vmatpush1.msra.mxu0 0.0
        %3272 = vmatprep.subr.mxu0 0.0
        %3273 = vmatpush1.msra.mxu0 0.0
        %3274 = vmatprep.subr.mxu0 0.0
        %3275 = vmatpush1.msra.mxu0 0.0
        %3276 = vmatprep.subr.mxu0 0.0
        %3277 = vmatpush1.msra.mxu0 0.0
        %3278 = vmatprep.subr.mxu0 0.0
        %3279 = vmatpush1.msra.mxu0 0.0
        %3280 = vmatprep.mubr.f32.mxu0 0.0
        %3281 = vmatmul.mubr.f32.gmra.mrb[0].mxu0 %v3214
        %v3282 = vpop.f32.mrb[0].mxu0
        %v3283 = vadd.f32 0.0, %v3282
        %v3284 = vpop.f32.mrb[0].mxu0
        %3285 = vdwg.mxu0
        %v3286 = vld [vmem:[%s9] sm:$0xff]
        %v3287 = vld [vmem:[%s9 + $0x8] sm:$0xff]
        %v3288 = vld [vmem:[%s9 + $0x10] sm:$0xff]
        %v3289 = vld [vmem:[%s9 + $0x18] sm:$0xff]
        %v3291 = vsel %vm681, %v3283, 0
        %3293 = vmatprep.subr.mxu0 0.0
        %3294 = vmatpush1.msra.mxu0 %v3286
        %3295 = vmatprep.subr.mxu0 0.0
        %3296 = vmatpush1.msra.mxu0 %v3287
        %3297 = vmatprep.subr.mxu0 0.0
        %3298 = vmatpush1.msra.mxu0 %v3288
        %3299 = vmatprep.subr.mxu0 0.0
        %3300 = vmatpush1.msra.mxu0 %v3289
        %3301 = vmatprep.subr.mxu0 0.0
        %3302 = vmatpush1.msra.mxu0 0.0
        %3303 = vmatprep.subr.mxu0 0.0
        %3304 = vmatpush1.msra.mxu0 0.0
        %3305 = vmatprep.subr.mxu0 0.0
        %3306 = vmatpush1.msra.mxu0 0.0
        %3307 = vmatprep.subr.mxu0 0.0
        %3308 = vmatpush1.msra.mxu0 0.0
        %3309 = vmatprep.subr.mxu0 0.0
        %3310 = vmatpush1.msra.mxu0 0.0
        %3311 = vmatprep.subr.mxu0 0.0
        %3312 = vmatpush1.msra.mxu0 0.0
        %3313 = vmatprep.subr.mxu0 0.0
        %3314 = vmatpush1.msra.mxu0 0.0
        %3315 = vmatprep.subr.mxu0 0.0
        %3316 = vmatpush1.msra.mxu0 0.0
        %3317 = vmatprep.subr.mxu0 0.0
        %3318 = vmatpush1.msra.mxu0 0.0
        %3319 = vmatprep.subr.mxu0 0.0
        %3320 = vmatpush1.msra.mxu0 0.0
        %3321 = vmatprep.subr.mxu0 0.0
        %3322 = vmatpush1.msra.mxu0 0.0
        %3323 = vmatprep.subr.mxu0 0.0
        %3324 = vmatpush1.msra.mxu0 0.0
        %3325 = vmatprep.subr.mxu0 0.0
        %3326 = vmatpush1.msra.mxu0 0.0
        %3327 = vmatprep.subr.mxu0 0.0
        %3328 = vmatpush1.msra.mxu0 0.0
        %3329 = vmatprep.subr.mxu0 0.0
        %3330 = vmatpush1.msra.mxu0 0.0
        %3331 = vmatprep.subr.mxu0 0.0
        %3332 = vmatpush1.msra.mxu0 0.0
        %3333 = vmatprep.subr.mxu0 0.0
        %3334 = vmatpush1.msra.mxu0 0.0
        %3335 = vmatprep.subr.mxu0 0.0
        %3336 = vmatpush1.msra.mxu0 0.0
        %3337 = vmatprep.subr.mxu0 0.0
        %3338 = vmatpush1.msra.mxu0 0.0
        %3339 = vmatprep.subr.mxu0 0.0
        %3340 = vmatpush1.msra.mxu0 0.0
        %3341 = vmatprep.subr.mxu0 0.0
        %3342 = vmatpush1.msra.mxu0 0.0
        %3343 = vmatprep.subr.mxu0 0.0
        %3344 = vmatpush1.msra.mxu0 0.0
        %3345 = vmatprep.subr.mxu0 0.0
        %3346 = vmatpush1.msra.mxu0 0.0
        %3347 = vmatprep.subr.mxu0 0.0
        %3348 = vmatpush1.msra.mxu0 0.0
        %3349 = vmatprep.subr.mxu0 0.0
        %3350 = vmatpush1.msra.mxu0 0.0
        %3351 = vmatprep.subr.mxu0 0.0
        %3352 = vmatpush1.msra.mxu0 0.0
        %3353 = vmatprep.subr.mxu0 0.0
        %3354 = vmatpush1.msra.mxu0 0.0
        %3355 = vmatprep.subr.mxu0 0.0
        %3356 = vmatpush1.msra.mxu0 0.0
        %3357 = vmatprep.mubr.f32.mxu0 0.0
        %3358 = vmatmul.mubr.f32.gmra.mrb[0].mxu0 %v3291
        %v3359 = vpop.f32.mrb[0].mxu0
        %v3360 = vadd.f32 0.0, %v3359
        %v3361 = vpop.f32.mrb[0].mxu0
        %3362 = vdwg.mxu0
        %v3363 = vld [vmem:[%s641] sm:$0xff]
        %v3364 = vld [vmem:[%s645] sm:$0xff]
        %v3365 = vld [vmem:[%s10] sm:$0xff]
        %v3366 = vld [vmem:[%s10 + $0x8] sm:$0xff]
        %v3367 = vld [vmem:[%s10 + $0x10] sm:$0xff]
        %v3368 = vld [vmem:[%s10 + $0x18] sm:$0xff]
        %v3369 = vld [vmem:[%s11] sm:$0xff]
        %v3370 = vld [vmem:[%s11 + $0x8] sm:$0xff]
        %v3371 = vld [vmem:[%s11 + $0x10] sm:$0xff]
        %v3372 = vld [vmem:[%s11 + $0x18] sm:$0xff]
        %v3373 = vld [vmem:[%s12] sm:$0xff]
        %v3374 = vld [vmem:[%s12 + $0x8] sm:$0xff]
        %v3375 = vld [vmem:[%s12 + $0x10] sm:$0xff]
        %v3376 = vld [vmem:[%s12 + $0x18] sm:$0xff]
        %v3377 = vld [vmem:[%s13] sm:$0xff]
        %v3378 = vld [vmem:[%s13 + $0x8] sm:$0xff]
        %v3379 = vld [vmem:[%s13 + $0x10] sm:$0xff]
        %v3380 = vld [vmem:[%s13 + $0x18] sm:$0xff]
        %v3381 = vld [vmem:[%s14] sm:$0xff]
        %v3382 = vld [vmem:[%s14 + $0x8] sm:$0xff]
        %v3383 = vld [vmem:[%s14 + $0x10] sm:$0xff]
        %v3384 = vld [vmem:[%s14 + $0x18] sm:$0xff]
        %v3385 = vld [vmem:[%s14 + $0x20] sm:$0xff]
        %v3386 = vld [vmem:[%s14 + $0x28] sm:$0xff]
        %v3387 = vld [vmem:[%s14 + $0x30] sm:$0xff]
        %v3388 = vld [vmem:[%s14 + $0x38] sm:$0xff]
        %v3389 = vld [vmem:[%s14 + $0x40] sm:$0xff]
        %v3390 = vld [vmem:[%s14 + $0x48] sm:$0xff]
        %v3391 = vld [vmem:[%s14 + $0x50] sm:$0xff]
        %v3392 = vld [vmem:[%s14 + $0x58] sm:$0xff]
        %v3393 = vld [vmem:[%s14 + $0x60] sm:$0xff]
        %v3394 = vld [vmem:[%s14 + $0x68] sm:$0xff]
        %v3395 = vld [vmem:[%s14 + $0x70] sm:$0xff]
        %v3396 = vld [vmem:[%s14 + $0x78] sm:$0xff]
        %v3397 = vld [vmem:[%s15] sm:$0xff]
        %v3398 = vld [vmem:[%s15 + $0x8] sm:$0x7]
        %v3399 = vlaneseq
        %v3400 = vshrl.u32 %v3399, 7
        %v3401 = vsub.s32 0, %v3400
        %v3402 = vrot.slane %v3397, %v3401
        %v3404 = vsel %vm681, %v3363, 0
        %3406 = vmatprep.subr.mxu0 0.0
        %3407 = vmatpush1.msra.mxu0 %v3365
        %3408 = vmatprep.subr.mxu0 0.0
        %3409 = vmatpush1.msra.mxu0 %v3366
        %3410 = vmatprep.subr.mxu0 0.0
        %3411 = vmatpush1.msra.mxu0 %v3367
        %3412 = vmatprep.subr.mxu0 0.0
        %3413 = vmatpush1.msra.mxu0 %v3368
        %3414 = vmatprep.subr.mxu0 0.0
        %3415 = vmatpush1.msra.mxu0 0.0
        %3416 = vmatprep.subr.mxu0 0.0
        %3417 = vmatpush1.msra.mxu0 0.0
        %3418 = vmatprep.subr.mxu0 0.0
        %3419 = vmatpush1.msra.mxu0 0.0
        %3420 = vmatprep.subr.mxu0 0.0
        %3421 = vmatpush1.msra.mxu0 0.0
        %3422 = vmatprep.subr.mxu0 0.0
        %3423 = vmatpush1.msra.mxu0 0.0
        %3424 = vmatprep.subr.mxu0 0.0
        %3425 = vmatpush1.msra.mxu0 0.0
        %3426 = vmatprep.subr.mxu0 0.0
        %3427 = vmatpush1.msra.mxu0 0.0
        %3428 = vmatprep.subr.mxu0 0.0
        %3429 = vmatpush1.msra.mxu0 0.0
        %3430 = vmatprep.subr.mxu0 0.0
        %3431 = vmatpush1.msra.mxu0 0.0
        %3432 = vmatprep.subr.mxu0 0.0
        %3433 = vmatpush1.msra.mxu0 0.0
        %3434 = vmatprep.subr.mxu0 0.0
        %3435 = vmatpush1.msra.mxu0 0.0
        %3436 = vmatprep.subr.mxu0 0.0
        %3437 = vmatpush1.msra.mxu0 0.0
        %3438 = vmatprep.subr.mxu0 0.0
        %3439 = vmatpush1.msra.mxu0 0.0
        %3440 = vmatprep.subr.mxu0 0.0
        %3441 = vmatpush1.msra.mxu0 0.0
        %3442 = vmatprep.subr.mxu0 0.0
        %3443 = vmatpush1.msra.mxu0 0.0
        %3444 = vmatprep.subr.mxu0 0.0
        %3445 = vmatpush1.msra.mxu0 0.0
        %3446 = vmatprep.subr.mxu0 0.0
        %3447 = vmatpush1.msra.mxu0 0.0
        %3448 = vmatprep.subr.mxu0 0.0
        %3449 = vmatpush1.msra.mxu0 0.0
        %3450 = vmatprep.subr.mxu0 0.0
        %3451 = vmatpush1.msra.mxu0 0.0
        %3452 = vmatprep.subr.mxu0 0.0
        %3453 = vmatpush1.msra.mxu0 0.0
        %3454 = vmatprep.subr.mxu0 0.0
        %3455 = vmatpush1.msra.mxu0 0.0
        %3456 = vmatprep.subr.mxu0 0.0
        %3457 = vmatpush1.msra.mxu0 0.0
        %3458 = vmatprep.subr.mxu0 0.0
        %3459 = vmatpush1.msra.mxu0 0.0
        %3460 = vmatprep.subr.mxu0 0.0
        %3461 = vmatpush1.msra.mxu0 0.0
        %3462 = vmatprep.subr.mxu0 0.0
        %3463 = vmatpush1.msra.mxu0 0.0
        %3464 = vmatprep.subr.mxu0 0.0
        %3465 = vmatpush1.msra.mxu0 0.0
        %3466 = vmatprep.subr.mxu0 0.0
        %3467 = vmatpush1.msra.mxu0 0.0
        %3468 = vmatprep.subr.mxu0 0.0
        %3469 = vmatpush1.msra.mxu0 0.0
        %3470 = vmatprep.mubr.f32.mxu0 0.0
        %3471 = vmatmul.mubr.f32.gmra.mrb[0].mxu0 %v3404
        %v3472 = vpop.f32.mrb[0].mxu0
        %v3473 = vadd.f32 %v3402, %v3472
        %v3474 = vpop.f32.mrb[0].mxu0
        %3475 = vdwg.mxu0
        %3477 = vrot.lane.b32.xlu0 %v3473, 96
        %v3478 = vpop.permute.xlu0 %3477
        %v3479 = vsel %vm764, %v3473, 0
        %v3481 = vsel %vm764, %v3478, 0
        %3483 = vmatprep.subr.mxu0 0.0
        %3484 = vmatpush1.xpose.msra.mxu0 %v3481
        %3485 = vmatprep.subr.mxu0 0.0
        %3486 = vmatpush1.xpose.msra.mxu0 0.0
        %3487 = vmatprep.subr.mxu0 0.0
        %3488 = vmatpush1.xpose.msra.mxu0 0.0
        %3489 = vmatprep.subr.mxu0 0.0
        %3490 = vmatpush1.xpose.msra.mxu0 0.0
        %3491 = vmatprep.subr.mxu0 0.0
        %3492 = vmatpush1.xpose.msra.mxu0 0.0
        %3493 = vmatprep.subr.mxu0 0.0
        %3494 = vmatpush1.xpose.msra.mxu0 0.0
        %3495 = vmatprep.subr.mxu0 0.0
        %3496 = vmatpush1.xpose.msra.mxu0 0.0
        %3497 = vmatprep.subr.mxu0 0.0
        %3498 = vmatpush1.xpose.msra.mxu0 0.0
        %3499 = vmatprep.subr.mxu0 0.0
        %3500 = vmatpush1.xpose.msra.mxu0 0.0
        %3501 = vmatprep.subr.mxu0 0.0
        %3502 = vmatpush1.xpose.msra.mxu0 0.0
        %3503 = vmatprep.subr.mxu0 0.0
        %3504 = vmatpush1.xpose.msra.mxu0 0.0
        %3505 = vmatprep.subr.mxu0 0.0
        %3506 = vmatpush1.xpose.msra.mxu0 0.0
        %3507 = vmatprep.subr.mxu0 0.0
        %3508 = vmatpush1.xpose.msra.mxu0 0.0
        %3509 = vmatprep.subr.mxu0 0.0
        %3510 = vmatpush1.xpose.msra.mxu0 0.0
        %3511 = vmatprep.subr.mxu0 0.0
        %3512 = vmatpush1.xpose.msra.mxu0 0.0
        %3513 = vmatprep.subr.mxu0 0.0
        %3514 = vmatpush1.xpose.msra.mxu0 0.0
        %3515 = vmatprep.subr.mxu0 0.0
        %3516 = vmatpush1.xpose.msra.mxu0 0.0
        %3517 = vmatprep.subr.mxu0 0.0
        %3518 = vmatpush1.xpose.msra.mxu0 0.0
        %3519 = vmatprep.subr.mxu0 0.0
        %3520 = vmatpush1.xpose.msra.mxu0 0.0
        %3521 = vmatprep.subr.mxu0 0.0
        %3522 = vmatpush1.xpose.msra.mxu0 0.0
        %3523 = vmatprep.subr.mxu0 0.0
        %3524 = vmatpush1.xpose.msra.mxu0 0.0
        %3525 = vmatprep.subr.mxu0 0.0
        %3526 = vmatpush1.xpose.msra.mxu0 0.0
        %3527 = vmatprep.subr.mxu0 0.0
        %3528 = vmatpush1.xpose.msra.mxu0 0.0
        %3529 = vmatprep.subr.mxu0 0.0
        %3530 = vmatpush1.xpose.msra.mxu0 0.0
        %3531 = vmatprep.subr.mxu0 0.0
        %3532 = vmatpush1.xpose.msra.mxu0 0.0
        %3533 = vmatprep.subr.mxu0 0.0
        %3534 = vmatpush1.xpose.msra.mxu0 0.0
        %3535 = vmatprep.subr.mxu0 0.0
        %3536 = vmatpush1.xpose.msra.mxu0 0.0
        %3537 = vmatprep.subr.mxu0 0.0
        %3538 = vmatpush1.xpose.msra.mxu0 0.0
        %3539 = vmatprep.subr.mxu0 0.0
        %3540 = vmatpush1.xpose.msra.mxu0 0.0
        %3541 = vmatprep.subr.mxu0 0.0
        %3542 = vmatpush1.xpose.msra.mxu0 0.0
        %3543 = vmatprep.subr.mxu0 0.0
        %3544 = vmatpush1.xpose.msra.mxu0 0.0
        %3545 = vmatprep.subr.mxu0 0.0
        %3546 = vmatpush1.xpose.msra.mxu0 0.0
        %3547 = vmatprep.mubr.f32.mxu0 0.0
        %3548 = vmatmul.mubr.f32.gmra.mrb[0].mxu0 %v3479
        %v3549 = vpop.f32.mrb[0].mxu0
        %v3550 = vadd.f32 %v3364, %v3549
        %v3551 = vpop.f32.mrb[0].mxu0
        %3552 = vdwg.mxu0
        %v3553 = vsel %vm764, %v3550, -inf
        %3554 = vmax.xlane.f32.xlu0 %v3553
        %v3555 = vpop.xlane.xlu0 %3554
        %v3556 = vsub.f32 %v3550, %v3555
        %v3557 = vmul.f32 %v3556, 1.442695
        %v3558 = vpow.pop %v3557
        %v3559 = vsel %vm764, %v3558, 0.0
        %3560 = vadd.xlane.f32.xlu0 %v3559
        %v3561 = vpop.xlane.xlu0 %3560
        %v3562 = vrcp.pop %v3561
        %v3563 = vmul.f32 %v3558, %v3562
        %3564 = vrot.lane.b32.xlu0 %v3473, 64
        %v3565 = vpop.permute.xlu0 %3564
        %v3568 = vsel %vm764, %v3563, 0
        %3570 = vmatprep.subr.mxu0 0.0
        %3571 = vmatpush1.msra.mxu0 %v3565
        %3572 = vmatprep.subr.mxu0 0.0
        %3573 = vmatpush1.msra.mxu0 0.0
        %3574 = vmatprep.subr.mxu0 0.0
        %3575 = vmatpush1.msra.mxu0 0.0
        %3576 = vmatprep.subr.mxu0 0.0
        %3577 = vmatpush1.msra.mxu0 0.0
        %3578 = vmatprep.subr.mxu0 0.0
        %3579 = vmatpush1.msra.mxu0 0.0
        %3580 = vmatprep.subr.mxu0 0.0
        %3581 = vmatpush1.msra.mxu0 0.0
        %3582 = vmatprep.subr.mxu0 0.0
        %3583 = vmatpush1.msra.mxu0 0.0
        %3584 = vmatprep.subr.mxu0 0.0
        %3585 = vmatpush1.msra.mxu0 0.0
        %3586 = vmatprep.subr.mxu0 0.0
        %3587 = vmatpush1.msra.mxu0 0.0
        %3588 = vmatprep.subr.mxu0 0.0
        %3589 = vmatpush1.msra.mxu0 0.0
        %3590 = vmatprep.subr.mxu0 0.0
        %3591 = vmatpush1.msra.mxu0 0.0
        %3592 = vmatprep.subr.mxu0 0.0
        %3593 = vmatpush1.msra.mxu0 0.0
        %3594 = vmatprep.subr.mxu0 0.0
        %3595 = vmatpush1.msra.mxu0 0.0
        %3596 = vmatprep.subr.mxu0 0.0
        %3597 = vmatpush1.msra.mxu0 0.0
        %3598 = vmatprep.subr.mxu0 0.0
        %3599 = vmatpush1.msra.mxu0 0.0
        %3600 = vmatprep.subr.mxu0 0.0
        %3601 = vmatpush1.msra.mxu0 0.0
        %3602 = vmatprep.subr.mxu0 0.0
        %3603 = vmatpush1.msra.mxu0 0.0
        %3604 = vmatprep.subr.mxu0 0.0
        %3605 = vmatpush1.msra.mxu0 0.0
        %3606 = vmatprep.subr.mxu0 0.0
        %3607 = vmatpush1.msra.mxu0 0.0
        %3608 = vmatprep.subr.mxu0 0.0
        %3609 = vmatpush1.msra.mxu0 0.0
        %3610 = vmatprep.subr.mxu0 0.0
        %3611 = vmatpush1.msra.mxu0 0.0
        %3612 = vmatprep.subr.mxu0 0.0
        %3613 = vmatpush1.msra.mxu0 0.0
        %3614 = vmatprep.subr.mxu0 0.0
        %3615 = vmatpush1.msra.mxu0 0.0
        %3616 = vmatprep.subr.mxu0 0.0
        %3617 = vmatpush1.msra.mxu0 0.0
        %3618 = vmatprep.subr.mxu0 0.0
        %3619 = vmatpush1.msra.mxu0 0.0
        %3620 = vmatprep.subr.mxu0 0.0
        %3621 = vmatpush1.msra.mxu0 0.0
        %3622 = vmatprep.subr.mxu0 0.0
        %3623 = vmatpush1.msra.mxu0 0.0
        %3624 = vmatprep.subr.mxu0 0.0
        %3625 = vmatpush1.msra.mxu0 0.0
        %3626 = vmatprep.subr.mxu0 0.0
        %3627 = vmatpush1.msra.mxu0 0.0
        %3628 = vmatprep.subr.mxu0 0.0
        %3629 = vmatpush1.msra.mxu0 0.0
        %3630 = vmatprep.subr.mxu0 0.0
        %3631 = vmatpush1.msra.mxu0 0.0
        %3632 = vmatprep.subr.mxu0 0.0
        %3633 = vmatpush1.msra.mxu0 0.0
        %3634 = vmatprep.mubr.f32.mxu0 0.0
        %3635 = vmatmul.mubr.f32.gmra.mrb[0].mxu0 %v3568
        %v3636 = vpop.f32.mrb[0].mxu0
        %v3637 = vadd.f32 0.0, %v3636
        %v3638 = vpop.f32.mrb[0].mxu0
        %3639 = vdwg.mxu0
        %3640 = vrot.lane.b32.xlu0 %v3473, 120
        %v3641 = vpop.permute.xlu0 %3640
        %3642 = vrot.lane.b32.xlu0 %v3473, 88
        %v3643 = vpop.permute.xlu0 %3642
        %v3644 = vsel %vm764, %v3641, 0
        %v3646 = vsel %vm764, %v3643, 0
        %3648 = vmatprep.subr.mxu0 0.0
        %3649 = vmatpush1.xpose.msra.mxu0 %v3646
        %3650 = vmatprep.subr.mxu0 0.0
        %3651 = vmatpush1.xpose.msra.mxu0 0.0
        %3652 = vmatprep.subr.mxu0 0.0
        %3653 = vmatpush1.xpose.msra.mxu0 0.0
        %3654 = vmatprep.subr.mxu0 0.0
        %3655 = vmatpush1.xpose.msra.mxu0 0.0
        %3656 = vmatprep.subr.mxu0 0.0
        %3657 = vmatpush1.xpose.msra.mxu0 0.0
        %3658 = vmatprep.subr.mxu0 0.0
        %3659 = vmatpush1.xpose.msra.mxu0 0.0
        %3660 = vmatprep.subr.mxu0 0.0
        %3661 = vmatpush1.xpose.msra.mxu0 0.0
        %3662 = vmatprep.subr.mxu0 0.0
        %3663 = vmatpush1.xpose.msra.mxu0 0.0
        %3664 = vmatprep.subr.mxu0 0.0
        %3665 = vmatpush1.xpose.msra.mxu0 0.0
        %3666 = vmatprep.subr.mxu0 0.0
        %3667 = vmatpush1.xpose.msra.mxu0 0.0
        %3668 = vmatprep.subr.mxu0 0.0
        %3669 = vmatpush1.xpose.msra.mxu0 0.0
        %3670 = vmatprep.subr.mxu0 0.0
        %3671 = vmatpush1.xpose.msra.mxu0 0.0
        %3672 = vmatprep.subr.mxu0 0.0
        %3673 = vmatpush1.xpose.msra.mxu0 0.0
        %3674 = vmatprep.subr.mxu0 0.0
        %3675 = vmatpush1.xpose.msra.mxu0 0.0
        %3676 = vmatprep.subr.mxu0 0.0
        %3677 = vmatpush1.xpose.msra.mxu0 0.0
        %3678 = vmatprep.subr.mxu0 0.0
        %3679 = vmatpush1.xpose.msra.mxu0 0.0
        %3680 = vmatprep.subr.mxu0 0.0
        %3681 = vmatpush1.xpose.msra.mxu0 0.0
        %3682 = vmatprep.subr.mxu0 0.0
        %3683 = vmatpush1.xpose.msra.mxu0 0.0
        %3684 = vmatprep.subr.mxu0 0.0
        %3685 = vmatpush1.xpose.msra.mxu0 0.0
        %3686 = vmatprep.subr.mxu0 0.0
        %3687 = vmatpush1.xpose.msra.mxu0 0.0
        %3688 = vmatprep.subr.mxu0 0.0
        %3689 = vmatpush1.xpose.msra.mxu0 0.0
        %3690 = vmatprep.subr.mxu0 0.0
        %3691 = vmatpush1.xpose.msra.mxu0 0.0
        %3692 = vmatprep.subr.mxu0 0.0
        %3693 = vmatpush1.xpose.msra.mxu0 0.0
        %3694 = vmatprep.subr.mxu0 0.0
        %3695 = vmatpush1.xpose.msra.mxu0 0.0
        %3696 = vmatprep.subr.mxu0 0.0
        %3697 = vmatpush1.xpose.msra.mxu0 0.0
        %3698 = vmatprep.subr.mxu0 0.0
        %3699 = vmatpush1.xpose.msra.mxu0 0.0
        %3700 = vmatprep.subr.mxu0 0.0
        %3701 = vmatpush1.xpose.msra.mxu0 0.0
        %3702 = vmatprep.subr.mxu0 0.0
        %3703 = vmatpush1.xpose.msra.mxu0 0.0
        %3704 = vmatprep.subr.mxu0 0.0
        %3705 = vmatpush1.xpose.msra.mxu0 0.0
        %3706 = vmatprep.subr.mxu0 0.0
        %3707 = vmatpush1.xpose.msra.mxu0 0.0
        %3708 = vmatprep.subr.mxu0 0.0
        %3709 = vmatpush1.xpose.msra.mxu0 0.0
        %3710 = vmatprep.subr.mxu0 0.0
        %3711 = vmatpush1.xpose.msra.mxu0 0.0
        %3712 = vmatprep.mubr.f32.mxu0 0.0
        %3713 = vmatmul.mubr.f32.gmra.mrb[0].mxu0 %v3644
        %v3714 = vpop.f32.mrb[0].mxu0
        %v3715 = vadd.f32 %v3364, %v3714
        %v3716 = vpop.f32.mrb[0].mxu0
        %3717 = vdwg.mxu0
        %v3718 = vsel %vm764, %v3715, -inf
        %3719 = vmax.xlane.f32.xlu0 %v3718
        %v3720 = vpop.xlane.xlu0 %3719
        %v3721 = vsub.f32 %v3715, %v3720
        %v3722 = vmul.f32 %v3721, 1.442695
        %v3723 = vpow.pop %v3722
        %v3724 = vsel %vm764, %v3723, 0.0
        %3725 = vadd.xlane.f32.xlu0 %v3724
        %v3726 = vpop.xlane.xlu0 %3725
        %v3727 = vrcp.pop %v3726
        %v3728 = vmul.f32 %v3723, %v3727
        %3729 = vrot.lane.b32.xlu0 %v3473, 56
        %v3730 = vpop.permute.xlu0 %3729
        %v3733 = vsel %vm764, %v3728, 0
        %3735 = vmatprep.subr.mxu0 0.0
        %3736 = vmatpush1.msra.mxu0 %v3730
        %3737 = vmatprep.subr.mxu0 0.0
        %3738 = vmatpush1.msra.mxu0 0.0
        %3739 = vmatprep.subr.mxu0 0.0
        %3740 = vmatpush1.msra.mxu0 0.0
        %3741 = vmatprep.subr.mxu0 0.0
        %3742 = vmatpush1.msra.mxu0 0.0
        %3743 = vmatprep.subr.mxu0 0.0
        %3744 = vmatpush1.msra.mxu0 0.0
        %3745 = vmatprep.subr.mxu0 0.0
        %3746 = vmatpush1.msra.mxu0 0.0
        %3747 = vmatprep.subr.mxu0 0.0
        %3748 = vmatpush1.msra.mxu0 0.0
        %3749 = vmatprep.subr.mxu0 0.0
        %3750 = vmatpush1.msra.mxu0 0.0
        %3751 = vmatprep.subr.mxu0 0.0
        %3752 = vmatpush1.msra.mxu0 0.0
        %3753 = vmatprep.subr.mxu0 0.0
        %3754 = vmatpush1.msra.mxu0 0.0
        %3755 = vmatprep.subr.mxu0 0.0
        %3756 = vmatpush1.msra.mxu0 0.0
        %3757 = vmatprep.subr.mxu0 0.0
        %3758 = vmatpush1.msra.mxu0 0.0
        %3759 = vmatprep.subr.mxu0 0.0
        %3760 = vmatpush1.msra.mxu0 0.0
        %3761 = vmatprep.subr.mxu0 0.0
        %3762 = vmatpush1.msra.mxu0 0.0
        %3763 = vmatprep.subr.mxu0 0.0
        %3764 = vmatpush1.msra.mxu0 0.0
        %3765 = vmatprep.subr.mxu0 0.0
        %3766 = vmatpush1.msra.mxu0 0.0
        %3767 = vmatprep.subr.mxu0 0.0
        %3768 = vmatpush1.msra.mxu0 0.0
        %3769 = vmatprep.subr.mxu0 0.0
        %3770 = vmatpush1.msra.mxu0 0.0
        %3771 = vmatprep.subr.mxu0 0.0
        %3772 = vmatpush1.msra.mxu0 0.0
        %3773 = vmatprep.subr.mxu0 0.0
        %3774 = vmatpush1.msra.mxu0 0.0
        %3775 = vmatprep.subr.mxu0 0.0
        %3776 = vmatpush1.msra.mxu0 0.0
        %3777 = vmatprep.subr.mxu0 0.0
        %3778 = vmatpush1.msra.mxu0 0.0
        %3779 = vmatprep.subr.mxu0 0.0
        %3780 = vmatpush1.msra.mxu0 0.0
        %3781 = vmatprep.subr.mxu0 0.0
        %3782 = vmatpush1.msra.mxu0 0.0
        %3783 = vmatprep.subr.mxu0 0.0
        %3784 = vmatpush1.msra.mxu0 0.0
        %3785 = vmatprep.subr.mxu0 0.0
        %3786 = vmatpush1.msra.mxu0 0.0
        %3787 = vmatprep.subr.mxu0 0.0
        %3788 = vmatpush1.msra.mxu0 0.0
        %3789 = vmatprep.subr.mxu0 0.0
        %3790 = vmatpush1.msra.mxu0 0.0
        %3791 = vmatprep.subr.mxu0 0.0
        %3792 = vmatpush1.msra.mxu0 0.0
        %3793 = vmatprep.subr.mxu0 0.0
        %3794 = vmatpush1.msra.mxu0 0.0
        %3795 = vmatprep.subr.mxu0 0.0
        %3796 = vmatpush1.msra.mxu0 0.0
        %3797 = vmatprep.subr.mxu0 0.0
        %3798 = vmatpush1.msra.mxu0 0.0
        %3799 = vmatprep.mubr.f32.mxu0 0.0
        %3800 = vmatmul.mubr.f32.gmra.mrb[0].mxu0 %v3733
        %v3801 = vpop.f32.mrb[0].mxu0
        %v3802 = vadd.f32 0.0, %v3801
        %v3803 = vpop.f32.mrb[0].mxu0
        %3804 = vdwg.mxu0
        %v3806 = vsel %vm764, %v3802, 0
        %3808 = vmatprep.subr.mxu0 0.0
        %3809 = vmatpush1.msra.mxu0 %v3370
        %3810 = vmatprep.subr.mxu0 0.0
        %3811 = vmatpush1.msra.mxu0 0.0
        %3812 = vmatprep.subr.mxu0 0.0
        %3813 = vmatpush1.msra.mxu0 0.0
        %3814 = vmatprep.subr.mxu0 0.0
        %3815 = vmatpush1.msra.mxu0 0.0
        %3816 = vmatprep.subr.mxu0 0.0
        %3817 = vmatpush1.msra.mxu0 0.0
        %3818 = vmatprep.subr.mxu0 0.0
        %3819 = vmatpush1.msra.mxu0 0.0
        %3820 = vmatprep.subr.mxu0 0.0
        %3821 = vmatpush1.msra.mxu0 0.0
        %3822 = vmatprep.subr.mxu0 0.0
        %3823 = vmatpush1.msra.mxu0 0.0
        %3824 = vmatprep.subr.mxu0 0.0
        %3825 = vmatpush1.msra.mxu0 0.0
        %3826 = vmatprep.subr.mxu0 0.0
        %3827 = vmatpush1.msra.mxu0 0.0
        %3828 = vmatprep.subr.mxu0 0.0
        %3829 = vmatpush1.msra.mxu0 0.0
        %3830 = vmatprep.subr.mxu0 0.0
        %3831 = vmatpush1.msra.mxu0 0.0
        %3832 = vmatprep.subr.mxu0 0.0
        %3833 = vmatpush1.msra.mxu0 0.0
        %3834 = vmatprep.subr.mxu0 0.0
        %3835 = vmatpush1.msra.mxu0 0.0
        %3836 = vmatprep.subr.mxu0 0.0
        %3837 = vmatpush1.msra.mxu0 0.0
        %3838 = vmatprep.subr.mxu0 0.0
        %3839 = vmatpush1.msra.mxu0 0.0
        %3840 = vmatprep.subr.mxu0 0.0
        %3841 = vmatpush1.msra.mxu0 0.0
        %3842 = vmatprep.subr.mxu0 0.0
        %3843 = vmatpush1.msra.mxu0 0.0
        %3844 = vmatprep.subr.mxu0 0.0
        %3845 = vmatpush1.msra.mxu0 0.0
        %3846 = vmatprep.subr.mxu0 0.0
        %3847 = vmatpush1.msra.mxu0 0.0
        %3848 = vmatprep.subr.mxu0 0.0
        %3849 = vmatpush1.msra.mxu0 0.0
        %3850 = vmatprep.subr.mxu0 0.0
        %3851 = vmatpush1.msra.mxu0 0.0
        %3852 = vmatprep.subr.mxu0 0.0
        %3853 = vmatpush1.msra.mxu0 0.0
        %3854 = vmatprep.subr.mxu0 0.0
        %3855 = vmatpush1.msra.mxu0 0.0
        %3856 = vmatprep.subr.mxu0 0.0
        %3857 = vmatpush1.msra.mxu0 0.0
        %3858 = vmatprep.subr.mxu0 0.0
        %3859 = vmatpush1.msra.mxu0 0.0
        %3860 = vmatprep.subr.mxu0 0.0
        %3861 = vmatpush1.msra.mxu0 0.0
        %3862 = vmatprep.subr.mxu0 0.0
        %3863 = vmatpush1.msra.mxu0 0.0
        %3864 = vmatprep.subr.mxu0 0.0
        %3865 = vmatpush1.msra.mxu0 0.0
        %3866 = vmatprep.subr.mxu0 0.0
        %3867 = vmatpush1.msra.mxu0 0.0
        %3868 = vmatprep.subr.mxu0 0.0
        %3869 = vmatpush1.msra.mxu0 0.0
        %3870 = vmatprep.subr.mxu0 0.0
        %3871 = vmatpush1.msra.mxu0 0.0
        %3872 = vmatprep.mubr.f32.mxu0 0.0
        %3873 = vmatmul.mubr.f32.gmra.mrb[0].mxu0 %v3806
        %v3874 = vpop.f32.mrb[0].mxu0
        %v3875 = vadd.f32 0.0, %v3874
        %v3876 = vpop.f32.mrb[0].mxu0
        %3877 = vdwg.mxu0
        %v3879 = vsel %vm764, %v3637, 0
        %3881 = vmatprep.subr.mxu0 0.0
        %3882 = vmatpush1.msra.mxu0 %v3369
        %3883 = vmatprep.subr.mxu0 0.0
        %3884 = vmatpush1.msra.mxu0 0.0
        %3885 = vmatprep.subr.mxu0 0.0
        %3886 = vmatpush1.msra.mxu0 0.0
        %3887 = vmatprep.subr.mxu0 0.0
        %3888 = vmatpush1.msra.mxu0 0.0
        %3889 = vmatprep.subr.mxu0 0.0
        %3890 = vmatpush1.msra.mxu0 0.0
        %3891 = vmatprep.subr.mxu0 0.0
        %3892 = vmatpush1.msra.mxu0 0.0
        %3893 = vmatprep.subr.mxu0 0.0
        %3894 = vmatpush1.msra.mxu0 0.0
        %3895 = vmatprep.subr.mxu0 0.0
        %3896 = vmatpush1.msra.mxu0 0.0
        %3897 = vmatprep.subr.mxu0 0.0
        %3898 = vmatpush1.msra.mxu0 0.0
        %3899 = vmatprep.subr.mxu0 0.0
        %3900 = vmatpush1.msra.mxu0 0.0
        %3901 = vmatprep.subr.mxu0 0.0
        %3902 = vmatpush1.msra.mxu0 0.0
        %3903 = vmatprep.subr.mxu0 0.0
        %3904 = vmatpush1.msra.mxu0 0.0
        %3905 = vmatprep.subr.mxu0 0.0
        %3906 = vmatpush1.msra.mxu0 0.0
        %3907 = vmatprep.subr.mxu0 0.0
        %3908 = vmatpush1.msra.mxu0 0.0
        %3909 = vmatprep.subr.mxu0 0.0
        %3910 = vmatpush1.msra.mxu0 0.0
        %3911 = vmatprep.subr.mxu0 0.0
        %3912 = vmatpush1.msra.mxu0 0.0
        %3913 = vmatprep.subr.mxu0 0.0
        %3914 = vmatpush1.msra.mxu0 0.0
        %3915 = vmatprep.subr.mxu0 0.0
        %3916 = vmatpush1.msra.mxu0 0.0
        %3917 = vmatprep.subr.mxu0 0.0
        %3918 = vmatpush1.msra.mxu0 0.0
        %3919 = vmatprep.subr.mxu0 0.0
        %3920 = vmatpush1.msra.mxu0 0.0
        %3921 = vmatprep.subr.mxu0 0.0
        %3922 = vmatpush1.msra.mxu0 0.0
        %3923 = vmatprep.subr.mxu0 0.0
        %3924 = vmatpush1.msra.mxu0 0.0
        %3925 = vmatprep.subr.mxu0 0.0
        %3926 = vmatpush1.msra.mxu0 0.0
        %3927 = vmatprep.subr.mxu0 0.0
        %3928 = vmatpush1.msra.mxu0 0.0
        %3929 = vmatprep.subr.mxu0 0.0
        %3930 = vmatpush1.msra.mxu0 0.0
        %3931 = vmatprep.subr.mxu0 0.0
        %3932 = vmatpush1.msra.mxu0 0.0
        %3933 = vmatprep.subr.mxu0 0.0
        %3934 = vmatpush1.msra.mxu0 0.0
        %3935 = vmatprep.subr.mxu0 0.0
        %3936 = vmatpush1.msra.mxu0 0.0
        %3937 = vmatprep.subr.mxu0 0.0
        %3938 = vmatpush1.msra.mxu0 0.0
        %3939 = vmatprep.subr.mxu0 0.0
        %3940 = vmatpush1.msra.mxu0 0.0
        %3941 = vmatprep.subr.mxu0 0.0
        %3942 = vmatpush1.msra.mxu0 0.0
        %3943 = vmatprep.subr.mxu0 0.0
        %3944 = vmatpush1.msra.mxu0 0.0
        %3945 = vmatprep.mubr.f32.mxu0 0.0
        %3946 = vmatmul.mubr.f32.gmra.mrb[0].mxu0 %v3879
        %v3947 = vpop.f32.mrb[0].mxu0
        %v3948 = vadd.f32 %v3875, %v3947
        %v3949 = vpop.f32.mrb[0].mxu0
        %3950 = vdwg.mxu0
        %3951 = vrot.lane.b32.xlu0 %v3473, 112
        %v3952 = vpop.permute.xlu0 %3951
        %3953 = vrot.lane.b32.xlu0 %v3473, 80
        %v3954 = vpop.permute.xlu0 %3953
        %v3955 = vsel %vm764, %v3952, 0
        %v3957 = vsel %vm764, %v3954, 0
        %3959 = vmatprep.subr.mxu0 0.0
        %3960 = vmatpush1.xpose.msra.mxu0 %v3957
        %3961 = vmatprep.subr.mxu0 0.0
        %3962 = vmatpush1.xpose.msra.mxu0 0.0
        %3963 = vmatprep.subr.mxu0 0.0
        %3964 = vmatpush1.xpose.msra.mxu0 0.0
        %3965 = vmatprep.subr.mxu0 0.0
        %3966 = vmatpush1.xpose.msra.mxu0 0.0
        %3967 = vmatprep.subr.mxu0 0.0
        %3968 = vmatpush1.xpose.msra.mxu0 0.0
        %3969 = vmatprep.subr.mxu0 0.0
        %3970 = vmatpush1.xpose.msra.mxu0 0.0
        %3971 = vmatprep.subr.mxu0 0.0
        %3972 = vmatpush1.xpose.msra.mxu0 0.0
        %3973 = vmatprep.subr.mxu0 0.0
        %3974 = vmatpush1.xpose.msra.mxu0 0.0
        %3975 = vmatprep.subr.mxu0 0.0
        %3976 = vmatpush1.xpose.msra.mxu0 0.0
        %3977 = vmatprep.subr.mxu0 0.0
        %3978 = vmatpush1.xpose.msra.mxu0 0.0
        %3979 = vmatprep.subr.mxu0 0.0
        %3980 = vmatpush1.xpose.msra.mxu0 0.0
        %3981 = vmatprep.subr.mxu0 0.0
        %3982 = vmatpush1.xpose.msra.mxu0 0.0
        %3983 = vmatprep.subr.mxu0 0.0
        %3984 = vmatpush1.xpose.msra.mxu0 0.0
        %3985 = vmatprep.subr.mxu0 0.0
        %3986 = vmatpush1.xpose.msra.mxu0 0.0
        %3987 = vmatprep.subr.mxu0 0.0
        %3988 = vmatpush1.xpose.msra.mxu0 0.0
        %3989 = vmatprep.subr.mxu0 0.0
        %3990 = vmatpush1.xpose.msra.mxu0 0.0
        %3991 = vmatprep.subr.mxu0 0.0
        %3992 = vmatpush1.xpose.msra.mxu0 0.0
        %3993 = vmatprep.subr.mxu0 0.0
        %3994 = vmatpush1.xpose.msra.mxu0 0.0
        %3995 = vmatprep.subr.mxu0 0.0
        %3996 = vmatpush1.xpose.msra.mxu0 0.0
        %3997 = vmatprep.subr.mxu0 0.0
        %3998 = vmatpush1.xpose.msra.mxu0 0.0
        %3999 = vmatprep.subr.mxu0 0.0
        %4000 = vmatpush1.xpose.msra.mxu0 0.0
        %4001 = vmatprep.subr.mxu0 0.0
        %4002 = vmatpush1.xpose.msra.mxu0 0.0
        %4003 = vmatprep.subr.mxu0 0.0
        %4004 = vmatpush1.xpose.msra.mxu0 0.0
        %4005 = vmatprep.subr.mxu0 0.0
        %4006 = vmatpush1.xpose.msra.mxu0 0.0
        %4007 = vmatprep.subr.mxu0 0.0
        %4008 = vmatpush1.xpose.msra.mxu0 0.0
        %4009 = vmatprep.subr.mxu0 0.0
        %4010 = vmatpush1.xpose.msra.mxu0 0.0
        %4011 = vmatprep.subr.mxu0 0.0
        %4012 = vmatpush1.xpose.msra.mxu0 0.0
        %4013 = vmatprep.subr.mxu0 0.0
        %4014 = vmatpush1.xpose.msra.mxu0 0.0
        %4015 = vmatprep.subr.mxu0 0.0
        %4016 = vmatpush1.xpose.msra.mxu0 0.0
        %4017 = vmatprep.subr.mxu0 0.0
        %4018 = vmatpush1.xpose.msra.mxu0 0.0
        %4019 = vmatprep.subr.mxu0 0.0
        %4020 = vmatpush1.xpose.msra.mxu0 0.0
        %4021 = vmatprep.subr.mxu0 0.0
        %4022 = vmatpush1.xpose.msra.mxu0 0.0
        %4023 = vmatprep.mubr.f32.mxu0 0.0
        %4024 = vmatmul.mubr.f32.gmra.mrb[0].mxu0 %v3955
        %v4025 = vpop.f32.mrb[0].mxu0
        %v4026 = vadd.f32 %v3364, %v4025
        %v4027 = vpop.f32.mrb[0].mxu0
        %4028 = vdwg.mxu0
        %v4029 = vsel %vm764, %v4026, -inf
        %4030 = vmax.xlane.f32.xlu0 %v4029
        %v4031 = vpop.xlane.xlu0 %4030
        %v4032 = vsub.f32 %v4026, %v4031
        %v4033 = vmul.f32 %v4032, 1.442695
        %v4034 = vpow.pop %v4033
        %v4035 = vsel %vm764, %v4034, 0.0
        %4036 = vadd.xlane.f32.xlu0 %v4035
        %v4037 = vpop.xlane.xlu0 %4036
        %v4038 = vrcp.pop %v4037
        %v4039 = vmul.f32 %v4034, %v4038
        %4040 = vrot.lane.b32.xlu0 %v3473, 48
        %v4041 = vpop.permute.xlu0 %4040
        %v4044 = vsel %vm764, %v4039, 0
        %4046 = vmatprep.subr.mxu0 0.0
        %4047 = vmatpush1.msra.mxu0 %v4041
        %4048 = vmatprep.subr.mxu0 0.0
        %4049 = vmatpush1.msra.mxu0 0.0
        %4050 = vmatprep.subr.mxu0 0.0
        %4051 = vmatpush1.msra.mxu0 0.0
        %4052 = vmatprep.subr.mxu0 0.0
        %4053 = vmatpush1.msra.mxu0 0.0
        %4054 = vmatprep.subr.mxu0 0.0
        %4055 = vmatpush1.msra.mxu0 0.0
        %4056 = vmatprep.subr.mxu0 0.0
        %4057 = vmatpush1.msra.mxu0 0.0
        %4058 = vmatprep.subr.mxu0 0.0
        %4059 = vmatpush1.msra.mxu0 0.0
        %4060 = vmatprep.subr.mxu0 0.0
        %4061 = vmatpush1.msra.mxu0 0.0
        %4062 = vmatprep.subr.mxu0 0.0
        %4063 = vmatpush1.msra.mxu0 0.0
        %4064 = vmatprep.subr.mxu0 0.0
        %4065 = vmatpush1.msra.mxu0 0.0
        %4066 = vmatprep.subr.mxu0 0.0
        %4067 = vmatpush1.msra.mxu0 0.0
        %4068 = vmatprep.subr.mxu0 0.0
        %4069 = vmatpush1.msra.mxu0 0.0
        %4070 = vmatprep.subr.mxu0 0.0
        %4071 = vmatpush1.msra.mxu0 0.0
        %4072 = vmatprep.subr.mxu0 0.0
        %4073 = vmatpush1.msra.mxu0 0.0
        %4074 = vmatprep.subr.mxu0 0.0
        %4075 = vmatpush1.msra.mxu0 0.0
        %4076 = vmatprep.subr.mxu0 0.0
        %4077 = vmatpush1.msra.mxu0 0.0
        %4078 = vmatprep.subr.mxu0 0.0
        %4079 = vmatpush1.msra.mxu0 0.0
        %4080 = vmatprep.subr.mxu0 0.0
        %4081 = vmatpush1.msra.mxu0 0.0
        %4082 = vmatprep.subr.mxu0 0.0
        %4083 = vmatpush1.msra.mxu0 0.0
        %4084 = vmatprep.subr.mxu0 0.0
        %4085 = vmatpush1.msra.mxu0 0.0
        %4086 = vmatprep.subr.mxu0 0.0
        %4087 = vmatpush1.msra.mxu0 0.0
        %4088 = vmatprep.subr.mxu0 0.0
        %4089 = vmatpush1.msra.mxu0 0.0
        %4090 = vmatprep.subr.mxu0 0.0
        %4091 = vmatpush1.msra.mxu0 0.0
        %4092 = vmatprep.subr.mxu0 0.0
        %4093 = vmatpush1.msra.mxu0 0.0
        %4094 = vmatprep.subr.mxu0 0.0
        %4095 = vmatpush1.msra.mxu0 0.0
        %4096 = vmatprep.subr.mxu0 0.0
        %4097 = vmatpush1.msra.mxu0 0.0
        %4098 = vmatprep.subr.mxu0 0.0
        %4099 = vmatpush1.msra.mxu0 0.0
        %4100 = vmatprep.subr.mxu0 0.0
        %4101 = vmatpush1.msra.mxu0 0.0
        %4102 = vmatprep.subr.mxu0 0.0
        %4103 = vmatpush1.msra.mxu0 0.0
        %4104 = vmatprep.subr.mxu0 0.0
        %4105 = vmatpush1.msra.mxu0 0.0
        %4106 = vmatprep.subr.mxu0 0.0
        %4107 = vmatpush1.msra.mxu0 0.0
        %4108 = vmatprep.subr.mxu0 0.0
        %4109 = vmatpush1.msra.mxu0 0.0
        %4110 = vmatprep.mubr.f32.mxu0 0.0
        %4111 = vmatmul.mubr.f32.gmra.mrb[0].mxu0 %v4044
        %v4112 = vpop.f32.mrb[0].mxu0
        %v4113 = vadd.f32 0.0, %v4112
        %v4114 = vpop.f32.mrb[0].mxu0
        %4115 = vdwg.mxu0
        %v4117 = vsel %vm764, %v4113, 0
        %4119 = vmatprep.subr.mxu0 0.0
        %4120 = vmatpush1.msra.mxu0 %v3371
        %4121 = vmatprep.subr.mxu0 0.0
        %4122 = vmatpush1.msra.mxu0 0.0
        %4123 = vmatprep.subr.mxu0 0.0
        %4124 = vmatpush1.msra.mxu0 0.0
        %4125 = vmatprep.subr.mxu0 0.0
        %4126 = vmatpush1.msra.mxu0 0.0
        %4127 = vmatprep.subr.mxu0 0.0
        %4128 = vmatpush1.msra.mxu0 0.0
        %4129 = vmatprep.subr.mxu0 0.0
        %4130 = vmatpush1.msra.mxu0 0.0
        %4131 = vmatprep.subr.mxu0 0.0
        %4132 = vmatpush1.msra.mxu0 0.0
        %4133 = vmatprep.subr.mxu0 0.0
        %4134 = vmatpush1.msra.mxu0 0.0
        %4135 = vmatprep.subr.mxu0 0.0
        %4136 = vmatpush1.msra.mxu0 0.0
        %4137 = vmatprep.subr.mxu0 0.0
        %4138 = vmatpush1.msra.mxu0 0.0
        %4139 = vmatprep.subr.mxu0 0.0
        %4140 = vmatpush1.msra.mxu0 0.0
        %4141 = vmatprep.subr.mxu0 0.0
        %4142 = vmatpush1.msra.mxu0 0.0
        %4143 = vmatprep.subr.mxu0 0.0
        %4144 = vmatpush1.msra.mxu0 0.0
        %4145 = vmatprep.subr.mxu0 0.0
        %4146 = vmatpush1.msra.mxu0 0.0
        %4147 = vmatprep.subr.mxu0 0.0
        %4148 = vmatpush1.msra.mxu0 0.0
        %4149 = vmatprep.subr.mxu0 0.0
        %4150 = vmatpush1.msra.mxu0 0.0
        %4151 = vmatprep.subr.mxu0 0.0
        %4152 = vmatpush1.msra.mxu0 0.0
        %4153 = vmatprep.subr.mxu0 0.0
        %4154 = vmatpush1.msra.mxu0 0.0
        %4155 = vmatprep.subr.mxu0 0.0
        %4156 = vmatpush1.msra.mxu0 0.0
        %4157 = vmatprep.subr.mxu0 0.0
        %4158 = vmatpush1.msra.mxu0 0.0
        %4159 = vmatprep.subr.mxu0 0.0
        %4160 = vmatpush1.msra.mxu0 0.0
        %4161 = vmatprep.subr.mxu0 0.0
        %4162 = vmatpush1.msra.mxu0 0.0
        %4163 = vmatprep.subr.mxu0 0.0
        %4164 = vmatpush1.msra.mxu0 0.0
        %4165 = vmatprep.subr.mxu0 0.0
        %4166 = vmatpush1.msra.mxu0 0.0
        %4167 = vmatprep.subr.mxu0 0.0
        %4168 = vmatpush1.msra.mxu0 0.0
        %4169 = vmatprep.subr.mxu0 0.0
        %4170 = vmatpush1.msra.mxu0 0.0
        %4171 = vmatprep.subr.mxu0 0.0
        %4172 = vmatpush1.msra.mxu0 0.0
        %4173 = vmatprep.subr.mxu0 0.0
        %4174 = vmatpush1.msra.mxu0 0.0
        %4175 = vmatprep.subr.mxu0 0.0
        %4176 = vmatpush1.msra.mxu0 0.0
        %4177 = vmatprep.subr.mxu0 0.0
        %4178 = vmatpush1.msra.mxu0 0.0
        %4179 = vmatprep.subr.mxu0 0.0
        %4180 = vmatpush1.msra.mxu0 0.0
        %4181 = vmatprep.subr.mxu0 0.0
        %4182 = vmatpush1.msra.mxu0 0.0
        %4183 = vmatprep.mubr.f32.mxu0 0.0
        %4184 = vmatmul.mubr.f32.gmra.mrb[0].mxu0 %v4117
        %v4185 = vpop.f32.mrb[0].mxu0
        %v4186 = vadd.f32 0.0, %v4185
        %v4187 = vpop.f32.mrb[0].mxu0
        %4188 = vdwg.mxu0
        %v4189 = vadd.f32 %v3948, %v4186
        %4190 = vrot.lane.b32.xlu0 %v3473, 104
        %v4191 = vpop.permute.xlu0 %4190
        %4192 = vrot.lane.b32.xlu0 %v3473, 72
        %v4193 = vpop.permute.xlu0 %4192
        %v4194 = vsel %vm764, %v4191, 0
        %v4196 = vsel %vm764, %v4193, 0
        %4198 = vmatprep.subr.mxu0 0.0
        %4199 = vmatpush1.xpose.msra.mxu0 %v4196
        %4200 = vmatprep.subr.mxu0 0.0
        %4201 = vmatpush1.xpose.msra.mxu0 0.0
        %4202 = vmatprep.subr.mxu0 0.0
        %4203 = vmatpush1.xpose.msra.mxu0 0.0
        %4204 = vmatprep.subr.mxu0 0.0
        %4205 = vmatpush1.xpose.msra.mxu0 0.0
        %4206 = vmatprep.subr.mxu0 0.0
        %4207 = vmatpush1.xpose.msra.mxu0 0.0
        %4208 = vmatprep.subr.mxu0 0.0
        %4209 = vmatpush1.xpose.msra.mxu0 0.0
        %4210 = vmatprep.subr.mxu0 0.0
        %4211 = vmatpush1.xpose.msra.mxu0 0.0
        %4212 = vmatprep.subr.mxu0 0.0
        %4213 = vmatpush1.xpose.msra.mxu0 0.0
        %4214 = vmatprep.subr.mxu0 0.0
        %4215 = vmatpush1.xpose.msra.mxu0 0.0
        %4216 = vmatprep.subr.mxu0 0.0
        %4217 = vmatpush1.xpose.msra.mxu0 0.0
        %4218 = vmatprep.subr.mxu0 0.0
        %4219 = vmatpush1.xpose.msra.mxu0 0.0
        %4220 = vmatprep.subr.mxu0 0.0
        %4221 = vmatpush1.xpose.msra.mxu0 0.0
        %4222 = vmatprep.subr.mxu0 0.0
        %4223 = vmatpush1.xpose.msra.mxu0 0.0
        %4224 = vmatprep.subr.mxu0 0.0
        %4225 = vmatpush1.xpose.msra.mxu0 0.0
        %4226 = vmatprep.subr.mxu0 0.0
        %4227 = vmatpush1.xpose.msra.mxu0 0.0
        %4228 = vmatprep.subr.mxu0 0.0
        %4229 = vmatpush1.xpose.msra.mxu0 0.0
        %4230 = vmatprep.subr.mxu0 0.0
        %4231 = vmatpush1.xpose.msra.mxu0 0.0
        %4232 = vmatprep.subr.mxu0 0.0
        %4233 = vmatpush1.xpose.msra.mxu0 0.0
        %4234 = vmatprep.subr.mxu0 0.0
        %4235 = vmatpush1.xpose.msra.mxu0 0.0
        %4236 = vmatprep.subr.mxu0 0.0
        %4237 = vmatpush1.xpose.msra.mxu0 0.0
        %4238 = vmatprep.subr.mxu0 0.0
        %4239 = vmatpush1.xpose.msra.mxu0 0.0
        %4240 = vmatprep.subr.mxu0 0.0
        %4241 = vmatpush1.xpose.msra.mxu0 0.0
        %4242 = vmatprep.subr.mxu0 0.0
        %4243 = vmatpush1.xpose.msra.mxu0 0.0
        %4244 = vmatprep.subr.mxu0 0.0
        %4245 = vmatpush1.xpose.msra.mxu0 0.0
        %4246 = vmatprep.subr.mxu0 0.0
        %4247 = vmatpush1.xpose.msra.mxu0 0.0
        %4248 = vmatprep.subr.mxu0 0.0
        %4249 = vmatpush1.xpose.msra.mxu0 0.0
        %4250 = vmatprep.subr.mxu0 0.0
        %4251 = vmatpush1.xpose.msra.mxu0 0.0
        %4252 = vmatprep.subr.mxu0 0.0
        %4253 = vmatpush1.xpose.msra.mxu0 0.0
        %4254 = vmatprep.subr.mxu0 0.0
        %4255 = vmatpush1.xpose.msra.mxu0 0.0
        %4256 = vmatprep.subr.mxu0 0.0
        %4257 = vmatpush1.xpose.msra.mxu0 0.0
        %4258 = vmatprep.subr.mxu0 0.0
        %4259 = vmatpush1.xpose.msra.mxu0 0.0
        %4260 = vmatprep.subr.mxu0 0.0
        %4261 = vmatpush1.xpose.msra.mxu0 0.0
        %4262 = vmatprep.mubr.f32.mxu0 0.0
        %4263 = vmatmul.mubr.f32.gmra.mrb[0].mxu0 %v4194
        %v4264 = vpop.f32.mrb[0].mxu0
        %v4265 = vadd.f32 %v3364, %v4264
        %v4266 = vpop.f32.mrb[0].mxu0
        %4267 = vdwg.mxu0
        %v4268 = vsel %vm764, %v4265, -inf
        %4269 = vmax.xlane.f32.xlu0 %v4268
        %v4270 = vpop.xlane.xlu0 %4269
        %v4271 = vsub.f32 %v4265, %v4270
        %v4272 = vmul.f32 %v4271, 1.442695
        %v4273 = vpow.pop %v4272
        %v4274 = vsel %vm764, %v4273, 0.0
        %4275 = vadd.xlane.f32.xlu0 %v4274
        %v4276 = vpop.xlane.xlu0 %4275
        %v4277 = vrcp.pop %v4276
        %v4278 = vmul.f32 %v4273, %v4277
        %4279 = vrot.lane.b32.xlu0 %v3473, 40
        %v4280 = vpop.permute.xlu0 %4279
        %v4283 = vsel %vm764, %v4278, 0
        %4285 = vmatprep.subr.mxu0 0.0
        %4286 = vmatpush1.msra.mxu0 %v4280
        %4287 = vmatprep.subr.mxu0 0.0
        %4288 = vmatpush1.msra.mxu0 0.0
        %4289 = vmatprep.subr.mxu0 0.0
        %4290 = vmatpush1.msra.mxu0 0.0
        %4291 = vmatprep.subr.mxu0 0.0
        %4292 = vmatpush1.msra.mxu0 0.0
        %4293 = vmatprep.subr.mxu0 0.0
        %4294 = vmatpush1.msra.mxu0 0.0
        %4295 = vmatprep.subr.mxu0 0.0
        %4296 = vmatpush1.msra.mxu0 0.0
        %4297 = vmatprep.subr.mxu0 0.0
        %4298 = vmatpush1.msra.mxu0 0.0
        %4299 = vmatprep.subr.mxu0 0.0
        %4300 = vmatpush1.msra.mxu0 0.0
        %4301 = vmatprep.subr.mxu0 0.0
        %4302 = vmatpush1.msra.mxu0 0.0
        %4303 = vmatprep.subr.mxu0 0.0
        %4304 = vmatpush1.msra.mxu0 0.0
        %4305 = vmatprep.subr.mxu0 0.0
        %4306 = vmatpush1.msra.mxu0 0.0
        %4307 = vmatprep.subr.mxu0 0.0
        %4308 = vmatpush1.msra.mxu0 0.0
        %4309 = vmatprep.subr.mxu0 0.0
        %4310 = vmatpush1.msra.mxu0 0.0
        %4311 = vmatprep.subr.mxu0 0.0
        %4312 = vmatpush1.msra.mxu0 0.0
        %4313 = vmatprep.subr.mxu0 0.0
        %4314 = vmatpush1.msra.mxu0 0.0
        %4315 = vmatprep.subr.mxu0 0.0
        %4316 = vmatpush1.msra.mxu0 0.0
        %4317 = vmatprep.subr.mxu0 0.0
        %4318 = vmatpush1.msra.mxu0 0.0
        %4319 = vmatprep.subr.mxu0 0.0
        %4320 = vmatpush1.msra.mxu0 0.0
        %4321 = vmatprep.subr.mxu0 0.0
        %4322 = vmatpush1.msra.mxu0 0.0
        %4323 = vmatprep.subr.mxu0 0.0
        %4324 = vmatpush1.msra.mxu0 0.0
        %4325 = vmatprep.subr.mxu0 0.0
        %4326 = vmatpush1.msra.mxu0 0.0
        %4327 = vmatprep.subr.mxu0 0.0
        %4328 = vmatpush1.msra.mxu0 0.0
        %4329 = vmatprep.subr.mxu0 0.0
        %4330 = vmatpush1.msra.mxu0 0.0
        %4331 = vmatprep.subr.mxu0 0.0
        %4332 = vmatpush1.msra.mxu0 0.0
        %4333 = vmatprep.subr.mxu0 0.0
        %4334 = vmatpush1.msra.mxu0 0.0
        %4335 = vmatprep.subr.mxu0 0.0
        %4336 = vmatpush1.msra.mxu0 0.0
        %4337 = vmatprep.subr.mxu0 0.0
        %4338 = vmatpush1.msra.mxu0 0.0
        %4339 = vmatprep.subr.mxu0 0.0
        %4340 = vmatpush1.msra.mxu0 0.0
        %4341 = vmatprep.subr.mxu0 0.0
        %4342 = vmatpush1.msra.mxu0 0.0
        %4343 = vmatprep.subr.mxu0 0.0
        %4344 = vmatpush1.msra.mxu0 0.0
        %4345 = vmatprep.subr.mxu0 0.0
        %4346 = vmatpush1.msra.mxu0 0.0
        %4347 = vmatprep.subr.mxu0 0.0
        %4348 = vmatpush1.msra.mxu0 0.0
        %4349 = vmatprep.mubr.f32.mxu0 0.0
        %4350 = vmatmul.mubr.f32.gmra.mrb[0].mxu0 %v4283
        %v4351 = vpop.f32.mrb[0].mxu0
        %v4352 = vadd.f32 0.0, %v4351
        %v4353 = vpop.f32.mrb[0].mxu0
        %4354 = vdwg.mxu0
        %v4356 = vsel %vm764, %v4352, 0
        %4358 = vmatprep.subr.mxu0 0.0
        %4359 = vmatpush1.msra.mxu0 %v3372
        %4360 = vmatprep.subr.mxu0 0.0
        %4361 = vmatpush1.msra.mxu0 0.0
        %4362 = vmatprep.subr.mxu0 0.0
        %4363 = vmatpush1.msra.mxu0 0.0
        %4364 = vmatprep.subr.mxu0 0.0
        %4365 = vmatpush1.msra.mxu0 0.0
        %4366 = vmatprep.subr.mxu0 0.0
        %4367 = vmatpush1.msra.mxu0 0.0
        %4368 = vmatprep.subr.mxu0 0.0
        %4369 = vmatpush1.msra.mxu0 0.0
        %4370 = vmatprep.subr.mxu0 0.0
        %4371 = vmatpush1.msra.mxu0 0.0
        %4372 = vmatprep.subr.mxu0 0.0
        %4373 = vmatpush1.msra.mxu0 0.0
        %4374 = vmatprep.subr.mxu0 0.0
        %4375 = vmatpush1.msra.mxu0 0.0
        %4376 = vmatprep.subr.mxu0 0.0
        %4377 = vmatpush1.msra.mxu0 0.0
        %4378 = vmatprep.subr.mxu0 0.0
        %4379 = vmatpush1.msra.mxu0 0.0
        %4380 = vmatprep.subr.mxu0 0.0
        %4381 = vmatpush1.msra.mxu0 0.0
        %4382 = vmatprep.subr.mxu0 0.0
        %4383 = vmatpush1.msra.mxu0 0.0
        %4384 = vmatprep.subr.mxu0 0.0
        %4385 = vmatpush1.msra.mxu0 0.0
        %4386 = vmatprep.subr.mxu0 0.0
        %4387 = vmatpush1.msra.mxu0 0.0
        %4388 = vmatprep.subr.mxu0 0.0
        %4389 = vmatpush1.msra.mxu0 0.0
        %4390 = vmatprep.subr.mxu0 0.0
        %4391 = vmatpush1.msra.mxu0 0.0
        %4392 = vmatprep.subr.mxu0 0.0
        %4393 = vmatpush1.msra.mxu0 0.0
        %4394 = vmatprep.subr.mxu0 0.0
        %4395 = vmatpush1.msra.mxu0 0.0
        %4396 = vmatprep.subr.mxu0 0.0
        %4397 = vmatpush1.msra.mxu0 0.0
        %4398 = vmatprep.subr.mxu0 0.0
        %4399 = vmatpush1.msra.mxu0 0.0
        %4400 = vmatprep.subr.mxu0 0.0
        %4401 = vmatpush1.msra.mxu0 0.0
        %4402 = vmatprep.subr.mxu0 0.0
        %4403 = vmatpush1.msra.mxu0 0.0
        %4404 = vmatprep.subr.mxu0 0.0
        %4405 = vmatpush1.msra.mxu0 0.0
        %4406 = vmatprep.subr.mxu0 0.0
        %4407 = vmatpush1.msra.mxu0 0.0
        %4408 = vmatprep.subr.mxu0 0.0
        %4409 = vmatpush1.msra.mxu0 0.0
        %4410 = vmatprep.subr.mxu0 0.0
        %4411 = vmatpush1.msra.mxu0 0.0
        %4412 = vmatprep.subr.mxu0 0.0
        %4413 = vmatpush1.msra.mxu0 0.0
        %4414 = vmatprep.subr.mxu0 0.0
        %4415 = vmatpush1.msra.mxu0 0.0
        %4416 = vmatprep.subr.mxu0 0.0
        %4417 = vmatpush1.msra.mxu0 0.0
        %4418 = vmatprep.subr.mxu0 0.0
        %4419 = vmatpush1.msra.mxu0 0.0
        %4420 = vmatprep.subr.mxu0 0.0
        %4421 = vmatpush1.msra.mxu0 0.0
        %4422 = vmatprep.mubr.f32.mxu0 0.0
        %4423 = vmatmul.mubr.f32.gmra.mrb[0].mxu0 %v4356
        %v4424 = vpop.f32.mrb[0].mxu0
        %v4425 = vadd.f32 0.0, %v4424
        %v4426 = vpop.f32.mrb[0].mxu0
        %4427 = vdwg.mxu0
        %v4428 = vadd.f32 %v4189, %v4425
        %v4429 = vlaneseq
        %v4430 = vshrl.u32 %v4429, 7
        %v4431 = vsub.s32 1, %v4430
        %v4432 = vrot.slane %v3397, %v4431
        %v4433 = vadd.f32 %v4428, %v4432
        %v4434 = vmax.f32 %v4433, 0.0
        %v4435 = vadd.f32 %v3363, %v4434
        %v4436 = vmax.f32 %v4435, 0.0
        %v4437 = vsel %vm681, %v4436, 0.0
        %4438 = vadd.xlane.f32.xlu0 %v4437
        %v4439 = vpop.xlane.xlu0 %4438
        %v4440 = vmul.f32 %v4439, %v1726
        %v4441 = vsub.f32 %v4436, %v4440
        %v4442 = vmul.f32 %v4441, %v4441
        %v4443 = vsel %vm681, %v4442, 0.0
        %4444 = vadd.xlane.f32.xlu0 %v4443
        %v4445 = vpop.xlane.xlu0 %4444
        %v4446 = vmul.f32 %v4445, %v1726
        %v4447 = vadd.f32 %v4446, 1e-05
        %v4448 = vrsqrt.pop %v4447
        %v4449 = vmul.f32 %v4441, %v4448
        %v4450 = vlaneseq
        %v4451 = vshrl.u32 %v4450, 7
        %v4452 = vsub.s32 2, %v4451
        %v4453 = vrot.slane %v3397, %v4452
        %v4454 = vmul.f32 %v4449, %v4453
        %v4455 = vlaneseq
        %v4456 = vshrl.u32 %v4455, 7
        %v4457 = vsub.s32 3, %v4456
        %v4458 = vrot.slane %v3397, %v4457
        %v4459 = vadd.f32 %v4454, %v4458
        %v4461 = vsel %vm764, %v4459, 0
        %v4464 = vsel %vm764, %v3360, 0
        %4466 = vmatprep.subr.mxu0 0.0
        %4467 = vmatpush1.xpose.msra.mxu0 %v4464
        %4468 = vmatprep.subr.mxu0 0.0
        %4469 = vmatpush1.xpose.msra.mxu0 0.0
        %4470 = vmatprep.subr.mxu0 0.0
        %4471 = vmatpush1.xpose.msra.mxu0 0.0
        %4472 = vmatprep.subr.mxu0 0.0
        %4473 = vmatpush1.xpose.msra.mxu0 0.0
        %4474 = vmatprep.subr.mxu0 0.0
        %4475 = vmatpush1.xpose.msra.mxu0 0.0
        %4476 = vmatprep.subr.mxu0 0.0
        %4477 = vmatpush1.xpose.msra.mxu0 0.0
        %4478 = vmatprep.subr.mxu0 0.0
        %4479 = vmatpush1.xpose.msra.mxu0 0.0
        %4480 = vmatprep.subr.mxu0 0.0
        %4481 = vmatpush1.xpose.msra.mxu0 0.0
        %4482 = vmatprep.subr.mxu0 0.0
        %4483 = vmatpush1.xpose.msra.mxu0 0.0
        %4484 = vmatprep.subr.mxu0 0.0
        %4485 = vmatpush1.xpose.msra.mxu0 0.0
        %4486 = vmatprep.subr.mxu0 0.0
        %4487 = vmatpush1.xpose.msra.mxu0 0.0
        %4488 = vmatprep.subr.mxu0 0.0
        %4489 = vmatpush1.xpose.msra.mxu0 0.0
        %4490 = vmatprep.subr.mxu0 0.0
        %4491 = vmatpush1.xpose.msra.mxu0 0.0
        %4492 = vmatprep.subr.mxu0 0.0
        %4493 = vmatpush1.xpose.msra.mxu0 0.0
        %4494 = vmatprep.subr.mxu0 0.0
        %4495 = vmatpush1.xpose.msra.mxu0 0.0
        %4496 = vmatprep.subr.mxu0 0.0
        %4497 = vmatpush1.xpose.msra.mxu0 0.0
        %4498 = vmatprep.subr.mxu0 0.0
        %4499 = vmatpush1.xpose.msra.mxu0 0.0
        %4500 = vmatprep.subr.mxu0 0.0
        %4501 = vmatpush1.xpose.msra.mxu0 0.0
        %4502 = vmatprep.subr.mxu0 0.0
        %4503 = vmatpush1.xpose.msra.mxu0 0.0
        %4504 = vmatprep.subr.mxu0 0.0
        %4505 = vmatpush1.xpose.msra.mxu0 0.0
        %4506 = vmatprep.subr.mxu0 0.0
        %4507 = vmatpush1.xpose.msra.mxu0 0.0
        %4508 = vmatprep.subr.mxu0 0.0
        %4509 = vmatpush1.xpose.msra.mxu0 0.0
        %4510 = vmatprep.subr.mxu0 0.0
        %4511 = vmatpush1.xpose.msra.mxu0 0.0
        %4512 = vmatprep.subr.mxu0 0.0
        %4513 = vmatpush1.xpose.msra.mxu0 0.0
        %4514 = vmatprep.subr.mxu0 0.0
        %4515 = vmatpush1.xpose.msra.mxu0 0.0
        %4516 = vmatprep.subr.mxu0 0.0
        %4517 = vmatpush1.xpose.msra.mxu0 0.0
        %4518 = vmatprep.subr.mxu0 0.0
        %4519 = vmatpush1.xpose.msra.mxu0 0.0
        %4520 = vmatprep.subr.mxu0 0.0
        %4521 = vmatpush1.xpose.msra.mxu0 0.0
        %4522 = vmatprep.subr.mxu0 0.0
        %4523 = vmatpush1.xpose.msra.mxu0 0.0
        %4524 = vmatprep.subr.mxu0 0.0
        %4525 = vmatpush1.xpose.msra.mxu0 0.0
        %4526 = vmatprep.subr.mxu0 0.0
        %4527 = vmatpush1.xpose.msra.mxu0 0.0
        %4528 = vmatprep.subr.mxu0 0.0
        %4529 = vmatpush1.xpose.msra.mxu0 0.0
        %4530 = vmatprep.mubr.f32.mxu0 0.0
        %4531 = vmatmul.mubr.f32.gmra.mrb[0].mxu0 %v4461
        %v4532 = vpop.f32.mrb[0].mxu0
        %v4533 = vadd.f32 0.0, %v4532
        %v4534 = vpop.f32.mrb[0].mxu0
        %4535 = vdwg.mxu0
        %v4536 = vsel %vm764, %v4533, -inf
        %4537 = vmax.xlane.f32.xlu0 %v4536
        %v4538 = vpop.xlane.xlu0 %4537
        %v4539 = vsub.f32 %v4533, %v4538
        %v4540 = vmul.f32 %v4539, 1.442695
        %v4541 = vpow.pop %v4540
        %v4542 = vsel %vm764, %v4541, 0.0
        %4543 = vadd.xlane.f32.xlu0 %v4542
        %v4544 = vpop.xlane.xlu0 %4543
        %v4545 = vrcp.pop %v4544
        %v4546 = vmul.f32 %v4541, %v4545
        %4547 = vrot.lane.b32.xlu0 %v3360, 96
        %v4548 = vpop.permute.xlu0 %4547
        %v4551 = vsel %vm764, %v4546, 0
        %4553 = vmatprep.subr.mxu0 0.0
        %4554 = vmatpush1.msra.mxu0 %v4548
        %4555 = vmatprep.subr.mxu0 0.0
        %4556 = vmatpush1.msra.mxu0 0.0
        %4557 = vmatprep.subr.mxu0 0.0
        %4558 = vmatpush1.msra.mxu0 0.0
        %4559 = vmatprep.subr.mxu0 0.0
        %4560 = vmatpush1.msra.mxu0 0.0
        %4561 = vmatprep.subr.mxu0 0.0
        %4562 = vmatpush1.msra.mxu0 0.0
        %4563 = vmatprep.subr.mxu0 0.0
        %4564 = vmatpush1.msra.mxu0 0.0
        %4565 = vmatprep.subr.mxu0 0.0
        %4566 = vmatpush1.msra.mxu0 0.0
        %4567 = vmatprep.subr.mxu0 0.0
        %4568 = vmatpush1.msra.mxu0 0.0
        %4569 = vmatprep.subr.mxu0 0.0
        %4570 = vmatpush1.msra.mxu0 0.0
        %4571 = vmatprep.subr.mxu0 0.0
        %4572 = vmatpush1.msra.mxu0 0.0
        %4573 = vmatprep.subr.mxu0 0.0
        %4574 = vmatpush1.msra.mxu0 0.0
        %4575 = vmatprep.subr.mxu0 0.0
        %4576 = vmatpush1.msra.mxu0 0.0
        %4577 = vmatprep.subr.mxu0 0.0
        %4578 = vmatpush1.msra.mxu0 0.0
        %4579 = vmatprep.subr.mxu0 0.0
        %4580 = vmatpush1.msra.mxu0 0.0
        %4581 = vmatprep.subr.mxu0 0.0
        %4582 = vmatpush1.msra.mxu0 0.0
        %4583 = vmatprep.subr.mxu0 0.0
        %4584 = vmatpush1.msra.mxu0 0.0
        %4585 = vmatprep.subr.mxu0 0.0
        %4586 = vmatpush1.msra.mxu0 0.0
        %4587 = vmatprep.subr.mxu0 0.0
        %4588 = vmatpush1.msra.mxu0 0.0
        %4589 = vmatprep.subr.mxu0 0.0
        %4590 = vmatpush1.msra.mxu0 0.0
        %4591 = vmatprep.subr.mxu0 0.0
        %4592 = vmatpush1.msra.mxu0 0.0
        %4593 = vmatprep.subr.mxu0 0.0
        %4594 = vmatpush1.msra.mxu0 0.0
        %4595 = vmatprep.subr.mxu0 0.0
        %4596 = vmatpush1.msra.mxu0 0.0
        %4597 = vmatprep.subr.mxu0 0.0
        %4598 = vmatpush1.msra.mxu0 0.0
        %4599 = vmatprep.subr.mxu0 0.0
        %4600 = vmatpush1.msra.mxu0 0.0
        %4601 = vmatprep.subr.mxu0 0.0
        %4602 = vmatpush1.msra.mxu0 0.0
        %4603 = vmatprep.subr.mxu0 0.0
        %4604 = vmatpush1.msra.mxu0 0.0
        %4605 = vmatprep.subr.mxu0 0.0
        %4606 = vmatpush1.msra.mxu0 0.0
        %4607 = vmatprep.subr.mxu0 0.0
        %4608 = vmatpush1.msra.mxu0 0.0
        %4609 = vmatprep.subr.mxu0 0.0
        %4610 = vmatpush1.msra.mxu0 0.0
        %4611 = vmatprep.subr.mxu0 0.0
        %4612 = vmatpush1.msra.mxu0 0.0
        %4613 = vmatprep.subr.mxu0 0.0
        %4614 = vmatpush1.msra.mxu0 0.0
        %4615 = vmatprep.subr.mxu0 0.0
        %4616 = vmatpush1.msra.mxu0 0.0
        %4617 = vmatprep.mubr.f32.mxu0 0.0
        %4618 = vmatmul.mubr.f32.gmra.mrb[0].mxu0 %v4551
        %v4619 = vpop.f32.mrb[0].mxu0
        %v4620 = vadd.f32 0.0, %v4619
        %v4621 = vpop.f32.mrb[0].mxu0
        %4622 = vdwg.mxu0
        %4623 = vrot.lane.b32.xlu0 %v4459, 120
        %v4624 = vpop.permute.xlu0 %4623
        %4625 = vrot.lane.b32.xlu0 %v3360, 120
        %v4626 = vpop.permute.xlu0 %4625
        %v4627 = vsel %vm764, %v4624, 0
        %v4629 = vsel %vm764, %v4626, 0
        %4631 = vmatprep.subr.mxu0 0.0
        %4632 = vmatpush1.xpose.msra.mxu0 %v4629
        %4633 = vmatprep.subr.mxu0 0.0
        %4634 = vmatpush1.xpose.msra.mxu0 0.0
        %4635 = vmatprep.subr.mxu0 0.0
        %4636 = vmatpush1.xpose.msra.mxu0 0.0
        %4637 = vmatprep.subr.mxu0 0.0
        %4638 = vmatpush1.xpose.msra.mxu0 0.0
        %4639 = vmatprep.subr.mxu0 0.0
        %4640 = vmatpush1.xpose.msra.mxu0 0.0
        %4641 = vmatprep.subr.mxu0 0.0
        %4642 = vmatpush1.xpose.msra.mxu0 0.0
        %4643 = vmatprep.subr.mxu0 0.0
        %4644 = vmatpush1.xpose.msra.mxu0 0.0
        %4645 = vmatprep.subr.mxu0 0.0
        %4646 = vmatpush1.xpose.msra.mxu0 0.0
        %4647 = vmatprep.subr.mxu0 0.0
        %4648 = vmatpush1.xpose.msra.mxu0 0.0
        %4649 = vmatprep.subr.mxu0 0.0
        %4650 = vmatpush1.xpose.msra.mxu0 0.0
        %4651 = vmatprep.subr.mxu0 0.0
        %4652 = vmatpush1.xpose.msra.mxu0 0.0
        %4653 = vmatprep.subr.mxu0 0.0
        %4654 = vmatpush1.xpose.msra.mxu0 0.0
        %4655 = vmatprep.subr.mxu0 0.0
        %4656 = vmatpush1.xpose.msra.mxu0 0.0
        %4657 = vmatprep.subr.mxu0 0.0
        %4658 = vmatpush1.xpose.msra.mxu0 0.0
        %4659 = vmatprep.subr.mxu0 0.0
        %4660 = vmatpush1.xpose.msra.mxu0 0.0
        %4661 = vmatprep.subr.mxu0 0.0
        %4662 = vmatpush1.xpose.msra.mxu0 0.0
        %4663 = vmatprep.subr.mxu0 0.0
        %4664 = vmatpush1.xpose.msra.mxu0 0.0
        %4665 = vmatprep.subr.mxu0 0.0
        %4666 = vmatpush1.xpose.msra.mxu0 0.0
        %4667 = vmatprep.subr.mxu0 0.0
        %4668 = vmatpush1.xpose.msra.mxu0 0.0
        %4669 = vmatprep.subr.mxu0 0.0
        %4670 = vmatpush1.xpose.msra.mxu0 0.0
        %4671 = vmatprep.subr.mxu0 0.0
        %4672 = vmatpush1.xpose.msra.mxu0 0.0
        %4673 = vmatprep.subr.mxu0 0.0
        %4674 = vmatpush1.xpose.msra.mxu0 0.0
        %4675 = vmatprep.subr.mxu0 0.0
        %4676 = vmatpush1.xpose.msra.mxu0 0.0
        %4677 = vmatprep.subr.mxu0 0.0
        %4678 = vmatpush1.xpose.msra.mxu0 0.0
        %4679 = vmatprep.subr.mxu0 0.0
        %4680 = vmatpush1.xpose.msra.mxu0 0.0
        %4681 = vmatprep.subr.mxu0 0.0
        %4682 = vmatpush1.xpose.msra.mxu0 0.0
        %4683 = vmatprep.subr.mxu0 0.0
        %4684 = vmatpush1.xpose.msra.mxu0 0.0
        %4685 = vmatprep.subr.mxu0 0.0
        %4686 = vmatpush1.xpose.msra.mxu0 0.0
        %4687 = vmatprep.subr.mxu0 0.0
        %4688 = vmatpush1.xpose.msra.mxu0 0.0
        %4689 = vmatprep.subr.mxu0 0.0
        %4690 = vmatpush1.xpose.msra.mxu0 0.0
        %4691 = vmatprep.subr.mxu0 0.0
        %4692 = vmatpush1.xpose.msra.mxu0 0.0
        %4693 = vmatprep.subr.mxu0 0.0
        %4694 = vmatpush1.xpose.msra.mxu0 0.0
        %4695 = vmatprep.mubr.f32.mxu0 0.0
        %4696 = vmatmul.mubr.f32.gmra.mrb[0].mxu0 %v4627
        %v4697 = vpop.f32.mrb[0].mxu0
        %v4698 = vadd.f32 0.0, %v4697
        %v4699 = vpop.f32.mrb[0].mxu0
        %4700 = vdwg.mxu0
        %v4701 = vsel %vm764, %v4698, -inf
        %4702 = vmax.xlane.f32.xlu0 %v4701
        %v4703 = vpop.xlane.xlu0 %4702
        %v4704 = vsub.f32 %v4698, %v4703
        %v4705 = vmul.f32 %v4704, 1.442695
        %v4706 = vpow.pop %v4705
        %v4707 = vsel %vm764, %v4706, 0.0
        %4708 = vadd.xlane.f32.xlu0 %v4707
        %v4709 = vpop.xlane.xlu0 %4708
        %v4710 = vrcp.pop %v4709
        %v4711 = vmul.f32 %v4706, %v4710
        %4712 = vrot.lane.b32.xlu0 %v3360, 88
        %v4713 = vpop.permute.xlu0 %4712
        %v4716 = vsel %vm764, %v4711, 0
        %4718 = vmatprep.subr.mxu0 0.0
        %4719 = vmatpush1.msra.mxu0 %v4713
        %4720 = vmatprep.subr.mxu0 0.0
        %4721 = vmatpush1.msra.mxu0 0.0
        %4722 = vmatprep.subr.mxu0 0.0
        %4723 = vmatpush1.msra.mxu0 0.0
        %4724 = vmatprep.subr.mxu0 0.0
        %4725 = vmatpush1.msra.mxu0 0.0
        %4726 = vmatprep.subr.mxu0 0.0
        %4727 = vmatpush1.msra.mxu0 0.0
        %4728 = vmatprep.subr.mxu0 0.0
        %4729 = vmatpush1.msra.mxu0 0.0
        %4730 = vmatprep.subr.mxu0 0.0
        %4731 = vmatpush1.msra.mxu0 0.0
        %4732 = vmatprep.subr.mxu0 0.0
        %4733 = vmatpush1.msra.mxu0 0.0
        %4734 = vmatprep.subr.mxu0 0.0
        %4735 = vmatpush1.msra.mxu0 0.0
        %4736 = vmatprep.subr.mxu0 0.0
        %4737 = vmatpush1.msra.mxu0 0.0
        %4738 = vmatprep.subr.mxu0 0.0
        %4739 = vmatpush1.msra.mxu0 0.0
        %4740 = vmatprep.subr.mxu0 0.0
        %4741 = vmatpush1.msra.mxu0 0.0
        %4742 = vmatprep.subr.mxu0 0.0
        %4743 = vmatpush1.msra.mxu0 0.0
        %4744 = vmatprep.subr.mxu0 0.0
        %4745 = vmatpush1.msra.mxu0 0.0
        %4746 = vmatprep.subr.mxu0 0.0
        %4747 = vmatpush1.msra.mxu0 0.0
        %4748 = vmatprep.subr.mxu0 0.0
        %4749 = vmatpush1.msra.mxu0 0.0
        %4750 = vmatprep.subr.mxu0 0.0
        %4751 = vmatpush1.msra.mxu0 0.0
        %4752 = vmatprep.subr.mxu0 0.0
        %4753 = vmatpush1.msra.mxu0 0.0
        %4754 = vmatprep.subr.mxu0 0.0
        %4755 = vmatpush1.msra.mxu0 0.0
        %4756 = vmatprep.subr.mxu0 0.0
        %4757 = vmatpush1.msra.mxu0 0.0
        %4758 = vmatprep.subr.mxu0 0.0
        %4759 = vmatpush1.msra.mxu0 0.0
        %4760 = vmatprep.subr.mxu0 0.0
        %4761 = vmatpush1.msra.mxu0 0.0
        %4762 = vmatprep.subr.mxu0 0.0
        %4763 = vmatpush1.msra.mxu0 0.0
        %4764 = vmatprep.subr.mxu0 0.0
        %4765 = vmatpush1.msra.mxu0 0.0
        %4766 = vmatprep.subr.mxu0 0.0
        %4767 = vmatpush1.msra.mxu0 0.0
        %4768 = vmatprep.subr.mxu0 0.0
        %4769 = vmatpush1.msra.mxu0 0.0
        %4770 = vmatprep.subr.mxu0 0.0
        %4771 = vmatpush1.msra.mxu0 0.0
        %4772 = vmatprep.subr.mxu0 0.0
        %4773 = vmatpush1.msra.mxu0 0.0
        %4774 = vmatprep.subr.mxu0 0.0
        %4775 = vmatpush1.msra.mxu0 0.0
        %4776 = vmatprep.subr.mxu0 0.0
        %4777 = vmatpush1.msra.mxu0 0.0
        %4778 = vmatprep.subr.mxu0 0.0
        %4779 = vmatpush1.msra.mxu0 0.0
        %4780 = vmatprep.subr.mxu0 0.0
        %4781 = vmatpush1.msra.mxu0 0.0
        %4782 = vmatprep.mubr.f32.mxu0 0.0
        %4783 = vmatmul.mubr.f32.gmra.mrb[0].mxu0 %v4716
        %v4784 = vpop.f32.mrb[0].mxu0
        %v4785 = vadd.f32 0.0, %v4784
        %v4786 = vpop.f32.mrb[0].mxu0
        %4787 = vdwg.mxu0
        %v4789 = vsel %vm764, %v4785, 0
        %4791 = vmatprep.subr.mxu0 0.0
        %4792 = vmatpush1.msra.mxu0 %v3374
        %4793 = vmatprep.subr.mxu0 0.0
        %4794 = vmatpush1.msra.mxu0 0.0
        %4795 = vmatprep.subr.mxu0 0.0
        %4796 = vmatpush1.msra.mxu0 0.0
        %4797 = vmatprep.subr.mxu0 0.0
        %4798 = vmatpush1.msra.mxu0 0.0
        %4799 = vmatprep.subr.mxu0 0.0
        %4800 = vmatpush1.msra.mxu0 0.0
        %4801 = vmatprep.subr.mxu0 0.0
        %4802 = vmatpush1.msra.mxu0 0.0
        %4803 = vmatprep.subr.mxu0 0.0
        %4804 = vmatpush1.msra.mxu0 0.0
        %4805 = vmatprep.subr.mxu0 0.0
        %4806 = vmatpush1.msra.mxu0 0.0
        %4807 = vmatprep.subr.mxu0 0.0
        %4808 = vmatpush1.msra.mxu0 0.0
        %4809 = vmatprep.subr.mxu0 0.0
        %4810 = vmatpush1.msra.mxu0 0.0
        %4811 = vmatprep.subr.mxu0 0.0
        %4812 = vmatpush1.msra.mxu0 0.0
        %4813 = vmatprep.subr.mxu0 0.0
        %4814 = vmatpush1.msra.mxu0 0.0
        %4815 = vmatprep.subr.mxu0 0.0
        %4816 = vmatpush1.msra.mxu0 0.0
        %4817 = vmatprep.subr.mxu0 0.0
        %4818 = vmatpush1.msra.mxu0 0.0
        %4819 = vmatprep.subr.mxu0 0.0
        %4820 = vmatpush1.msra.mxu0 0.0
        %4821 = vmatprep.subr.mxu0 0.0
        %4822 = vmatpush1.msra.mxu0 0.0
        %4823 = vmatprep.subr.mxu0 0.0
        %4824 = vmatpush1.msra.mxu0 0.0
        %4825 = vmatprep.subr.mxu0 0.0
        %4826 = vmatpush1.msra.mxu0 0.0
        %4827 = vmatprep.subr.mxu0 0.0
        %4828 = vmatpush1.msra.mxu0 0.0
        %4829 = vmatprep.subr.mxu0 0.0
        %4830 = vmatpush1.msra.mxu0 0.0
        %4831 = vmatprep.subr.mxu0 0.0
        %4832 = vmatpush1.msra.mxu0 0.0
        %4833 = vmatprep.subr.mxu0 0.0
        %4834 = vmatpush1.msra.mxu0 0.0
        %4835 = vmatprep.subr.mxu0 0.0
        %4836 = vmatpush1.msra.mxu0 0.0
        %4837 = vmatprep.subr.mxu0 0.0
        %4838 = vmatpush1.msra.mxu0 0.0
        %4839 = vmatprep.subr.mxu0 0.0
        %4840 = vmatpush1.msra.mxu0 0.0
        %4841 = vmatprep.subr.mxu0 0.0
        %4842 = vmatpush1.msra.mxu0 0.0
        %4843 = vmatprep.subr.mxu0 0.0
        %4844 = vmatpush1.msra.mxu0 0.0
        %4845 = vmatprep.subr.mxu0 0.0
        %4846 = vmatpush1.msra.mxu0 0.0
        %4847 = vmatprep.subr.mxu0 0.0
        %4848 = vmatpush1.msra.mxu0 0.0
        %4849 = vmatprep.subr.mxu0 0.0
        %4850 = vmatpush1.msra.mxu0 0.0
        %4851 = vmatprep.subr.mxu0 0.0
        %4852 = vmatpush1.msra.mxu0 0.0
        %4853 = vmatprep.subr.mxu0 0.0
        %4854 = vmatpush1.msra.mxu0 0.0
        %4855 = vmatprep.mubr.f32.mxu0 0.0
        %4856 = vmatmul.mubr.f32.gmra.mrb[0].mxu0 %v4789
        %v4857 = vpop.f32.mrb[0].mxu0
        %v4858 = vadd.f32 0.0, %v4857
        %v4859 = vpop.f32.mrb[0].mxu0
        %4860 = vdwg.mxu0
        %v4862 = vsel %vm764, %v4620, 0
        %4864 = vmatprep.subr.mxu0 0.0
        %4865 = vmatpush1.msra.mxu0 %v3373
        %4866 = vmatprep.subr.mxu0 0.0
        %4867 = vmatpush1.msra.mxu0 0.0
        %4868 = vmatprep.subr.mxu0 0.0
        %4869 = vmatpush1.msra.mxu0 0.0
        %4870 = vmatprep.subr.mxu0 0.0
        %4871 = vmatpush1.msra.mxu0 0.0
        %4872 = vmatprep.subr.mxu0 0.0
        %4873 = vmatpush1.msra.mxu0 0.0
        %4874 = vmatprep.subr.mxu0 0.0
        %4875 = vmatpush1.msra.mxu0 0.0
        %4876 = vmatprep.subr.mxu0 0.0
        %4877 = vmatpush1.msra.mxu0 0.0
        %4878 = vmatprep.subr.mxu0 0.0
        %4879 = vmatpush1.msra.mxu0 0.0
        %4880 = vmatprep.subr.mxu0 0.0
        %4881 = vmatpush1.msra.mxu0 0.0
        %4882 = vmatprep.subr.mxu0 0.0
        %4883 = vmatpush1.msra.mxu0 0.0
        %4884 = vmatprep.subr.mxu0 0.0
        %4885 = vmatpush1.msra.mxu0 0.0
        %4886 = vmatprep.subr.mxu0 0.0
        %4887 = vmatpush1.msra.mxu0 0.0
        %4888 = vmatprep.subr.mxu0 0.0
        %4889 = vmatpush1.msra.mxu0 0.0
        %4890 = vmatprep.subr.mxu0 0.0
        %4891 = vmatpush1.msra.mxu0 0.0
        %4892 = vmatprep.subr.mxu0 0.0
        %4893 = vmatpush1.msra.mxu0 0.0
        %4894 = vmatprep.subr.mxu0 0.0
        %4895 = vmatpush1.msra.mxu0 0.0
        %4896 = vmatprep.subr.mxu0 0.0
        %4897 = vmatpush1.msra.mxu0 0.0
        %4898 = vmatprep.subr.mxu0 0.0
        %4899 = vmatpush1.msra.mxu0 0.0
        %4900 = vmatprep.subr.mxu0 0.0
        %4901 = vmatpush1.msra.mxu0 0.0
        %4902 = vmatprep.subr.mxu0 0.0
        %4903 = vmatpush1.msra.mxu0 0.0
        %4904 = vmatprep.subr.mxu0 0.0
        %4905 = vmatpush1.msra.mxu0 0.0
        %4906 = vmatprep.subr.mxu0 0.0
        %4907 = vmatpush1.msra.mxu0 0.0
        %4908 = vmatprep.subr.mxu0 0.0
        %4909 = vmatpush1.msra.mxu0 0.0
        %4910 = vmatprep.subr.mxu0 0.0
        %4911 = vmatpush1.msra.mxu0 0.0
        %4912 = vmatprep.subr.mxu0 0.0
        %4913 = vmatpush1.msra.mxu0 0.0
        %4914 = vmatprep.subr.mxu0 0.0
        %4915 = vmatpush1.msra.mxu0 0.0
        %4916 = vmatprep.subr.mxu0 0.0
        %4917 = vmatpush1.msra.mxu0 0.0
        %4918 = vmatprep.subr.mxu0 0.0
        %4919 = vmatpush1.msra.mxu0 0.0
        %4920 = vmatprep.subr.mxu0 0.0
        %4921 = vmatpush1.msra.mxu0 0.0
        %4922 = vmatprep.subr.mxu0 0.0
        %4923 = vmatpush1.msra.mxu0 0.0
        %4924 = vmatprep.subr.mxu0 0.0
        %4925 = vmatpush1.msra.mxu0 0.0
        %4926 = vmatprep.subr.mxu0 0.0
        %4927 = vmatpush1.msra.mxu0 0.0
        %4928 = vmatprep.mubr.f32.mxu0 0.0
        %4929 = vmatmul.mubr.f32.gmra.mrb[0].mxu0 %v4862
        %v4930 = vpop.f32.mrb[0].mxu0
        %v4931 = vadd.f32 %v4858, %v4930
        %v4932 = vpop.f32.mrb[0].mxu0
        %4933 = vdwg.mxu0
        %4934 = vrot.lane.b32.xlu0 %v4459, 112
        %v4935 = vpop.permute.xlu0 %4934
        %4936 = vrot.lane.b32.xlu0 %v3360, 112
        %v4937 = vpop.permute.xlu0 %4936
        %v4938 = vsel %vm764, %v4935, 0
        %v4940 = vsel %vm764, %v4937, 0
        %4942 = vmatprep.subr.mxu0 0.0
        %4943 = vmatpush1.xpose.msra.mxu0 %v4940
        %4944 = vmatprep.subr.mxu0 0.0
        %4945 = vmatpush1.xpose.msra.mxu0 0.0
        %4946 = vmatprep.subr.mxu0 0.0
        %4947 = vmatpush1.xpose.msra.mxu0 0.0
        %4948 = vmatprep.subr.mxu0 0.0
        %4949 = vmatpush1.xpose.msra.mxu0 0.0
        %4950 = vmatprep.subr.mxu0 0.0
        %4951 = vmatpush1.xpose.msra.mxu0 0.0
        %4952 = vmatprep.subr.mxu0 0.0
        %4953 = vmatpush1.xpose.msra.mxu0 0.0
        %4954 = vmatprep.subr.mxu0 0.0
        %4955 = vmatpush1.xpose.msra.mxu0 0.0
        %4956 = vmatprep.subr.mxu0 0.0
        %4957 = vmatpush1.xpose.msra.mxu0 0.0
        %4958 = vmatprep.subr.mxu0 0.0
        %4959 = vmatpush1.xpose.msra.mxu0 0.0
        %4960 = vmatprep.subr.mxu0 0.0
        %4961 = vmatpush1.xpose.msra.mxu0 0.0
        %4962 = vmatprep.subr.mxu0 0.0
        %4963 = vmatpush1.xpose.msra.mxu0 0.0
        %4964 = vmatprep.subr.mxu0 0.0
        %4965 = vmatpush1.xpose.msra.mxu0 0.0
        %4966 = vmatprep.subr.mxu0 0.0
        %4967 = vmatpush1.xpose.msra.mxu0 0.0
        %4968 = vmatprep.subr.mxu0 0.0
        %4969 = vmatpush1.xpose.msra.mxu0 0.0
        %4970 = vmatprep.subr.mxu0 0.0
        %4971 = vmatpush1.xpose.msra.mxu0 0.0
        %4972 = vmatprep.subr.mxu0 0.0
        %4973 = vmatpush1.xpose.msra.mxu0 0.0
        %4974 = vmatprep.subr.mxu0 0.0
        %4975 = vmatpush1.xpose.msra.mxu0 0.0
        %4976 = vmatprep.subr.mxu0 0.0
        %4977 = vmatpush1.xpose.msra.mxu0 0.0
        %4978 = vmatprep.subr.mxu0 0.0
        %4979 = vmatpush1.xpose.msra.mxu0 0.0
        %4980 = vmatprep.subr.mxu0 0.0
        %4981 = vmatpush1.xpose.msra.mxu0 0.0
        %4982 = vmatprep.subr.mxu0 0.0
        %4983 = vmatpush1.xpose.msra.mxu0 0.0
        %4984 = vmatprep.subr.mxu0 0.0
        %4985 = vmatpush1.xpose.msra.mxu0 0.0
        %4986 = vmatprep.subr.mxu0 0.0
        %4987 = vmatpush1.xpose.msra.mxu0 0.0
        %4988 = vmatprep.subr.mxu0 0.0
        %4989 = vmatpush1.xpose.msra.mxu0 0.0
        %4990 = vmatprep.subr.mxu0 0.0
        %4991 = vmatpush1.xpose.msra.mxu0 0.0
        %4992 = vmatprep.subr.mxu0 0.0
        %4993 = vmatpush1.xpose.msra.mxu0 0.0
        %4994 = vmatprep.subr.mxu0 0.0
        %4995 = vmatpush1.xpose.msra.mxu0 0.0
        %4996 = vmatprep.subr.mxu0 0.0
        %4997 = vmatpush1.xpose.msra.mxu0 0.0
        %4998 = vmatprep.subr.mxu0 0.0
        %4999 = vmatpush1.xpose.msra.mxu0 0.0
        %5000 = vmatprep.subr.mxu0 0.0
        %5001 = vmatpush1.xpose.msra.mxu0 0.0
        %5002 = vmatprep.subr.mxu0 0.0
        %5003 = vmatpush1.xpose.msra.mxu0 0.0
        %5004 = vmatprep.subr.mxu0 0.0
        %5005 = vmatpush1.xpose.msra.mxu0 0.0
        %5006 = vmatprep.mubr.f32.mxu0 0.0
        %5007 = vmatmul.mubr.f32.gmra.mrb[0].mxu0 %v4938
        %v5008 = vpop.f32.mrb[0].mxu0
        %v5009 = vadd.f32 0.0, %v5008
        %v5010 = vpop.f32.mrb[0].mxu0
        %5011 = vdwg.mxu0
        %v5012 = vsel %vm764, %v5009, -inf
        %5013 = vmax.xlane.f32.xlu0 %v5012
        %v5014 = vpop.xlane.xlu0 %5013
        %v5015 = vsub.f32 %v5009, %v5014
        %v5016 = vmul.f32 %v5015, 1.442695
        %v5017 = vpow.pop %v5016
        %v5018 = vsel %vm764, %v5017, 0.0
        %5019 = vadd.xlane.f32.xlu0 %v5018
        %v5020 = vpop.xlane.xlu0 %5019
        %v5021 = vrcp.pop %v5020
        %v5022 = vmul.f32 %v5017, %v5021
        %5023 = vrot.lane.b32.xlu0 %v3360, 80
        %v5024 = vpop.permute.xlu0 %5023
        %v5027 = vsel %vm764, %v5022, 0
        %5029 = vmatprep.subr.mxu0 0.0
        %5030 = vmatpush1.msra.mxu0 %v5024
        %5031 = vmatprep.subr.mxu0 0.0
        %5032 = vmatpush1.msra.mxu0 0.0
        %5033 = vmatprep.subr.mxu0 0.0
        %5034 = vmatpush1.msra.mxu0 0.0
        %5035 = vmatprep.subr.mxu0 0.0
        %5036 = vmatpush1.msra.mxu0 0.0
        %5037 = vmatprep.subr.mxu0 0.0
        %5038 = vmatpush1.msra.mxu0 0.0
        %5039 = vmatprep.subr.mxu0 0.0
        %5040 = vmatpush1.msra.mxu0 0.0
        %5041 = vmatprep.subr.mxu0 0.0
        %5042 = vmatpush1.msra.mxu0 0.0
        %5043 = vmatprep.subr.mxu0 0.0
        %5044 = vmatpush1.msra.mxu0 0.0
        %5045 = vmatprep.subr.mxu0 0.0
        %5046 = vmatpush1.msra.mxu0 0.0
        %5047 = vmatprep.subr.mxu0 0.0
        %5048 = vmatpush1.msra.mxu0 0.0
        %5049 = vmatprep.subr.mxu0 0.0
        %5050 = vmatpush1.msra.mxu0 0.0
        %5051 = vmatprep.subr.mxu0 0.0
        %5052 = vmatpush1.msra.mxu0 0.0
        %5053 = vmatprep.subr.mxu0 0.0
        %5054 = vmatpush1.msra.mxu0 0.0
        %5055 = vmatprep.subr.mxu0 0.0
        %5056 = vmatpush1.msra.mxu0 0.0
        %5057 = vmatprep.subr.mxu0 0.0
        %5058 = vmatpush1.msra.mxu0 0.0
        %5059 = vmatprep.subr.mxu0 0.0
        %5060 = vmatpush1.msra.mxu0 0.0
        %5061 = vmatprep.subr.mxu0 0.0
        %5062 = vmatpush1.msra.mxu0 0.0
        %5063 = vmatprep.subr.mxu0 0.0
        %5064 = vmatpush1.msra.mxu0 0.0
        %5065 = vmatprep.subr.mxu0 0.0
        %5066 = vmatpush1.msra.mxu0 0.0
        %5067 = vmatprep.subr.mxu0 0.0
        %5068 = vmatpush1.msra.mxu0 0.0
        %5069 = vmatprep.subr.mxu0 0.0
        %5070 = vmatpush1.msra.mxu0 0.0
        %5071 = vmatprep.subr.mxu0 0.0
        %5072 = vmatpush1.msra.mxu0 0.0
        %5073 = vmatprep.subr.mxu0 0.0
        %5074 = vmatpush1.msra.mxu0 0.0
        %5075 = vmatprep.subr.mxu0 0.0
        %5076 = vmatpush1.msra.mxu0 0.0
        %5077 = vmatprep.subr.mxu0 0.0
        %5078 = vmatpush1.msra.mxu0 0.0
        %5079 = vmatprep.subr.mxu0 0.0
        %5080 = vmatpush1.msra.mxu0 0.0
        %5081 = vmatprep.subr.mxu0 0.0
        %5082 = vmatpush1.msra.mxu0 0.0
        %5083 = vmatprep.subr.mxu0 0.0
        %5084 = vmatpush1.msra.mxu0 0.0
        %5085 = vmatprep.subr.mxu0 0.0
        %5086 = vmatpush1.msra.mxu0 0.0
        %5087 = vmatprep.subr.mxu0 0.0
        %5088 = vmatpush1.msra.mxu0 0.0
        %5089 = vmatprep.subr.mxu0 0.0
        %5090 = vmatpush1.msra.mxu0 0.0
        %5091 = vmatprep.subr.mxu0 0.0
        %5092 = vmatpush1.msra.mxu0 0.0
        %5093 = vmatprep.mubr.f32.mxu0 0.0
        %5094 = vmatmul.mubr.f32.gmra.mrb[0].mxu0 %v5027
        %v5095 = vpop.f32.mrb[0].mxu0
        %v5096 = vadd.f32 0.0, %v5095
        %v5097 = vpop.f32.mrb[0].mxu0
        %5098 = vdwg.mxu0
        %v5100 = vsel %vm764, %v5096, 0
        %5102 = vmatprep.subr.mxu0 0.0
        %5103 = vmatpush1.msra.mxu0 %v3375
        %5104 = vmatprep.subr.mxu0 0.0
        %5105 = vmatpush1.msra.mxu0 0.0
        %5106 = vmatprep.subr.mxu0 0.0
        %5107 = vmatpush1.msra.mxu0 0.0
        %5108 = vmatprep.subr.mxu0 0.0
        %5109 = vmatpush1.msra.mxu0 0.0
        %5110 = vmatprep.subr.mxu0 0.0
        %5111 = vmatpush1.msra.mxu0 0.0
        %5112 = vmatprep.subr.mxu0 0.0
        %5113 = vmatpush1.msra.mxu0 0.0
        %5114 = vmatprep.subr.mxu0 0.0
        %5115 = vmatpush1.msra.mxu0 0.0
        %5116 = vmatprep.subr.mxu0 0.0
        %5117 = vmatpush1.msra.mxu0 0.0
        %5118 = vmatprep.subr.mxu0 0.0
        %5119 = vmatpush1.msra.mxu0 0.0
        %5120 = vmatprep.subr.mxu0 0.0
        %5121 = vmatpush1.msra.mxu0 0.0
        %5122 = vmatprep.subr.mxu0 0.0
        %5123 = vmatpush1.msra.mxu0 0.0
        %5124 = vmatprep.subr.mxu0 0.0
        %5125 = vmatpush1.msra.mxu0 0.0
        %5126 = vmatprep.subr.mxu0 0.0
        %5127 = vmatpush1.msra.mxu0 0.0
        %5128 = vmatprep.subr.mxu0 0.0
        %5129 = vmatpush1.msra.mxu0 0.0
        %5130 = vmatprep.subr.mxu0 0.0
        %5131 = vmatpush1.msra.mxu0 0.0
        %5132 = vmatprep.subr.mxu0 0.0
        %5133 = vmatpush1.msra.mxu0 0.0
        %5134 = vmatprep.subr.mxu0 0.0
        %5135 = vmatpush1.msra.mxu0 0.0
        %5136 = vmatprep.subr.mxu0 0.0
        %5137 = vmatpush1.msra.mxu0 0.0
        %5138 = vmatprep.subr.mxu0 0.0
        %5139 = vmatpush1.msra.mxu0 0.0
        %5140 = vmatprep.subr.mxu0 0.0
        %5141 = vmatpush1.msra.mxu0 0.0
        %5142 = vmatprep.subr.mxu0 0.0
        %5143 = vmatpush1.msra.mxu0 0.0
        %5144 = vmatprep.subr.mxu0 0.0
        %5145 = vmatpush1.msra.mxu0 0.0
        %5146 = vmatprep.subr.mxu0 0.0
        %5147 = vmatpush1.msra.mxu0 0.0
        %5148 = vmatprep.subr.mxu0 0.0
        %5149 = vmatpush1.msra.mxu0 0.0
        %5150 = vmatprep.subr.mxu0 0.0
        %5151 = vmatpush1.msra.mxu0 0.0
        %5152 = vmatprep.subr.mxu0 0.0
        %5153 = vmatpush1.msra.mxu0 0.0
        %5154 = vmatprep.subr.mxu0 0.0
        %5155 = vmatpush1.msra.mxu0 0.0
        %5156 = vmatprep.subr.mxu0 0.0
        %5157 = vmatpush1.msra.mxu0 0.0
        %5158 = vmatprep.subr.mxu0 0.0
        %5159 = vmatpush1.msra.mxu0 0.0
        %5160 = vmatprep.subr.mxu0 0.0
        %5161 = vmatpush1.msra.mxu0 0.0
        %5162 = vmatprep.subr.mxu0 0.0
        %5163 = vmatpush1.msra.mxu0 0.0
        %5164 = vmatprep.subr.mxu0 0.0
        %5165 = vmatpush1.msra.mxu0 0.0
        %5166 = vmatprep.mubr.f32.mxu0 0.0
        %5167 = vmatmul.mubr.f32.gmra.mrb[0].mxu0 %v5100
        %v5168 = vpop.f32.mrb[0].mxu0
        %v5169 = vadd.f32 0.0, %v5168
        %v5170 = vpop.f32.mrb[0].mxu0
        %5171 = vdwg.mxu0
        %v5172 = vadd.f32 %v4931, %v5169
        %5173 = vrot.lane.b32.xlu0 %v4459, 104
        %v5174 = vpop.permute.xlu0 %5173
        %5175 = vrot.lane.b32.xlu0 %v3360, 104
        %v5176 = vpop.permute.xlu0 %5175
        %v5177 = vsel %vm764, %v5174, 0
        %v5179 = vsel %vm764, %v5176, 0
        %5181 = vmatprep.subr.mxu0 0.0
        %5182 = vmatpush1.xpose.msra.mxu0 %v5179
        %5183 = vmatprep.subr.mxu0 0.0
        %5184 = vmatpush1.xpose.msra.mxu0 0.0
        %5185 = vmatprep.subr.mxu0 0.0
        %5186 = vmatpush1.xpose.msra.mxu0 0.0
        %5187 = vmatprep.subr.mxu0 0.0
        %5188 = vmatpush1.xpose.msra.mxu0 0.0
        %5189 = vmatprep.subr.mxu0 0.0
        %5190 = vmatpush1.xpose.msra.mxu0 0.0
        %5191 = vmatprep.subr.mxu0 0.0
        %5192 = vmatpush1.xpose.msra.mxu0 0.0
        %5193 = vmatprep.subr.mxu0 0.0
        %5194 = vmatpush1.xpose.msra.mxu0 0.0
        %5195 = vmatprep.subr.mxu0 0.0
        %5196 = vmatpush1.xpose.msra.mxu0 0.0
        %5197 = vmatprep.subr.mxu0 0.0
        %5198 = vmatpush1.xpose.msra.mxu0 0.0
        %5199 = vmatprep.subr.mxu0 0.0
        %5200 = vmatpush1.xpose.msra.mxu0 0.0
        %5201 = vmatprep.subr.mxu0 0.0
        %5202 = vmatpush1.xpose.msra.mxu0 0.0
        %5203 = vmatprep.subr.mxu0 0.0
        %5204 = vmatpush1.xpose.msra.mxu0 0.0
        %5205 = vmatprep.subr.mxu0 0.0
        %5206 = vmatpush1.xpose.msra.mxu0 0.0
        %5207 = vmatprep.subr.mxu0 0.0
        %5208 = vmatpush1.xpose.msra.mxu0 0.0
        %5209 = vmatprep.subr.mxu0 0.0
        %5210 = vmatpush1.xpose.msra.mxu0 0.0
        %5211 = vmatprep.subr.mxu0 0.0
        %5212 = vmatpush1.xpose.msra.mxu0 0.0
        %5213 = vmatprep.subr.mxu0 0.0
        %5214 = vmatpush1.xpose.msra.mxu0 0.0
        %5215 = vmatprep.subr.mxu0 0.0
        %5216 = vmatpush1.xpose.msra.mxu0 0.0
        %5217 = vmatprep.subr.mxu0 0.0
        %5218 = vmatpush1.xpose.msra.mxu0 0.0
        %5219 = vmatprep.subr.mxu0 0.0
        %5220 = vmatpush1.xpose.msra.mxu0 0.0
        %5221 = vmatprep.subr.mxu0 0.0
        %5222 = vmatpush1.xpose.msra.mxu0 0.0
        %5223 = vmatprep.subr.mxu0 0.0
        %5224 = vmatpush1.xpose.msra.mxu0 0.0
        %5225 = vmatprep.subr.mxu0 0.0
        %5226 = vmatpush1.xpose.msra.mxu0 0.0
        %5227 = vmatprep.subr.mxu0 0.0
        %5228 = vmatpush1.xpose.msra.mxu0 0.0
        %5229 = vmatprep.subr.mxu0 0.0
        %5230 = vmatpush1.xpose.msra.mxu0 0.0
        %5231 = vmatprep.subr.mxu0 0.0
        %5232 = vmatpush1.xpose.msra.mxu0 0.0
        %5233 = vmatprep.subr.mxu0 0.0
        %5234 = vmatpush1.xpose.msra.mxu0 0.0
        %5235 = vmatprep.subr.mxu0 0.0
        %5236 = vmatpush1.xpose.msra.mxu0 0.0
        %5237 = vmatprep.subr.mxu0 0.0
        %5238 = vmatpush1.xpose.msra.mxu0 0.0
        %5239 = vmatprep.subr.mxu0 0.0
        %5240 = vmatpush1.xpose.msra.mxu0 0.0
        %5241 = vmatprep.subr.mxu0 0.0
        %5242 = vmatpush1.xpose.msra.mxu0 0.0
        %5243 = vmatprep.subr.mxu0 0.0
        %5244 = vmatpush1.xpose.msra.mxu0 0.0
        %5245 = vmatprep.mubr.f32.mxu0 0.0
        %5246 = vmatmul.mubr.f32.gmra.mrb[0].mxu0 %v5177
        %v5247 = vpop.f32.mrb[0].mxu0
        %v5248 = vadd.f32 0.0, %v5247
        %v5249 = vpop.f32.mrb[0].mxu0
        %5250 = vdwg.mxu0
        %v5251 = vsel %vm764, %v5248, -inf
        %5252 = vmax.xlane.f32.xlu0 %v5251
        %v5253 = vpop.xlane.xlu0 %5252
        %v5254 = vsub.f32 %v5248, %v5253
        %v5255 = vmul.f32 %v5254, 1.442695
        %v5256 = vpow.pop %v5255
        %v5257 = vsel %vm764, %v5256, 0.0
        %5258 = vadd.xlane.f32.xlu0 %v5257
        %v5259 = vpop.xlane.xlu0 %5258
        %v5260 = vrcp.pop %v5259
        %v5261 = vmul.f32 %v5256, %v5260
        %5262 = vrot.lane.b32.xlu0 %v3360, 72
        %v5263 = vpop.permute.xlu0 %5262
        %v5266 = vsel %vm764, %v5261, 0
        %5268 = vmatprep.subr.mxu0 0.0
        %5269 = vmatpush1.msra.mxu0 %v5263
        %5270 = vmatprep.subr.mxu0 0.0
        %5271 = vmatpush1.msra.mxu0 0.0
        %5272 = vmatprep.subr.mxu0 0.0
        %5273 = vmatpush1.msra.mxu0 0.0
        %5274 = vmatprep.subr.mxu0 0.0
        %5275 = vmatpush1.msra.mxu0 0.0
        %5276 = vmatprep.subr.mxu0 0.0
        %5277 = vmatpush1.msra.mxu0 0.0
        %5278 = vmatprep.subr.mxu0 0.0
        %5279 = vmatpush1.msra.mxu0 0.0
        %5280 = vmatprep.subr.mxu0 0.0
        %5281 = vmatpush1.msra.mxu0 0.0
        %5282 = vmatprep.subr.mxu0 0.0
        %5283 = vmatpush1.msra.mxu0 0.0
        %5284 = vmatprep.subr.mxu0 0.0
        %5285 = vmatpush1.msra.mxu0 0.0
        %5286 = vmatprep.subr.mxu0 0.0
        %5287 = vmatpush1.msra.mxu0 0.0
        %5288 = vmatprep.subr.mxu0 0.0
        %5289 = vmatpush1.msra.mxu0 0.0
        %5290 = vmatprep.subr.mxu0 0.0
        %5291 = vmatpush1.msra.mxu0 0.0
        %5292 = vmatprep.subr.mxu0 0.0
        %5293 = vmatpush1.msra.mxu0 0.0
        %5294 = vmatprep.subr.mxu0 0.0
        %5295 = vmatpush1.msra.mxu0 0.0
        %5296 = vmatprep.subr.mxu0 0.0
        %5297 = vmatpush1.msra.mxu0 0.0
        %5298 = vmatprep.subr.mxu0 0.0
        %5299 = vmatpush1.msra.mxu0 0.0
        %5300 = vmatprep.subr.mxu0 0.0
        %5301 = vmatpush1.msra.mxu0 0.0
        %5302 = vmatprep.subr.mxu0 0.0
        %5303 = vmatpush1.msra.mxu0 0.0
        %5304 = vmatprep.subr.mxu0 0.0
        %5305 = vmatpush1.msra.mxu0 0.0
        %5306 = vmatprep.subr.mxu0 0.0
        %5307 = vmatpush1.msra.mxu0 0.0
        %5308 = vmatprep.subr.mxu0 0.0
        %5309 = vmatpush1.msra.mxu0 0.0
        %5310 = vmatprep.subr.mxu0 0.0
        %5311 = vmatpush1.msra.mxu0 0.0
        %5312 = vmatprep.subr.mxu0 0.0
        %5313 = vmatpush1.msra.mxu0 0.0
        %5314 = vmatprep.subr.mxu0 0.0
        %5315 = vmatpush1.msra.mxu0 0.0
        %5316 = vmatprep.subr.mxu0 0.0
        %5317 = vmatpush1.msra.mxu0 0.0
        %5318 = vmatprep.subr.mxu0 0.0
        %5319 = vmatpush1.msra.mxu0 0.0
        %5320 = vmatprep.subr.mxu0 0.0
        %5321 = vmatpush1.msra.mxu0 0.0
        %5322 = vmatprep.subr.mxu0 0.0
        %5323 = vmatpush1.msra.mxu0 0.0
        %5324 = vmatprep.subr.mxu0 0.0
        %5325 = vmatpush1.msra.mxu0 0.0
        %5326 = vmatprep.subr.mxu0 0.0
        %5327 = vmatpush1.msra.mxu0 0.0
        %5328 = vmatprep.subr.mxu0 0.0
        %5329 = vmatpush1.msra.mxu0 0.0
        %5330 = vmatprep.subr.mxu0 0.0
        %5331 = vmatpush1.msra.mxu0 0.0
        %5332 = vmatprep.mubr.f32.mxu0 0.0
        %5333 = vmatmul.mubr.f32.gmra.mrb[0].mxu0 %v5266
        %v5334 = vpop.f32.mrb[0].mxu0
        %v5335 = vadd.f32 0.0, %v5334
        %v5336 = vpop.f32.mrb[0].mxu0
        %5337 = vdwg.mxu0
        %v5339 = vsel %vm764, %v5335, 0
        %5341 = vmatprep.subr.mxu0 0.0
        %5342 = vmatpush1.msra.mxu0 %v3376
        %5343 = vmatprep.subr.mxu0 0.0
        %5344 = vmatpush1.msra.mxu0 0.0
        %5345 = vmatprep.subr.mxu0 0.0
        %5346 = vmatpush1.msra.mxu0 0.0
        %5347 = vmatprep.subr.mxu0 0.0
        %5348 = vmatpush1.msra.mxu0 0.0
        %5349 = vmatprep.subr.mxu0 0.0
        %5350 = vmatpush1.msra.mxu0 0.0
        %5351 = vmatprep.subr.mxu0 0.0
        %5352 = vmatpush1.msra.mxu0 0.0
        %5353 = vmatprep.subr.mxu0 0.0
        %5354 = vmatpush1.msra.mxu0 0.0
        %5355 = vmatprep.subr.mxu0 0.0
        %5356 = vmatpush1.msra.mxu0 0.0
        %5357 = vmatprep.subr.mxu0 0.0
        %5358 = vmatpush1.msra.mxu0 0.0
        %5359 = vmatprep.subr.mxu0 0.0
        %5360 = vmatpush1.msra.mxu0 0.0
        %5361 = vmatprep.subr.mxu0 0.0
        %5362 = vmatpush1.msra.mxu0 0.0
        %5363 = vmatprep.subr.mxu0 0.0
        %5364 = vmatpush1.msra.mxu0 0.0
        %5365 = vmatprep.subr.mxu0 0.0
        %5366 = vmatpush1.msra.mxu0 0.0
        %5367 = vmatprep.subr.mxu0 0.0
        %5368 = vmatpush1.msra.mxu0 0.0
        %5369 = vmatprep.subr.mxu0 0.0
        %5370 = vmatpush1.msra.mxu0 0.0
        %5371 = vmatprep.subr.mxu0 0.0
        %5372 = vmatpush1.msra.mxu0 0.0
        %5373 = vmatprep.subr.mxu0 0.0
        %5374 = vmatpush1.msra.mxu0 0.0
        %5375 = vmatprep.subr.mxu0 0.0
        %5376 = vmatpush1.msra.mxu0 0.0
        %5377 = vmatprep.subr.mxu0 0.0
        %5378 = vmatpush1.msra.mxu0 0.0
        %5379 = vmatprep.subr.mxu0 0.0
        %5380 = vmatpush1.msra.mxu0 0.0
        %5381 = vmatprep.subr.mxu0 0.0
        %5382 = vmatpush1.msra.mxu0 0.0
        %5383 = vmatprep.subr.mxu0 0.0
        %5384 = vmatpush1.msra.mxu0 0.0
        %5385 = vmatprep.subr.mxu0 0.0
        %5386 = vmatpush1.msra.mxu0 0.0
        %5387 = vmatprep.subr.mxu0 0.0
        %5388 = vmatpush1.msra.mxu0 0.0
        %5389 = vmatprep.subr.mxu0 0.0
        %5390 = vmatpush1.msra.mxu0 0.0
        %5391 = vmatprep.subr.mxu0 0.0
        %5392 = vmatpush1.msra.mxu0 0.0
        %5393 = vmatprep.subr.mxu0 0.0
        %5394 = vmatpush1.msra.mxu0 0.0
        %5395 = vmatprep.subr.mxu0 0.0
        %5396 = vmatpush1.msra.mxu0 0.0
        %5397 = vmatprep.subr.mxu0 0.0
        %5398 = vmatpush1.msra.mxu0 0.0
        %5399 = vmatprep.subr.mxu0 0.0
        %5400 = vmatpush1.msra.mxu0 0.0
        %5401 = vmatprep.subr.mxu0 0.0
        %5402 = vmatpush1.msra.mxu0 0.0
        %5403 = vmatprep.subr.mxu0 0.0
        %5404 = vmatpush1.msra.mxu0 0.0
        %5405 = vmatprep.mubr.f32.mxu0 0.0
        %5406 = vmatmul.mubr.f32.gmra.mrb[0].mxu0 %v5339
        %v5407 = vpop.f32.mrb[0].mxu0
        %v5408 = vadd.f32 0.0, %v5407
        %v5409 = vpop.f32.mrb[0].mxu0
        %5410 = vdwg.mxu0
        %v5411 = vadd.f32 %v5172, %v5408
        %v5412 = vlaneseq
        %v5413 = vshrl.u32 %v5412, 7
        %v5414 = vsub.s32 4, %v5413
        %v5415 = vrot.slane %v3397, %v5414
        %v5416 = vadd.f32 %v5411, %v5415
        %v5417 = vmax.f32 %v5416, 0.0
        %v5418 = vadd.f32 %v4459, %v5417
        %v5419 = vmax.f32 %v5418, 0.0
        %v5420 = vsel %vm681, %v5419, 0.0
        %5421 = vadd.xlane.f32.xlu0 %v5420
        %v5422 = vpop.xlane.xlu0 %5421
        %v5423 = vmul.f32 %v5422, %v1726
        %v5424 = vsub.f32 %v5419, %v5423
        %v5425 = vmul.f32 %v5424, %v5424
        %v5426 = vsel %vm681, %v5425, 0.0
        %5427 = vadd.xlane.f32.xlu0 %v5426
        %v5428 = vpop.xlane.xlu0 %5427
        %v5429 = vmul.f32 %v5428, %v1726
        %v5430 = vadd.f32 %v5429, 1e-05
        %v5431 = vrsqrt.pop %v5430
        %v5432 = vmul.f32 %v5424, %v5431
        %v5433 = vlaneseq
        %v5434 = vshrl.u32 %v5433, 7
        %v5435 = vsub.s32 5, %v5434
        %v5436 = vrot.slane %v3397, %v5435
        %v5437 = vmul.f32 %v5432, %v5436
        %v5438 = vlaneseq
        %v5439 = vshrl.u32 %v5438, 7
        %v5440 = vsub.s32 6, %v5439
        %v5441 = vrot.slane %v3397, %v5440
        %v5442 = vadd.f32 %v5437, %v5441
        %v5443 = vlaneseq
        %v5444 = vshrl.u32 %v5443, 7
        %v5445 = vsub.s32 7, %v5444
        %v5446 = vrot.slane %v3397, %v5445
        %v5448 = vsel %vm681, %v5442, 0
        %5450 = vmatprep.subr.mxu0 0.0
        %5451 = vmatpush1.msra.mxu0 %v3377
        %5452 = vmatprep.subr.mxu0 0.0
        %5453 = vmatpush1.msra.mxu0 %v3378
        %5454 = vmatprep.subr.mxu0 0.0
        %5455 = vmatpush1.msra.mxu0 %v3379
        %5456 = vmatprep.subr.mxu0 0.0
        %5457 = vmatpush1.msra.mxu0 %v3380
        %5458 = vmatprep.subr.mxu0 0.0
        %5459 = vmatpush1.msra.mxu0 0.0
        %5460 = vmatprep.subr.mxu0 0.0
        %5461 = vmatpush1.msra.mxu0 0.0
        %5462 = vmatprep.subr.mxu0 0.0
        %5463 = vmatpush1.msra.mxu0 0.0
        %5464 = vmatprep.subr.mxu0 0.0
        %5465 = vmatpush1.msra.mxu0 0.0
        %5466 = vmatprep.subr.mxu0 0.0
        %5467 = vmatpush1.msra.mxu0 0.0
        %5468 = vmatprep.subr.mxu0 0.0
        %5469 = vmatpush1.msra.mxu0 0.0
        %5470 = vmatprep.subr.mxu0 0.0
        %5471 = vmatpush1.msra.mxu0 0.0
        %5472 = vmatprep.subr.mxu0 0.0
        %5473 = vmatpush1.msra.mxu0 0.0
        %5474 = vmatprep.subr.mxu0 0.0
        %5475 = vmatpush1.msra.mxu0 0.0
        %5476 = vmatprep.subr.mxu0 0.0
        %5477 = vmatpush1.msra.mxu0 0.0
        %5478 = vmatprep.subr.mxu0 0.0
        %5479 = vmatpush1.msra.mxu0 0.0
        %5480 = vmatprep.subr.mxu0 0.0
        %5481 = vmatpush1.msra.mxu0 0.0
        %5482 = vmatprep.subr.mxu0 0.0
        %5483 = vmatpush1.msra.mxu0 0.0
        %5484 = vmatprep.subr.mxu0 0.0
        %5485 = vmatpush1.msra.mxu0 0.0
        %5486 = vmatprep.subr.mxu0 0.0
        %5487 = vmatpush1.msra.mxu0 0.0
        %5488 = vmatprep.subr.mxu0 0.0
        %5489 = vmatpush1.msra.mxu0 0.0
        %5490 = vmatprep.subr.mxu0 0.0
        %5491 = vmatpush1.msra.mxu0 0.0
        %5492 = vmatprep.subr.mxu0 0.0
        %5493 = vmatpush1.msra.mxu0 0.0
        %5494 = vmatprep.subr.mxu0 0.0
        %5495 = vmatpush1.msra.mxu0 0.0
        %5496 = vmatprep.subr.mxu0 0.0
        %5497 = vmatpush1.msra.mxu0 0.0
        %5498 = vmatprep.subr.mxu0 0.0
        %5499 = vmatpush1.msra.mxu0 0.0
        %5500 = vmatprep.subr.mxu0 0.0
        %5501 = vmatpush1.msra.mxu0 0.0
        %5502 = vmatprep.subr.mxu0 0.0
        %5503 = vmatpush1.msra.mxu0 0.0
        %5504 = vmatprep.subr.mxu0 0.0
        %5505 = vmatpush1.msra.mxu0 0.0
        %5506 = vmatprep.subr.mxu0 0.0
        %5507 = vmatpush1.msra.mxu0 0.0
        %5508 = vmatprep.subr.mxu0 0.0
        %5509 = vmatpush1.msra.mxu0 0.0
        %5510 = vmatprep.subr.mxu0 0.0
        %5511 = vmatpush1.msra.mxu0 0.0
        %5512 = vmatprep.subr.mxu0 0.0
        %5513 = vmatpush1.msra.mxu0 0.0
        %5514 = vmatprep.mubr.f32.mxu0 0.0
        %5515 = vmatmul.mubr.f32.gmra.mrb[0].mxu0 %v5448
        %v5516 = vpop.f32.mrb[0].mxu0
        %v5517 = vadd.f32 %v5446, %v5516
        %v5518 = vpop.f32.mrb[0].mxu0
        %5519 = vdwg.mxu0
        %v5520 = vmax.f32 %v5517, 0.0
        %v5521 = vlaneseq
        %v5522 = vshrl.u32 %v5521, 7
        %v5523 = vsub.s32 0, %v5522
        %v5524 = vrot.slane %v3398, %v5523
        %5525 = vmatprep.subr.mxu0 0.0
        %5526 = vmatpush1.msra.mxu0 %v3381
        %5527 = vmatprep.subr.mxu0 0.0
        %5528 = vmatpush1.msra.mxu0 %v3382
        %5529 = vmatprep.subr.mxu0 0.0
        %5530 = vmatpush1.msra.mxu0 %v3383
        %5531 = vmatprep.subr.mxu0 0.0
        %5532 = vmatpush1.msra.mxu0 %v3384
        %5533 = vmatprep.subr.mxu0 0.0
        %5534 = vmatpush1.msra.mxu0 %v3385
        %5535 = vmatprep.subr.mxu0 0.0
        %5536 = vmatpush1.msra.mxu0 %v3386
        %5537 = vmatprep.subr.mxu0 0.0
        %5538 = vmatpush1.msra.mxu0 %v3387
        %5539 = vmatprep.subr.mxu0 0.0
        %5540 = vmatpush1.msra.mxu0 %v3388
        %5541 = vmatprep.subr.mxu0 0.0
        %5542 = vmatpush1.msra.mxu0 %v3389
        %5543 = vmatprep.subr.mxu0 0.0
        %5544 = vmatpush1.msra.mxu0 %v3390
        %5545 = vmatprep.subr.mxu0 0.0
        %5546 = vmatpush1.msra.mxu0 %v3391
        %5547 = vmatprep.subr.mxu0 0.0
        %5548 = vmatpush1.msra.mxu0 %v3392
        %5549 = vmatprep.subr.mxu0 0.0
        %5550 = vmatpush1.msra.mxu0 %v3393
        %5551 = vmatprep.subr.mxu0 0.0
        %5552 = vmatpush1.msra.mxu0 %v3394
        %5553 = vmatprep.subr.mxu0 0.0
        %5554 = vmatpush1.msra.mxu0 %v3395
        %5555 = vmatprep.subr.mxu0 0.0
        %5556 = vmatpush1.msra.mxu0 %v3396
        %5557 = vmatprep.subr.mxu0 0.0
        %5558 = vmatpush1.msra.mxu0 0.0
        %5559 = vmatprep.subr.mxu0 0.0
        %5560 = vmatpush1.msra.mxu0 0.0
        %5561 = vmatprep.subr.mxu0 0.0
        %5562 = vmatpush1.msra.mxu0 0.0
        %5563 = vmatprep.subr.mxu0 0.0
        %5564 = vmatpush1.msra.mxu0 0.0
        %5565 = vmatprep.subr.mxu0 0.0
        %5566 = vmatpush1.msra.mxu0 0.0
        %5567 = vmatprep.subr.mxu0 0.0
        %5568 = vmatpush1.msra.mxu0 0.0
        %5569 = vmatprep.subr.mxu0 0.0
        %5570 = vmatpush1.msra.mxu0 0.0
        %5571 = vmatprep.subr.mxu0 0.0
        %5572 = vmatpush1.msra.mxu0 0.0
        %5573 = vmatprep.subr.mxu0 0.0
        %5574 = vmatpush1.msra.mxu0 0.0
        %5575 = vmatprep.subr.mxu0 0.0
        %5576 = vmatpush1.msra.mxu0 0.0
        %5577 = vmatprep.subr.mxu0 0.0
        %5578 = vmatpush1.msra.mxu0 0.0
        %5579 = vmatprep.subr.mxu0 0.0
        %5580 = vmatpush1.msra.mxu0 0.0
        %5581 = vmatprep.subr.mxu0 0.0
        %5582 = vmatpush1.msra.mxu0 0.0
        %5583 = vmatprep.subr.mxu0 0.0
        %5584 = vmatpush1.msra.mxu0 0.0
        %5585 = vmatprep.subr.mxu0 0.0
        %5586 = vmatpush1.msra.mxu0 0.0
        %5587 = vmatprep.subr.mxu0 0.0
        %5588 = vmatpush1.msra.mxu0 0.0
        %5589 = vmatprep.mubr.f32.mxu0 0.0
        %5590 = vmatmul.mubr.f32.gmra.mrb[0].mxu0 %v5520
        %v5591 = vpop.f32.mrb[0].mxu0
        %v5592 = vadd.f32 %v5524, %v5591
        %v5593 = vpop.f32.mrb[0].mxu0
        %5594 = vdwg.mxu0
        %v5595 = vadd.f32 %v5442, %v5592
        %v5596 = vmax.f32 %v5595, 0.0
        %v5597 = vsel %vm681, %v5596, 0.0
        %5598 = vadd.xlane.f32.xlu0 %v5597
        %v5599 = vpop.xlane.xlu0 %5598
        %v5600 = vmul.f32 %v5599, %v1726
        %v5601 = vsub.f32 %v5596, %v5600
        %v5602 = vmul.f32 %v5601, %v5601
        %v5603 = vsel %vm681, %v5602, 0.0
        %5604 = vadd.xlane.f32.xlu0 %v5603
        %v5605 = vpop.xlane.xlu0 %5604
        %v5606 = vmul.f32 %v5605, %v1726
        %v5607 = vadd.f32 %v5606, 1e-05
        %v5608 = vrsqrt.pop %v5607
        %v5609 = vmul.f32 %v5601, %v5608
        %v5610 = vlaneseq
        %v5611 = vshrl.u32 %v5610, 7
        %v5612 = vsub.s32 1, %v5611
        %v5613 = vrot.slane %v3398, %v5612
        %v5614 = vmul.f32 %v5609, %v5613
        %v5615 = vlaneseq
        %v5616 = vshrl.u32 %v5615, 7
        %v5617 = vsub.s32 2, %v5616
        %v5618 = vrot.slane %v3398, %v5617
        %v5619 = vadd.f32 %v5614, %v5618
        %s5620 = scalar_lea.vmem %s10, 32
        %v5621 = vld [vmem:[%s5620] sm:$0xff]
        %v5622 = vld [vmem:[%s5620 + $0x8] sm:$0xff]
        %v5623 = vld [vmem:[%s5620 + $0x10] sm:$0xff]
        %v5624 = vld [vmem:[%s5620 + $0x18] sm:$0xff]
        %s5625 = scalar_lea.vmem %s11, 32
        %v5626 = vld [vmem:[%s5625] sm:$0xff]
        %v5627 = vld [vmem:[%s5625 + $0x8] sm:$0xff]
        %v5628 = vld [vmem:[%s5625 + $0x10] sm:$0xff]
        %v5629 = vld [vmem:[%s5625 + $0x18] sm:$0xff]
        %s5630 = scalar_lea.vmem %s12, 32
        %v5631 = vld [vmem:[%s5630] sm:$0xff]
        %v5632 = vld [vmem:[%s5630 + $0x8] sm:$0xff]
        %v5633 = vld [vmem:[%s5630 + $0x10] sm:$0xff]
        %v5634 = vld [vmem:[%s5630 + $0x18] sm:$0xff]
        %s5635 = scalar_lea.vmem %s13, 32
        %v5636 = vld [vmem:[%s5635] sm:$0xff]
        %v5637 = vld [vmem:[%s5635 + $0x8] sm:$0xff]
        %v5638 = vld [vmem:[%s5635 + $0x10] sm:$0xff]
        %v5639 = vld [vmem:[%s5635 + $0x18] sm:$0xff]
        %s5640 = scalar_lea.vmem %s14, 128
        %v5641 = vld [vmem:[%s5640] sm:$0xff]
        %v5642 = vld [vmem:[%s5640 + $0x8] sm:$0xff]
        %v5643 = vld [vmem:[%s5640 + $0x10] sm:$0xff]
        %v5644 = vld [vmem:[%s5640 + $0x18] sm:$0xff]
        %v5645 = vld [vmem:[%s5640 + $0x20] sm:$0xff]
        %v5646 = vld [vmem:[%s5640 + $0x28] sm:$0xff]
        %v5647 = vld [vmem:[%s5640 + $0x30] sm:$0xff]
        %v5648 = vld [vmem:[%s5640 + $0x38] sm:$0xff]
        %v5649 = vld [vmem:[%s5640 + $0x40] sm:$0xff]
        %v5650 = vld [vmem:[%s5640 + $0x48] sm:$0xff]
        %v5651 = vld [vmem:[%s5640 + $0x50] sm:$0xff]
        %v5652 = vld [vmem:[%s5640 + $0x58] sm:$0xff]
        %v5653 = vld [vmem:[%s5640 + $0x60] sm:$0xff]
        %v5654 = vld [vmem:[%s5640 + $0x68] sm:$0xff]
        %v5655 = vld [vmem:[%s5640 + $0x70] sm:$0xff]
        %v5656 = vld [vmem:[%s5640 + $0x78] sm:$0xff]
        %s5657 = scalar_lea.vmem %s15, 16
        %v5658 = vld [vmem:[%s5657] sm:$0xff]
        %v5659 = vld [vmem:[%s5657 + $0x8] sm:$0x7]
        %v5660 = vlaneseq
        %v5661 = vshrl.u32 %v5660, 7
        %v5662 = vsub.s32 0, %v5661
        %v5663 = vrot.slane %v5658, %v5662
        %v5665 = vsel %vm681, %v5619, 0
        %5667 = vmatprep.subr.mxu0 0.0
        %5668 = vmatpush1.msra.mxu0 %v5621
        %5669 = vmatprep.subr.mxu0 0.0
        %5670 = vmatpush1.msra.mxu0 %v5622
        %5671 = vmatprep.subr.mxu0 0.0
        %5672 = vmatpush1.msra.mxu0 %v5623
        %5673 = vmatprep.subr.mxu0 0.0
        %5674 = vmatpush1.msra.mxu0 %v5624
        %5675 = vmatprep.subr.mxu0 0.0
        %5676 = vmatpush1.msra.mxu0 0.0
        %5677 = vmatprep.subr.mxu0 0.0
        %5678 = vmatpush1.msra.mxu0 0.0
        %5679 = vmatprep.subr.mxu0 0.0
        %5680 = vmatpush1.msra.mxu0 0.0
        %5681 = vmatprep.subr.mxu0 0.0
        %5682 = vmatpush1.msra.mxu0 0.0
        %5683 = vmatprep.subr.mxu0 0.0
        %5684 = vmatpush1.msra.mxu0 0.0
        %5685 = vmatprep.subr.mxu0 0.0
        %5686 = vmatpush1.msra.mxu0 0.0
        %5687 = vmatprep.subr.mxu0 0.0
        %5688 = vmatpush1.msra.mxu0 0.0
        %5689 = vmatprep.subr.mxu0 0.0
        %5690 = vmatpush1.msra.mxu0 0.0
        %5691 = vmatprep.subr.mxu0 0.0
        %5692 = vmatpush1.msra.mxu0 0.0
        %5693 = vmatprep.subr.mxu0 0.0
        %5694 = vmatpush1.msra.mxu0 0.0
        %5695 = vmatprep.subr.mxu0 0.0
        %5696 = vmatpush1.msra.mxu0 0.0
        %5697 = vmatprep.subr.mxu0 0.0
        %5698 = vmatpush1.msra.mxu0 0.0
        %5699 = vmatprep.subr.mxu0 0.0
        %5700 = vmatpush1.msra.mxu0 0.0
        %5701 = vmatprep.subr.mxu0 0.0
        %5702 = vmatpush1.msra.mxu0 0.0
        %5703 = vmatprep.subr.mxu0 0.0
        %5704 = vmatpush1.msra.mxu0 0.0
        %5705 = vmatprep.subr.mxu0 0.0
        %5706 = vmatpush1.msra.mxu0 0.0
        %5707 = vmatprep.subr.mxu0 0.0
        %5708 = vmatpush1.msra.mxu0 0.0
        %5709 = vmatprep.subr.mxu0 0.0
        %5710 = vmatpush1.msra.mxu0 0.0
        %5711 = vmatprep.subr.mxu0 0.0
        %5712 = vmatpush1.msra.mxu0 0.0
        %5713 = vmatprep.subr.mxu0 0.0
        %5714 = vmatpush1.msra.mxu0 0.0
        %5715 = vmatprep.subr.mxu0 0.0
        %5716 = vmatpush1.msra.mxu0 0.0
        %5717 = vmatprep.subr.mxu0 0.0
        %5718 = vmatpush1.msra.mxu0 0.0
        %5719 = vmatprep.subr.mxu0 0.0
        %5720 = vmatpush1.msra.mxu0 0.0
        %5721 = vmatprep.subr.mxu0 0.0
        %5722 = vmatpush1.msra.mxu0 0.0
        %5723 = vmatprep.subr.mxu0 0.0
        %5724 = vmatpush1.msra.mxu0 0.0
        %5725 = vmatprep.subr.mxu0 0.0
        %5726 = vmatpush1.msra.mxu0 0.0
        %5727 = vmatprep.subr.mxu0 0.0
        %5728 = vmatpush1.msra.mxu0 0.0
        %5729 = vmatprep.subr.mxu0 0.0
        %5730 = vmatpush1.msra.mxu0 0.0
        %5731 = vmatprep.mubr.f32.mxu0 0.0
        %5732 = vmatmul.mubr.f32.gmra.mrb[0].mxu0 %v5665
        %v5733 = vpop.f32.mrb[0].mxu0
        %v5734 = vadd.f32 %v5663, %v5733
        %v5735 = vpop.f32.mrb[0].mxu0
        %5736 = vdwg.mxu0
        %5738 = vrot.lane.b32.xlu0 %v5734, 96
        %v5739 = vpop.permute.xlu0 %5738
        %v5740 = vsel %vm764, %v5734, 0
        %v5742 = vsel %vm764, %v5739, 0
        %5744 = vmatprep.subr.mxu0 0.0
        %5745 = vmatpush1.xpose.msra.mxu0 %v5742
        %5746 = vmatprep.subr.mxu0 0.0
        %5747 = vmatpush1.xpose.msra.mxu0 0.0
        %5748 = vmatprep.subr.mxu0 0.0
        %5749 = vmatpush1.xpose.msra.mxu0 0.0
        %5750 = vmatprep.subr.mxu0 0.0
        %5751 = vmatpush1.xpose.msra.mxu0 0.0
        %5752 = vmatprep.subr.mxu0 0.0
        %5753 = vmatpush1.xpose.msra.mxu0 0.0
        %5754 = vmatprep.subr.mxu0 0.0
        %5755 = vmatpush1.xpose.msra.mxu0 0.0
        %5756 = vmatprep.subr.mxu0 0.0
        %5757 = vmatpush1.xpose.msra.mxu0 0.0
        %5758 = vmatprep.subr.mxu0 0.0
        %5759 = vmatpush1.xpose.msra.mxu0 0.0
        %5760 = vmatprep.subr.mxu0 0.0
        %5761 = vmatpush1.xpose.msra.mxu0 0.0
        %5762 = vmatprep.subr.mxu0 0.0
        %5763 = vmatpush1.xpose.msra.mxu0 0.0
        %5764 = vmatprep.subr.mxu0 0.0
        %5765 = vmatpush1.xpose.msra.mxu0 0.0
        %5766 = vmatprep.subr.mxu0 0.0
        %5767 = vmatpush1.xpose.msra.mxu0 0.0
        %5768 = vmatprep.subr.mxu0 0.0
        %5769 = vmatpush1.xpose.msra.mxu0 0.0
        %5770 = vmatprep.subr.mxu0 0.0
        %5771 = vmatpush1.xpose.msra.mxu0 0.0
        %5772 = vmatprep.subr.mxu0 0.0
        %5773 = vmatpush1.xpose.msra.mxu0 0.0
        %5774 = vmatprep.subr.mxu0 0.0
        %5775 = vmatpush1.xpose.msra.mxu0 0.0
        %5776 = vmatprep.subr.mxu0 0.0
        %5777 = vmatpush1.xpose.msra.mxu0 0.0
        %5778 = vmatprep.subr.mxu0 0.0
        %5779 = vmatpush1.xpose.msra.mxu0 0.0
        %5780 = vmatprep.subr.mxu0 0.0
        %5781 = vmatpush1.xpose.msra.mxu0 0.0
        %5782 = vmatprep.subr.mxu0 0.0
        %5783 = vmatpush1.xpose.msra.mxu0 0.0
        %5784 = vmatprep.subr.mxu0 0.0
        %5785 = vmatpush1.xpose.msra.mxu0 0.0
        %5786 = vmatprep.subr.mxu0 0.0
        %5787 = vmatpush1.xpose.msra.mxu0 0.0
        %5788 = vmatprep.subr.mxu0 0.0
        %5789 = vmatpush1.xpose.msra.mxu0 0.0
        %5790 = vmatprep.subr.mxu0 0.0
        %5791 = vmatpush1.xpose.msra.mxu0 0.0
        %5792 = vmatprep.subr.mxu0 0.0
        %5793 = vmatpush1.xpose.msra.mxu0 0.0
        %5794 = vmatprep.subr.mxu0 0.0
        %5795 = vmatpush1.xpose.msra.mxu0 0.0
        %5796 = vmatprep.subr.mxu0 0.0
        %5797 = vmatpush1.xpose.msra.mxu0 0.0
        %5798 = vmatprep.subr.mxu0 0.0
        %5799 = vmatpush1.xpose.msra.mxu0 0.0
        %5800 = vmatprep.subr.mxu0 0.0
        %5801 = vmatpush1.xpose.msra.mxu0 0.0
        %5802 = vmatprep.subr.mxu0 0.0
        %5803 = vmatpush1.xpose.msra.mxu0 0.0
        %5804 = vmatprep.subr.mxu0 0.0
        %5805 = vmatpush1.xpose.msra.mxu0 0.0
        %5806 = vmatprep.subr.mxu0 0.0
        %5807 = vmatpush1.xpose.msra.mxu0 0.0
        %5808 = vmatprep.mubr.f32.mxu0 0.0
        %5809 = vmatmul.mubr.f32.gmra.mrb[0].mxu0 %v5740
        %v5810 = vpop.f32.mrb[0].mxu0
        %v5811 = vadd.f32 %v3364, %v5810
        %v5812 = vpop.f32.mrb[0].mxu0
        %5813 = vdwg.mxu0
        %v5814 = vsel %vm764, %v5811, -inf
        %5815 = vmax.xlane.f32.xlu0 %v5814
        %v5816 = vpop.xlane.xlu0 %5815
        %v5817 = vsub.f32 %v5811, %v5816
        %v5818 = vmul.f32 %v5817, 1.442695
        %v5819 = vpow.pop %v5818
        %v5820 = vsel %vm764, %v5819, 0.0
        %5821 = vadd.xlane.f32.xlu0 %v5820
        %v5822 = vpop.xlane.xlu0 %5821
        %v5823 = vrcp.pop %v5822
        %v5824 = vmul.f32 %v5819, %v5823
        %5825 = vrot.lane.b32.xlu0 %v5734, 64
        %v5826 = vpop.permute.xlu0 %5825
        %v5829 = vsel %vm764, %v5824, 0
        %5831 = vmatprep.subr.mxu0 0.0
        %5832 = vmatpush1.msra.mxu0 %v5826
        %5833 = vmatprep.subr.mxu0 0.0
        %5834 = vmatpush1.msra.mxu0 0.0
        %5835 = vmatprep.subr.mxu0 0.0
        %5836 = vmatpush1.msra.mxu0 0.0
        %5837 = vmatprep.subr.mxu0 0.0
        %5838 = vmatpush1.msra.mxu0 0.0
        %5839 = vmatprep.subr.mxu0 0.0
        %5840 = vmatpush1.msra.mxu0 0.0
        %5841 = vmatprep.subr.mxu0 0.0
        %5842 = vmatpush1.msra.mxu0 0.0
        %5843 = vmatprep.subr.mxu0 0.0
        %5844 = vmatpush1.msra.mxu0 0.0
        %5845 = vmatprep.subr.mxu0 0.0
        %5846 = vmatpush1.msra.mxu0 0.0
        %5847 = vmatprep.subr.mxu0 0.0
        %5848 = vmatpush1.msra.mxu0 0.0
        %5849 = vmatprep.subr.mxu0 0.0
        %5850 = vmatpush1.msra.mxu0 0.0
        %5851 = vmatprep.subr.mxu0 0.0
        %5852 = vmatpush1.msra.mxu0 0.0
        %5853 = vmatprep.subr.mxu0 0.0
        %5854 = vmatpush1.msra.mxu0 0.0
        %5855 = vmatprep.subr.mxu0 0.0
        %5856 = vmatpush1.msra.mxu0 0.0
        %5857 = vmatprep.subr.mxu0 0.0
        %5858 = vmatpush1.msra.mxu0 0.0
        %5859 = vmatprep.subr.mxu0 0.0
        %5860 = vmatpush1.msra.mxu0 0.0
        %5861 = vmatprep.subr.mxu0 0.0
        %5862 = vmatpush1.msra.mxu0 0.0
        %5863 = vmatprep.subr.mxu0 0.0
        %5864 = vmatpush1.msra.mxu0 0.0
        %5865 = vmatprep.subr.mxu0 0.0
        %5866 = vmatpush1.msra.mxu0 0.0
        %5867 = vmatprep.subr.mxu0 0.0
        %5868 = vmatpush1.msra.mxu0 0.0
        %5869 = vmatprep.subr.mxu0 0.0
        %5870 = vmatpush1.msra.mxu0 0.0
        %5871 = vmatprep.subr.mxu0 0.0
        %5872 = vmatpush1.msra.mxu0 0.0
        %5873 = vmatprep.subr.mxu0 0.0
        %5874 = vmatpush1.msra.mxu0 0.0
        %5875 = vmatprep.subr.mxu0 0.0
        %5876 = vmatpush1.msra.mxu0 0.0
        %5877 = vmatprep.subr.mxu0 0.0
        %5878 = vmatpush1.msra.mxu0 0.0
        %5879 = vmatprep.subr.mxu0 0.0
        %5880 = vmatpush1.msra.mxu0 0.0
        %5881 = vmatprep.subr.mxu0 0.0
        %5882 = vmatpush1.msra.mxu0 0.0
        %5883 = vmatprep.subr.mxu0 0.0
        %5884 = vmatpush1.msra.mxu0 0.0
        %5885 = vmatprep.subr.mxu0 0.0
        %5886 = vmatpush1.msra.mxu0 0.0
        %5887 = vmatprep.subr.mxu0 0.0
        %5888 = vmatpush1.msra.mxu0 0.0
        %5889 = vmatprep.subr.mxu0 0.0
        %5890 = vmatpush1.msra.mxu0 0.0
        %5891 = vmatprep.subr.mxu0 0.0
        %5892 = vmatpush1.msra.mxu0 0.0
        %5893 = vmatprep.subr.mxu0 0.0
        %5894 = vmatpush1.msra.mxu0 0.0
        %5895 = vmatprep.mubr.f32.mxu0 0.0
        %5896 = vmatmul.mubr.f32.gmra.mrb[0].mxu0 %v5829
        %v5897 = vpop.f32.mrb[0].mxu0
        %v5898 = vadd.f32 0.0, %v5897
        %v5899 = vpop.f32.mrb[0].mxu0
        %5900 = vdwg.mxu0
        %5901 = vrot.lane.b32.xlu0 %v5734, 120
        %v5902 = vpop.permute.xlu0 %5901
        %5903 = vrot.lane.b32.xlu0 %v5734, 88
        %v5904 = vpop.permute.xlu0 %5903
        %v5905 = vsel %vm764, %v5902, 0
        %v5907 = vsel %vm764, %v5904, 0
        %5909 = vmatprep.subr.mxu0 0.0
        %5910 = vmatpush1.xpose.msra.mxu0 %v5907
        %5911 = vmatprep.subr.mxu0 0.0
        %5912 = vmatpush1.xpose.msra.mxu0 0.0
        %5913 = vmatprep.subr.mxu0 0.0
        %5914 = vmatpush1.xpose.msra.mxu0 0.0
        %5915 = vmatprep.subr.mxu0 0.0
        %5916 = vmatpush1.xpose.msra.mxu0 0.0
        %5917 = vmatprep.subr.mxu0 0.0
        %5918 = vmatpush1.xpose.msra.mxu0 0.0
        %5919 = vmatprep.subr.mxu0 0.0
        %5920 = vmatpush1.xpose.msra.mxu0 0.0
        %5921 = vmatprep.subr.mxu0 0.0
        %5922 = vmatpush1.xpose.msra.mxu0 0.0
        %5923 = vmatprep.subr.mxu0 0.0
        %5924 = vmatpush1.xpose.msra.mxu0 0.0
        %5925 = vmatprep.subr.mxu0 0.0
        %5926 = vmatpush1.xpose.msra.mxu0 0.0
        %5927 = vmatprep.subr.mxu0 0.0
        %5928 = vmatpush1.xpose.msra.mxu0 0.0
        %5929 = vmatprep.subr.mxu0 0.0
        %5930 = vmatpush1.xpose.msra.mxu0 0.0
        %5931 = vmatprep.subr.mxu0 0.0
        %5932 = vmatpush1.xpose.msra.mxu0 0.0
        %5933 = vmatprep.subr.mxu0 0.0
        %5934 = vmatpush1.xpose.msra.mxu0 0.0
        %5935 = vmatprep.subr.mxu0 0.0
        %5936 = vmatpush1.xpose.msra.mxu0 0.0
        %5937 = vmatprep.subr.mxu0 0.0
        %5938 = vmatpush1.xpose.msra.mxu0 0.0
        %5939 = vmatprep.subr.mxu0 0.0
        %5940 = vmatpush1.xpose.msra.mxu0 0.0
        %5941 = vmatprep.subr.mxu0 0.0
        %5942 = vmatpush1.xpose.msra.mxu0 0.0
        %5943 = vmatprep.subr.mxu0 0.0
        %5944 = vmatpush1.xpose.msra.mxu0 0.0
        %5945 = vmatprep.subr.mxu0 0.0
        %5946 = vmatpush1.xpose.msra.mxu0 0.0
        %5947 = vmatprep.subr.mxu0 0.0
        %5948 = vmatpush1.xpose.msra.mxu0 0.0
        %5949 = vmatprep.subr.mxu0 0.0
        %5950 = vmatpush1.xpose.msra.mxu0 0.0
        %5951 = vmatprep.subr.mxu0 0.0
        %5952 = vmatpush1.xpose.msra.mxu0 0.0
        %5953 = vmatprep.subr.mxu0 0.0
        %5954 = vmatpush1.xpose.msra.mxu0 0.0
        %5955 = vmatprep.subr.mxu0 0.0
        %5956 = vmatpush1.xpose.msra.mxu0 0.0
        %5957 = vmatprep.subr.mxu0 0.0
        %5958 = vmatpush1.xpose.msra.mxu0 0.0
        %5959 = vmatprep.subr.mxu0 0.0
        %5960 = vmatpush1.xpose.msra.mxu0 0.0
        %5961 = vmatprep.subr.mxu0 0.0
        %5962 = vmatpush1.xpose.msra.mxu0 0.0
        %5963 = vmatprep.subr.mxu0 0.0
        %5964 = vmatpush1.xpose.msra.mxu0 0.0
        %5965 = vmatprep.subr.mxu0 0.0
        %5966 = vmatpush1.xpose.msra.mxu0 0.0
        %5967 = vmatprep.subr.mxu0 0.0
        %5968 = vmatpush1.xpose.msra.mxu0 0.0
        %5969 = vmatprep.subr.mxu0 0.0
        %5970 = vmatpush1.xpose.msra.mxu0 0.0
        %5971 = vmatprep.subr.mxu0 0.0
        %5972 = vmatpush1.xpose.msra.mxu0 0.0
        %5973 = vmatprep.mubr.f32.mxu0 0.0
        %5974 = vmatmul.mubr.f32.gmra.mrb[0].mxu0 %v5905
        %v5975 = vpop.f32.mrb[0].mxu0
        %v5976 = vadd.f32 %v3364, %v5975
        %v5977 = vpop.f32.mrb[0].mxu0
        %5978 = vdwg.mxu0
        %v5979 = vsel %vm764, %v5976, -inf
        %5980 = vmax.xlane.f32.xlu0 %v5979
        %v5981 = vpop.xlane.xlu0 %5980
        %v5982 = vsub.f32 %v5976, %v5981
        %v5983 = vmul.f32 %v5982, 1.442695
        %v5984 = vpow.pop %v5983
        %v5985 = vsel %vm764, %v5984, 0.0
        %5986 = vadd.xlane.f32.xlu0 %v5985
        %v5987 = vpop.xlane.xlu0 %5986
        %v5988 = vrcp.pop %v5987
        %v5989 = vmul.f32 %v5984, %v5988
        %5990 = vrot.lane.b32.xlu0 %v5734, 56
        %v5991 = vpop.permute.xlu0 %5990
        %v5994 = vsel %vm764, %v5989, 0
        %5996 = vmatprep.subr.mxu0 0.0
        %5997 = vmatpush1.msra.mxu0 %v5991
        %5998 = vmatprep.subr.mxu0 0.0
        %5999 = vmatpush1.msra.mxu0 0.0
        %6000 = vmatprep.subr.mxu0 0.0
        %6001 = vmatpush1.msra.mxu0 0.0
        %6002 = vmatprep.subr.mxu0 0.0
        %6003 = vmatpush1.msra.mxu0 0.0
        %6004 = vmatprep.subr.mxu0 0.0
        %6005 = vmatpush1.msra.mxu0 0.0
        %6006 = vmatprep.subr.mxu0 0.0
        %6007 = vmatpush1.msra.mxu0 0.0
        %6008 = vmatprep.subr.mxu0 0.0
        %6009 = vmatpush1.msra.mxu0 0.0
        %6010 = vmatprep.subr.mxu0 0.0
        %6011 = vmatpush1.msra.mxu0 0.0
        %6012 = vmatprep.subr.mxu0 0.0
        %6013 = vmatpush1.msra.mxu0 0.0
        %6014 = vmatprep.subr.mxu0 0.0
        %6015 = vmatpush1.msra.mxu0 0.0
        %6016 = vmatprep.subr.mxu0 0.0
        %6017 = vmatpush1.msra.mxu0 0.0
        %6018 = vmatprep.subr.mxu0 0.0
        %6019 = vmatpush1.msra.mxu0 0.0
        %6020 = vmatprep.subr.mxu0 0.0
        %6021 = vmatpush1.msra.mxu0 0.0
        %6022 = vmatprep.subr.mxu0 0.0
        %6023 = vmatpush1.msra.mxu0 0.0
        %6024 = vmatprep.subr.mxu0 0.0
        %6025 = vmatpush1.msra.mxu0 0.0
        %6026 = vmatprep.subr.mxu0 0.0
        %6027 = vmatpush1.msra.mxu0 0.0
        %6028 = vmatprep.subr.mxu0 0.0
        %6029 = vmatpush1.msra.mxu0 0.0
        %6030 = vmatprep.subr.mxu0 0.0
        %6031 = vmatpush1.msra.mxu0 0.0
        %6032 = vmatprep.subr.mxu0 0.0
        %6033 = vmatpush1.msra.mxu0 0.0
        %6034 = vmatprep.subr.mxu0 0.0
        %6035 = vmatpush1.msra.mxu0 0.0
        %6036 = vmatprep.subr.mxu0 0.0
        %6037 = vmatpush1.msra.mxu0 0.0
        %6038 = vmatprep.subr.mxu0 0.0
        %6039 = vmatpush1.msra.mxu0 0.0
        %6040 = vmatprep.subr.mxu0 0.0
        %6041 = vmatpush1.msra.mxu0 0.0
        %6042 = vmatprep.subr.mxu0 0.0
        %6043 = vmatpush1.msra.mxu0 0.0
        %6044 = vmatprep.subr.mxu0 0.0
        %6045 = vmatpush1.msra.mxu0 0.0
        %6046 = vmatprep.subr.mxu0 0.0
        %6047 = vmatpush1.msra.mxu0 0.0
        %6048 = vmatprep.subr.mxu0 0.0
        %6049 = vmatpush1.msra.mxu0 0.0
        %6050 = vmatprep.subr.mxu0 0.0
        %6051 = vmatpush1.msra.mxu0 0.0
        %6052 = vmatprep.subr.mxu0 0.0
        %6053 = vmatpush1.msra.mxu0 0.0
        %6054 = vmatprep.subr.mxu0 0.0
        %6055 = vmatpush1.msra.mxu0 0.0
        %6056 = vmatprep.subr.mxu0 0.0
        %6057 = vmatpush1.msra.mxu0 0.0
        %6058 = vmatprep.subr.mxu0 0.0
        %6059 = vmatpush1.msra.mxu0 0.0
        %6060 = vmatprep.mubr.f32.mxu0 0.0
        %6061 = vmatmul.mubr.f32.gmra.mrb[0].mxu0 %v5994
        %v6062 = vpop.f32.mrb[0].mxu0
        %v6063 = vadd.f32 0.0, %v6062
        %v6064 = vpop.f32.mrb[0].mxu0
        %6065 = vdwg.mxu0
        %v6067 = vsel %vm764, %v6063, 0
        %6069 = vmatprep.subr.mxu0 0.0
        %6070 = vmatpush1.msra.mxu0 %v5627
        %6071 = vmatprep.subr.mxu0 0.0
        %6072 = vmatpush1.msra.mxu0 0.0
        %6073 = vmatprep.subr.mxu0 0.0
        %6074 = vmatpush1.msra.mxu0 0.0
        %6075 = vmatprep.subr.mxu0 0.0
        %6076 = vmatpush1.msra.mxu0 0.0
        %6077 = vmatprep.subr.mxu0 0.0
        %6078 = vmatpush1.msra.mxu0 0.0
        %6079 = vmatprep.subr.mxu0 0.0
        %6080 = vmatpush1.msra.mxu0 0.0
        %6081 = vmatprep.subr.mxu0 0.0
        %6082 = vmatpush1.msra.mxu0 0.0
        %6083 = vmatprep.subr.mxu0 0.0
        %6084 = vmatpush1.msra.mxu0 0.0
        %6085 = vmatprep.subr.mxu0 0.0
        %6086 = vmatpush1.msra.mxu0 0.0
        %6087 = vmatprep.subr.mxu0 0.0
        %6088 = vmatpush1.msra.mxu0 0.0
        %6089 = vmatprep.subr.mxu0 0.0
        %6090 = vmatpush1.msra.mxu0 0.0
        %6091 = vmatprep.subr.mxu0 0.0
        %6092 = vmatpush1.msra.mxu0 0.0
        %6093 = vmatprep.subr.mxu0 0.0
        %6094 = vmatpush1.msra.mxu0 0.0
        %6095 = vmatprep.subr.mxu0 0.0
        %6096 = vmatpush1.msra.mxu0 0.0
        %6097 = vmatprep.subr.mxu0 0.0
        %6098 = vmatpush1.msra.mxu0 0.0
        %6099 = vmatprep.subr.mxu0 0.0
        %6100 = vmatpush1.msra.mxu0 0.0
        %6101 = vmatprep.subr.mxu0 0.0
        %6102 = vmatpush1.msra.mxu0 0.0
        %6103 = vmatprep.subr.mxu0 0.0
        %6104 = vmatpush1.msra.mxu0 0.0
        %6105 = vmatprep.subr.mxu0 0.0
        %6106 = vmatpush1.msra.mxu0 0.0
        %6107 = vmatprep.subr.mxu0 0.0
        %6108 = vmatpush1.msra.mxu0 0.0
        %6109 = vmatprep.subr.mxu0 0.0
        %6110 = vmatpush1.msra.mxu0 0.0
        %6111 = vmatprep.subr.mxu0 0.0
        %6112 = vmatpush1.msra.mxu0 0.0
        %6113 = vmatprep.subr.mxu0 0.0
        %6114 = vmatpush1.msra.mxu0 0.0
        %6115 = vmatprep.subr.mxu0 0.0
        %6116 = vmatpush1.msra.mxu0 0.0
        %6117 = vmatprep.subr.mxu0 0.0
        %6118 = vmatpush1.msra.mxu0 0.0
        %6119 = vmatprep.subr.mxu0 0.0
        %6120 = vmatpush1.msra.mxu0 0.0
        %6121 = vmatprep.subr.mxu0 0.0
        %6122 = vmatpush1.msra.mxu0 0.0
        %6123 = vmatprep.subr.mxu0 0.0
        %6124 = vmatpush1.msra.mxu0 0.0
        %6125 = vmatprep.subr.mxu0 0.0
        %6126 = vmatpush1.msra.mxu0 0.0
        %6127 = vmatprep.subr.mxu0 0.0
        %6128 = vmatpush1.msra.mxu0 0.0
        %6129 = vmatprep.subr.mxu0 0.0
        %6130 = vmatpush1.msra.mxu0 0.0
        %6131 = vmatprep.subr.mxu0 0.0
        %6132 = vmatpush1.msra.mxu0 0.0
        %6133 = vmatprep.mubr.f32.mxu0 0.0
        %6134 = vmatmul.mubr.f32.gmra.mrb[0].mxu0 %v6067
        %v6135 = vpop.f32.mrb[0].mxu0
        %v6136 = vadd.f32 0.0, %v6135
        %v6137 = vpop.f32.mrb[0].mxu0
        %6138 = vdwg.mxu0
        %v6140 = vsel %vm764, %v5898, 0
        %6142 = vmatprep.subr.mxu0 0.0
        %6143 = vmatpush1.msra.mxu0 %v5626
        %6144 = vmatprep.subr.mxu0 0.0
        %6145 = vmatpush1.msra.mxu0 0.0
        %6146 = vmatprep.subr.mxu0 0.0
        %6147 = vmatpush1.msra.mxu0 0.0
        %6148 = vmatprep.subr.mxu0 0.0
        %6149 = vmatpush1.msra.mxu0 0.0
        %6150 = vmatprep.subr.mxu0 0.0
        %6151 = vmatpush1.msra.mxu0 0.0
        %6152 = vmatprep.subr.mxu0 0.0
        %6153 = vmatpush1.msra.mxu0 0.0
        %6154 = vmatprep.subr.mxu0 0.0
        %6155 = vmatpush1.msra.mxu0 0.0
        %6156 = vmatprep.subr.mxu0 0.0
        %6157 = vmatpush1.msra.mxu0 0.0
        %6158 = vmatprep.subr.mxu0 0.0
        %6159 = vmatpush1.msra.mxu0 0.0
        %6160 = vmatprep.subr.mxu0 0.0
        %6161 = vmatpush1.msra.mxu0 0.0
        %6162 = vmatprep.subr.mxu0 0.0
        %6163 = vmatpush1.msra.mxu0 0.0
        %6164 = vmatprep.subr.mxu0 0.0
        %6165 = vmatpush1.msra.mxu0 0.0
        %6166 = vmatprep.subr.mxu0 0.0
        %6167 = vmatpush1.msra.mxu0 0.0
        %6168 = vmatprep.subr.mxu0 0.0
        %6169 = vmatpush1.msra.mxu0 0.0
        %6170 = vmatprep.subr.mxu0 0.0
        %6171 = vmatpush1.msra.mxu0 0.0
        %6172 = vmatprep.subr.mxu0 0.0
        %6173 = vmatpush1.msra.mxu0 0.0
        %6174 = vmatprep.subr.mxu0 0.0
        %6175 = vmatpush1.msra.mxu0 0.0
        %6176 = vmatprep.subr.mxu0 0.0
        %6177 = vmatpush1.msra.mxu0 0.0
        %6178 = vmatprep.subr.mxu0 0.0
        %6179 = vmatpush1.msra.mxu0 0.0
        %6180 = vmatprep.subr.mxu0 0.0
        %6181 = vmatpush1.msra.mxu0 0.0
        %6182 = vmatprep.subr.mxu0 0.0
        %6183 = vmatpush1.msra.mxu0 0.0
        %6184 = vmatprep.subr.mxu0 0.0
        %6185 = vmatpush1.msra.mxu0 0.0
        %6186 = vmatprep.subr.mxu0 0.0
        %6187 = vmatpush1.msra.mxu0 0.0
        %6188 = vmatprep.subr.mxu0 0.0
        %6189 = vmatpush1.msra.mxu0 0.0
        %6190 = vmatprep.subr.mxu0 0.0
        %6191 = vmatpush1.msra.mxu0 0.0
        %6192 = vmatprep.subr.mxu0 0.0
        %6193 = vmatpush1.msra.mxu0 0.0
        %6194 = vmatprep.subr.mxu0 0.0
        %6195 = vmatpush1.msra.mxu0 0.0
        %6196 = vmatprep.subr.mxu0 0.0
        %6197 = vmatpush1.msra.mxu0 0.0
        %6198 = vmatprep.subr.mxu0 0.0
        %6199 = vmatpush1.msra.mxu0 0.0
        %6200 = vmatprep.subr.mxu0 0.0
        %6201 = vmatpush1.msra.mxu0 0.0
        %6202 = vmatprep.subr.mxu0 0.0
        %6203 = vmatpush1.msra.mxu0 0.0
        %6204 = vmatprep.subr.mxu0 0.0
        %6205 = vmatpush1.msra.mxu0 0.0
        %6206 = vmatprep.mubr.f32.mxu0 0.0
        %6207 = vmatmul.mubr.f32.gmra.mrb[0].mxu0 %v6140
        %v6208 = vpop.f32.mrb[0].mxu0
        %v6209 = vadd.f32 %v6136, %v6208
        %v6210 = vpop.f32.mrb[0].mxu0
        %6211 = vdwg.mxu0
        %6212 = vrot.lane.b32.xlu0 %v5734, 112
        %v6213 = vpop.permute.xlu0 %6212
        %6214 = vrot.lane.b32.xlu0 %v5734, 80
        %v6215 = vpop.permute.xlu0 %6214
        %v6216 = vsel %vm764, %v6213, 0
        %v6218 = vsel %vm764, %v6215, 0
        %6220 = vmatprep.subr.mxu0 0.0
        %6221 = vmatpush1.xpose.msra.mxu0 %v6218
        %6222 = vmatprep.subr.mxu0 0.0
        %6223 = vmatpush1.xpose.msra.mxu0 0.0
        %6224 = vmatprep.subr.mxu0 0.0
        %6225 = vmatpush1.xpose.msra.mxu0 0.0
        %6226 = vmatprep.subr.mxu0 0.0
        %6227 = vmatpush1.xpose.msra.mxu0 0.0
        %6228 = vmatprep.subr.mxu0 0.0
        %6229 = vmatpush1.xpose.msra.mxu0 0.0
        %6230 = vmatprep.subr.mxu0 0.0
        %6231 = vmatpush1.xpose.msra.mxu0 0.0
        %6232 = vmatprep.subr.mxu0 0.0
        %6233 = vmatpush1.xpose.msra.mxu0 0.0
        %6234 = vmatprep.subr.mxu0 0.0
        %6235 = vmatpush1.xpose.msra.mxu0 0.0
        %6236 = vmatprep.subr.mxu0 0.0
        %6237 = vmatpush1.xpose.msra.mxu0 0.0
        %6238 = vmatprep.subr.mxu0 0.0
        %6239 = vmatpush1.xpose.msra.mxu0 0.0
        %6240 = vmatprep.subr.mxu0 0.0
        %6241 = vmatpush1.xpose.msra.mxu0 0.0
        %6242 = vmatprep.subr.mxu0 0.0
        %6243 = vmatpush1.xpose.msra.mxu0 0.0
        %6244 = vmatprep.subr.mxu0 0.0
        %6245 = vmatpush1.xpose.msra.mxu0 0.0
        %6246 = vmatprep.subr.mxu0 0.0
        %6247 = vmatpush1.xpose.msra.mxu0 0.0
        %6248 = vmatprep.subr.mxu0 0.0
        %6249 = vmatpush1.xpose.msra.mxu0 0.0
        %6250 = vmatprep.subr.mxu0 0.0
        %6251 = vmatpush1.xpose.msra.mxu0 0.0
        %6252 = vmatprep.subr.mxu0 0.0
        %6253 = vmatpush1.xpose.msra.mxu0 0.0
        %6254 = vmatprep.subr.mxu0 0.0
        %6255 = vmatpush1.xpose.msra.mxu0 0.0
        %6256 = vmatprep.subr.mxu0 0.0
        %6257 = vmatpush1.xpose.msra.mxu0 0.0
        %6258 = vmatprep.subr.mxu0 0.0
        %6259 = vmatpush1.xpose.msra.mxu0 0.0
        %6260 = vmatprep.subr.mxu0 0.0
        %6261 = vmatpush1.xpose.msra.mxu0 0.0
        %6262 = vmatprep.subr.mxu0 0.0
        %6263 = vmatpush1.xpose.msra.mxu0 0.0
        %6264 = vmatprep.subr.mxu0 0.0
        %6265 = vmatpush1.xpose.msra.mxu0 0.0
        %6266 = vmatprep.subr.mxu0 0.0
        %6267 = vmatpush1.xpose.msra.mxu0 0.0
        %6268 = vmatprep.subr.mxu0 0.0
        %6269 = vmatpush1.xpose.msra.mxu0 0.0
        %6270 = vmatprep.subr.mxu0 0.0
        %6271 = vmatpush1.xpose.msra.mxu0 0.0
        %6272 = vmatprep.subr.mxu0 0.0
        %6273 = vmatpush1.xpose.msra.mxu0 0.0
        %6274 = vmatprep.subr.mxu0 0.0
        %6275 = vmatpush1.xpose.msra.mxu0 0.0
        %6276 = vmatprep.subr.mxu0 0.0
        %6277 = vmatpush1.xpose.msra.mxu0 0.0
        %6278 = vmatprep.subr.mxu0 0.0
        %6279 = vmatpush1.xpose.msra.mxu0 0.0
        %6280 = vmatprep.subr.mxu0 0.0
        %6281 = vmatpush1.xpose.msra.mxu0 0.0
        %6282 = vmatprep.subr.mxu0 0.0
        %6283 = vmatpush1.xpose.msra.mxu0 0.0
        %6284 = vmatprep.mubr.f32.mxu0 0.0
        %6285 = vmatmul.mubr.f32.gmra.mrb[0].mxu0 %v6216
        %v6286 = vpop.f32.mrb[0].mxu0
        %v6287 = vadd.f32 %v3364, %v6286
        %v6288 = vpop.f32.mrb[0].mxu0
        %6289 = vdwg.mxu0
        %v6290 = vsel %vm764, %v6287, -inf
        %6291 = vmax.xlane.f32.xlu0 %v6290
        %v6292 = vpop.xlane.xlu0 %6291
        %v6293 = vsub.f32 %v6287, %v6292
        %v6294 = vmul.f32 %v6293, 1.442695
        %v6295 = vpow.pop %v6294
        %v6296 = vsel %vm764, %v6295, 0.0
        %6297 = vadd.xlane.f32.xlu0 %v6296
        %v6298 = vpop.xlane.xlu0 %6297
        %v6299 = vrcp.pop %v6298
        %v6300 = vmul.f32 %v6295, %v6299
        %6301 = vrot.lane.b32.xlu0 %v5734, 48
        %v6302 = vpop.permute.xlu0 %6301
        %v6305 = vsel %vm764, %v6300, 0
        %6307 = vmatprep.subr.mxu0 0.0
        %6308 = vmatpush1.msra.mxu0 %v6302
        %6309 = vmatprep.subr.mxu0 0.0
        %6310 = vmatpush1.msra.mxu0 0.0
        %6311 = vmatprep.subr.mxu0 0.0
        %6312 = vmatpush1.msra.mxu0 0.0
        %6313 = vmatprep.subr.mxu0 0.0
        %6314 = vmatpush1.msra.mxu0 0.0
        %6315 = vmatprep.subr.mxu0 0.0
        %6316 = vmatpush1.msra.mxu0 0.0
        %6317 = vmatprep.subr.mxu0 0.0
        %6318 = vmatpush1.msra.mxu0 0.0
        %6319 = vmatprep.subr.mxu0 0.0
        %6320 = vmatpush1.msra.mxu0 0.0
        %6321 = vmatprep.subr.mxu0 0.0
        %6322 = vmatpush1.msra.mxu0 0.0
        %6323 = vmatprep.subr.mxu0 0.0
        %6324 = vmatpush1.msra.mxu0 0.0
        %6325 = vmatprep.subr.mxu0 0.0
        %6326 = vmatpush1.msra.mxu0 0.0
        %6327 = vmatprep.subr.mxu0 0.0
        %6328 = vmatpush1.msra.mxu0 0.0
        %6329 = vmatprep.subr.mxu0 0.0
        %6330 = vmatpush1.msra.mxu0 0.0
        %6331 = vmatprep.subr.mxu0 0.0
        %6332 = vmatpush1.msra.mxu0 0.0
        %6333 = vmatprep.subr.mxu0 0.0
        %6334 = vmatpush1.msra.mxu0 0.0
        %6335 = vmatprep.subr.mxu0 0.0
        %6336 = vmatpush1.msra.mxu0 0.0
        %6337 = vmatprep.subr.mxu0 0.0
        %6338 = vmatpush1.msra.mxu0 0.0
        %6339 = vmatprep.subr.mxu0 0.0
        %6340 = vmatpush1.msra.mxu0 0.0
        %6341 = vmatprep.subr.mxu0 0.0
        %6342 = vmatpush1.msra.mxu0 0.0
        %6343 = vmatprep.subr.mxu0 0.0
        %6344 = vmatpush1.msra.mxu0 0.0
        %6345 = vmatprep.subr.mxu0 0.0
        %6346 = vmatpush1.msra.mxu0 0.0
        %6347 = vmatprep.subr.mxu0 0.0
        %6348 = vmatpush1.msra.mxu0 0.0
        %6349 = vmatprep.subr.mxu0 0.0
        %6350 = vmatpush1.msra.mxu0 0.0
        %6351 = vmatprep.subr.mxu0 0.0
        %6352 = vmatpush1.msra.mxu0 0.0
        %6353 = vmatprep.subr.mxu0 0.0
        %6354 = vmatpush1.msra.mxu0 0.0
        %6355 = vmatprep.subr.mxu0 0.0
        %6356 = vmatpush1.msra.mxu0 0.0
        %6357 = vmatprep.subr.mxu0 0.0
        %6358 = vmatpush1.msra.mxu0 0.0
        %6359 = vmatprep.subr.mxu0 0.0
        %6360 = vmatpush1.msra.mxu0 0.0
        %6361 = vmatprep.subr.mxu0 0.0
        %6362 = vmatpush1.msra.mxu0 0.0
        %6363 = vmatprep.subr.mxu0 0.0
        %6364 = vmatpush1.msra.mxu0 0.0
        %6365 = vmatprep.subr.mxu0 0.0
        %6366 = vmatpush1.msra.mxu0 0.0
        %6367 = vmatprep.subr.mxu0 0.0
        %6368 = vmatpush1.msra.mxu0 0.0
        %6369 = vmatprep.subr.mxu0 0.0
        %6370 = vmatpush1.msra.mxu0 0.0
        %6371 = vmatprep.mubr.f32.mxu0 0.0
        %6372 = vmatmul.mubr.f32.gmra.mrb[0].mxu0 %v6305
        %v6373 = vpop.f32.mrb[0].mxu0
        %v6374 = vadd.f32 0.0, %v6373
        %v6375 = vpop.f32.mrb[0].mxu0
        %6376 = vdwg.mxu0
        %v6378 = vsel %vm764, %v6374, 0
        %6380 = vmatprep.subr.mxu0 0.0
        %6381 = vmatpush1.msra.mxu0 %v5628
        %6382 = vmatprep.subr.mxu0 0.0
        %6383 = vmatpush1.msra.mxu0 0.0
        %6384 = vmatprep.subr.mxu0 0.0
        %6385 = vmatpush1.msra.mxu0 0.0
        %6386 = vmatprep.subr.mxu0 0.0
        %6387 = vmatpush1.msra.mxu0 0.0
        %6388 = vmatprep.subr.mxu0 0.0
        %6389 = vmatpush1.msra.mxu0 0.0
        %6390 = vmatprep.subr.mxu0 0.0
        %6391 = vmatpush1.msra.mxu0 0.0
        %6392 = vmatprep.subr.mxu0 0.0
        %6393 = vmatpush1.msra.mxu0 0.0
        %6394 = vmatprep.subr.mxu0 0.0
        %6395 = vmatpush1.msra.mxu0 0.0
        %6396 = vmatprep.subr.mxu0 0.0
        %6397 = vmatpush1.msra.mxu0 0.0
        %6398 = vmatprep.subr.mxu0 0.0
        %6399 = vmatpush1.msra.mxu0 0.0
        %6400 = vmatprep.subr.mxu0 0.0
        %6401 = vmatpush1.msra.mxu0 0.0
        %6402 = vmatprep.subr.mxu0 0.0
        %6403 = vmatpush1.msra.mxu0 0.0
        %6404 = vmatprep.subr.mxu0 0.0
        %6405 = vmatpush1.msra.mxu0 0.0
        %6406 = vmatprep.subr.mxu0 0.0
        %6407 = vmatpush1.msra.mxu0 0.0
        %6408 = vmatprep.subr.mxu0 0.0
        %6409 = vmatpush1.msra.mxu0 0.0
        %6410 = vmatprep.subr.mxu0 0.0
        %6411 = vmatpush1.msra.mxu0 0.0
        %6412 = vmatprep.subr.mxu0 0.0
        %6413 = vmatpush1.msra.mxu0 0.0
        %6414 = vmatprep.subr.mxu0 0.0
        %6415 = vmatpush1.msra.mxu0 0.0
        %6416 = vmatprep.subr.mxu0 0.0
        %6417 = vmatpush1.msra.mxu0 0.0
        %6418 = vmatprep.subr.mxu0 0.0
        %6419 = vmatpush1.msra.mxu0 0.0
        %6420 = vmatprep.subr.mxu0 0.0
        %6421 = vmatpush1.msra.mxu0 0.0
        %6422 = vmatprep.subr.mxu0 0.0
        %6423 = vmatpush1.msra.mxu0 0.0
        %6424 = vmatprep.subr.mxu0 0.0
        %6425 = vmatpush1.msra.mxu0 0.0
        %6426 = vmatprep.subr.mxu0 0.0
        %6427 = vmatpush1.msra.mxu0 0.0
        %6428 = vmatprep.subr.mxu0 0.0
        %6429 = vmatpush1.msra.mxu0 0.0
        %6430 = vmatprep.subr.mxu0 0.0
        %6431 = vmatpush1.msra.mxu0 0.0
        %6432 = vmatprep.subr.mxu0 0.0
        %6433 = vmatpush1.msra.mxu0 0.0
        %6434 = vmatprep.subr.mxu0 0.0
        %6435 = vmatpush1.msra.mxu0 0.0
        %6436 = vmatprep.subr.mxu0 0.0
        %6437 = vmatpush1.msra.mxu0 0.0
        %6438 = vmatprep.subr.mxu0 0.0
        %6439 = vmatpush1.msra.mxu0 0.0
        %6440 = vmatprep.subr.mxu0 0.0
        %6441 = vmatpush1.msra.mxu0 0.0
        %6442 = vmatprep.subr.mxu0 0.0
        %6443 = vmatpush1.msra.mxu0 0.0
        %6444 = vmatprep.mubr.f32.mxu0 0.0
        %6445 = vmatmul.mubr.f32.gmra.mrb[0].mxu0 %v6378
        %v6446 = vpop.f32.mrb[0].mxu0
        %v6447 = vadd.f32 0.0, %v6446
        %v6448 = vpop.f32.mrb[0].mxu0
        %6449 = vdwg.mxu0
        %v6450 = vadd.f32 %v6209, %v6447
        %6451 = vrot.lane.b32.xlu0 %v5734, 104
        %v6452 = vpop.permute.xlu0 %6451
        %6453 = vrot.lane.b32.xlu0 %v5734, 72
        %v6454 = vpop.permute.xlu0 %6453
        %v6455 = vsel %vm764, %v6452, 0
        %v6457 = vsel %vm764, %v6454, 0
        %6459 = vmatprep.subr.mxu0 0.0
        %6460 = vmatpush1.xpose.msra.mxu0 %v6457
        %6461 = vmatprep.subr.mxu0 0.0
        %6462 = vmatpush1.xpose.msra.mxu0 0.0
        %6463 = vmatprep.subr.mxu0 0.0
        %6464 = vmatpush1.xpose.msra.mxu0 0.0
        %6465 = vmatprep.subr.mxu0 0.0
        %6466 = vmatpush1.xpose.msra.mxu0 0.0
        %6467 = vmatprep.subr.mxu0 0.0
        %6468 = vmatpush1.xpose.msra.mxu0 0.0
        %6469 = vmatprep.subr.mxu0 0.0
        %6470 = vmatpush1.xpose.msra.mxu0 0.0
        %6471 = vmatprep.subr.mxu0 0.0
        %6472 = vmatpush1.xpose.msra.mxu0 0.0
        %6473 = vmatprep.subr.mxu0 0.0
        %6474 = vmatpush1.xpose.msra.mxu0 0.0
        %6475 = vmatprep.subr.mxu0 0.0
        %6476 = vmatpush1.xpose.msra.mxu0 0.0
        %6477 = vmatprep.subr.mxu0 0.0
        %6478 = vmatpush1.xpose.msra.mxu0 0.0
        %6479 = vmatprep.subr.mxu0 0.0
        %6480 = vmatpush1.xpose.msra.mxu0 0.0
        %6481 = vmatprep.subr.mxu0 0.0
        %6482 = vmatpush1.xpose.msra.mxu0 0.0
        %6483 = vmatprep.subr.mxu0 0.0
        %6484 = vmatpush1.xpose.msra.mxu0 0.0
        %6485 = vmatprep.subr.mxu0 0.0
        %6486 = vmatpush1.xpose.msra.mxu0 0.0
        %6487 = vmatprep.subr.mxu0 0.0
        %6488 = vmatpush1.xpose.msra.mxu0 0.0
        %6489 = vmatprep.subr.mxu0 0.0
        %6490 = vmatpush1.xpose.msra.mxu0 0.0
        %6491 = vmatprep.subr.mxu0 0.0
        %6492 = vmatpush1.xpose.msra.mxu0 0.0
        %6493 = vmatprep.subr.mxu0 0.0
        %6494 = vmatpush1.xpose.msra.mxu0 0.0
        %6495 = vmatprep.subr.mxu0 0.0
        %6496 = vmatpush1.xpose.msra.mxu0 0.0
        %6497 = vmatprep.subr.mxu0 0.0
        %6498 = vmatpush1.xpose.msra.mxu0 0.0
        %6499 = vmatprep.subr.mxu0 0.0
        %6500 = vmatpush1.xpose.msra.mxu0 0.0
        %6501 = vmatprep.subr.mxu0 0.0
        %6502 = vmatpush1.xpose.msra.mxu0 0.0
        %6503 = vmatprep.subr.mxu0 0.0
        %6504 = vmatpush1.xpose.msra.mxu0 0.0
        %6505 = vmatprep.subr.mxu0 0.0
        %6506 = vmatpush1.xpose.msra.mxu0 0.0
        %6507 = vmatprep.subr.mxu0 0.0
        %6508 = vmatpush1.xpose.msra.mxu0 0.0
        %6509 = vmatprep.subr.mxu0 0.0
        %6510 = vmatpush1.xpose.msra.mxu0 0.0
        %6511 = vmatprep.subr.mxu0 0.0
        %6512 = vmatpush1.xpose.msra.mxu0 0.0
        %6513 = vmatprep.subr.mxu0 0.0
        %6514 = vmatpush1.xpose.msra.mxu0 0.0
        %6515 = vmatprep.subr.mxu0 0.0
        %6516 = vmatpush1.xpose.msra.mxu0 0.0
        %6517 = vmatprep.subr.mxu0 0.0
        %6518 = vmatpush1.xpose.msra.mxu0 0.0
        %6519 = vmatprep.subr.mxu0 0.0
        %6520 = vmatpush1.xpose.msra.mxu0 0.0
        %6521 = vmatprep.subr.mxu0 0.0
        %6522 = vmatpush1.xpose.msra.mxu0 0.0
        %6523 = vmatprep.mubr.f32.mxu0 0.0
        %6524 = vmatmul.mubr.f32.gmra.mrb[0].mxu0 %v6455
        %v6525 = vpop.f32.mrb[0].mxu0
        %v6526 = vadd.f32 %v3364, %v6525
        %v6527 = vpop.f32.mrb[0].mxu0
        %6528 = vdwg.mxu0
        %v6529 = vsel %vm764, %v6526, -inf
        %6530 = vmax.xlane.f32.xlu0 %v6529
        %v6531 = vpop.xlane.xlu0 %6530
        %v6532 = vsub.f32 %v6526, %v6531
        %v6533 = vmul.f32 %v6532, 1.442695
        %v6534 = vpow.pop %v6533
        %v6535 = vsel %vm764, %v6534, 0.0
        %6536 = vadd.xlane.f32.xlu0 %v6535
        %v6537 = vpop.xlane.xlu0 %6536
        %v6538 = vrcp.pop %v6537
        %v6539 = vmul.f32 %v6534, %v6538
        %6540 = vrot.lane.b32.xlu0 %v5734, 40
        %v6541 = vpop.permute.xlu0 %6540
        %v6544 = vsel %vm764, %v6539, 0
        %6546 = vmatprep.subr.mxu0 0.0
        %6547 = vmatpush1.msra.mxu0 %v6541
        %6548 = vmatprep.subr.mxu0 0.0
        %6549 = vmatpush1.msra.mxu0 0.0
        %6550 = vmatprep.subr.mxu0 0.0
        %6551 = vmatpush1.msra.mxu0 0.0
        %6552 = vmatprep.subr.mxu0 0.0
        %6553 = vmatpush1.msra.mxu0 0.0
        %6554 = vmatprep.subr.mxu0 0.0
        %6555 = vmatpush1.msra.mxu0 0.0
        %6556 = vmatprep.subr.mxu0 0.0
        %6557 = vmatpush1.msra.mxu0 0.0
        %6558 = vmatprep.subr.mxu0 0.0
        %6559 = vmatpush1.msra.mxu0 0.0
        %6560 = vmatprep.subr.mxu0 0.0
        %6561 = vmatpush1.msra.mxu0 0.0
        %6562 = vmatprep.subr.mxu0 0.0
        %6563 = vmatpush1.msra.mxu0 0.0
        %6564 = vmatprep.subr.mxu0 0.0
        %6565 = vmatpush1.msra.mxu0 0.0
        %6566 = vmatprep.subr.mxu0 0.0
        %6567 = vmatpush1.msra.mxu0 0.0
        %6568 = vmatprep.subr.mxu0 0.0
        %6569 = vmatpush1.msra.mxu0 0.0
        %6570 = vmatprep.subr.mxu0 0.0
        %6571 = vmatpush1.msra.mxu0 0.0
        %6572 = vmatprep.subr.mxu0 0.0
        %6573 = vmatpush1.msra.mxu0 0.0
        %6574 = vmatprep.subr.mxu0 0.0
        %6575 = vmatpush1.msra.mxu0 0.0
        %6576 = vmatprep.subr.mxu0 0.0
        %6577 = vmatpush1.msra.mxu0 0.0
        %6578 = vmatprep.subr.mxu0 0.0
        %6579 = vmatpush1.msra.mxu0 0.0
        %6580 = vmatprep.subr.mxu0 0.0
        %6581 = vmatpush1.msra.mxu0 0.0
        %6582 = vmatprep.subr.mxu0 0.0
        %6583 = vmatpush1.msra.mxu0 0.0
        %6584 = vmatprep.subr.mxu0 0.0
        %6585 = vmatpush1.msra.mxu0 0.0
        %6586 = vmatprep.subr.mxu0 0.0
        %6587 = vmatpush1.msra.mxu0 0.0
        %6588 = vmatprep.subr.mxu0 0.0
        %6589 = vmatpush1.msra.mxu0 0.0
        %6590 = vmatprep.subr.mxu0 0.0
        %6591 = vmatpush1.msra.mxu0 0.0
        %6592 = vmatprep.subr.mxu0 0.0
        %6593 = vmatpush1.msra.mxu0 0.0
        %6594 = vmatprep.subr.mxu0 0.0
        %6595 = vmatpush1.msra.mxu0 0.0
        %6596 = vmatprep.subr.mxu0 0.0
        %6597 = vmatpush1.msra.mxu0 0.0
        %6598 = vmatprep.subr.mxu0 0.0
        %6599 = vmatpush1.msra.mxu0 0.0
        %6600 = vmatprep.subr.mxu0 0.0
        %6601 = vmatpush1.msra.mxu0 0.0
        %6602 = vmatprep.subr.mxu0 0.0
        %6603 = vmatpush1.msra.mxu0 0.0
        %6604 = vmatprep.subr.mxu0 0.0
        %6605 = vmatpush1.msra.mxu0 0.0
        %6606 = vmatprep.subr.mxu0 0.0
        %6607 = vmatpush1.msra.mxu0 0.0
        %6608 = vmatprep.subr.mxu0 0.0
        %6609 = vmatpush1.msra.mxu0 0.0
        %6610 = vmatprep.mubr.f32.mxu0 0.0
        %6611 = vmatmul.mubr.f32.gmra.mrb[0].mxu0 %v6544
        %v6612 = vpop.f32.mrb[0].mxu0
        %v6613 = vadd.f32 0.0, %v6612
        %v6614 = vpop.f32.mrb[0].mxu0
        %6615 = vdwg.mxu0
        %v6617 = vsel %vm764, %v6613, 0
        %6619 = vmatprep.subr.mxu0 0.0
        %6620 = vmatpush1.msra.mxu0 %v5629
        %6621 = vmatprep.subr.mxu0 0.0
        %6622 = vmatpush1.msra.mxu0 0.0
        %6623 = vmatprep.subr.mxu0 0.0
        %6624 = vmatpush1.msra.mxu0 0.0
        %6625 = vmatprep.subr.mxu0 0.0
        %6626 = vmatpush1.msra.mxu0 0.0
        %6627 = vmatprep.subr.mxu0 0.0
        %6628 = vmatpush1.msra.mxu0 0.0
        %6629 = vmatprep.subr.mxu0 0.0
        %6630 = vmatpush1.msra.mxu0 0.0
        %6631 = vmatprep.subr.mxu0 0.0
        %6632 = vmatpush1.msra.mxu0 0.0
        %6633 = vmatprep.subr.mxu0 0.0
        %6634 = vmatpush1.msra.mxu0 0.0
        %6635 = vmatprep.subr.mxu0 0.0
        %6636 = vmatpush1.msra.mxu0 0.0
        %6637 = vmatprep.subr.mxu0 0.0
        %6638 = vmatpush1.msra.mxu0 0.0
        %6639 = vmatprep.subr.mxu0 0.0
        %6640 = vmatpush1.msra.mxu0 0.0
        %6641 = vmatprep.subr.mxu0 0.0
        %6642 = vmatpush1.msra.mxu0 0.0
        %6643 = vmatprep.subr.mxu0 0.0
        %6644 = vmatpush1.msra.mxu0 0.0
        %6645 = vmatprep.subr.mxu0 0.0
        %6646 = vmatpush1.msra.mxu0 0.0
        %6647 = vmatprep.subr.mxu0 0.0
        %6648 = vmatpush1.msra.mxu0 0.0
        %6649 = vmatprep.subr.mxu0 0.0
        %6650 = vmatpush1.msra.mxu0 0.0
        %6651 = vmatprep.subr.mxu0 0.0
        %6652 = vmatpush1.msra.mxu0 0.0
        %6653 = vmatprep.subr.mxu0 0.0
        %6654 = vmatpush1.msra.mxu0 0.0
        %6655 = vmatprep.subr.mxu0 0.0
        %6656 = vmatpush1.msra.mxu0 0.0
        %6657 = vmatprep.subr.mxu0 0.0
        %6658 = vmatpush1.msra.mxu0 0.0
        %6659 = vmatprep.subr.mxu0 0.0
        %6660 = vmatpush1.msra.mxu0 0.0
        %6661 = vmatprep.subr.mxu0 0.0
        %6662 = vmatpush1.msra.mxu0 0.0
        %6663 = vmatprep.subr.mxu0 0.0
        %6664 = vmatpush1.msra.mxu0 0.0
        %6665 = vmatprep.subr.mxu0 0.0
        %6666 = vmatpush1.msra.mxu0 0.0
        %6667 = vmatprep.subr.mxu0 0.0
        %6668 = vmatpush1.msra.mxu0 0.0
        %6669 = vmatprep.subr.mxu0 0.0
        %6670 = vmatpush1.msra.mxu0 0.0
        %6671 = vmatprep.subr.mxu0 0.0
        %6672 = vmatpush1.msra.mxu0 0.0
        %6673 = vmatprep.subr.mxu0 0.0
        %6674 = vmatpush1.msra.mxu0 0.0
        %6675 = vmatprep.subr.mxu0 0.0
        %6676 = vmatpush1.msra.mxu0 0.0
        %6677 = vmatprep.subr.mxu0 0.0
        %6678 = vmatpush1.msra.mxu0 0.0
        %6679 = vmatprep.subr.mxu0 0.0
        %6680 = vmatpush1.msra.mxu0 0.0
        %6681 = vmatprep.subr.mxu0 0.0
        %6682 = vmatpush1.msra.mxu0 0.0
        %6683 = vmatprep.mubr.f32.mxu0 0.0
        %6684 = vmatmul.mubr.f32.gmra.mrb[0].mxu0 %v6617
        %v6685 = vpop.f32.mrb[0].mxu0
        %v6686 = vadd.f32 0.0, %v6685
        %v6687 = vpop.f32.mrb[0].mxu0
        %6688 = vdwg.mxu0
        %v6689 = vadd.f32 %v6450, %v6686
        %v6690 = vlaneseq
        %v6691 = vshrl.u32 %v6690, 7
        %v6692 = vsub.s32 1, %v6691
        %v6693 = vrot.slane %v5658, %v6692
        %v6694 = vadd.f32 %v6689, %v6693
        %v6695 = vmax.f32 %v6694, 0.0
        %v6696 = vadd.f32 %v5619, %v6695
        %v6697 = vmax.f32 %v6696, 0.0
        %v6698 = vsel %vm681, %v6697, 0.0
        %6699 = vadd.xlane.f32.xlu0 %v6698
        %v6700 = vpop.xlane.xlu0 %6699
        %v6701 = vmul.f32 %v6700, %v1726
        %v6702 = vsub.f32 %v6697, %v6701
        %v6703 = vmul.f32 %v6702, %v6702
        %v6704 = vsel %vm681, %v6703, 0.0
        %6705 = vadd.xlane.f32.xlu0 %v6704
        %v6706 = vpop.xlane.xlu0 %6705
        %v6707 = vmul.f32 %v6706, %v1726
        %v6708 = vadd.f32 %v6707, 1e-05
        %v6709 = vrsqrt.pop %v6708
        %v6710 = vmul.f32 %v6702, %v6709
        %v6711 = vlaneseq
        %v6712 = vshrl.u32 %v6711, 7
        %v6713 = vsub.s32 2, %v6712
        %v6714 = vrot.slane %v5658, %v6713
        %v6715 = vmul.f32 %v6710, %v6714
        %v6716 = vlaneseq
        %v6717 = vshrl.u32 %v6716, 7
        %v6718 = vsub.s32 3, %v6717
        %v6719 = vrot.slane %v5658, %v6718
        %v6720 = vadd.f32 %v6715, %v6719
        %v6722 = vsel %vm764, %v6720, 0
        %6724 = vmatprep.subr.mxu0 0.0
        %6725 = vmatpush1.xpose.msra.mxu0 %v4464
        %6726 = vmatprep.subr.mxu0 0.0
        %6727 = vmatpush1.xpose.msra.mxu0 0.0
        %6728 = vmatprep.subr.mxu0 0.0
        %6729 = vmatpush1.xpose.msra.mxu0 0.0
        %6730 = vmatprep.subr.mxu0 0.0
        %6731 = vmatpush1.xpose.msra.mxu0 0.0
        %6732 = vmatprep.subr.mxu0 0.0
        %6733 = vmatpush1.xpose.msra.mxu0 0.0
        %6734 = vmatprep.subr.mxu0 0.0
        %6735 = vmatpush1.xpose.msra.mxu0 0.0
        %6736 = vmatprep.subr.mxu0 0.0
        %6737 = vmatpush1.xpose.msra.mxu0 0.0
        %6738 = vmatprep.subr.mxu0 0.0
        %6739 = vmatpush1.xpose.msra.mxu0 0.0
        %6740 = vmatprep.subr.mxu0 0.0
        %6741 = vmatpush1.xpose.msra.mxu0 0.0
        %6742 = vmatprep.subr.mxu0 0.0
        %6743 = vmatpush1.xpose.msra.mxu0 0.0
        %6744 = vmatprep.subr.mxu0 0.0
        %6745 = vmatpush1.xpose.msra.mxu0 0.0
        %6746 = vmatprep.subr.mxu0 0.0
        %6747 = vmatpush1.xpose.msra.mxu0 0.0
        %6748 = vmatprep.subr.mxu0 0.0
        %6749 = vmatpush1.xpose.msra.mxu0 0.0
        %6750 = vmatprep.subr.mxu0 0.0
        %6751 = vmatpush1.xpose.msra.mxu0 0.0
        %6752 = vmatprep.subr.mxu0 0.0
        %6753 = vmatpush1.xpose.msra.mxu0 0.0
        %6754 = vmatprep.subr.mxu0 0.0
        %6755 = vmatpush1.xpose.msra.mxu0 0.0
        %6756 = vmatprep.subr.mxu0 0.0
        %6757 = vmatpush1.xpose.msra.mxu0 0.0
        %6758 = vmatprep.subr.mxu0 0.0
        %6759 = vmatpush1.xpose.msra.mxu0 0.0
        %6760 = vmatprep.subr.mxu0 0.0
        %6761 = vmatpush1.xpose.msra.mxu0 0.0
        %6762 = vmatprep.subr.mxu0 0.0
        %6763 = vmatpush1.xpose.msra.mxu0 0.0
        %6764 = vmatprep.subr.mxu0 0.0
        %6765 = vmatpush1.xpose.msra.mxu0 0.0
        %6766 = vmatprep.subr.mxu0 0.0
        %6767 = vmatpush1.xpose.msra.mxu0 0.0
        %6768 = vmatprep.subr.mxu0 0.0
        %6769 = vmatpush1.xpose.msra.mxu0 0.0
        %6770 = vmatprep.subr.mxu0 0.0
        %6771 = vmatpush1.xpose.msra.mxu0 0.0
        %6772 = vmatprep.subr.mxu0 0.0
        %6773 = vmatpush1.xpose.msra.mxu0 0.0
        %6774 = vmatprep.subr.mxu0 0.0
        %6775 = vmatpush1.xpose.msra.mxu0 0.0
        %6776 = vmatprep.subr.mxu0 0.0
        %6777 = vmatpush1.xpose.msra.mxu0 0.0
        %6778 = vmatprep.subr.mxu0 0.0
        %6779 = vmatpush1.xpose.msra.mxu0 0.0
        %6780 = vmatprep.subr.mxu0 0.0
        %6781 = vmatpush1.xpose.msra.mxu0 0.0
        %6782 = vmatprep.subr.mxu0 0.0
        %6783 = vmatpush1.xpose.msra.mxu0 0.0
        %6784 = vmatprep.subr.mxu0 0.0
        %6785 = vmatpush1.xpose.msra.mxu0 0.0
        %6786 = vmatprep.subr.mxu0 0.0
        %6787 = vmatpush1.xpose.msra.mxu0 0.0
        %6788 = vmatprep.mubr.f32.mxu0 0.0
        %6789 = vmatmul.mubr.f32.gmra.mrb[0].mxu0 %v6722
        %v6790 = vpop.f32.mrb[0].mxu0
        %v6791 = vadd.f32 0.0, %v6790
        %v6792 = vpop.f32.mrb[0].mxu0
        %6793 = vdwg.mxu0
        %v6794 = vsel %vm764, %v6791, -inf
        %6795 = vmax.xlane.f32.xlu0 %v6794
        %v6796 = vpop.xlane.xlu0 %6795
        %v6797 = vsub.f32 %v6791, %v6796
        %v6798 = vmul.f32 %v6797, 1.442695
        %v6799 = vpow.pop %v6798
        %v6800 = vsel %vm764, %v6799, 0.0
        %6801 = vadd.xlane.f32.xlu0 %v6800
        %v6802 = vpop.xlane.xlu0 %6801
        %v6803 = vrcp.pop %v6802
        %v6804 = vmul.f32 %v6799, %v6803
        %v6806 = vsel %vm764, %v6804, 0
        %6808 = vmatprep.subr.mxu0 0.0
        %6809 = vmatpush1.msra.mxu0 %v4548
        %6810 = vmatprep.subr.mxu0 0.0
        %6811 = vmatpush1.msra.mxu0 0.0
        %6812 = vmatprep.subr.mxu0 0.0
        %6813 = vmatpush1.msra.mxu0 0.0
        %6814 = vmatprep.subr.mxu0 0.0
        %6815 = vmatpush1.msra.mxu0 0.0
        %6816 = vmatprep.subr.mxu0 0.0
        %6817 = vmatpush1.msra.mxu0 0.0
        %6818 = vmatprep.subr.mxu0 0.0
        %6819 = vmatpush1.msra.mxu0 0.0
        %6820 = vmatprep.subr.mxu0 0.0
        %6821 = vmatpush1.msra.mxu0 0.0
        %6822 = vmatprep.subr.mxu0 0.0
        %6823 = vmatpush1.msra.mxu0 0.0
        %6824 = vmatprep.subr.mxu0 0.0
        %6825 = vmatpush1.msra.mxu0 0.0
        %6826 = vmatprep.subr.mxu0 0.0
        %6827 = vmatpush1.msra.mxu0 0.0
        %6828 = vmatprep.subr.mxu0 0.0
        %6829 = vmatpush1.msra.mxu0 0.0
        %6830 = vmatprep.subr.mxu0 0.0
        %6831 = vmatpush1.msra.mxu0 0.0
        %6832 = vmatprep.subr.mxu0 0.0
        %6833 = vmatpush1.msra.mxu0 0.0
        %6834 = vmatprep.subr.mxu0 0.0
        %6835 = vmatpush1.msra.mxu0 0.0
        %6836 = vmatprep.subr.mxu0 0.0
        %6837 = vmatpush1.msra.mxu0 0.0
        %6838 = vmatprep.subr.mxu0 0.0
        %6839 = vmatpush1.msra.mxu0 0.0
        %6840 = vmatprep.subr.mxu0 0.0
        %6841 = vmatpush1.msra.mxu0 0.0
        %6842 = vmatprep.subr.mxu0 0.0
        %6843 = vmatpush1.msra.mxu0 0.0
        %6844 = vmatprep.subr.mxu0 0.0
        %6845 = vmatpush1.msra.mxu0 0.0
        %6846 = vmatprep.subr.mxu0 0.0
        %6847 = vmatpush1.msra.mxu0 0.0
        %6848 = vmatprep.subr.mxu0 0.0
        %6849 = vmatpush1.msra.mxu0 0.0
        %6850 = vmatprep.subr.mxu0 0.0
        %6851 = vmatpush1.msra.mxu0 0.0
        %6852 = vmatprep.subr.mxu0 0.0
        %6853 = vmatpush1.msra.mxu0 0.0
        %6854 = vmatprep.subr.mxu0 0.0
        %6855 = vmatpush1.msra.mxu0 0.0
        %6856 = vmatprep.subr.mxu0 0.0
        %6857 = vmatpush1.msra.mxu0 0.0
        %6858 = vmatprep.subr.mxu0 0.0
        %6859 = vmatpush1.msra.mxu0 0.0
        %6860 = vmatprep.subr.mxu0 0.0
        %6861 = vmatpush1.msra.mxu0 0.0
        %6862 = vmatprep.subr.mxu0 0.0
        %6863 = vmatpush1.msra.mxu0 0.0
        %6864 = vmatprep.subr.mxu0 0.0
        %6865 = vmatpush1.msra.mxu0 0.0
        %6866 = vmatprep.subr.mxu0 0.0
        %6867 = vmatpush1.msra.mxu0 0.0
        %6868 = vmatprep.subr.mxu0 0.0
        %6869 = vmatpush1.msra.mxu0 0.0
        %6870 = vmatprep.subr.mxu0 0.0
        %6871 = vmatpush1.msra.mxu0 0.0
        %6872 = vmatprep.mubr.f32.mxu0 0.0
        %6873 = vmatmul.mubr.f32.gmra.mrb[0].mxu0 %v6806
        %v6874 = vpop.f32.mrb[0].mxu0
        %v6875 = vadd.f32 0.0, %v6874
        %v6876 = vpop.f32.mrb[0].mxu0
        %6877 = vdwg.mxu0
        %6878 = vrot.lane.b32.xlu0 %v6720, 120
        %v6879 = vpop.permute.xlu0 %6878
        %v6880 = vsel %vm764, %v6879, 0
        %6882 = vmatprep.subr.mxu0 0.0
        %6883 = vmatpush1.xpose.msra.mxu0 %v4629
        %6884 = vmatprep.subr.mxu0 0.0
        %6885 = vmatpush1.xpose.msra.mxu0 0.0
        %6886 = vmatprep.subr.mxu0 0.0
        %6887 = vmatpush1.xpose.msra.mxu0 0.0
        %6888 = vmatprep.subr.mxu0 0.0
        %6889 = vmatpush1.xpose.msra.mxu0 0.0
        %6890 = vmatprep.subr.mxu0 0.0
        %6891 = vmatpush1.xpose.msra.mxu0 0.0
        %6892 = vmatprep.subr.mxu0 0.0
        %6893 = vmatpush1.xpose.msra.mxu0 0.0
        %6894 = vmatprep.subr.mxu0 0.0
        %6895 = vmatpush1.xpose.msra.mxu0 0.0
        %6896 = vmatprep.subr.mxu0 0.0
        %6897 = vmatpush1.xpose.msra.mxu0 0.0
        %6898 = vmatprep.subr.mxu0 0.0
        %6899 = vmatpush1.xpose.msra.mxu0 0.0
        %6900 = vmatprep.subr.mxu0 0.0
        %6901 = vmatpush1.xpose.msra.mxu0 0.0
        %6902 = vmatprep.subr.mxu0 0.0
        %6903 = vmatpush1.xpose.msra.mxu0 0.0
        %6904 = vmatprep.subr.mxu0 0.0
        %6905 = vmatpush1.xpose.msra.mxu0 0.0
        %6906 = vmatprep.subr.mxu0 0.0
        %6907 = vmatpush1.xpose.msra.mxu0 0.0
        %6908 = vmatprep.subr.mxu0 0.0
        %6909 = vmatpush1.xpose.msra.mxu0 0.0
        %6910 = vmatprep.subr.mxu0 0.0
        %6911 = vmatpush1.xpose.msra.mxu0 0.0
        %6912 = vmatprep.subr.mxu0 0.0
        %6913 = vmatpush1.xpose.msra.mxu0 0.0
        %6914 = vmatprep.subr.mxu0 0.0
        %6915 = vmatpush1.xpose.msra.mxu0 0.0
        %6916 = vmatprep.subr.mxu0 0.0
        %6917 = vmatpush1.xpose.msra.mxu0 0.0
        %6918 = vmatprep.subr.mxu0 0.0
        %6919 = vmatpush1.xpose.msra.mxu0 0.0
        %6920 = vmatprep.subr.mxu0 0.0
        %6921 = vmatpush1.xpose.msra.mxu0 0.0
        %6922 = vmatprep.subr.mxu0 0.0
        %6923 = vmatpush1.xpose.msra.mxu0 0.0
        %6924 = vmatprep.subr.mxu0 0.0
        %6925 = vmatpush1.xpose.msra.mxu0 0.0
        %6926 = vmatprep.subr.mxu0 0.0
        %6927 = vmatpush1.xpose.msra.mxu0 0.0
        %6928 = vmatprep.subr.mxu0 0.0
        %6929 = vmatpush1.xpose.msra.mxu0 0.0
        %6930 = vmatprep.subr.mxu0 0.0
        %6931 = vmatpush1.xpose.msra.mxu0 0.0
        %6932 = vmatprep.subr.mxu0 0.0
        %6933 = vmatpush1.xpose.msra.mxu0 0.0
        %6934 = vmatprep.subr.mxu0 0.0
        %6935 = vmatpush1.xpose.msra.mxu0 0.0
        %6936 = vmatprep.subr.mxu0 0.0
        %6937 = vmatpush1.xpose.msra.mxu0 0.0
        %6938 = vmatprep.subr.mxu0 0.0
        %6939 = vmatpush1.xpose.msra.mxu0 0.0
        %6940 = vmatprep.subr.mxu0 0.0
        %6941 = vmatpush1.xpose.msra.mxu0 0.0
        %6942 = vmatprep.subr.mxu0 0.0
        %6943 = vmatpush1.xpose.msra.mxu0 0.0
        %6944 = vmatprep.subr.mxu0 0.0
        %6945 = vmatpush1.xpose.msra.mxu0 0.0
        %6946 = vmatprep.mubr.f32.mxu0 0.0
        %6947 = vmatmul.mubr.f32.gmra.mrb[0].mxu0 %v6880
        %v6948 = vpop.f32.mrb[0].mxu0
        %v6949 = vadd.f32 0.0, %v6948
        %v6950 = vpop.f32.mrb[0].mxu0
        %6951 = vdwg.mxu0
        %v6952 = vsel %vm764, %v6949, -inf
        %6953 = vmax.xlane.f32.xlu0 %v6952
        %v6954 = vpop.xlane.xlu0 %6953
        %v6955 = vsub.f32 %v6949, %v6954
        %v6956 = vmul.f32 %v6955, 1.442695
        %v6957 = vpow.pop %v6956
        %v6958 = vsel %vm764, %v6957, 0.0
        %6959 = vadd.xlane.f32.xlu0 %v6958
        %v6960 = vpop.xlane.xlu0 %6959
        %v6961 = vrcp.pop %v6960
        %v6962 = vmul.f32 %v6957, %v6961
        %v6964 = vsel %vm764, %v6962, 0
        %6966 = vmatprep.subr.mxu0 0.0
        %6967 = vmatpush1.msra.mxu0 %v4713
        %6968 = vmatprep.subr.mxu0 0.0
        %6969 = vmatpush1.msra.mxu0 0.0
        %6970 = vmatprep.subr.mxu0 0.0
        %6971 = vmatpush1.msra.mxu0 0.0
        %6972 = vmatprep.subr.mxu0 0.0
        %6973 = vmatpush1.msra.mxu0 0.0
        %6974 = vmatprep.subr.mxu0 0.0
        %6975 = vmatpush1.msra.mxu0 0.0
        %6976 = vmatprep.subr.mxu0 0.0
        %6977 = vmatpush1.msra.mxu0 0.0
        %6978 = vmatprep.subr.mxu0 0.0
        %6979 = vmatpush1.msra.mxu0 0.0
        %6980 = vmatprep.subr.mxu0 0.0
        %6981 = vmatpush1.msra.mxu0 0.0
        %6982 = vmatprep.subr.mxu0 0.0
        %6983 = vmatpush1.msra.mxu0 0.0
        %6984 = vmatprep.subr.mxu0 0.0
        %6985 = vmatpush1.msra.mxu0 0.0
        %6986 = vmatprep.subr.mxu0 0.0
        %6987 = vmatpush1.msra.mxu0 0.0
        %6988 = vmatprep.subr.mxu0 0.0
        %6989 = vmatpush1.msra.mxu0 0.0
        %6990 = vmatprep.subr.mxu0 0.0
        %6991 = vmatpush1.msra.mxu0 0.0
        %6992 = vmatprep.subr.mxu0 0.0
        %6993 = vmatpush1.msra.mxu0 0.0
        %6994 = vmatprep.subr.mxu0 0.0
        %6995 = vmatpush1.msra.mxu0 0.0
        %6996 = vmatprep.subr.mxu0 0.0
        %6997 = vmatpush1.msra.mxu0 0.0
        %6998 = vmatprep.subr.mxu0 0.0
        %6999 = vmatpush1.msra.mxu0 0.0
        %7000 = vmatprep.subr.mxu0 0.0
        %7001 = vmatpush1.msra.mxu0 0.0
        %7002 = vmatprep.subr.mxu0 0.0
        %7003 = vmatpush1.msra.mxu0 0.0
        %7004 = vmatprep.subr.mxu0 0.0
        %7005 = vmatpush1.msra.mxu0 0.0
        %7006 = vmatprep.subr.mxu0 0.0
        %7007 = vmatpush1.msra.mxu0 0.0
        %7008 = vmatprep.subr.mxu0 0.0
        %7009 = vmatpush1.msra.mxu0 0.0
        %7010 = vmatprep.subr.mxu0 0.0
        %7011 = vmatpush1.msra.mxu0 0.0
        %7012 = vmatprep.subr.mxu0 0.0
        %7013 = vmatpush1.msra.mxu0 0.0
        %7014 = vmatprep.subr.mxu0 0.0
        %7015 = vmatpush1.msra.mxu0 0.0
        %7016 = vmatprep.subr.mxu0 0.0
        %7017 = vmatpush1.msra.mxu0 0.0
        %7018 = vmatprep.subr.mxu0 0.0
        %7019 = vmatpush1.msra.mxu0 0.0
        %7020 = vmatprep.subr.mxu0 0.0
        %7021 = vmatpush1.msra.mxu0 0.0
        %7022 = vmatprep.subr.mxu0 0.0
        %7023 = vmatpush1.msra.mxu0 0.0
        %7024 = vmatprep.subr.mxu0 0.0
        %7025 = vmatpush1.msra.mxu0 0.0
        %7026 = vmatprep.subr.mxu0 0.0
        %7027 = vmatpush1.msra.mxu0 0.0
        %7028 = vmatprep.subr.mxu0 0.0
        %7029 = vmatpush1.msra.mxu0 0.0
        %7030 = vmatprep.mubr.f32.mxu0 0.0
        %7031 = vmatmul.mubr.f32.gmra.mrb[0].mxu0 %v6964
        %v7032 = vpop.f32.mrb[0].mxu0
        %v7033 = vadd.f32 0.0, %v7032
        %v7034 = vpop.f32.mrb[0].mxu0
        %7035 = vdwg.mxu0
        %v7037 = vsel %vm764, %v7033, 0
        %7039 = vmatprep.subr.mxu0 0.0
        %7040 = vmatpush1.msra.mxu0 %v5632
        %7041 = vmatprep.subr.mxu0 0.0
        %7042 = vmatpush1.msra.mxu0 0.0
        %7043 = vmatprep.subr.mxu0 0.0
        %7044 = vmatpush1.msra.mxu0 0.0
        %7045 = vmatprep.subr.mxu0 0.0
        %7046 = vmatpush1.msra.mxu0 0.0
        %7047 = vmatprep.subr.mxu0 0.0
        %7048 = vmatpush1.msra.mxu0 0.0
        %7049 = vmatprep.subr.mxu0 0.0
        %7050 = vmatpush1.msra.mxu0 0.0
        %7051 = vmatprep.subr.mxu0 0.0
        %7052 = vmatpush1.msra.mxu0 0.0
        %7053 = vmatprep.subr.mxu0 0.0
        %7054 = vmatpush1.msra.mxu0 0.0
        %7055 = vmatprep.subr.mxu0 0.0
        %7056 = vmatpush1.msra.mxu0 0.0
        %7057 = vmatprep.subr.mxu0 0.0
        %7058 = vmatpush1.msra.mxu0 0.0
        %7059 = vmatprep.subr.mxu0 0.0
        %7060 = vmatpush1.msra.mxu0 0.0
        %7061 = vmatprep.subr.mxu0 0.0
        %7062 = vmatpush1.msra.mxu0 0.0
        %7063 = vmatprep.subr.mxu0 0.0
        %7064 = vmatpush1.msra.mxu0 0.0
        %7065 = vmatprep.subr.mxu0 0.0
        %7066 = vmatpush1.msra.mxu0 0.0
        %7067 = vmatprep.subr.mxu0 0.0
        %7068 = vmatpush1.msra.mxu0 0.0
        %7069 = vmatprep.subr.mxu0 0.0
        %7070 = vmatpush1.msra.mxu0 0.0
        %7071 = vmatprep.subr.mxu0 0.0
        %7072 = vmatpush1.msra.mxu0 0.0
        %7073 = vmatprep.subr.mxu0 0.0
        %7074 = vmatpush1.msra.mxu0 0.0
        %7075 = vmatprep.subr.mxu0 0.0
        %7076 = vmatpush1.msra.mxu0 0.0
        %7077 = vmatprep.subr.mxu0 0.0
        %7078 = vmatpush1.msra.mxu0 0.0
        %7079 = vmatprep.subr.mxu0 0.0
        %7080 = vmatpush1.msra.mxu0 0.0
        %7081 = vmatprep.subr.mxu0 0.0
        %7082 = vmatpush1.msra.mxu0 0.0
        %7083 = vmatprep.subr.mxu0 0.0
        %7084 = vmatpush1.msra.mxu0 0.0
        %7085 = vmatprep.subr.mxu0 0.0
        %7086 = vmatpush1.msra.mxu0 0.0
        %7087 = vmatprep.subr.mxu0 0.0
        %7088 = vmatpush1.msra.mxu0 0.0
        %7089 = vmatprep.subr.mxu0 0.0
        %7090 = vmatpush1.msra.mxu0 0.0
        %7091 = vmatprep.subr.mxu0 0.0
        %7092 = vmatpush1.msra.mxu0 0.0
        %7093 = vmatprep.subr.mxu0 0.0
        %7094 = vmatpush1.msra.mxu0 0.0
        %7095 = vmatprep.subr.mxu0 0.0
        %7096 = vmatpush1.msra.mxu0 0.0
        %7097 = vmatprep.subr.mxu0 0.0
        %7098 = vmatpush1.msra.mxu0 0.0
        %7099 = vmatprep.subr.mxu0 0.0
        %7100 = vmatpush1.msra.mxu0 0.0
        %7101 = vmatprep.subr.mxu0 0.0
        %7102 = vmatpush1.msra.mxu0 0.0
        %7103 = vmatprep.mubr.f32.mxu0 0.0
        %7104 = vmatmul.mubr.f32.gmra.mrb[0].mxu0 %v7037
        %v7105 = vpop.f32.mrb[0].mxu0
        %v7106 = vadd.f32 0.0, %v7105
        %v7107 = vpop.f32.mrb[0].mxu0
        %7108 = vdwg.mxu0
        %v7110 = vsel %vm764, %v6875, 0
        %7112 = vmatprep.subr.mxu0 0.0
        %7113 = vmatpush1.msra.mxu0 %v5631
        %7114 = vmatprep.subr.mxu0 0.0
        %7115 = vmatpush1.msra.mxu0 0.0
        %7116 = vmatprep.subr.mxu0 0.0
        %7117 = vmatpush1.msra.mxu0 0.0
        %7118 = vmatprep.subr.mxu0 0.0
        %7119 = vmatpush1.msra.mxu0 0.0
        %7120 = vmatprep.subr.mxu0 0.0
        %7121 = vmatpush1.msra.mxu0 0.0
        %7122 = vmatprep.subr.mxu0 0.0
        %7123 = vmatpush1.msra.mxu0 0.0
        %7124 = vmatprep.subr.mxu0 0.0
        %7125 = vmatpush1.msra.mxu0 0.0
        %7126 = vmatprep.subr.mxu0 0.0
        %7127 = vmatpush1.msra.mxu0 0.0
        %7128 = vmatprep.subr.mxu0 0.0
        %7129 = vmatpush1.msra.mxu0 0.0
        %7130 = vmatprep.subr.mxu0 0.0
        %7131 = vmatpush1.msra.mxu0 0.0
        %7132 = vmatprep.subr.mxu0 0.0
        %7133 = vmatpush1.msra.mxu0 0.0
        %7134 = vmatprep.subr.mxu0 0.0
        %7135 = vmatpush1.msra.mxu0 0.0
        %7136 = vmatprep.subr.mxu0 0.0
        %7137 = vmatpush1.msra.mxu0 0.0
        %7138 = vmatprep.subr.mxu0 0.0
        %7139 = vmatpush1.msra.mxu0 0.0
        %7140 = vmatprep.subr.mxu0 0.0
        %7141 = vmatpush1.msra.mxu0 0.0
        %7142 = vmatprep.subr.mxu0 0.0
        %7143 = vmatpush1.msra.mxu0 0.0
        %7144 = vmatprep.subr.mxu0 0.0
        %7145 = vmatpush1.msra.mxu0 0.0
        %7146 = vmatprep.subr.mxu0 0.0
        %7147 = vmatpush1.msra.mxu0 0.0
        %7148 = vmatprep.subr.mxu0 0.0
        %7149 = vmatpush1.msra.mxu0 0.0
        %7150 = vmatprep.subr.mxu0 0.0
        %7151 = vmatpush1.msra.mxu0 0.0
        %7152 = vmatprep.subr.mxu0 0.0
        %7153 = vmatpush1.msra.mxu0 0.0
        %7154 = vmatprep.subr.mxu0 0.0
        %7155 = vmatpush1.msra.mxu0 0.0
        %7156 = vmatprep.subr.mxu0 0.0
        %7157 = vmatpush1.msra.mxu0 0.0
        %7158 = vmatprep.subr.mxu0 0.0
        %7159 = vmatpush1.msra.mxu0 0.0
        %7160 = vmatprep.subr.mxu0 0.0
        %7161 = vmatpush1.msra.mxu0 0.0
        %7162 = vmatprep.subr.mxu0 0.0
        %7163 = vmatpush1.msra.mxu0 0.0
        %7164 = vmatprep.subr.mxu0 0.0
        %7165 = vmatpush1.msra.mxu0 0.0
        %7166 = vmatprep.subr.mxu0 0.0
        %7167 = vmatpush1.msra.mxu0 0.0
        %7168 = vmatprep.subr.mxu0 0.0
        %7169 = vmatpush1.msra.mxu0 0.0
        %7170 = vmatprep.subr.mxu0 0.0
        %7171 = vmatpush1.msra.mxu0 0.0
        %7172 = vmatprep.subr.mxu0 0.0
        %7173 = vmatpush1.msra.mxu0 0.0
        %7174 = vmatprep.subr.mxu0 0.0
        %7175 = vmatpush1.msra.mxu0 0.0
        %7176 = vmatprep.mubr.f32.mxu0 0.0
        %7177 = vmatmul.mubr.f32.gmra.mrb[0].mxu0 %v7110
        %v7178 = vpop.f32.mrb[0].mxu0
        %v7179 = vadd.f32 %v7106, %v7178
        %v7180 = vpop.f32.mrb[0].mxu0
        %7181 = vdwg.mxu0
        %7182 = vrot.lane.b32.xlu0 %v6720, 112
        %v7183 = vpop.permute.xlu0 %7182
        %v7184 = vsel %vm764, %v7183, 0
        %7186 = vmatprep.subr.mxu0 0.0
        %7187 = vmatpush1.xpose.msra.mxu0 %v4940
        %7188 = vmatprep.subr.mxu0 0.0
        %7189 = vmatpush1.xpose.msra.mxu0 0.0
        %7190 = vmatprep.subr.mxu0 0.0
        %7191 = vmatpush1.xpose.msra.mxu0 0.0
        %7192 = vmatprep.subr.mxu0 0.0
        %7193 = vmatpush1.xpose.msra.mxu0 0.0
        %7194 = vmatprep.subr.mxu0 0.0
        %7195 = vmatpush1.xpose.msra.mxu0 0.0
        %7196 = vmatprep.subr.mxu0 0.0
        %7197 = vmatpush1.xpose.msra.mxu0 0.0
        %7198 = vmatprep.subr.mxu0 0.0
        %7199 = vmatpush1.xpose.msra.mxu0 0.0
        %7200 = vmatprep.subr.mxu0 0.0
        %7201 = vmatpush1.xpose.msra.mxu0 0.0
        %7202 = vmatprep.subr.mxu0 0.0
        %7203 = vmatpush1.xpose.msra.mxu0 0.0
        %7204 = vmatprep.subr.mxu0 0.0
        %7205 = vmatpush1.xpose.msra.mxu0 0.0
        %7206 = vmatprep.subr.mxu0 0.0
        %7207 = vmatpush1.xpose.msra.mxu0 0.0
        %7208 = vmatprep.subr.mxu0 0.0
        %7209 = vmatpush1.xpose.msra.mxu0 0.0
        %7210 = vmatprep.subr.mxu0 0.0
        %7211 = vmatpush1.xpose.msra.mxu0 0.0
        %7212 = vmatprep.subr.mxu0 0.0
        %7213 = vmatpush1.xpose.msra.mxu0 0.0
        %7214 = vmatprep.subr.mxu0 0.0
        %7215 = vmatpush1.xpose.msra.mxu0 0.0
        %7216 = vmatprep.subr.mxu0 0.0
        %7217 = vmatpush1.xpose.msra.mxu0 0.0
        %7218 = vmatprep.subr.mxu0 0.0
        %7219 = vmatpush1.xpose.msra.mxu0 0.0
        %7220 = vmatprep.subr.mxu0 0.0
        %7221 = vmatpush1.xpose.msra.mxu0 0.0
        %7222 = vmatprep.subr.mxu0 0.0
        %7223 = vmatpush1.xpose.msra.mxu0 0.0
        %7224 = vmatprep.subr.mxu0 0.0
        %7225 = vmatpush1.xpose.msra.mxu0 0.0
        %7226 = vmatprep.subr.mxu0 0.0
        %7227 = vmatpush1.xpose.msra.mxu0 0.0
        %7228 = vmatprep.subr.mxu0 0.0
        %7229 = vmatpush1.xpose.msra.mxu0 0.0
        %7230 = vmatprep.subr.mxu0 0.0
        %7231 = vmatpush1.xpose.msra.mxu0 0.0
        %7232 = vmatprep.subr.mxu0 0.0
        %7233 = vmatpush1.xpose.msra.mxu0 0.0
        %7234 = vmatprep.subr.mxu0 0.0
        %7235 = vmatpush1.xpose.msra.mxu0 0.0
        %7236 = vmatprep.subr.mxu0 0.0
        %7237 = vmatpush1.xpose.msra.mxu0 0.0
        %7238 = vmatprep.subr.mxu0 0.0
        %7239 = vmatpush1.xpose.msra.mxu0 0.0
        %7240 = vmatprep.subr.mxu0 0.0
        %7241 = vmatpush1.xpose.msra.mxu0 0.0
        %7242 = vmatprep.subr.mxu0 0.0
        %7243 = vmatpush1.xpose.msra.mxu0 0.0
        %7244 = vmatprep.subr.mxu0 0.0
        %7245 = vmatpush1.xpose.msra.mxu0 0.0
        %7246 = vmatprep.subr.mxu0 0.0
        %7247 = vmatpush1.xpose.msra.mxu0 0.0
        %7248 = vmatprep.subr.mxu0 0.0
        %7249 = vmatpush1.xpose.msra.mxu0 0.0
        %7250 = vmatprep.mubr.f32.mxu0 0.0
        %7251 = vmatmul.mubr.f32.gmra.mrb[0].mxu0 %v7184
        %v7252 = vpop.f32.mrb[0].mxu0
        %v7253 = vadd.f32 0.0, %v7252
        %v7254 = vpop.f32.mrb[0].mxu0
        %7255 = vdwg.mxu0
        %v7256 = vsel %vm764, %v7253, -inf
        %7257 = vmax.xlane.f32.xlu0 %v7256
        %v7258 = vpop.xlane.xlu0 %7257
        %v7259 = vsub.f32 %v7253, %v7258
        %v7260 = vmul.f32 %v7259, 1.442695
        %v7261 = vpow.pop %v7260
        %v7262 = vsel %vm764, %v7261, 0.0
        %7263 = vadd.xlane.f32.xlu0 %v7262
        %v7264 = vpop.xlane.xlu0 %7263
        %v7265 = vrcp.pop %v7264
        %v7266 = vmul.f32 %v7261, %v7265
        %v7268 = vsel %vm764, %v7266, 0
        %7270 = vmatprep.subr.mxu0 0.0
        %7271 = vmatpush1.msra.mxu0 %v5024
        %7272 = vmatprep.subr.mxu0 0.0
        %7273 = vmatpush1.msra.mxu0 0.0
        %7274 = vmatprep.subr.mxu0 0.0
        %7275 = vmatpush1.msra.mxu0 0.0
        %7276 = vmatprep.subr.mxu0 0.0
        %7277 = vmatpush1.msra.mxu0 0.0
        %7278 = vmatprep.subr.mxu0 0.0
        %7279 = vmatpush1.msra.mxu0 0.0
        %7280 = vmatprep.subr.mxu0 0.0
        %7281 = vmatpush1.msra.mxu0 0.0
        %7282 = vmatprep.subr.mxu0 0.0
        %7283 = vmatpush1.msra.mxu0 0.0
        %7284 = vmatprep.subr.mxu0 0.0
        %7285 = vmatpush1.msra.mxu0 0.0
        %7286 = vmatprep.subr.mxu0 0.0
        %7287 = vmatpush1.msra.mxu0 0.0
        %7288 = vmatprep.subr.mxu0 0.0
        %7289 = vmatpush1.msra.mxu0 0.0
        %7290 = vmatprep.subr.mxu0 0.0
        %7291 = vmatpush1.msra.mxu0 0.0
        %7292 = vmatprep.subr.mxu0 0.0
        %7293 = vmatpush1.msra.mxu0 0.0
        %7294 = vmatprep.subr.mxu0 0.0
        %7295 = vmatpush1.msra.mxu0 0.0
        %7296 = vmatprep.subr.mxu0 0.0
        %7297 = vmatpush1.msra.mxu0 0.0
        %7298 = vmatprep.subr.mxu0 0.0
        %7299 = vmatpush1.msra.mxu0 0.0
        %7300 = vmatprep.subr.mxu0 0.0
        %7301 = vmatpush1.msra.mxu0 0.0
        %7302 = vmatprep.subr.mxu0 0.0
        %7303 = vmatpush1.msra.mxu0 0.0
        %7304 = vmatprep.subr.mxu0 0.0
        %7305 = vmatpush1.msra.mxu0 0.0
        %7306 = vmatprep.subr.mxu0 0.0
        %7307 = vmatpush1.msra.mxu0 0.0
        %7308 = vmatprep.subr.mxu0 0.0
        %7309 = vmatpush1.msra.mxu0 0.0
        %7310 = vmatprep.subr.mxu0 0.0
        %7311 = vmatpush1.msra.mxu0 0.0
        %7312 = vmatprep.subr.mxu0 0.0
        %7313 = vmatpush1.msra.mxu0 0.0
        %7314 = vmatprep.subr.mxu0 0.0
        %7315 = vmatpush1.msra.mxu0 0.0
        %7316 = vmatprep.subr.mxu0 0.0
        %7317 = vmatpush1.msra.mxu0 0.0
        %7318 = vmatprep.subr.mxu0 0.0
        %7319 = vmatpush1.msra.mxu0 0.0
        %7320 = vmatprep.subr.mxu0 0.0
        %7321 = vmatpush1.msra.mxu0 0.0
        %7322 = vmatprep.subr.mxu0 0.0
        %7323 = vmatpush1.msra.mxu0 0.0
        %7324 = vmatprep.subr.mxu0 0.0
        %7325 = vmatpush1.msra.mxu0 0.0
        %7326 = vmatprep.subr.mxu0 0.0
        %7327 = vmatpush1.msra.mxu0 0.0
        %7328 = vmatprep.subr.mxu0 0.0
        %7329 = vmatpush1.msra.mxu0 0.0
        %7330 = vmatprep.subr.mxu0 0.0
        %7331 = vmatpush1.msra.mxu0 0.0
        %7332 = vmatprep.subr.mxu0 0.0
        %7333 = vmatpush1.msra.mxu0 0.0
        %7334 = vmatprep.mubr.f32.mxu0 0.0
        %7335 = vmatmul.mubr.f32.gmra.mrb[0].mxu0 %v7268
        %v7336 = vpop.f32.mrb[0].mxu0
        %v7337 = vadd.f32 0.0, %v7336
        %v7338 = vpop.f32.mrb[0].mxu0
        %7339 = vdwg.mxu0
        %v7341 = vsel %vm764, %v7337, 0
        %7343 = vmatprep.subr.mxu0 0.0
        %7344 = vmatpush1.msra.mxu0 %v5633
        %7345 = vmatprep.subr.mxu0 0.0
        %7346 = vmatpush1.msra.mxu0 0.0
        %7347 = vmatprep.subr.mxu0 0.0
        %7348 = vmatpush1.msra.mxu0 0.0
        %7349 = vmatprep.subr.mxu0 0.0
        %7350 = vmatpush1.msra.mxu0 0.0
        %7351 = vmatprep.subr.mxu0 0.0
        %7352 = vmatpush1.msra.mxu0 0.0
        %7353 = vmatprep.subr.mxu0 0.0
        %7354 = vmatpush1.msra.mxu0 0.0
        %7355 = vmatprep.subr.mxu0 0.0
        %7356 = vmatpush1.msra.mxu0 0.0
        %7357 = vmatprep.subr.mxu0 0.0
        %7358 = vmatpush1.msra.mxu0 0.0
        %7359 = vmatprep.subr.mxu0 0.0
        %7360 = vmatpush1.msra.mxu0 0.0
        %7361 = vmatprep.subr.mxu0 0.0
        %7362 = vmatpush1.msra.mxu0 0.0
        %7363 = vmatprep.subr.mxu0 0.0
        %7364 = vmatpush1.msra.mxu0 0.0
        %7365 = vmatprep.subr.mxu0 0.0
        %7366 = vmatpush1.msra.mxu0 0.0
        %7367 = vmatprep.subr.mxu0 0.0
        %7368 = vmatpush1.msra.mxu0 0.0
        %7369 = vmatprep.subr.mxu0 0.0
        %7370 = vmatpush1.msra.mxu0 0.0
        %7371 = vmatprep.subr.mxu0 0.0
        %7372 = vmatpush1.msra.mxu0 0.0
        %7373 = vmatprep.subr.mxu0 0.0
        %7374 = vmatpush1.msra.mxu0 0.0
        %7375 = vmatprep.subr.mxu0 0.0
        %7376 = vmatpush1.msra.mxu0 0.0
        %7377 = vmatprep.subr.mxu0 0.0
        %7378 = vmatpush1.msra.mxu0 0.0
        %7379 = vmatprep.subr.mxu0 0.0
        %7380 = vmatpush1.msra.mxu0 0.0
        %7381 = vmatprep.subr.mxu0 0.0
        %7382 = vmatpush1.msra.mxu0 0.0
        %7383 = vmatprep.subr.mxu0 0.0
        %7384 = vmatpush1.msra.mxu0 0.0
        %7385 = vmatprep.subr.mxu0 0.0
        %7386 = vmatpush1.msra.mxu0 0.0
        %7387 = vmatprep.subr.mxu0 0.0
        %7388 = vmatpush1.msra.mxu0 0.0
        %7389 = vmatprep.subr.mxu0 0.0
        %7390 = vmatpush1.msra.mxu0 0.0
        %7391 = vmatprep.subr.mxu0 0.0
        %7392 = vmatpush1.msra.mxu0 0.0
        %7393 = vmatprep.subr.mxu0 0.0
        %7394 = vmatpush1.msra.mxu0 0.0
        %7395 = vmatprep.subr.mxu0 0.0
        %7396 = vmatpush1.msra.mxu0 0.0
        %7397 = vmatprep.subr.mxu0 0.0
        %7398 = vmatpush1.msra.mxu0 0.0
        %7399 = vmatprep.subr.mxu0 0.0
        %7400 = vmatpush1.msra.mxu0 0.0
        %7401 = vmatprep.subr.mxu0 0.0
        %7402 = vmatpush1.msra.mxu0 0.0
        %7403 = vmatprep.subr.mxu0 0.0
        %7404 = vmatpush1.msra.mxu0 0.0
        %7405 = vmatprep.subr.mxu0 0.0
        %7406 = vmatpush1.msra.mxu0 0.0
        %7407 = vmatprep.mubr.f32.mxu0 0.0
        %7408 = vmatmul.mubr.f32.gmra.mrb[0].mxu0 %v7341
        %v7409 = vpop.f32.mrb[0].mxu0
        %v7410 = vadd.f32 0.0, %v7409
        %v7411 = vpop.f32.mrb[0].mxu0
        %7412 = vdwg.mxu0
        %v7413 = vadd.f32 %v7179, %v7410
        %7414 = vrot.lane.b32.xlu0 %v6720, 104
        %v7415 = vpop.permute.xlu0 %7414
        %v7416 = vsel %vm764, %v7415, 0
        %7418 = vmatprep.subr.mxu0 0.0
        %7419 = vmatpush1.xpose.msra.mxu0 %v5179
        %7420 = vmatprep.subr.mxu0 0.0
        %7421 = vmatpush1.xpose.msra.mxu0 0.0
        %7422 = vmatprep.subr.mxu0 0.0
        %7423 = vmatpush1.xpose.msra.mxu0 0.0
        %7424 = vmatprep.subr.mxu0 0.0
        %7425 = vmatpush1.xpose.msra.mxu0 0.0
        %7426 = vmatprep.subr.mxu0 0.0
        %7427 = vmatpush1.xpose.msra.mxu0 0.0
        %7428 = vmatprep.subr.mxu0 0.0
        %7429 = vmatpush1.xpose.msra.mxu0 0.0
        %7430 = vmatprep.subr.mxu0 0.0
        %7431 = vmatpush1.xpose.msra.mxu0 0.0
        %7432 = vmatprep.subr.mxu0 0.0
        %7433 = vmatpush1.xpose.msra.mxu0 0.0
        %7434 = vmatprep.subr.mxu0 0.0
        %7435 = vmatpush1.xpose.msra.mxu0 0.0
        %7436 = vmatprep.subr.mxu0 0.0
        %7437 = vmatpush1.xpose.msra.mxu0 0.0
        %7438 = vmatprep.subr.mxu0 0.0
        %7439 = vmatpush1.xpose.msra.mxu0 0.0
        %7440 = vmatprep.subr.mxu0 0.0
        %7441 = vmatpush1.xpose.msra.mxu0 0.0
        %7442 = vmatprep.subr.mxu0 0.0
        %7443 = vmatpush1.xpose.msra.mxu0 0.0
        %7444 = vmatprep.subr.mxu0 0.0
        %7445 = vmatpush1.xpose.msra.mxu0 0.0
        %7446 = vmatprep.subr.mxu0 0.0
        %7447 = vmatpush1.xpose.msra.mxu0 0.0
        %7448 = vmatprep.subr.mxu0 0.0
        %7449 = vmatpush1.xpose.msra.mxu0 0.0
        %7450 = vmatprep.subr.mxu0 0.0
        %7451 = vmatpush1.xpose.msra.mxu0 0.0
        %7452 = vmatprep.subr.mxu0 0.0
        %7453 = vmatpush1.xpose.msra.mxu0 0.0
        %7454 = vmatprep.subr.mxu0 0.0
        %7455 = vmatpush1.xpose.msra.mxu0 0.0
        %7456 = vmatprep.subr.mxu0 0.0
        %7457 = vmatpush1.xpose.msra.mxu0 0.0
        %7458 = vmatprep.subr.mxu0 0.0
        %7459 = vmatpush1.xpose.msra.mxu0 0.0
        %7460 = vmatprep.subr.mxu0 0.0
        %7461 = vmatpush1.xpose.msra.mxu0 0.0
        %7462 = vmatprep.subr.mxu0 0.0
        %7463 = vmatpush1.xpose.msra.mxu0 0.0
        %7464 = vmatprep.subr.mxu0 0.0
        %7465 = vmatpush1.xpose.msra.mxu0 0.0
        %7466 = vmatprep.subr.mxu0 0.0
        %7467 = vmatpush1.xpose.msra.mxu0 0.0
        %7468 = vmatprep.subr.mxu0 0.0
        %7469 = vmatpush1.xpose.msra.mxu0 0.0
        %7470 = vmatprep.subr.mxu0 0.0
        %7471 = vmatpush1.xpose.msra.mxu0 0.0
        %7472 = vmatprep.subr.mxu0 0.0
        %7473 = vmatpush1.xpose.msra.mxu0 0.0
        %7474 = vmatprep.subr.mxu0 0.0
        %7475 = vmatpush1.xpose.msra.mxu0 0.0
        %7476 = vmatprep.subr.mxu0 0.0
        %7477 = vmatpush1.xpose.msra.mxu0 0.0
        %7478 = vmatprep.subr.mxu0 0.0
        %7479 = vmatpush1.xpose.msra.mxu0 0.0
        %7480 = vmatprep.subr.mxu0 0.0
        %7481 = vmatpush1.xpose.msra.mxu0 0.0
        %7482 = vmatprep.mubr.f32.mxu0 0.0
        %7483 = vmatmul.mubr.f32.gmra.mrb[0].mxu0 %v7416
        %v7484 = vpop.f32.mrb[0].mxu0
        %v7485 = vadd.f32 0.0, %v7484
        %v7486 = vpop.f32.mrb[0].mxu0
        %7487 = vdwg.mxu0
        %v7488 = vsel %vm764, %v7485, -inf
        %7489 = vmax.xlane.f32.xlu0 %v7488
        %v7490 = vpop.xlane.xlu0 %7489
        %v7491 = vsub.f32 %v7485, %v7490
        %v7492 = vmul.f32 %v7491, 1.442695
        %v7493 = vpow.pop %v7492
        %v7494 = vsel %vm764, %v7493, 0.0
        %7495 = vadd.xlane.f32.xlu0 %v7494
        %v7496 = vpop.xlane.xlu0 %7495
        %v7497 = vrcp.pop %v7496
        %v7498 = vmul.f32 %v7493, %v7497
        %v7500 = vsel %vm764, %v7498, 0
        %7502 = vmatprep.subr.mxu0 0.0
        %7503 = vmatpush1.msra.mxu0 %v5263
        %7504 = vmatprep.subr.mxu0 0.0
        %7505 = vmatpush1.msra.mxu0 0.0
        %7506 = vmatprep.subr.mxu0 0.0
        %7507 = vmatpush1.msra.mxu0 0.0
        %7508 = vmatprep.subr.mxu0 0.0
        %7509 = vmatpush1.msra.mxu0 0.0
        %7510 = vmatprep.subr.mxu0 0.0
        %7511 = vmatpush1.msra.mxu0 0.0
        %7512 = vmatprep.subr.mxu0 0.0
        %7513 = vmatpush1.msra.mxu0 0.0
        %7514 = vmatprep.subr.mxu0 0.0
        %7515 = vmatpush1.msra.mxu0 0.0
        %7516 = vmatprep.subr.mxu0 0.0
        %7517 = vmatpush1.msra.mxu0 0.0
        %7518 = vmatprep.subr.mxu0 0.0
        %7519 = vmatpush1.msra.mxu0 0.0
        %7520 = vmatprep.subr.mxu0 0.0
        %7521 = vmatpush1.msra.mxu0 0.0
        %7522 = vmatprep.subr.mxu0 0.0
        %7523 = vmatpush1.msra.mxu0 0.0
        %7524 = vmatprep.subr.mxu0 0.0
        %7525 = vmatpush1.msra.mxu0 0.0
        %7526 = vmatprep.subr.mxu0 0.0
        %7527 = vmatpush1.msra.mxu0 0.0
        %7528 = vmatprep.subr.mxu0 0.0
        %7529 = vmatpush1.msra.mxu0 0.0
        %7530 = vmatprep.subr.mxu0 0.0
        %7531 = vmatpush1.msra.mxu0 0.0
        %7532 = vmatprep.subr.mxu0 0.0
        %7533 = vmatpush1.msra.mxu0 0.0
        %7534 = vmatprep.subr.mxu0 0.0
        %7535 = vmatpush1.msra.mxu0 0.0
        %7536 = vmatprep.subr.mxu0 0.0
        %7537 = vmatpush1.msra.mxu0 0.0
        %7538 = vmatprep.subr.mxu0 0.0
        %7539 = vmatpush1.msra.mxu0 0.0
        %7540 = vmatprep.subr.mxu0 0.0
        %7541 = vmatpush1.msra.mxu0 0.0
        %7542 = vmatprep.subr.mxu0 0.0
        %7543 = vmatpush1.msra.mxu0 0.0
        %7544 = vmatprep.subr.mxu0 0.0
        %7545 = vmatpush1.msra.mxu0 0.0
        %7546 = vmatprep.subr.mxu0 0.0
        %7547 = vmatpush1.msra.mxu0 0.0
        %7548 = vmatprep.subr.mxu0 0.0
        %7549 = vmatpush1.msra.mxu0 0.0
        %7550 = vmatprep.subr.mxu0 0.0
        %7551 = vmatpush1.msra.mxu0 0.0
        %7552 = vmatprep.subr.mxu0 0.0
        %7553 = vmatpush1.msra.mxu0 0.0
        %7554 = vmatprep.subr.mxu0 0.0
        %7555 = vmatpush1.msra.mxu0 0.0
        %7556 = vmatprep.subr.mxu0 0.0
        %7557 = vmatpush1.msra.mxu0 0.0
        %7558 = vmatprep.subr.mxu0 0.0
        %7559 = vmatpush1.msra.mxu0 0.0
        %7560 = vmatprep.subr.mxu0 0.0
        %7561 = vmatpush1.msra.mxu0 0.0
        %7562 = vmatprep.subr.mxu0 0.0
        %7563 = vmatpush1.msra.mxu0 0.0
        %7564 = vmatprep.subr.mxu0 0.0
        %7565 = vmatpush1.msra.mxu0 0.0
        %7566 = vmatprep.mubr.f32.mxu0 0.0
        %7567 = vmatmul.mubr.f32.gmra.mrb[0].mxu0 %v7500
        %v7568 = vpop.f32.mrb[0].mxu0
        %v7569 = vadd.f32 0.0, %v7568
        %v7570 = vpop.f32.mrb[0].mxu0
        %7571 = vdwg.mxu0
        %v7573 = vsel %vm764, %v7569, 0
        %7575 = vmatprep.subr.mxu0 0.0
        %7576 = vmatpush1.msra.mxu0 %v5634
        %7577 = vmatprep.subr.mxu0 0.0
        %7578 = vmatpush1.msra.mxu0 0.0
        %7579 = vmatprep.subr.mxu0 0.0
        %7580 = vmatpush1.msra.mxu0 0.0
        %7581 = vmatprep.subr.mxu0 0.0
        %7582 = vmatpush1.msra.mxu0 0.0
        %7583 = vmatprep.subr.mxu0 0.0
        %7584 = vmatpush1.msra.mxu0 0.0
        %7585 = vmatprep.subr.mxu0 0.0
        %7586 = vmatpush1.msra.mxu0 0.0
        %7587 = vmatprep.subr.mxu0 0.0
        %7588 = vmatpush1.msra.mxu0 0.0
        %7589 = vmatprep.subr.mxu0 0.0
        %7590 = vmatpush1.msra.mxu0 0.0
        %7591 = vmatprep.subr.mxu0 0.0
        %7592 = vmatpush1.msra.mxu0 0.0
        %7593 = vmatprep.subr.mxu0 0.0
        %7594 = vmatpush1.msra.mxu0 0.0
        %7595 = vmatprep.subr.mxu0 0.0
        %7596 = vmatpush1.msra.mxu0 0.0
        %7597 = vmatprep.subr.mxu0 0.0
        %7598 = vmatpush1.msra.mxu0 0.0
        %7599 = vmatprep.subr.mxu0 0.0
        %7600 = vmatpush1.msra.mxu0 0.0
        %7601 = vmatprep.subr.mxu0 0.0
        %7602 = vmatpush1.msra.mxu0 0.0
        %7603 = vmatprep.subr.mxu0 0.0
        %7604 = vmatpush1.msra.mxu0 0.0
        %7605 = vmatprep.subr.mxu0 0.0
        %7606 = vmatpush1.msra.mxu0 0.0
        %7607 = vmatprep.subr.mxu0 0.0
        %7608 = vmatpush1.msra.mxu0 0.0
        %7609 = vmatprep.subr.mxu0 0.0
        %7610 = vmatpush1.msra.mxu0 0.0
        %7611 = vmatprep.subr.mxu0 0.0
        %7612 = vmatpush1.msra.mxu0 0.0
        %7613 = vmatprep.subr.mxu0 0.0
        %7614 = vmatpush1.msra.mxu0 0.0
        %7615 = vmatprep.subr.mxu0 0.0
        %7616 = vmatpush1.msra.mxu0 0.0
        %7617 = vmatprep.subr.mxu0 0.0
        %7618 = vmatpush1.msra.mxu0 0.0
        %7619 = vmatprep.subr.mxu0 0.0
        %7620 = vmatpush1.msra.mxu0 0.0
        %7621 = vmatprep.subr.mxu0 0.0
        %7622 = vmatpush1.msra.mxu0 0.0
        %7623 = vmatprep.subr.mxu0 0.0
        %7624 = vmatpush1.msra.mxu0 0.0
        %7625 = vmatprep.subr.mxu0 0.0
        %7626 = vmatpush1.msra.mxu0 0.0
        %7627 = vmatprep.subr.mxu0 0.0
        %7628 = vmatpush1.msra.mxu0 0.0
        %7629 = vmatprep.subr.mxu0 0.0
        %7630 = vmatpush1.msra.mxu0 0.0
        %7631 = vmatprep.subr.mxu0 0.0
        %7632 = vmatpush1.msra.mxu0 0.0
        %7633 = vmatprep.subr.mxu0 0.0
        %7634 = vmatpush1.msra.mxu0 0.0
        %7635 = vmatprep.subr.mxu0 0.0
        %7636 = vmatpush1.msra.mxu0 0.0
        %7637 = vmatprep.subr.mxu0 0.0
        %7638 = vmatpush1.msra.mxu0 0.0
        %7639 = vmatprep.mubr.f32.mxu0 0.0
        %7640 = vmatmul.mubr.f32.gmra.mrb[0].mxu0 %v7573
        %v7641 = vpop.f32.mrb[0].mxu0
        %v7642 = vadd.f32 0.0, %v7641
        %v7643 = vpop.f32.mrb[0].mxu0
        %7644 = vdwg.mxu0
        %v7645 = vadd.f32 %v7413, %v7642
        %v7646 = vlaneseq
        %v7647 = vshrl.u32 %v7646, 7
        %v7648 = vsub.s32 4, %v7647
        %v7649 = vrot.slane %v5658, %v7648
        %v7650 = vadd.f32 %v7645, %v7649
        %v7651 = vmax.f32 %v7650, 0.0
        %v7652 = vadd.f32 %v6720, %v7651
        %v7653 = vmax.f32 %v7652, 0.0
        %v7654 = vsel %vm681, %v7653, 0.0
        %7655 = vadd.xlane.f32.xlu0 %v7654
        %v7656 = vpop.xlane.xlu0 %7655
        %v7657 = vmul.f32 %v7656, %v1726
        %v7658 = vsub.f32 %v7653, %v7657
        %v7659 = vmul.f32 %v7658, %v7658
        %v7660 = vsel %vm681, %v7659, 0.0
        %7661 = vadd.xlane.f32.xlu0 %v7660
        %v7662 = vpop.xlane.xlu0 %7661
        %v7663 = vmul.f32 %v7662, %v1726
        %v7664 = vadd.f32 %v7663, 1e-05
        %v7665 = vrsqrt.pop %v7664
        %v7666 = vmul.f32 %v7658, %v7665
        %v7667 = vlaneseq
        %v7668 = vshrl.u32 %v7667, 7
        %v7669 = vsub.s32 5, %v7668
        %v7670 = vrot.slane %v5658, %v7669
        %v7671 = vmul.f32 %v7666, %v7670
        %v7672 = vlaneseq
        %v7673 = vshrl.u32 %v7672, 7
        %v7674 = vsub.s32 6, %v7673
        %v7675 = vrot.slane %v5658, %v7674
        %v7676 = vadd.f32 %v7671, %v7675
        %v7677 = vlaneseq
        %v7678 = vshrl.u32 %v7677, 7
        %v7679 = vsub.s32 7, %v7678
        %v7680 = vrot.slane %v5658, %v7679
        %v7682 = vsel %vm681, %v7676, 0
        %7684 = vmatprep.subr.mxu0 0.0
        %7685 = vmatpush1.msra.mxu0 %v5636
        %7686 = vmatprep.subr.mxu0 0.0
        %7687 = vmatpush1.msra.mxu0 %v5637
        %7688 = vmatprep.subr.mxu0 0.0
        %7689 = vmatpush1.msra.mxu0 %v5638
        %7690 = vmatprep.subr.mxu0 0.0
        %7691 = vmatpush1.msra.mxu0 %v5639
        %7692 = vmatprep.subr.mxu0 0.0
        %7693 = vmatpush1.msra.mxu0 0.0
        %7694 = vmatprep.subr.mxu0 0.0
        %7695 = vmatpush1.msra.mxu0 0.0
        %7696 = vmatprep.subr.mxu0 0.0
        %7697 = vmatpush1.msra.mxu0 0.0
        %7698 = vmatprep.subr.mxu0 0.0
        %7699 = vmatpush1.msra.mxu0 0.0
        %7700 = vmatprep.subr.mxu0 0.0
        %7701 = vmatpush1.msra.mxu0 0.0
        %7702 = vmatprep.subr.mxu0 0.0
        %7703 = vmatpush1.msra.mxu0 0.0
        %7704 = vmatprep.subr.mxu0 0.0
        %7705 = vmatpush1.msra.mxu0 0.0
        %7706 = vmatprep.subr.mxu0 0.0
        %7707 = vmatpush1.msra.mxu0 0.0
        %7708 = vmatprep.subr.mxu0 0.0
        %7709 = vmatpush1.msra.mxu0 0.0
        %7710 = vmatprep.subr.mxu0 0.0
        %7711 = vmatpush1.msra.mxu0 0.0
        %7712 = vmatprep.subr.mxu0 0.0
        %7713 = vmatpush1.msra.mxu0 0.0
        %7714 = vmatprep.subr.mxu0 0.0
        %7715 = vmatpush1.msra.mxu0 0.0
        %7716 = vmatprep.subr.mxu0 0.0
        %7717 = vmatpush1.msra.mxu0 0.0
        %7718 = vmatprep.subr.mxu0 0.0
        %7719 = vmatpush1.msra.mxu0 0.0
        %7720 = vmatprep.subr.mxu0 0.0
        %7721 = vmatpush1.msra.mxu0 0.0
        %7722 = vmatprep.subr.mxu0 0.0
        %7723 = vmatpush1.msra.mxu0 0.0
        %7724 = vmatprep.subr.mxu0 0.0
        %7725 = vmatpush1.msra.mxu0 0.0
        %7726 = vmatprep.subr.mxu0 0.0
        %7727 = vmatpush1.msra.mxu0 0.0
        %7728 = vmatprep.subr.mxu0 0.0
        %7729 = vmatpush1.msra.mxu0 0.0
        %7730 = vmatprep.subr.mxu0 0.0
        %7731 = vmatpush1.msra.mxu0 0.0
        %7732 = vmatprep.subr.mxu0 0.0
        %7733 = vmatpush1.msra.mxu0 0.0
        %7734 = vmatprep.subr.mxu0 0.0
        %7735 = vmatpush1.msra.mxu0 0.0
        %7736 = vmatprep.subr.mxu0 0.0
        %7737 = vmatpush1.msra.mxu0 0.0
        %7738 = vmatprep.subr.mxu0 0.0
        %7739 = vmatpush1.msra.mxu0 0.0
        %7740 = vmatprep.subr.mxu0 0.0
        %7741 = vmatpush1.msra.mxu0 0.0
        %7742 = vmatprep.subr.mxu0 0.0
        %7743 = vmatpush1.msra.mxu0 0.0
        %7744 = vmatprep.subr.mxu0 0.0
        %7745 = vmatpush1.msra.mxu0 0.0
        %7746 = vmatprep.subr.mxu0 0.0
        %7747 = vmatpush1.msra.mxu0 0.0
        %7748 = vmatprep.mubr.f32.mxu0 0.0
        %7749 = vmatmul.mubr.f32.gmra.mrb[0].mxu0 %v7682
        %v7750 = vpop.f32.mrb[0].mxu0
        %v7751 = vadd.f32 %v7680, %v7750
        %v7752 = vpop.f32.mrb[0].mxu0
        %7753 = vdwg.mxu0
        %v7754 = vmax.f32 %v7751, 0.0
        %v7755 = vlaneseq
        %v7756 = vshrl.u32 %v7755, 7
        %v7757 = vsub.s32 0, %v7756
        %v7758 = vrot.slane %v5659, %v7757
        %7759 = vmatprep.subr.mxu0 0.0
        %7760 = vmatpush1.msra.mxu0 %v5641
        %7761 = vmatprep.subr.mxu0 0.0
        %7762 = vmatpush1.msra.mxu0 %v5642
        %7763 = vmatprep.subr.mxu0 0.0
        %7764 = vmatpush1.msra.mxu0 %v5643
        %7765 = vmatprep.subr.mxu0 0.0
        %7766 = vmatpush1.msra.mxu0 %v5644
        %7767 = vmatprep.subr.mxu0 0.0
        %7768 = vmatpush1.msra.mxu0 %v5645
        %7769 = vmatprep.subr.mxu0 0.0
        %7770 = vmatpush1.msra.mxu0 %v5646
        %7771 = vmatprep.subr.mxu0 0.0
        %7772 = vmatpush1.msra.mxu0 %v5647
        %7773 = vmatprep.subr.mxu0 0.0
        %7774 = vmatpush1.msra.mxu0 %v5648
        %7775 = vmatprep.subr.mxu0 0.0
        %7776 = vmatpush1.msra.mxu0 %v5649
        %7777 = vmatprep.subr.mxu0 0.0
        %7778 = vmatpush1.msra.mxu0 %v5650
        %7779 = vmatprep.subr.mxu0 0.0
        %7780 = vmatpush1.msra.mxu0 %v5651
        %7781 = vmatprep.subr.mxu0 0.0
        %7782 = vmatpush1.msra.mxu0 %v5652
        %7783 = vmatprep.subr.mxu0 0.0
        %7784 = vmatpush1.msra.mxu0 %v5653
        %7785 = vmatprep.subr.mxu0 0.0
        %7786 = vmatpush1.msra.mxu0 %v5654
        %7787 = vmatprep.subr.mxu0 0.0
        %7788 = vmatpush1.msra.mxu0 %v5655
        %7789 = vmatprep.subr.mxu0 0.0
        %7790 = vmatpush1.msra.mxu0 %v5656
        %7791 = vmatprep.subr.mxu0 0.0
        %7792 = vmatpush1.msra.mxu0 0.0
        %7793 = vmatprep.subr.mxu0 0.0
        %7794 = vmatpush1.msra.mxu0 0.0
        %7795 = vmatprep.subr.mxu0 0.0
        %7796 = vmatpush1.msra.mxu0 0.0
        %7797 = vmatprep.subr.mxu0 0.0
        %7798 = vmatpush1.msra.mxu0 0.0
        %7799 = vmatprep.subr.mxu0 0.0
        %7800 = vmatpush1.msra.mxu0 0.0
        %7801 = vmatprep.subr.mxu0 0.0
        %7802 = vmatpush1.msra.mxu0 0.0
        %7803 = vmatprep.subr.mxu0 0.0
        %7804 = vmatpush1.msra.mxu0 0.0
        %7805 = vmatprep.subr.mxu0 0.0
        %7806 = vmatpush1.msra.mxu0 0.0
        %7807 = vmatprep.subr.mxu0 0.0
        %7808 = vmatpush1.msra.mxu0 0.0
        %7809 = vmatprep.subr.mxu0 0.0
        %7810 = vmatpush1.msra.mxu0 0.0
        %7811 = vmatprep.subr.mxu0 0.0
        %7812 = vmatpush1.msra.mxu0 0.0
        %7813 = vmatprep.subr.mxu0 0.0
        %7814 = vmatpush1.msra.mxu0 0.0
        %7815 = vmatprep.subr.mxu0 0.0
        %7816 = vmatpush1.msra.mxu0 0.0
        %7817 = vmatprep.subr.mxu0 0.0
        %7818 = vmatpush1.msra.mxu0 0.0
        %7819 = vmatprep.subr.mxu0 0.0
        %7820 = vmatpush1.msra.mxu0 0.0
        %7821 = vmatprep.subr.mxu0 0.0
        %7822 = vmatpush1.msra.mxu0 0.0
        %7823 = vmatprep.mubr.f32.mxu0 0.0
        %7824 = vmatmul.mubr.f32.gmra.mrb[0].mxu0 %v7754
        %v7825 = vpop.f32.mrb[0].mxu0
        %v7826 = vadd.f32 %v7758, %v7825
        %v7827 = vpop.f32.mrb[0].mxu0
        %7828 = vdwg.mxu0
        %v7829 = vadd.f32 %v7676, %v7826
        %v7830 = vmax.f32 %v7829, 0.0
        %v7831 = vsel %vm681, %v7830, 0.0
        %7832 = vadd.xlane.f32.xlu0 %v7831
        %v7833 = vpop.xlane.xlu0 %7832
        %v7834 = vmul.f32 %v7833, %v1726
        %v7835 = vsub.f32 %v7830, %v7834
        %v7836 = vmul.f32 %v7835, %v7835
        %v7837 = vsel %vm681, %v7836, 0.0
        %7838 = vadd.xlane.f32.xlu0 %v7837
        %v7839 = vpop.xlane.xlu0 %7838
        %v7840 = vmul.f32 %v7839, %v1726
        %v7841 = vadd.f32 %v7840, 1e-05
        %v7842 = vrsqrt.pop %v7841
        %v7843 = vmul.f32 %v7835, %v7842
        %v7844 = vlaneseq
        %v7845 = vshrl.u32 %v7844, 7
        %v7846 = vsub.s32 1, %v7845
        %v7847 = vrot.slane %v5659, %v7846
        %v7848 = vmul.f32 %v7843, %v7847
        %v7849 = vlaneseq
        %v7850 = vshrl.u32 %v7849, 7
        %v7851 = vsub.s32 2, %v7850
        %v7852 = vrot.slane %v5659, %v7851
        %v7853 = vadd.f32 %v7848, %v7852
        %v7854 = vld [vmem:[%s16] sm:$0xff]
        %v7855 = vld [vmem:[%s16 + $0x8] sm:$0xff]
        %v7856 = vld [vmem:[%s16 + $0x10] sm:$0xff]
        %v7857 = vld [vmem:[%s16 + $0x18] sm:$0xff]
        %v7858 = vld [vmem:[%s18] sm:$0x1]
        %v7859 = vlaneseq
        %v7860 = vshrl.u32 %v7859, 7
        %v7861 = vsub.s32 0, %v7860
        %v7862 = vrot.slane %v7858, %v7861
        %v7864 = vsel %vm681, %v7853, 0
        %7866 = vmatprep.subr.mxu0 0.0
        %7867 = vmatpush1.msra.mxu0 %v7854
        %7868 = vmatprep.subr.mxu0 0.0
        %7869 = vmatpush1.msra.mxu0 %v7855
        %7870 = vmatprep.subr.mxu0 0.0
        %7871 = vmatpush1.msra.mxu0 %v7856
        %7872 = vmatprep.subr.mxu0 0.0
        %7873 = vmatpush1.msra.mxu0 %v7857
        %7874 = vmatprep.subr.mxu0 0.0
        %7875 = vmatpush1.msra.mxu0 0.0
        %7876 = vmatprep.subr.mxu0 0.0
        %7877 = vmatpush1.msra.mxu0 0.0
        %7878 = vmatprep.subr.mxu0 0.0
        %7879 = vmatpush1.msra.mxu0 0.0
        %7880 = vmatprep.subr.mxu0 0.0
        %7881 = vmatpush1.msra.mxu0 0.0
        %7882 = vmatprep.subr.mxu0 0.0
        %7883 = vmatpush1.msra.mxu0 0.0
        %7884 = vmatprep.subr.mxu0 0.0
        %7885 = vmatpush1.msra.mxu0 0.0
        %7886 = vmatprep.subr.mxu0 0.0
        %7887 = vmatpush1.msra.mxu0 0.0
        %7888 = vmatprep.subr.mxu0 0.0
        %7889 = vmatpush1.msra.mxu0 0.0
        %7890 = vmatprep.subr.mxu0 0.0
        %7891 = vmatpush1.msra.mxu0 0.0
        %7892 = vmatprep.subr.mxu0 0.0
        %7893 = vmatpush1.msra.mxu0 0.0
        %7894 = vmatprep.subr.mxu0 0.0
        %7895 = vmatpush1.msra.mxu0 0.0
        %7896 = vmatprep.subr.mxu0 0.0
        %7897 = vmatpush1.msra.mxu0 0.0
        %7898 = vmatprep.subr.mxu0 0.0
        %7899 = vmatpush1.msra.mxu0 0.0
        %7900 = vmatprep.subr.mxu0 0.0
        %7901 = vmatpush1.msra.mxu0 0.0
        %7902 = vmatprep.subr.mxu0 0.0
        %7903 = vmatpush1.msra.mxu0 0.0
        %7904 = vmatprep.subr.mxu0 0.0
        %7905 = vmatpush1.msra.mxu0 0.0
        %7906 = vmatprep.subr.mxu0 0.0
        %7907 = vmatpush1.msra.mxu0 0.0
        %7908 = vmatprep.subr.mxu0 0.0
        %7909 = vmatpush1.msra.mxu0 0.0
        %7910 = vmatprep.subr.mxu0 0.0
        %7911 = vmatpush1.msra.mxu0 0.0
        %7912 = vmatprep.subr.mxu0 0.0
        %7913 = vmatpush1.msra.mxu0 0.0
        %7914 = vmatprep.subr.mxu0 0.0
        %7915 = vmatpush1.msra.mxu0 0.0
        %7916 = vmatprep.subr.mxu0 0.0
        %7917 = vmatpush1.msra.mxu0 0.0
        %7918 = vmatprep.subr.mxu0 0.0
        %7919 = vmatpush1.msra.mxu0 0.0
        %7920 = vmatprep.subr.mxu0 0.0
        %7921 = vmatpush1.msra.mxu0 0.0
        %7922 = vmatprep.subr.mxu0 0.0
        %7923 = vmatpush1.msra.mxu0 0.0
        %7924 = vmatprep.subr.mxu0 0.0
        %7925 = vmatpush1.msra.mxu0 0.0
        %7926 = vmatprep.subr.mxu0 0.0
        %7927 = vmatpush1.msra.mxu0 0.0
        %7928 = vmatprep.subr.mxu0 0.0
        %7929 = vmatpush1.msra.mxu0 0.0
        %7930 = vmatprep.mubr.f32.mxu0 0.0
        %7931 = vmatmul.mubr.f32.gmra.mrb[0].mxu0 %v7864
        %v7932 = vpop.f32.mrb[0].mxu0
        %v7933 = vadd.f32 %v7862, %v7932
        %v7934 = vpop.f32.mrb[0].mxu0
        %7935 = vdwg.mxu0
        %v7936 = vmax.f32 %v7933, 0.0
        %v7937 = vld [vmem:[%s17] sm:$0xff]
        %v7938 = vld [vmem:[%s17 + $0x8] sm:$0xff]
        %v7939 = vld [vmem:[%s17 + $0x10] sm:$0xff]
        %v7940 = vld [vmem:[%s17 + $0x18] sm:$0xff]
        %v7941 = vld [vmem:[%s17 + $0x20] sm:$0xff]
        %v7942 = vld [vmem:[%s17 + $0x28] sm:$0xff]
        %v7943 = vld [vmem:[%s17 + $0x30] sm:$0xff]
        %v7944 = vld [vmem:[%s17 + $0x38] sm:$0xff]
        %v7945 = vld [vmem:[%s17 + $0x40] sm:$0xff]
        %v7946 = vld [vmem:[%s17 + $0x48] sm:$0xff]
        %v7947 = vld [vmem:[%s17 + $0x50] sm:$0xff]
        %v7948 = vld [vmem:[%s17 + $0x58] sm:$0xff]
        %v7949 = vld [vmem:[%s17 + $0x60] sm:$0xff]
        %v7950 = vld [vmem:[%s17 + $0x68] sm:$0xff]
        %v7951 = vld [vmem:[%s17 + $0x70] sm:$0xff]
        %v7952 = vld [vmem:[%s17 + $0x78] sm:$0xff]
        %v7953 = vld [vmem:[%s18 + $0x1] sm:$0x1]
        %v7954 = vlaneseq
        %v7955 = vshrl.u32 %v7954, 7
        %v7956 = vsub.s32 0, %v7955
        %v7957 = vrot.slane %v7953, %v7956
        %7958 = vmatprep.subr.mxu0 0.0
        %7959 = vmatpush1.msra.mxu0 %v7937
        %7960 = vmatprep.subr.mxu0 0.0
        %7961 = vmatpush1.msra.mxu0 %v7938
        %7962 = vmatprep.subr.mxu0 0.0
        %7963 = vmatpush1.msra.mxu0 %v7939
        %7964 = vmatprep.subr.mxu0 0.0
        %7965 = vmatpush1.msra.mxu0 %v7940
        %7966 = vmatprep.subr.mxu0 0.0
        %7967 = vmatpush1.msra.mxu0 %v7941
        %7968 = vmatprep.subr.mxu0 0.0
        %7969 = vmatpush1.msra.mxu0 %v7942
        %7970 = vmatprep.subr.mxu0 0.0
        %7971 = vmatpush1.msra.mxu0 %v7943
        %7972 = vmatprep.subr.mxu0 0.0
        %7973 = vmatpush1.msra.mxu0 %v7944
        %7974 = vmatprep.subr.mxu0 0.0
        %7975 = vmatpush1.msra.mxu0 %v7945
        %7976 = vmatprep.subr.mxu0 0.0
        %7977 = vmatpush1.msra.mxu0 %v7946
        %7978 = vmatprep.subr.mxu0 0.0
        %7979 = vmatpush1.msra.mxu0 %v7947
        %7980 = vmatprep.subr.mxu0 0.0
        %7981 = vmatpush1.msra.mxu0 %v7948
        %7982 = vmatprep.subr.mxu0 0.0
        %7983 = vmatpush1.msra.mxu0 %v7949
        %7984 = vmatprep.subr.mxu0 0.0
        %7985 = vmatpush1.msra.mxu0 %v7950
        %7986 = vmatprep.subr.mxu0 0.0
        %7987 = vmatpush1.msra.mxu0 %v7951
        %7988 = vmatprep.subr.mxu0 0.0
        %7989 = vmatpush1.msra.mxu0 %v7952
        %7990 = vmatprep.subr.mxu0 0.0
        %7991 = vmatpush1.msra.mxu0 0.0
        %7992 = vmatprep.subr.mxu0 0.0
        %7993 = vmatpush1.msra.mxu0 0.0
        %7994 = vmatprep.subr.mxu0 0.0
        %7995 = vmatpush1.msra.mxu0 0.0
        %7996 = vmatprep.subr.mxu0 0.0
        %7997 = vmatpush1.msra.mxu0 0.0
        %7998 = vmatprep.subr.mxu0 0.0
        %7999 = vmatpush1.msra.mxu0 0.0
        %8000 = vmatprep.subr.mxu0 0.0
        %8001 = vmatpush1.msra.mxu0 0.0
        %8002 = vmatprep.subr.mxu0 0.0
        %8003 = vmatpush1.msra.mxu0 0.0
        %8004 = vmatprep.subr.mxu0 0.0
        %8005 = vmatpush1.msra.mxu0 0.0
        %8006 = vmatprep.subr.mxu0 0.0
        %8007 = vmatpush1.msra.mxu0 0.0
        %8008 = vmatprep.subr.mxu0 0.0
        %8009 = vmatpush1.msra.mxu0 0.0
        %8010 = vmatprep.subr.mxu0 0.0
        %8011 = vmatpush1.msra.mxu0 0.0
        %8012 = vmatprep.subr.mxu0 0.0
        %8013 = vmatpush1.msra.mxu0 0.0
        %8014 = vmatprep.subr.mxu0 0.0
        %8015 = vmatpush1.msra.mxu0 0.0
        %8016 = vmatprep.subr.mxu0 0.0
        %8017 = vmatpush1.msra.mxu0 0.0
        %8018 = vmatprep.subr.mxu0 0.0
        %8019 = vmatpush1.msra.mxu0 0.0
        %8020 = vmatprep.subr.mxu0 0.0
        %8021 = vmatpush1.msra.mxu0 0.0
        %8022 = vmatprep.mubr.f32.mxu0 0.0
        %8023 = vmatmul.mubr.f32.gmra.mrb[0].mxu0 %v7936
        %v8024 = vpop.f32.mrb[0].mxu0
        %v8025 = vadd.f32 %v7957, %v8024
        %v8026 = vpop.f32.mrb[0].mxu0
        %8027 = vdwg.mxu0
        %8028 = vst [vmem:[%s630] sm:$0xff] %v8025
        %s8029 = sand.u32 %s460, 1
        %s8030 = scalar_lea.sflag [#allocation3], %s8029
        %s8031 = sand.u32 %s460, 1
        %s8032 = smul.addr %s8031, 8
        %s8033 = scalar_lea.vmem [#allocation2], %s8032
        // Predicated region
        $region97: #{transformer_forward.1} parent=95 // pred_check
          %p8034 = pneg %p470
        $region98: #{transformer_forward.1} parent=95 // pred_check_branch
          %8036 = sbr.rel (%p8034) target = $region100
        $region99: #{transformer_forward.1} parent=95 // pred_region
          %s8038 = ssub.s32 128, 128
          %8039 = vsyncadd %s8030, %s8038
          %s8040 = smul.addr %s33, 128
          %s8041 = scalar_lea.hbm %s19, %s8040
          %s8043 = sshll.u32 %s8033, 4
          %s8044 = int_to_ptr.vmem [resolvable:$true] %s8043
          %8046 = dma.vmem_to_hbm [thread:$0]  %s8044, 128, %s8041, %s8030
        $region100: #{transformer_forward.1} parent=95 // pred_fallthru
          _
      $region96: #{transformer_forward.1} parent=5 // pred_fallthru
        _
      %p8047 = scmp.le.s32.totalorder 2, %s28
      // Predicated region
      $region101: #{transformer_forward.1} parent=5 // pred_check
        %p8048 = pneg %p8047
      $region102: #{transformer_forward.1} parent=5 // pred_check_branch
        %8050 = sbr.rel (%p8048) target = $region104
      $region103: #{transformer_forward.1} parent=5 // pred_region
        %s8051 = ssub.s32 %s28, 2
        // Predicated region
        $region105: #{transformer_forward.1} parent=103 // pred_check
          %p8052 = pneg %p476
        $region106: #{transformer_forward.1} parent=103 // pred_check_branch
          %8054 = sbr.rel (%p8052) target = $region108
        $region107: #{transformer_forward.1} parent=103 // pred_region
          %s8055 = sand.u32 %s461, 1
          %s8056 = scalar_lea.sflag [#allocation3], %s8055
          %s8057 = sand.u32 %s461, 1
          %s8058 = smul.addr %s8057, 8
          %s8059 = scalar_lea.vmem [#allocation2], %s8058
          %8060 = dma.done %s8056, 128
        $region108: #{transformer_forward.1} parent=103 // pred_fallthru
          _
      $region104: #{transformer_forward.1} parent=5 // pred_fallthru
        _
    $region6: #{transformer_forward.1} parent=1 // loop_footer
      %s32 = sadd.s32 1, %s28
    $region7: #{transformer_forward.1} parent=1 // loop_footer_branch
      %27 = sbr.rel target = $region3
    $region8: #{transformer_forward.1} parent=1 // loop_exit
      _
    %8061 = vsyncpa [#allocation3], 1
    %s8062 = scalar_lea.sflag [#allocation3], 1
    %8063 = vsyncpa %s8062, 1

</llo_original>
